<compile_context>
chip_gen: v7x
topology: tpu7x:2x2x1
jax: 0.10.0
libtpu: 0.0.40
codegen_flags: <defaults>
</compile_context>

<pallas_src>
import functools

import jax
import jax.numpy as jnp
from jax.experimental import pallas as pl
from jax.experimental.pallas import tpu as pltpu

_LANE = 128
_SUBLANE = 8


def _round_up(x, m):
    return ((x + m - 1) // m) * m


def _cdiv(a, b):
    return (a + b - 1) // b


def _num_tensorcores():
    """Best-effort TensorCores-per-chip (v7x=2, v5e/v6e=1). Conservative default 1."""
    try:
        info = pltpu.get_tpu_info()
    except Exception:
        return 1
    for attr in ("num_tensorcores", "tensorcores_per_chip", "num_tensor_cores",
                 "cores_per_chip"):
        v = getattr(info, attr, None)
        if v is None:
            continue
        try:
            v = int(v)
        except (TypeError, ValueError):
            continue
        if v >= 1:
            return max(1, min(v, 2))
    return 1


def _choose_tm(batch, num_cores):
    """Batch tile size.

    1-TC chips (v5e/v6e): one sublane-aligned tile up to 1024 rows — per-step
    pipeline overhead dominates at these layer sizes, so fewer grid steps win.
    2-TC chips (v7x): split mid/large batches so each core gets a tile of the
    "parallel" grid axis.
    """
    b8 = _round_up(batch, _SUBLANE)
    if num_cores <= 1 or batch <= 128:
        return min(1024, b8)
    return min(1024, _round_up(_cdiv(batch, num_cores), _SUBLANE))


def _mlp_kernel(x_ref, *refs, num_layers, out_features, matmul_dtype, precision):
    """Fused MLP ([Linear -> ReLU]*(L-1) -> Linear) over one batch tile.

    refs = (w0, b0, w1, b1, ..., w_{L-1}, b_{L-1}, o_ref)
      x_ref : (tm, in_f)        f32 activations at natural feature width
      w_l   : (in_l, out_pad_l) matmul_dtype, out dim zero-padded to 128 lanes
      b_l   : (1, out_pad_l)    f32, zero in padded lanes
      o_ref : (tm, out_features) f32 (out_features = 1)
    Padded weight rows/cols and bias lanes are zero, so padded lanes stay exactly 0
    through ReLU and never perturb the next contraction.
    """
    o_ref = refs[2 * num_layers]
    h = x_ref[...].astype(jnp.float32)
    for l in range(num_layers):
        w = refs[2 * l][...]
        b = refs[2 * l + 1][...]
        y = jnp.dot(h.astype(matmul_dtype), w,
                    preferred_element_type=jnp.float32,
                    precision=precision)               # MXU, f32 accumulate
        y = y + b                                      # f32 epilogue (VPU slack)
        if l < num_layers - 1:                         # ReLU on hidden layers only
            y = jnp.maximum(y, 0.0)
        h = y
    o_ref[...] = h[:, :out_features].astype(o_ref.dtype)


def _pad_params(params, matmul_dtype):
    """Zero-pad only the out dims of each layer to 128 lanes (in dim of layer 0 and
    of every following layer tracks the previous padded out dim)."""
    padded = []
    prev_out_pad = params[0][0].shape[0]          # layer-0 in dim stays natural
    for w, b in params:
        in_f, out_f = w.shape
        in_p, out_p = prev_out_pad, _round_up(out_f, _LANE)
        w_p = jnp.zeros((in_p, out_p), matmul_dtype).at[:in_f, :out_f].set(
            w.astype(matmul_dtype))
        b_p = jnp.zeros((1, out_p), jnp.float32).at[:, :out_f].set(
            b.reshape(1, out_f).astype(jnp.float32))
        padded.append((w_p, b_p))
        prev_out_pad = out_p
    return padded


def _resident_spec(block_shape, single_buffer):
    """Full-array block with a constant index_map -> loaded once, VMEM-resident.
    Single-buffered when requested (never changes across grid steps)."""
    index_map = lambda i: tuple(0 for _ in block_shape)
    if single_buffer:
        return pl.BlockSpec(block_shape, index_map, pipeline_mode=pl.Buffered(1))
    return pl.BlockSpec(block_shape, index_map)


def discriminator_forward(params, x, *, matmul_dtype=jnp.bfloat16, tm=None):
    """Forward pass for the whole Discriminator in a single pallas_call.

    x: (B, input_size) f32  ->  (B, 1) f32
    """
    B, in_f = x.shape
    num_layers = len(params)
    out_features = params[-1][0].shape[1]
    assert params[0][0].shape[0] == in_f

    exact_f32 = jnp.dtype(matmul_dtype) == jnp.dtype(jnp.float32)
    precision = jax.lax.Precision.HIGHEST if exact_f32 else None

    padded = _pad_params(params, matmul_dtype)
    flat_params = []
    for w_p, b_p in padded:
        flat_params.extend([w_p, b_p])

    if tm is None:
        tm = _choose_tm(B, _num_tensorcores())
    tm = max(_SUBLANE, _round_up(tm, _SUBLANE))
    grid = (_cdiv(B, tm),)    # no batch padding: Pallas masks overhanging rows

    # Honest scheduling hint: real (unpadded) math and real bytes moved.
    flops = 2 * B * sum(w.shape[0] * w.shape[1] for w, _ in params)
    bytes_accessed = (
        x.size * x.dtype.itemsize
        + sum(a.size * a.dtype.itemsize for a in flat_params)
        + B * out_features * 4)

    kernel = functools.partial(
        _mlp_kernel, num_layers=num_layers, out_features=out_features,
        matmul_dtype=matmul_dtype, precision=precision)

    def _call(single_buffer_weights):
        in_specs = [pl.BlockSpec((tm, in_f), lambda i: (i, 0))]
        for w_p, b_p in padded:
            in_specs.append(_resident_spec(w_p.shape, single_buffer_weights))
            in_specs.append(_resident_spec(b_p.shape, single_buffer_weights))
        return pl.pallas_call(
            kernel,
            out_shape=jax.ShapeDtypeStruct((B, out_features), jnp.float32),
            grid_spec=pltpu.PrefetchScalarGridSpec(
                num_scalar_prefetch=0,
                grid=grid,
                in_specs=in_specs,
                out_specs=pl.BlockSpec((tm, out_features), lambda i: (i, 0)),
            ),
            compiler_params=pltpu.CompilerParams(
                dimension_semantics=("parallel",)),
            cost_estimate=pl.CostEstimate(
                flops=flops, transcendentals=0, bytes_accessed=bytes_accessed),
        )(x, *flat_params)

    try:
        return _call(True)
    except Exception:
        # pl.Buffered(1) / pipeline_mode not supported on this JAX build:
        # fall back to default (double-buffered) weight blocks.
        return _call(False)


def init_discriminator_params(key, input_size, hidden_sizes):
    """Init matching PyTorch nn.Linear default (uniform +-1/sqrt(fan_in)).

    Weights stored transposed: (in_features, out_features); biases (1, out_features).
    """
    sizes = [input_size] + list(hidden_sizes) + [1]
    params = []
    for i in range(len(sizes) - 1):
        fan_in, fan_out = sizes[i], sizes[i + 1]
        key, wk, bk = jax.random.split(key, 3)
        bound = 1.0 / (fan_in ** 0.5)
        w = jax.random.uniform(wk, (fan_in, fan_out), jnp.float32, -bound, bound)
        b = jax.random.uniform(bk, (1, fan_out), jnp.float32, -bound, bound)
        params.append((w, b))
    return params


def discriminator_ref(params, x):
    """Pure-JAX f32 reference with the PyTorch forward() semantics."""
    h = x
    for w, b in params[:-1]:
        h = jnp.maximum(
            jnp.dot(h, w, precision=jax.lax.Precision.HIGHEST) + b, 0.0)
    w_out, b_out = params[-1]
    return jnp.dot(h, w_out, precision=jax.lax.Precision.HIGHEST) + b_out


if __name__ == "__main__":
    key = jax.random.PRNGKey(0)

    batch = 100          # deliberately not a multiple of 8/tm: exercises the
                         # masked-overhang path (no batch padding in the wrapper)
    input_size = 32
    hidden_sizes = [64, 32]

    pkey, xkey = jax.random.split(key)
    params = init_discriminator_params(pkey, input_size, hidden_sizes)
    x = jax.random.normal(xkey, (batch, input_size), jnp.float32)

    ref = discriminator_ref(params, x)

    # Exact-ish f32 MXU path (Precision.HIGHEST): must match the reference tightly.
    out_f32 = jax.block_until_ready(
        discriminator_forward(params, x, matmul_dtype=jnp.float32))
    assert out_f32.shape == (batch, 1), out_f32.shape
    err32 = float(jnp.max(jnp.abs(out_f32 - ref)))
    assert err32 < 2e-5, ("f32 path max err", err32)

    # bf16-input MXU fast path (production default): f32 accumulation + f32 epilogue.
    out_bf16 = jax.block_until_ready(
        discriminator_forward(params, x, matmul_dtype=jnp.bfloat16))
    assert out_bf16.shape == (batch, 1), out_bf16.shape
    errbf = float(jnp.max(jnp.abs(out_bf16 - ref)))
    assert jnp.allclose(out_bf16, ref, atol=5e-2, rtol=5e-2), ("bf16 err", errbf)

    print("KERNEL_OK")
</pallas_src>

<mosaic_0001>
module attributes {stable_mosaic.version = 11 : i64} {
  func.func @_mlp_kernel(%arg0: i32, %arg1: memref<104x32xf32, #tpu.memory_space<vmem>>, %arg2: memref<32x128xf32, #tpu.memory_space<vmem>>, %arg3: memref<1x128xf32, #tpu.memory_space<vmem>>, %arg4: memref<128x128xf32, #tpu.memory_space<vmem>>, %arg5: memref<1x128xf32, #tpu.memory_space<vmem>>, %arg6: memref<128x128xf32, #tpu.memory_space<vmem>>, %arg7: memref<1x128xf32, #tpu.memory_space<vmem>>, %arg8: memref<104x1xf32, #tpu.memory_space<vmem>>) attributes {dimension_semantics = [#tpu.dimension_semantics<parallel>], iteration_bounds = array<i64: 1>, scalar_prefetch = 0 : i64, scratch_operands = 0 : i64, tpu.core_type = #tpu.core_type<tc>, window_params = [{transform_indices = @transform_0, window_bounds = array<i64: 104, 32>}, {pipeline_mode = #tpu.pipeline_mode<synchronous>, transform_indices = @transform_1, window_bounds = array<i64: 32, 128>}, {pipeline_mode = #tpu.pipeline_mode<synchronous>, transform_indices = @transform_2, window_bounds = array<i64: 1, 128>}, {pipeline_mode = #tpu.pipeline_mode<synchronous>, transform_indices = @transform_3, window_bounds = array<i64: 128, 128>}, {pipeline_mode = #tpu.pipeline_mode<synchronous>, transform_indices = @transform_4, window_bounds = array<i64: 1, 128>}, {pipeline_mode = #tpu.pipeline_mode<synchronous>, transform_indices = @transform_5, window_bounds = array<i64: 128, 128>}, {pipeline_mode = #tpu.pipeline_mode<synchronous>, transform_indices = @transform_6, window_bounds = array<i64: 1, 128>}, {transform_indices = @transform_7, window_bounds = array<i64: 104, 1>}]} {
    %c0 = arith.constant 0 : index
    %c0_0 = arith.constant 0 : index
    %0 = vector.load %arg1[%c0, %c0_0] : memref<104x32xf32, #tpu.memory_space<vmem>>, vector<104x32xf32>
    %c0_1 = arith.constant 0 : index
    %c0_2 = arith.constant 0 : index
    %1 = vector.load %arg2[%c0_1, %c0_2] : memref<32x128xf32, #tpu.memory_space<vmem>>, vector<32x128xf32>
    %c0_3 = arith.constant 0 : index
    %c0_4 = arith.constant 0 : index
    %2 = vector.load %arg3[%c0_3, %c0_4] : memref<1x128xf32, #tpu.memory_space<vmem>>, vector<1x128xf32>
    %cst = arith.constant dense<0.000000e+00> : vector<104x128xf32>
    %3 = tpu.matmul %0, %1, %cst {dimension_numbers = #tpu.dot_dimension_numbers<[1], [0], [0], [1], [0, 0, 1, 1], [], []>, precision = #tpu.contract_precision<fp32>} : vector<104x32xf32>, vector<32x128xf32>, vector<104x128xf32> -> vector<104x128xf32>
    %4 = vector.broadcast %2 : vector<1x128xf32> to vector<104x128xf32>
    %5 = arith.addf %3, %4 : vector<104x128xf32>
    %cst_5 = arith.constant 0.000000e+00 : f32
    %6 = vector.broadcast %cst_5 : f32 to vector<104x128xf32>
    %7 = arith.maximumf %5, %6 : vector<104x128xf32>
    %c0_6 = arith.constant 0 : index
    %c0_7 = arith.constant 0 : index
    %8 = vector.load %arg4[%c0_6, %c0_7] : memref<128x128xf32, #tpu.memory_space<vmem>>, vector<128x128xf32>
    %c0_8 = arith.constant 0 : index
    %c0_9 = arith.constant 0 : index
    %9 = vector.load %arg5[%c0_8, %c0_9] : memref<1x128xf32, #tpu.memory_space<vmem>>, vector<1x128xf32>
    %cst_10 = arith.constant dense<0.000000e+00> : vector<104x128xf32>
    %10 = tpu.matmul %7, %8, %cst_10 {dimension_numbers = #tpu.dot_dimension_numbers<[1], [0], [0], [1], [0, 0, 1, 1], [], []>, precision = #tpu.contract_precision<fp32>} : vector<104x128xf32>, vector<128x128xf32>, vector<104x128xf32> -> vector<104x128xf32>
    %11 = vector.broadcast %9 : vector<1x128xf32> to vector<104x128xf32>
    %12 = arith.addf %10, %11 : vector<104x128xf32>
    %cst_11 = arith.constant 0.000000e+00 : f32
    %13 = vector.broadcast %cst_11 : f32 to vector<104x128xf32>
    %14 = arith.maximumf %12, %13 : vector<104x128xf32>
    %c0_12 = arith.constant 0 : index
    %c0_13 = arith.constant 0 : index
    %15 = vector.load %arg6[%c0_12, %c0_13] : memref<128x128xf32, #tpu.memory_space<vmem>>, vector<128x128xf32>
    %c0_14 = arith.constant 0 : index
    %c0_15 = arith.constant 0 : index
    %16 = vector.load %arg7[%c0_14, %c0_15] : memref<1x128xf32, #tpu.memory_space<vmem>>, vector<1x128xf32>
    %cst_16 = arith.constant dense<0.000000e+00> : vector<104x128xf32>
    %17 = tpu.matmul %14, %15, %cst_16 {dimension_numbers = #tpu.dot_dimension_numbers<[1], [0], [0], [1], [0, 0, 1, 1], [], []>, precision = #tpu.contract_precision<fp32>} : vector<104x128xf32>, vector<128x128xf32>, vector<104x128xf32> -> vector<104x128xf32>
    %18 = vector.broadcast %16 : vector<1x128xf32> to vector<104x128xf32>
    %19 = arith.addf %17, %18 : vector<104x128xf32>
    %20 = vector.extract_strided_slice %19 {offsets = [0, 0], sizes = [104, 1], strides = [1, 1]} : vector<104x128xf32> to vector<104x1xf32>
    %c0_17 = arith.constant 0 : index
    %c0_18 = arith.constant 0 : index
    %21 = vector.load %arg8[%c0_17, %c0_18] : memref<104x1xf32, #tpu.memory_space<vmem>>, vector<104x1xf32>
    tpu.vector_store %arg8[%c0_17, %c0_18], %20 {strides = array<i32>} : memref<104x1xf32, #tpu.memory_space<vmem>>, vector<104x1xf32>,
    return
  }
  func.func @transform_0(%arg0: i32) -> (i32, i32) {
    %c0_i32 = arith.constant 0 : i32
    %c0_i32_0 = arith.constant 0 : i32
    return %arg0, %c0_i32 : i32, i32
  }
  func.func @transform_1(%arg0: i32) -> (i32, i32) {
    %c0_i32 = arith.constant 0 : i32
    %c0_i32_0 = arith.constant 0 : i32
    %c0_i32_1 = arith.constant 0 : i32
    return %c0_i32, %c0_i32_0 : i32, i32
  }
  func.func @transform_2(%arg0: i32) -> (i32, i32) {
    %c0_i32 = arith.constant 0 : i32
    %c0_i32_0 = arith.constant 0 : i32
    %c0_i32_1 = arith.constant 0 : i32
    return %c0_i32, %c0_i32_0 : i32, i32
  }
  func.func @transform_3(%arg0: i32) -> (i32, i32) {
    %c0_i32 = arith.constant 0 : i32
    %c0_i32_0 = arith.constant 0 : i32
    %c0_i32_1 = arith.constant 0 : i32
    return %c0_i32, %c0_i32_0 : i32, i32
  }
  func.func @transform_4(%arg0: i32) -> (i32, i32) {
    %c0_i32 = arith.constant 0 : i32
    %c0_i32_0 = arith.constant 0 : i32
    %c0_i32_1 = arith.constant 0 : i32
    return %c0_i32, %c0_i32_0 : i32, i32
  }
  func.func @transform_5(%arg0: i32) -> (i32, i32) {
    %c0_i32 = arith.constant 0 : i32
    %c0_i32_0 = arith.constant 0 : i32
    %c0_i32_1 = arith.constant 0 : i32
    return %c0_i32, %c0_i32_0 : i32, i32
  }
  func.func @transform_6(%arg0: i32) -> (i32, i32) {
    %c0_i32 = arith.constant 0 : i32
    %c0_i32_0 = arith.constant 0 : i32
    %c0_i32_1 = arith.constant 0 : i32
    return %c0_i32, %c0_i32_0 : i32, i32
  }
  func.func @transform_7(%arg0: i32) -> (i32, i32) {
    %c0_i32 = arith.constant 0 : i32
    %c0_i32_0 = arith.constant 0 : i32
    return %arg0, %c0_i32 : i32, i32
  }
}

module attributes {stable_mosaic.version = 11 : i64} {
  func.func @_mlp_kernel(%arg0: i32, %arg1: memref<104x32xf32, #tpu.memory_space<vmem>>, %arg2: memref<32x128xf32, #tpu.memory_space<vmem>>, %arg3: memref<1x128xf32, #tpu.memory_space<vmem>>, %arg4: memref<128x128xf32, #tpu.memory_space<vmem>>, %arg5: memref<1x128xf32, #tpu.memory_space<vmem>>, %arg6: memref<128x128xf32, #tpu.memory_space<vmem>>, %arg7: memref<1x128xf32, #tpu.memory_space<vmem>>, %arg8: memref<104x1xf32, #tpu.memory_space<vmem>>) attributes {dimension_semantics = [#tpu.dimension_semantics<parallel>], iteration_bounds = array<i64: 1>, scalar_prefetch = 0 : i64, scratch_operands = 0 : i64, tpu.core_type = #tpu.core_type<tc>, window_params = [{transform_indices = @transform_0, window_bounds = array<i64: 104, 32>}, {pipeline_mode = #tpu.pipeline_mode<synchronous>, transform_indices = @transform_1, window_bounds = array<i64: 32, 128>}, {pipeline_mode = #tpu.pipeline_mode<synchronous>, transform_indices = @transform_2, window_bounds = array<i64: 1, 128>}, {pipeline_mode = #tpu.pipeline_mode<synchronous>, transform_indices = @transform_3, window_bounds = array<i64: 128, 128>}, {pipeline_mode = #tpu.pipeline_mode<synchronous>, transform_indices = @transform_4, window_bounds = array<i64: 1, 128>}, {pipeline_mode = #tpu.pipeline_mode<synchronous>, transform_indices = @transform_5, window_bounds = array<i64: 128, 128>}, {pipeline_mode = #tpu.pipeline_mode<synchronous>, transform_indices = @transform_6, window_bounds = array<i64: 1, 128>}, {transform_indices = @transform_7, window_bounds = array<i64: 104, 1>}]} {
    %c0 = arith.constant 0 : index
    %c0_0 = arith.constant 0 : index
    %0 = vector.load %arg1[%c0, %c0_0] : memref<104x32xf32, #tpu.memory_space<vmem>>, vector<104x32xf32>
    %c0_1 = arith.constant 0 : index
    %c0_2 = arith.constant 0 : index
    %1 = vector.load %arg2[%c0_1, %c0_2] : memref<32x128xf32, #tpu.memory_space<vmem>>, vector<32x128xf32>
    %c0_3 = arith.constant 0 : index
    %c0_4 = arith.constant 0 : index
    %2 = vector.load %arg3[%c0_3, %c0_4] : memref<1x128xf32, #tpu.memory_space<vmem>>, vector<1x128xf32>
    %cst = arith.constant dense<0.000000e+00> : vector<104x128xf32>
    %3 = tpu.matmul %0, %1, %cst {dimension_numbers = #tpu.dot_dimension_numbers<[1], [0], [0], [1], [0, 0, 1, 1], [], []>, precision = #tpu.contract_precision<fp32>} : vector<104x32xf32>, vector<32x128xf32>, vector<104x128xf32> -> vector<104x128xf32>
    %4 = vector.broadcast %2 : vector<1x128xf32> to vector<104x128xf32>
    %5 = arith.addf %3, %4 : vector<104x128xf32>
    %cst_5 = arith.constant 0.000000e+00 : f32
    %6 = vector.broadcast %cst_5 : f32 to vector<104x128xf32>
    %7 = arith.maximumf %5, %6 : vector<104x128xf32>
    %c0_6 = arith.constant 0 : index
    %c0_7 = arith.constant 0 : index
    %8 = vector.load %arg4[%c0_6, %c0_7] : memref<128x128xf32, #tpu.memory_space<vmem>>, vector<128x128xf32>
    %c0_8 = arith.constant 0 : index
    %c0_9 = arith.constant 0 : index
    %9 = vector.load %arg5[%c0_8, %c0_9] : memref<1x128xf32, #tpu.memory_space<vmem>>, vector<1x128xf32>
    %cst_10 = arith.constant dense<0.000000e+00> : vector<104x128xf32>
    %10 = tpu.matmul %7, %8, %cst_10 {dimension_numbers = #tpu.dot_dimension_numbers<[1], [0], [0], [1], [0, 0, 1, 1], [], []>, precision = #tpu.contract_precision<fp32>} : vector<104x128xf32>, vector<128x128xf32>, vector<104x128xf32> -> vector<104x128xf32>
    %11 = vector.broadcast %9 : vector<1x128xf32> to vector<104x128xf32>
    %12 = arith.addf %10, %11 : vector<104x128xf32>
    %cst_11 = arith.constant 0.000000e+00 : f32
    %13 = vector.broadcast %cst_11 : f32 to vector<104x128xf32>
    %14 = arith.maximumf %12, %13 : vector<104x128xf32>
    %c0_12 = arith.constant 0 : index
    %c0_13 = arith.constant 0 : index
    %15 = vector.load %arg6[%c0_12, %c0_13] : memref<128x128xf32, #tpu.memory_space<vmem>>, vector<128x128xf32>
    %c0_14 = arith.constant 0 : index
    %c0_15 = arith.constant 0 : index
    %16 = vector.load %arg7[%c0_14, %c0_15] : memref<1x128xf32, #tpu.memory_space<vmem>>, vector<1x128xf32>
    %cst_16 = arith.constant dense<0.000000e+00> : vector<104x128xf32>
    %17 = tpu.matmul %14, %15, %cst_16 {dimension_numbers = #tpu.dot_dimension_numbers<[1], [0], [0], [1], [0, 0, 1, 1], [], []>, precision = #tpu.contract_precision<fp32>} : vector<104x128xf32>, vector<128x128xf32>, vector<104x128xf32> -> vector<104x128xf32>
    %18 = vector.broadcast %16 : vector<1x128xf32> to vector<104x128xf32>
    %19 = arith.addf %17, %18 : vector<104x128xf32>
    %20 = vector.extract_strided_slice %19 {offsets = [0, 0], sizes = [104, 1], strides = [1, 1]} : vector<104x128xf32> to vector<104x1xf32>
    %c0_17 = arith.constant 0 : index
    %c0_18 = arith.constant 0 : index
    %21 = vector.load %arg8[%c0_17, %c0_18] : memref<104x1xf32, #tpu.memory_space<vmem>>, vector<104x1xf32>
    tpu.vector_store %arg8[%c0_17, %c0_18], %20 {strides = array<i32>} : memref<104x1xf32, #tpu.memory_space<vmem>>, vector<104x1xf32>,
    return
  }
  func.func @transform_0(%arg0: i32) -> (i32, i32) {
    %c0_i32 = arith.constant 0 : i32
    %c0_i32_0 = arith.constant 0 : i32
    return %arg0, %c0_i32 : i32, i32
  }
  func.func @transform_1(%arg0: i32) -> (i32, i32) {
    %c0_i32 = arith.constant 0 : i32
    %c0_i32_0 = arith.constant 0 : i32
    %c0_i32_1 = arith.constant 0 : i32
    return %c0_i32, %c0_i32_0 : i32, i32
  }
  func.func @transform_2(%arg0: i32) -> (i32, i32) {
    %c0_i32 = arith.constant 0 : i32
    %c0_i32_0 = arith.constant 0 : i32
    %c0_i32_1 = arith.constant 0 : i32
    return %c0_i32, %c0_i32_0 : i32, i32
  }
  func.func @transform_3(%arg0: i32) -> (i32, i32) {
    %c0_i32 = arith.constant 0 : i32
    %c0_i32_0 = arith.constant 0 : i32
    %c0_i32_1 = arith.constant 0 : i32
    return %c0_i32, %c0_i32_0 : i32, i32
  }
  func.func @transform_4(%arg0: i32) -> (i32, i32) {
    %c0_i32 = arith.constant 0 : i32
    %c0_i32_0 = arith.constant 0 : i32
    %c0_i32_1 = arith.constant 0 : i32
    return %c0_i32, %c0_i32_0 : i32, i32
  }
  func.func @transform_5(%arg0: i32) -> (i32, i32) {
    %c0_i32 = arith.constant 0 : i32
    %c0_i32_0 = arith.constant 0 : i32
    %c0_i32_1 = arith.constant 0 : i32
    return %c0_i32, %c0_i32_0 : i32, i32
  }
  func.func @transform_6(%arg0: i32) -> (i32, i32) {
    %c0_i32 = arith.constant 0 : i32
    %c0_i32_0 = arith.constant 0 : i32
    %c0_i32_1 = arith.constant 0 : i32
    return %c0_i32, %c0_i32_0 : i32, i32
  }
  func.func @transform_7(%arg0: i32) -> (i32, i32) {
    %c0_i32 = arith.constant 0 : i32
    %c0_i32_0 = arith.constant 0 : i32
    return %arg0, %c0_i32 : i32, i32
  }
}

</mosaic_0001>

<llo_original>
// kernel: tpu_custom_call.1
$region0: #{tpu_custom_call.1}
  #allocation0 [shape = 'u32[]', space=smem, size = 0x4, offset = 0x4, fixed_abs, tag = 'smem constant byte address 0x4 - core index']
  #allocation1 [shape = 'u32[144,128]{1,0:T(1,128)}', space=vmem, size = 0x12000, scoped, tag = 'internal scratch']
  %s0 = inlined_call_operand.vmem [shape: f32[100,32], index: 0, kind: input, shape index: {}]
  %s1 = inlined_call_operand.hbm [shape: f32[32,128], index: 1, kind: input, shape index: {}]
  %s2 = inlined_call_operand.vmem [shape: f32[1,128], index: 2, kind: input, shape index: {}]
  %s3 = inlined_call_operand.vmem [shape: f32[128,128], index: 3, kind: input, shape index: {}]
  %s4 = inlined_call_operand.vmem [shape: f32[1,128], index: 4, kind: input, shape index: {}]
  %s5 = inlined_call_operand.hbm [shape: f32[128,128], index: 5, kind: input, shape index: {}]
  %s6 = inlined_call_operand.vmem [shape: f32[1,128], index: 6, kind: input, shape index: {}]
  %s7 = inlined_call_operand.vmem [shape: f32[100,1], index: 7, kind: output, shape index: {}]
  %s8 = sld [smem:[#allocation0]]
  $region46: #{tpu_custom_call.1} parent=0
    _
  %s10 = ssub.s32 1, %s8
  %s11 = scalar_select 0, %s10, %s8
  $region1: #{tpu_custom_call.1} parent=0
    #allocation2 [shape = 'u8[16384]{0}', space=vmem, size = 0x4000, scoped, tag = 'input window, operand 1, single buffered']
    #allocation3 [shape = 's32[1]{0}', space=sflag, size = 0x4, scoped, tag = 'scoped memory for tpu_custom_call.1']
    #allocation4 [shape = 'u8[65536]{0}', space=vmem, size = 0x10000, scoped, tag = 'input window, operand 5, single buffered']
    #allocation5 [shape = 's32[1]{0}', space=sflag, size = 0x4, scoped, tag = 'scoped memory for tpu_custom_call.1']
    %12 = vsyncpa [#allocation3], 0
    %13 = vsyncpa [#allocation5], 0
    // Predicated region
    $region2: #{tpu_custom_call.1} parent=1 // pred_check
      _
    $region3: #{tpu_custom_call.1} parent=1 // pred_check_branch
      %15 = sbr.rel (0) target = $region5
    $region4: #{tpu_custom_call.1} parent=1 // pred_region
      _
    $region5: #{tpu_custom_call.1} parent=1 // pred_fallthru
      _
    // Predicated region
    $region6: #{tpu_custom_call.1} parent=1 // pred_check
      _
    $region7: #{tpu_custom_call.1} parent=1 // pred_check_branch
      %17 = sbr.rel (0) target = $region9
    $region8: #{tpu_custom_call.1} parent=1 // pred_region
      %s19 = ssub.s32 512, 512
      %20 = vsyncadd [#allocation3], %s19
      %s21 = sshll.u32 [#allocation2], 4
      %s22 = int_to_ptr.vmem [resolvable:$true] %s21
      %27 = dma.hbm_to_vmem [thread:$0]  %s1, 512, %s22, [#allocation3], 128, 128, 8
    $region9: #{tpu_custom_call.1} parent=1 // pred_fallthru
      _
    // Predicated region
    $region10: #{tpu_custom_call.1} parent=1 // pred_check
      _
    $region11: #{tpu_custom_call.1} parent=1 // pred_check_branch
      %29 = sbr.rel (0) target = $region13
    $region12: #{tpu_custom_call.1} parent=1 // pred_region
      _
    $region13: #{tpu_custom_call.1} parent=1 // pred_fallthru
      _
    // Predicated region
    $region14: #{tpu_custom_call.1} parent=1 // pred_check
      _
    $region15: #{tpu_custom_call.1} parent=1 // pred_check_branch
      %31 = sbr.rel (0) target = $region17
    $region16: #{tpu_custom_call.1} parent=1 // pred_region
      _
    $region17: #{tpu_custom_call.1} parent=1 // pred_fallthru
      _
    // Predicated region
    $region18: #{tpu_custom_call.1} parent=1 // pred_check
      _
    $region19: #{tpu_custom_call.1} parent=1 // pred_check_branch
      %33 = sbr.rel (0) target = $region21
    $region20: #{tpu_custom_call.1} parent=1 // pred_region
      _
    $region21: #{tpu_custom_call.1} parent=1 // pred_fallthru
      _
    // Predicated region
    $region22: #{tpu_custom_call.1} parent=1 // pred_check
      _
    $region23: #{tpu_custom_call.1} parent=1 // pred_check_branch
      %35 = sbr.rel (0) target = $region25
    $region24: #{tpu_custom_call.1} parent=1 // pred_region
      %s37 = ssub.s32 2048, 2048
      %38 = vsyncadd [#allocation5], %s37
      %s39 = sshll.u32 [#allocation4], 4
      %s40 = int_to_ptr.vmem [resolvable:$true] %s39
      %45 = dma.hbm_to_vmem [thread:$0]  %s5, 2048, %s40, [#allocation5], 128, 128, 8
    $region25: #{tpu_custom_call.1} parent=1 // pred_fallthru
      _
    // Predicated region
    $region26: #{tpu_custom_call.1} parent=1 // pred_check
      _
    $region27: #{tpu_custom_call.1} parent=1 // pred_check_branch
      %47 = sbr.rel (0) target = $region29
    $region28: #{tpu_custom_call.1} parent=1 // pred_region
      _
    $region29: #{tpu_custom_call.1} parent=1 // pred_fallthru
      _
    // Predicated region
    $region30: #{tpu_custom_call.1} parent=1 // pred_check
      _
    $region31: #{tpu_custom_call.1} parent=1 // pred_check_branch
      %49 = sbr.rel (0) target = $region33
    $region32: #{tpu_custom_call.1} parent=1 // pred_region
      %50 = dma.done [#allocation3], 512
    $region33: #{tpu_custom_call.1} parent=1 // pred_fallthru
      _
    // Predicated region
    $region34: #{tpu_custom_call.1} parent=1 // pred_check
      _
    $region35: #{tpu_custom_call.1} parent=1 // pred_check_branch
      %52 = sbr.rel (0) target = $region37
    $region36: #{tpu_custom_call.1} parent=1 // pred_region
      %53 = dma.done [#allocation5], 2048
    $region37: #{tpu_custom_call.1} parent=1 // pred_fallthru
      _
    %v54 = vld [vmem:[%s0] sm:$0xff]
    %v55 = vld [vmem:[%s0 + $0x8] sm:$0xff]
    %v56 = vld [vmem:[%s0 + $0x10] sm:$0xff]
    %v57 = vld [vmem:[%s0 + $0x18] sm:$0xff]
    %v58 = vld [vmem:[%s0 + $0x20] sm:$0xff]
    %v59 = vld [vmem:[%s0 + $0x28] sm:$0xff]
    %v60 = vld [vmem:[%s0 + $0x30] sm:$0xff]
    %v61 = vld [vmem:[%s0 + $0x38] sm:$0xff]
    %v62 = vld [vmem:[%s0 + $0x40] sm:$0xff]
    %v63 = vld [vmem:[%s0 + $0x48] sm:$0xff]
    %v64 = vld [vmem:[%s0 + $0x50] sm:$0xff]
    %v65 = vld [vmem:[%s0 + $0x58] sm:$0xff]
    %v66 = vld [vmem:[%s0 + $0x60] sm:$0xff]
    %v67 = vld [vmem:[#allocation2] sm:$0xff]
    %v68 = vld [vmem:[#allocation2 + $0x8] sm:$0xff]
    %v69 = vld [vmem:[#allocation2 + $0x10] sm:$0xff]
    %v70 = vld [vmem:[#allocation2 + $0x18] sm:$0xff]
    %v71 = vld [vmem:[%s2] sm:$0x1]
    %v73 = vlaneseq
    %v74 = vshrl.u32 %v73, 7
    %v75 = vsub.s32 0, %v74
    %v76 = vrot.slane %v71, %v75
    %vm78 = vcmask 261120
    %v80 = vsel %vm78, %v54, 0
    %v83 = vsel %vm78, %v55, 0
    %v86 = vsel %vm78, %v56, 0
    %v89 = vsel %vm78, %v57, 0
    %v92 = vsel %vm78, %v58, 0
    %v95 = vsel %vm78, %v59, 0
    %v98 = vsel %vm78, %v60, 0
    %v101 = vsel %vm78, %v61, 0
    %v104 = vsel %vm78, %v62, 0
    %v107 = vsel %vm78, %v63, 0
    %v110 = vsel %vm78, %v64, 0
    %v113 = vsel %vm78, %v65, 0
    %v116 = vsel %vm78, %v66, 0
    %118 = vmatprep.subr.mxu0 0.0
    %v119 = vand.u32 %v67, 4294901760
    %120 = vmatpush1.msra.mxu0 %v119
    %121 = vmatprep.subr.mxu0 0.0
    %v122 = vand.u32 %v68, 4294901760
    %123 = vmatpush1.msra.mxu0 %v122
    %124 = vmatprep.subr.mxu0 0.0
    %v125 = vand.u32 %v69, 4294901760
    %126 = vmatpush1.msra.mxu0 %v125
    %127 = vmatprep.subr.mxu0 0.0
    %v128 = vand.u32 %v70, 4294901760
    %129 = vmatpush1.msra.mxu0 %v128
    %130 = vmatprep.subr.mxu0 0.0
    %131 = vmatpush1.msra.mxu0 0.0
    %132 = vmatprep.subr.mxu0 0.0
    %133 = vmatpush1.msra.mxu0 0.0
    %134 = vmatprep.subr.mxu0 0.0
    %135 = vmatpush1.msra.mxu0 0.0
    %136 = vmatprep.subr.mxu0 0.0
    %137 = vmatpush1.msra.mxu0 0.0
    %138 = vmatprep.subr.mxu0 0.0
    %139 = vmatpush1.msra.mxu0 0.0
    %140 = vmatprep.subr.mxu0 0.0
    %141 = vmatpush1.msra.mxu0 0.0
    %142 = vmatprep.subr.mxu0 0.0
    %143 = vmatpush1.msra.mxu0 0.0
    %144 = vmatprep.subr.mxu0 0.0
    %145 = vmatpush1.msra.mxu0 0.0
    %146 = vmatprep.subr.mxu0 0.0
    %147 = vmatpush1.msra.mxu0 0.0
    %148 = vmatprep.subr.mxu0 0.0
    %149 = vmatpush1.msra.mxu0 0.0
    %150 = vmatprep.subr.mxu0 0.0
    %151 = vmatpush1.msra.mxu0 0.0
    %152 = vmatprep.subr.mxu0 0.0
    %153 = vmatpush1.msra.mxu0 0.0
    %154 = vmatprep.subr.mxu0 0.0
    %155 = vmatpush1.msra.mxu0 0.0
    %156 = vmatprep.subr.mxu0 0.0
    %157 = vmatpush1.msra.mxu0 0.0
    %158 = vmatprep.subr.mxu0 0.0
    %159 = vmatpush1.msra.mxu0 0.0
    %160 = vmatprep.subr.mxu0 0.0
    %161 = vmatpush1.msra.mxu0 0.0
    %162 = vmatprep.subr.mxu0 0.0
    %163 = vmatpush1.msra.mxu0 0.0
    %164 = vmatprep.subr.mxu0 0.0
    %165 = vmatpush1.msra.mxu0 0.0
    %166 = vmatprep.subr.mxu0 0.0
    %167 = vmatpush1.msra.mxu0 0.0
    %168 = vmatprep.subr.mxu0 0.0
    %169 = vmatpush1.msra.mxu0 0.0
    %170 = vmatprep.subr.mxu0 0.0
    %171 = vmatpush1.msra.mxu0 0.0
    %172 = vmatprep.subr.mxu0 0.0
    %173 = vmatpush1.msra.mxu0 0.0
    %174 = vmatprep.subr.mxu0 0.0
    %175 = vmatpush1.msra.mxu0 0.0
    %176 = vmatprep.subr.mxu0 0.0
    %177 = vmatpush1.msra.mxu0 0.0
    %178 = vmatprep.subr.mxu0 0.0
    %179 = vmatpush1.msra.mxu0 0.0
    %180 = vmatprep.subr.mxu0 0.0
    %181 = vmatpush1.msra.mxu0 0.0
    %182 = vmatprep.subr.mxu0 0.0
    %183 = vmatpush1.msra.mxu0 0.0
    %184 = vmatprep.subr.mxu0 0.0
    %185 = vmatpush1.msra.mxu0 0.0
    %186 = vmatprep.mubr.f32.mxu0 0.0
    %v187 = vand.u32 %v80, 4294901760
    %v188 = vsub.f32 %v80, %v187
    %v189 = vand.u32 %v188, 4294901760
    %v190 = vsub.f32 %v188, %v189
    %v191 = vand.u32 %v190, 4294901760
    %192 = vmatmul.mubr.f32.gmra.mrb[0].mxu0 %v191
    %v193 = vpop.f32.mrb[0].mxu0
    %v194 = vadd.f32 %v76, %v193
    %v195 = vpop.f32.mrb[0].mxu0
    %196 = vmatprep.mubr.f32.mxu0 0.0
    %v197 = vand.u32 %v83, 4294901760
    %v198 = vsub.f32 %v83, %v197
    %v199 = vand.u32 %v198, 4294901760
    %v200 = vsub.f32 %v198, %v199
    %v201 = vand.u32 %v200, 4294901760
    %202 = vmatmul.mubr.f32.gmra.mrb[0].mxu0 %v201
    %v203 = vpop.f32.mrb[0].mxu0
    %v204 = vadd.f32 %v76, %v203
    %v205 = vpop.f32.mrb[0].mxu0
    %206 = vmatprep.mubr.f32.mxu0 0.0
    %v207 = vand.u32 %v86, 4294901760
    %v208 = vsub.f32 %v86, %v207
    %v209 = vand.u32 %v208, 4294901760
    %v210 = vsub.f32 %v208, %v209
    %v211 = vand.u32 %v210, 4294901760
    %212 = vmatmul.mubr.f32.gmra.mrb[0].mxu0 %v211
    %v213 = vpop.f32.mrb[0].mxu0
    %v214 = vadd.f32 %v76, %v213
    %v215 = vpop.f32.mrb[0].mxu0
    %216 = vmatprep.mubr.f32.mxu0 0.0
    %v217 = vand.u32 %v89, 4294901760
    %v218 = vsub.f32 %v89, %v217
    %v219 = vand.u32 %v218, 4294901760
    %v220 = vsub.f32 %v218, %v219
    %v221 = vand.u32 %v220, 4294901760
    %222 = vmatmul.mubr.f32.gmra.mrb[0].mxu0 %v221
    %v223 = vpop.f32.mrb[0].mxu0
    %v224 = vadd.f32 %v76, %v223
    %v225 = vpop.f32.mrb[0].mxu0
    %226 = vmatprep.mubr.f32.mxu0 0.0
    %v227 = vand.u32 %v92, 4294901760
    %v228 = vsub.f32 %v92, %v227
    %v229 = vand.u32 %v228, 4294901760
    %v230 = vsub.f32 %v228, %v229
    %v231 = vand.u32 %v230, 4294901760
    %232 = vmatmul.mubr.f32.gmra.mrb[0].mxu0 %v231
    %v233 = vpop.f32.mrb[0].mxu0
    %v234 = vadd.f32 %v76, %v233
    %v235 = vpop.f32.mrb[0].mxu0
    %236 = vmatprep.mubr.f32.mxu0 0.0
    %v237 = vand.u32 %v95, 4294901760
    %v238 = vsub.f32 %v95, %v237
    %v239 = vand.u32 %v238, 4294901760
    %v240 = vsub.f32 %v238, %v239
    %v241 = vand.u32 %v240, 4294901760
    %242 = vmatmul.mubr.f32.gmra.mrb[0].mxu0 %v241
    %v243 = vpop.f32.mrb[0].mxu0
    %v244 = vadd.f32 %v76, %v243
    %v245 = vpop.f32.mrb[0].mxu0
    %246 = vmatprep.mubr.f32.mxu0 0.0
    %v247 = vand.u32 %v98, 4294901760
    %v248 = vsub.f32 %v98, %v247
    %v249 = vand.u32 %v248, 4294901760
    %v250 = vsub.f32 %v248, %v249
    %v251 = vand.u32 %v250, 4294901760
    %252 = vmatmul.mubr.f32.gmra.mrb[0].mxu0 %v251
    %v253 = vpop.f32.mrb[0].mxu0
    %v254 = vadd.f32 %v76, %v253
    %v255 = vpop.f32.mrb[0].mxu0
    %256 = vmatprep.mubr.f32.mxu0 0.0
    %v257 = vand.u32 %v101, 4294901760
    %v258 = vsub.f32 %v101, %v257
    %v259 = vand.u32 %v258, 4294901760
    %v260 = vsub.f32 %v258, %v259
    %v261 = vand.u32 %v260, 4294901760
    %262 = vmatmul.mubr.f32.gmra.mrb[0].mxu0 %v261
    %v263 = vpop.f32.mrb[0].mxu0
    %v264 = vadd.f32 %v76, %v263
    %v265 = vpop.f32.mrb[0].mxu0
    %266 = vmatprep.mubr.f32.mxu0 0.0
    %v267 = vand.u32 %v104, 4294901760
    %v268 = vsub.f32 %v104, %v267
    %v269 = vand.u32 %v268, 4294901760
    %v270 = vsub.f32 %v268, %v269
    %v271 = vand.u32 %v270, 4294901760
    %272 = vmatmul.mubr.f32.gmra.mrb[0].mxu0 %v271
    %v273 = vpop.f32.mrb[0].mxu0
    %v274 = vadd.f32 %v76, %v273
    %v275 = vpop.f32.mrb[0].mxu0
    %276 = vmatprep.mubr.f32.mxu0 0.0
    %v277 = vand.u32 %v107, 4294901760
    %v278 = vsub.f32 %v107, %v277
    %v279 = vand.u32 %v278, 4294901760
    %v280 = vsub.f32 %v278, %v279
    %v281 = vand.u32 %v280, 4294901760
    %282 = vmatmul.mubr.f32.gmra.mrb[0].mxu0 %v281
    %v283 = vpop.f32.mrb[0].mxu0
    %v284 = vadd.f32 %v76, %v283
    %v285 = vpop.f32.mrb[0].mxu0
    %286 = vmatprep.mubr.f32.mxu0 0.0
    %v287 = vand.u32 %v110, 4294901760
    %v288 = vsub.f32 %v110, %v287
    %v289 = vand.u32 %v288, 4294901760
    %v290 = vsub.f32 %v288, %v289
    %v291 = vand.u32 %v290, 4294901760
    %292 = vmatmul.mubr.f32.gmra.mrb[0].mxu0 %v291
    %v293 = vpop.f32.mrb[0].mxu0
    %v294 = vadd.f32 %v76, %v293
    %v295 = vpop.f32.mrb[0].mxu0
    %296 = vmatprep.mubr.f32.mxu0 0.0
    %v297 = vand.u32 %v113, 4294901760
    %v298 = vsub.f32 %v113, %v297
    %v299 = vand.u32 %v298, 4294901760
    %v300 = vsub.f32 %v298, %v299
    %v301 = vand.u32 %v300, 4294901760
    %302 = vmatmul.mubr.f32.gmra.mrb[0].mxu0 %v301
    %v303 = vpop.f32.mrb[0].mxu0
    %v304 = vadd.f32 %v76, %v303
    %v305 = vpop.f32.mrb[0].mxu0
    %306 = vmatprep.mubr.f32.mxu0 0.0
    %v307 = vand.u32 %v116, 4294901760
    %v308 = vsub.f32 %v116, %v307
    %v309 = vand.u32 %v308, 4294901760
    %v310 = vsub.f32 %v308, %v309
    %v311 = vand.u32 %v310, 4294901760
    %312 = vmatmul.mubr.f32.gmra.mrb[0].mxu0 %v311
    %v313 = vpop.f32.mrb[0].mxu0
    %v314 = vadd.f32 %v76, %v313
    %v315 = vpop.f32.mrb[0].mxu0
    %316 = vdwg.mxu0
    %317 = vmatprep.subr.mxu0 0.0
    %v318 = vand.u32 %v67, 4294901760
    %v319 = vsub.f32 %v67, %v318
    %v320 = vand.u32 %v319, 4294901760
    %v321 = vsub.f32 %v319, %v320
    %v322 = vand.u32 %v321, 4294901760
    %323 = vmatpush1.msra.mxu0 %v322
    %324 = vmatprep.subr.mxu0 0.0
    %v325 = vand.u32 %v68, 4294901760
    %v326 = vsub.f32 %v68, %v325
    %v327 = vand.u32 %v326, 4294901760
    %v328 = vsub.f32 %v326, %v327
    %v329 = vand.u32 %v328, 4294901760
    %330 = vmatpush1.msra.mxu0 %v329
    %331 = vmatprep.subr.mxu0 0.0
    %v332 = vand.u32 %v69, 4294901760
    %v333 = vsub.f32 %v69, %v332
    %v334 = vand.u32 %v333, 4294901760
    %v335 = vsub.f32 %v333, %v334
    %v336 = vand.u32 %v335, 4294901760
    %337 = vmatpush1.msra.mxu0 %v336
    %338 = vmatprep.subr.mxu0 0.0
    %v339 = vand.u32 %v70, 4294901760
    %v340 = vsub.f32 %v70, %v339
    %v341 = vand.u32 %v340, 4294901760
    %v342 = vsub.f32 %v340, %v341
    %v343 = vand.u32 %v342, 4294901760
    %344 = vmatpush1.msra.mxu0 %v343
    %345 = vmatprep.subr.mxu0 0.0
    %346 = vmatpush1.msra.mxu0 0.0
    %347 = vmatprep.subr.mxu0 0.0
    %348 = vmatpush1.msra.mxu0 0.0
    %349 = vmatprep.subr.mxu0 0.0
    %350 = vmatpush1.msra.mxu0 0.0
    %351 = vmatprep.subr.mxu0 0.0
    %352 = vmatpush1.msra.mxu0 0.0
    %353 = vmatprep.subr.mxu0 0.0
    %354 = vmatpush1.msra.mxu0 0.0
    %355 = vmatprep.subr.mxu0 0.0
    %356 = vmatpush1.msra.mxu0 0.0
    %357 = vmatprep.subr.mxu0 0.0
    %358 = vmatpush1.msra.mxu0 0.0
    %359 = vmatprep.subr.mxu0 0.0
    %360 = vmatpush1.msra.mxu0 0.0
    %361 = vmatprep.subr.mxu0 0.0
    %362 = vmatpush1.msra.mxu0 0.0
    %363 = vmatprep.subr.mxu0 0.0
    %364 = vmatpush1.msra.mxu0 0.0
    %365 = vmatprep.subr.mxu0 0.0
    %366 = vmatpush1.msra.mxu0 0.0
    %367 = vmatprep.subr.mxu0 0.0
    %368 = vmatpush1.msra.mxu0 0.0
    %369 = vmatprep.subr.mxu0 0.0
    %370 = vmatpush1.msra.mxu0 0.0
    %371 = vmatprep.subr.mxu0 0.0
    %372 = vmatpush1.msra.mxu0 0.0
    %373 = vmatprep.subr.mxu0 0.0
    %374 = vmatpush1.msra.mxu0 0.0
    %375 = vmatprep.subr.mxu0 0.0
    %376 = vmatpush1.msra.mxu0 0.0
    %377 = vmatprep.subr.mxu0 0.0
    %378 = vmatpush1.msra.mxu0 0.0
    %379 = vmatprep.subr.mxu0 0.0
    %380 = vmatpush1.msra.mxu0 0.0
    %381 = vmatprep.subr.mxu0 0.0
    %382 = vmatpush1.msra.mxu0 0.0
    %383 = vmatprep.subr.mxu0 0.0
    %384 = vmatpush1.msra.mxu0 0.0
    %385 = vmatprep.subr.mxu0 0.0
    %386 = vmatpush1.msra.mxu0 0.0
    %387 = vmatprep.subr.mxu0 0.0
    %388 = vmatpush1.msra.mxu0 0.0
    %389 = vmatprep.subr.mxu0 0.0
    %390 = vmatpush1.msra.mxu0 0.0
    %391 = vmatprep.subr.mxu0 0.0
    %392 = vmatpush1.msra.mxu0 0.0
    %393 = vmatprep.subr.mxu0 0.0
    %394 = vmatpush1.msra.mxu0 0.0
    %395 = vmatprep.subr.mxu0 0.0
    %396 = vmatpush1.msra.mxu0 0.0
    %397 = vmatprep.subr.mxu0 0.0
    %398 = vmatpush1.msra.mxu0 0.0
    %399 = vmatprep.subr.mxu0 0.0
    %400 = vmatpush1.msra.mxu0 0.0
    %401 = vmatprep.mubr.f32.mxu0 0.0
    %v402 = vand.u32 %v80, 4294901760
    %403 = vmatmul.mubr.f32.gmra.mrb[0].mxu0 %v402
    %v404 = vpop.f32.mrb[0].mxu0
    %v405 = vadd.f32 %v194, %v404
    %v406 = vpop.f32.mrb[0].mxu0
    %407 = vmatprep.mubr.f32.mxu0 0.0
    %v408 = vand.u32 %v83, 4294901760
    %409 = vmatmul.mubr.f32.gmra.mrb[0].mxu0 %v408
    %v410 = vpop.f32.mrb[0].mxu0
    %v411 = vadd.f32 %v204, %v410
    %v412 = vpop.f32.mrb[0].mxu0
    %413 = vmatprep.mubr.f32.mxu0 0.0
    %v414 = vand.u32 %v86, 4294901760
    %415 = vmatmul.mubr.f32.gmra.mrb[0].mxu0 %v414
    %v416 = vpop.f32.mrb[0].mxu0
    %v417 = vadd.f32 %v214, %v416
    %v418 = vpop.f32.mrb[0].mxu0
    %419 = vmatprep.mubr.f32.mxu0 0.0
    %v420 = vand.u32 %v89, 4294901760
    %421 = vmatmul.mubr.f32.gmra.mrb[0].mxu0 %v420
    %v422 = vpop.f32.mrb[0].mxu0
    %v423 = vadd.f32 %v224, %v422
    %v424 = vpop.f32.mrb[0].mxu0
    %425 = vmatprep.mubr.f32.mxu0 0.0
    %v426 = vand.u32 %v92, 4294901760
    %427 = vmatmul.mubr.f32.gmra.mrb[0].mxu0 %v426
    %v428 = vpop.f32.mrb[0].mxu0
    %v429 = vadd.f32 %v234, %v428
    %v430 = vpop.f32.mrb[0].mxu0
    %431 = vmatprep.mubr.f32.mxu0 0.0
    %v432 = vand.u32 %v95, 4294901760
    %433 = vmatmul.mubr.f32.gmra.mrb[0].mxu0 %v432
    %v434 = vpop.f32.mrb[0].mxu0
    %v435 = vadd.f32 %v244, %v434
    %v436 = vpop.f32.mrb[0].mxu0
    %437 = vmatprep.mubr.f32.mxu0 0.0
    %v438 = vand.u32 %v98, 4294901760
    %439 = vmatmul.mubr.f32.gmra.mrb[0].mxu0 %v438
    %v440 = vpop.f32.mrb[0].mxu0
    %v441 = vadd.f32 %v254, %v440
    %v442 = vpop.f32.mrb[0].mxu0
    %443 = vmatprep.mubr.f32.mxu0 0.0
    %v444 = vand.u32 %v101, 4294901760
    %445 = vmatmul.mubr.f32.gmra.mrb[0].mxu0 %v444
    %v446 = vpop.f32.mrb[0].mxu0
    %v447 = vadd.f32 %v264, %v446
    %v448 = vpop.f32.mrb[0].mxu0
    %449 = vmatprep.mubr.f32.mxu0 0.0
    %v450 = vand.u32 %v104, 4294901760
    %451 = vmatmul.mubr.f32.gmra.mrb[0].mxu0 %v450
    %v452 = vpop.f32.mrb[0].mxu0
    %v453 = vadd.f32 %v274, %v452
    %v454 = vpop.f32.mrb[0].mxu0
    %455 = vmatprep.mubr.f32.mxu0 0.0
    %v456 = vand.u32 %v107, 4294901760
    %457 = vmatmul.mubr.f32.gmra.mrb[0].mxu0 %v456
    %v458 = vpop.f32.mrb[0].mxu0
    %v459 = vadd.f32 %v284, %v458
    %v460 = vpop.f32.mrb[0].mxu0
    %461 = vmatprep.mubr.f32.mxu0 0.0
    %v462 = vand.u32 %v110, 4294901760
    %463 = vmatmul.mubr.f32.gmra.mrb[0].mxu0 %v462
    %v464 = vpop.f32.mrb[0].mxu0
    %v465 = vadd.f32 %v294, %v464
    %v466 = vpop.f32.mrb[0].mxu0
    %467 = vmatprep.mubr.f32.mxu0 0.0
    %v468 = vand.u32 %v113, 4294901760
    %469 = vmatmul.mubr.f32.gmra.mrb[0].mxu0 %v468
    %v470 = vpop.f32.mrb[0].mxu0
    %v471 = vadd.f32 %v304, %v470
    %v472 = vpop.f32.mrb[0].mxu0
    %473 = vmatprep.mubr.f32.mxu0 0.0
    %v474 = vand.u32 %v116, 4294901760
    %475 = vmatmul.mubr.f32.gmra.mrb[0].mxu0 %v474
    %v476 = vpop.f32.mrb[0].mxu0
    %v477 = vadd.f32 %v314, %v476
    %v478 = vpop.f32.mrb[0].mxu0
    %479 = vdwg.mxu0
    %480 = vmatprep.subr.mxu0 0.0
    %v481 = vand.u32 %v67, 4294901760
    %v482 = vsub.f32 %v67, %v481
    %483 = vmatpush1.msra.mxu0 %v482
    %484 = vmatprep.subr.mxu0 0.0
    %v485 = vand.u32 %v68, 4294901760
    %v486 = vsub.f32 %v68, %v485
    %487 = vmatpush1.msra.mxu0 %v486
    %488 = vmatprep.subr.mxu0 0.0
    %v489 = vand.u32 %v69, 4294901760
    %v490 = vsub.f32 %v69, %v489
    %491 = vmatpush1.msra.mxu0 %v490
    %492 = vmatprep.subr.mxu0 0.0
    %v493 = vand.u32 %v70, 4294901760
    %v494 = vsub.f32 %v70, %v493
    %495 = vmatpush1.msra.mxu0 %v494
    %496 = vmatprep.subr.mxu0 0.0
    %497 = vmatpush1.msra.mxu0 0.0
    %498 = vmatprep.subr.mxu0 0.0
    %499 = vmatpush1.msra.mxu0 0.0
    %500 = vmatprep.subr.mxu0 0.0
    %501 = vmatpush1.msra.mxu0 0.0
    %502 = vmatprep.subr.mxu0 0.0
    %503 = vmatpush1.msra.mxu0 0.0
    %504 = vmatprep.subr.mxu0 0.0
    %505 = vmatpush1.msra.mxu0 0.0
    %506 = vmatprep.subr.mxu0 0.0
    %507 = vmatpush1.msra.mxu0 0.0
    %508 = vmatprep.subr.mxu0 0.0
    %509 = vmatpush1.msra.mxu0 0.0
    %510 = vmatprep.subr.mxu0 0.0
    %511 = vmatpush1.msra.mxu0 0.0
    %512 = vmatprep.subr.mxu0 0.0
    %513 = vmatpush1.msra.mxu0 0.0
    %514 = vmatprep.subr.mxu0 0.0
    %515 = vmatpush1.msra.mxu0 0.0
    %516 = vmatprep.subr.mxu0 0.0
    %517 = vmatpush1.msra.mxu0 0.0
    %518 = vmatprep.subr.mxu0 0.0
    %519 = vmatpush1.msra.mxu0 0.0
    %520 = vmatprep.subr.mxu0 0.0
    %521 = vmatpush1.msra.mxu0 0.0
    %522 = vmatprep.subr.mxu0 0.0
    %523 = vmatpush1.msra.mxu0 0.0
    %524 = vmatprep.subr.mxu0 0.0
    %525 = vmatpush1.msra.mxu0 0.0
    %526 = vmatprep.subr.mxu0 0.0
    %527 = vmatpush1.msra.mxu0 0.0
    %528 = vmatprep.subr.mxu0 0.0
    %529 = vmatpush1.msra.mxu0 0.0
    %530 = vmatprep.subr.mxu0 0.0
    %531 = vmatpush1.msra.mxu0 0.0
    %532 = vmatprep.subr.mxu0 0.0
    %533 = vmatpush1.msra.mxu0 0.0
    %534 = vmatprep.subr.mxu0 0.0
    %535 = vmatpush1.msra.mxu0 0.0
    %536 = vmatprep.subr.mxu0 0.0
    %537 = vmatpush1.msra.mxu0 0.0
    %538 = vmatprep.subr.mxu0 0.0
    %539 = vmatpush1.msra.mxu0 0.0
    %540 = vmatprep.subr.mxu0 0.0
    %541 = vmatpush1.msra.mxu0 0.0
    %542 = vmatprep.subr.mxu0 0.0
    %543 = vmatpush1.msra.mxu0 0.0
    %544 = vmatprep.subr.mxu0 0.0
    %545 = vmatpush1.msra.mxu0 0.0
    %546 = vmatprep.subr.mxu0 0.0
    %547 = vmatpush1.msra.mxu0 0.0
    %548 = vmatprep.subr.mxu0 0.0
    %549 = vmatpush1.msra.mxu0 0.0
    %550 = vmatprep.subr.mxu0 0.0
    %551 = vmatpush1.msra.mxu0 0.0
    %552 = vmatprep.mubr.f32.mxu0 0.0
    %v553 = vand.u32 %v80, 4294901760
    %v554 = vsub.f32 %v80, %v553
    %555 = vmatmul.mubr.f32.gmra.mrb[0].mxu0 %v554
    %v556 = vpop.f32.mrb[0].mxu0
    %v557 = vadd.f32 %v405, %v556
    %v558 = vpop.f32.mrb[0].mxu0
    %559 = vmatprep.mubr.f32.mxu0 0.0
    %v560 = vand.u32 %v83, 4294901760
    %v561 = vsub.f32 %v83, %v560
    %562 = vmatmul.mubr.f32.gmra.mrb[0].mxu0 %v561
    %v563 = vpop.f32.mrb[0].mxu0
    %v564 = vadd.f32 %v411, %v563
    %v565 = vpop.f32.mrb[0].mxu0
    %566 = vmatprep.mubr.f32.mxu0 0.0
    %v567 = vand.u32 %v86, 4294901760
    %v568 = vsub.f32 %v86, %v567
    %569 = vmatmul.mubr.f32.gmra.mrb[0].mxu0 %v568
    %v570 = vpop.f32.mrb[0].mxu0
    %v571 = vadd.f32 %v417, %v570
    %v572 = vpop.f32.mrb[0].mxu0
    %573 = vmatprep.mubr.f32.mxu0 0.0
    %v574 = vand.u32 %v89, 4294901760
    %v575 = vsub.f32 %v89, %v574
    %576 = vmatmul.mubr.f32.gmra.mrb[0].mxu0 %v575
    %v577 = vpop.f32.mrb[0].mxu0
    %v578 = vadd.f32 %v423, %v577
    %v579 = vpop.f32.mrb[0].mxu0
    %580 = vmatprep.mubr.f32.mxu0 0.0
    %v581 = vand.u32 %v92, 4294901760
    %v582 = vsub.f32 %v92, %v581
    %583 = vmatmul.mubr.f32.gmra.mrb[0].mxu0 %v582
    %v584 = vpop.f32.mrb[0].mxu0
    %v585 = vadd.f32 %v429, %v584
    %v586 = vpop.f32.mrb[0].mxu0
    %587 = vmatprep.mubr.f32.mxu0 0.0
    %v588 = vand.u32 %v95, 4294901760
    %v589 = vsub.f32 %v95, %v588
    %590 = vmatmul.mubr.f32.gmra.mrb[0].mxu0 %v589
    %v591 = vpop.f32.mrb[0].mxu0
    %v592 = vadd.f32 %v435, %v591
    %v593 = vpop.f32.mrb[0].mxu0
    %594 = vmatprep.mubr.f32.mxu0 0.0
    %v595 = vand.u32 %v98, 4294901760
    %v596 = vsub.f32 %v98, %v595
    %597 = vmatmul.mubr.f32.gmra.mrb[0].mxu0 %v596
    %v598 = vpop.f32.mrb[0].mxu0
    %v599 = vadd.f32 %v441, %v598
    %v600 = vpop.f32.mrb[0].mxu0
    %601 = vmatprep.mubr.f32.mxu0 0.0
    %v602 = vand.u32 %v101, 4294901760
    %v603 = vsub.f32 %v101, %v602
    %604 = vmatmul.mubr.f32.gmra.mrb[0].mxu0 %v603
    %v605 = vpop.f32.mrb[0].mxu0
    %v606 = vadd.f32 %v447, %v605
    %v607 = vpop.f32.mrb[0].mxu0
    %608 = vmatprep.mubr.f32.mxu0 0.0
    %v609 = vand.u32 %v104, 4294901760
    %v610 = vsub.f32 %v104, %v609
    %611 = vmatmul.mubr.f32.gmra.mrb[0].mxu0 %v610
    %v612 = vpop.f32.mrb[0].mxu0
    %v613 = vadd.f32 %v453, %v612
    %v614 = vpop.f32.mrb[0].mxu0
    %615 = vmatprep.mubr.f32.mxu0 0.0
    %v616 = vand.u32 %v107, 4294901760
    %v617 = vsub.f32 %v107, %v616
    %618 = vmatmul.mubr.f32.gmra.mrb[0].mxu0 %v617
    %v619 = vpop.f32.mrb[0].mxu0
    %v620 = vadd.f32 %v459, %v619
    %v621 = vpop.f32.mrb[0].mxu0
    %622 = vmatprep.mubr.f32.mxu0 0.0
    %v623 = vand.u32 %v110, 4294901760
    %v624 = vsub.f32 %v110, %v623
    %625 = vmatmul.mubr.f32.gmra.mrb[0].mxu0 %v624
    %v626 = vpop.f32.mrb[0].mxu0
    %v627 = vadd.f32 %v465, %v626
    %v628 = vpop.f32.mrb[0].mxu0
    %629 = vmatprep.mubr.f32.mxu0 0.0
    %v630 = vand.u32 %v113, 4294901760
    %v631 = vsub.f32 %v113, %v630
    %632 = vmatmul.mubr.f32.gmra.mrb[0].mxu0 %v631
    %v633 = vpop.f32.mrb[0].mxu0
    %v634 = vadd.f32 %v471, %v633
    %v635 = vpop.f32.mrb[0].mxu0
    %636 = vmatprep.mubr.f32.mxu0 0.0
    %v637 = vand.u32 %v116, 4294901760
    %v638 = vsub.f32 %v116, %v637
    %639 = vmatmul.mubr.f32.gmra.mrb[0].mxu0 %v638
    %v640 = vpop.f32.mrb[0].mxu0
    %v641 = vadd.f32 %v477, %v640
    %v642 = vpop.f32.mrb[0].mxu0
    %643 = vdwg.mxu0
    %644 = vmatprep.subr.mxu0 0.0
    %v645 = vand.u32 %v67, 4294901760
    %646 = vmatpush1.msra.mxu0 %v645
    %647 = vmatprep.subr.mxu0 0.0
    %v648 = vand.u32 %v68, 4294901760
    %649 = vmatpush1.msra.mxu0 %v648
    %650 = vmatprep.subr.mxu0 0.0
    %v651 = vand.u32 %v69, 4294901760
    %652 = vmatpush1.msra.mxu0 %v651
    %653 = vmatprep.subr.mxu0 0.0
    %v654 = vand.u32 %v70, 4294901760
    %655 = vmatpush1.msra.mxu0 %v654
    %656 = vmatprep.subr.mxu0 0.0
    %657 = vmatpush1.msra.mxu0 0.0
    %658 = vmatprep.subr.mxu0 0.0
    %659 = vmatpush1.msra.mxu0 0.0
    %660 = vmatprep.subr.mxu0 0.0
    %661 = vmatpush1.msra.mxu0 0.0
    %662 = vmatprep.subr.mxu0 0.0
    %663 = vmatpush1.msra.mxu0 0.0
    %664 = vmatprep.subr.mxu0 0.0
    %665 = vmatpush1.msra.mxu0 0.0
    %666 = vmatprep.subr.mxu0 0.0
    %667 = vmatpush1.msra.mxu0 0.0
    %668 = vmatprep.subr.mxu0 0.0
    %669 = vmatpush1.msra.mxu0 0.0
    %670 = vmatprep.subr.mxu0 0.0
    %671 = vmatpush1.msra.mxu0 0.0
    %672 = vmatprep.subr.mxu0 0.0
    %673 = vmatpush1.msra.mxu0 0.0
    %674 = vmatprep.subr.mxu0 0.0
    %675 = vmatpush1.msra.mxu0 0.0
    %676 = vmatprep.subr.mxu0 0.0
    %677 = vmatpush1.msra.mxu0 0.0
    %678 = vmatprep.subr.mxu0 0.0
    %679 = vmatpush1.msra.mxu0 0.0
    %680 = vmatprep.subr.mxu0 0.0
    %681 = vmatpush1.msra.mxu0 0.0
    %682 = vmatprep.subr.mxu0 0.0
    %683 = vmatpush1.msra.mxu0 0.0
    %684 = vmatprep.subr.mxu0 0.0
    %685 = vmatpush1.msra.mxu0 0.0
    %686 = vmatprep.subr.mxu0 0.0
    %687 = vmatpush1.msra.mxu0 0.0
    %688 = vmatprep.subr.mxu0 0.0
    %689 = vmatpush1.msra.mxu0 0.0
    %690 = vmatprep.subr.mxu0 0.0
    %691 = vmatpush1.msra.mxu0 0.0
    %692 = vmatprep.subr.mxu0 0.0
    %693 = vmatpush1.msra.mxu0 0.0
    %694 = vmatprep.subr.mxu0 0.0
    %695 = vmatpush1.msra.mxu0 0.0
    %696 = vmatprep.subr.mxu0 0.0
    %697 = vmatpush1.msra.mxu0 0.0
    %698 = vmatprep.subr.mxu0 0.0
    %699 = vmatpush1.msra.mxu0 0.0
    %700 = vmatprep.subr.mxu0 0.0
    %701 = vmatpush1.msra.mxu0 0.0
    %702 = vmatprep.subr.mxu0 0.0
    %703 = vmatpush1.msra.mxu0 0.0
    %704 = vmatprep.subr.mxu0 0.0
    %705 = vmatpush1.msra.mxu0 0.0
    %706 = vmatprep.subr.mxu0 0.0
    %707 = vmatpush1.msra.mxu0 0.0
    %708 = vmatprep.subr.mxu0 0.0
    %709 = vmatpush1.msra.mxu0 0.0
    %710 = vmatprep.subr.mxu0 0.0
    %711 = vmatpush1.msra.mxu0 0.0
    %712 = vmatprep.mubr.f32.mxu0 0.0
    %v713 = vand.u32 %v80, 4294901760
    %v714 = vsub.f32 %v80, %v713
    %v715 = vand.u32 %v714, 4294901760
    %716 = vmatmul.mubr.f32.gmra.mrb[0].mxu0 %v715
    %v717 = vpop.f32.mrb[0].mxu0
    %v718 = vadd.f32 %v557, %v717
    %v719 = vpop.f32.mrb[0].mxu0
    %720 = vmatprep.mubr.f32.mxu0 0.0
    %v721 = vand.u32 %v83, 4294901760
    %v722 = vsub.f32 %v83, %v721
    %v723 = vand.u32 %v722, 4294901760
    %724 = vmatmul.mubr.f32.gmra.mrb[0].mxu0 %v723
    %v725 = vpop.f32.mrb[0].mxu0
    %v726 = vadd.f32 %v564, %v725
    %v727 = vpop.f32.mrb[0].mxu0
    %728 = vmatprep.mubr.f32.mxu0 0.0
    %v729 = vand.u32 %v86, 4294901760
    %v730 = vsub.f32 %v86, %v729
    %v731 = vand.u32 %v730, 4294901760
    %732 = vmatmul.mubr.f32.gmra.mrb[0].mxu0 %v731
    %v733 = vpop.f32.mrb[0].mxu0
    %v734 = vadd.f32 %v571, %v733
    %v735 = vpop.f32.mrb[0].mxu0
    %736 = vmatprep.mubr.f32.mxu0 0.0
    %v737 = vand.u32 %v89, 4294901760
    %v738 = vsub.f32 %v89, %v737
    %v739 = vand.u32 %v738, 4294901760
    %740 = vmatmul.mubr.f32.gmra.mrb[0].mxu0 %v739
    %v741 = vpop.f32.mrb[0].mxu0
    %v742 = vadd.f32 %v578, %v741
    %v743 = vpop.f32.mrb[0].mxu0
    %744 = vmatprep.mubr.f32.mxu0 0.0
    %v745 = vand.u32 %v92, 4294901760
    %v746 = vsub.f32 %v92, %v745
    %v747 = vand.u32 %v746, 4294901760
    %748 = vmatmul.mubr.f32.gmra.mrb[0].mxu0 %v747
    %v749 = vpop.f32.mrb[0].mxu0
    %v750 = vadd.f32 %v585, %v749
    %v751 = vpop.f32.mrb[0].mxu0
    %752 = vmatprep.mubr.f32.mxu0 0.0
    %v753 = vand.u32 %v95, 4294901760
    %v754 = vsub.f32 %v95, %v753
    %v755 = vand.u32 %v754, 4294901760
    %756 = vmatmul.mubr.f32.gmra.mrb[0].mxu0 %v755
    %v757 = vpop.f32.mrb[0].mxu0
    %v758 = vadd.f32 %v592, %v757
    %v759 = vpop.f32.mrb[0].mxu0
    %760 = vmatprep.mubr.f32.mxu0 0.0
    %v761 = vand.u32 %v98, 4294901760
    %v762 = vsub.f32 %v98, %v761
    %v763 = vand.u32 %v762, 4294901760
    %764 = vmatmul.mubr.f32.gmra.mrb[0].mxu0 %v763
    %v765 = vpop.f32.mrb[0].mxu0
    %v766 = vadd.f32 %v599, %v765
    %v767 = vpop.f32.mrb[0].mxu0
    %768 = vmatprep.mubr.f32.mxu0 0.0
    %v769 = vand.u32 %v101, 4294901760
    %v770 = vsub.f32 %v101, %v769
    %v771 = vand.u32 %v770, 4294901760
    %772 = vmatmul.mubr.f32.gmra.mrb[0].mxu0 %v771
    %v773 = vpop.f32.mrb[0].mxu0
    %v774 = vadd.f32 %v606, %v773
    %v775 = vpop.f32.mrb[0].mxu0
    %776 = vmatprep.mubr.f32.mxu0 0.0
    %v777 = vand.u32 %v104, 4294901760
    %v778 = vsub.f32 %v104, %v777
    %v779 = vand.u32 %v778, 4294901760
    %780 = vmatmul.mubr.f32.gmra.mrb[0].mxu0 %v779
    %v781 = vpop.f32.mrb[0].mxu0
    %v782 = vadd.f32 %v613, %v781
    %v783 = vpop.f32.mrb[0].mxu0
    %784 = vmatprep.mubr.f32.mxu0 0.0
    %v785 = vand.u32 %v107, 4294901760
    %v786 = vsub.f32 %v107, %v785
    %v787 = vand.u32 %v786, 4294901760
    %788 = vmatmul.mubr.f32.gmra.mrb[0].mxu0 %v787
    %v789 = vpop.f32.mrb[0].mxu0
    %v790 = vadd.f32 %v620, %v789
    %v791 = vpop.f32.mrb[0].mxu0
    %792 = vmatprep.mubr.f32.mxu0 0.0
    %v793 = vand.u32 %v110, 4294901760
    %v794 = vsub.f32 %v110, %v793
    %v795 = vand.u32 %v794, 4294901760
    %796 = vmatmul.mubr.f32.gmra.mrb[0].mxu0 %v795
    %v797 = vpop.f32.mrb[0].mxu0
    %v798 = vadd.f32 %v627, %v797
    %v799 = vpop.f32.mrb[0].mxu0
    %800 = vmatprep.mubr.f32.mxu0 0.0
    %v801 = vand.u32 %v113, 4294901760
    %v802 = vsub.f32 %v113, %v801
    %v803 = vand.u32 %v802, 4294901760
    %804 = vmatmul.mubr.f32.gmra.mrb[0].mxu0 %v803
    %v805 = vpop.f32.mrb[0].mxu0
    %v806 = vadd.f32 %v634, %v805
    %v807 = vpop.f32.mrb[0].mxu0
    %808 = vmatprep.mubr.f32.mxu0 0.0
    %v809 = vand.u32 %v116, 4294901760
    %v810 = vsub.f32 %v116, %v809
    %v811 = vand.u32 %v810, 4294901760
    %812 = vmatmul.mubr.f32.gmra.mrb[0].mxu0 %v811
    %v813 = vpop.f32.mrb[0].mxu0
    %v814 = vadd.f32 %v641, %v813
    %v815 = vpop.f32.mrb[0].mxu0
    %816 = vdwg.mxu0
    %817 = vmatprep.subr.mxu0 0.0
    %v818 = vand.u32 %v67, 4294901760
    %v819 = vsub.f32 %v67, %v818
    %v820 = vand.u32 %v819, 4294901760
    %821 = vmatpush1.msra.mxu0 %v820
    %822 = vmatprep.subr.mxu0 0.0
    %v823 = vand.u32 %v68, 4294901760
    %v824 = vsub.f32 %v68, %v823
    %v825 = vand.u32 %v824, 4294901760
    %826 = vmatpush1.msra.mxu0 %v825
    %827 = vmatprep.subr.mxu0 0.0
    %v828 = vand.u32 %v69, 4294901760
    %v829 = vsub.f32 %v69, %v828
    %v830 = vand.u32 %v829, 4294901760
    %831 = vmatpush1.msra.mxu0 %v830
    %832 = vmatprep.subr.mxu0 0.0
    %v833 = vand.u32 %v70, 4294901760
    %v834 = vsub.f32 %v70, %v833
    %v835 = vand.u32 %v834, 4294901760
    %836 = vmatpush1.msra.mxu0 %v835
    %837 = vmatprep.subr.mxu0 0.0
    %838 = vmatpush1.msra.mxu0 0.0
    %839 = vmatprep.subr.mxu0 0.0
    %840 = vmatpush1.msra.mxu0 0.0
    %841 = vmatprep.subr.mxu0 0.0
    %842 = vmatpush1.msra.mxu0 0.0
    %843 = vmatprep.subr.mxu0 0.0
    %844 = vmatpush1.msra.mxu0 0.0
    %845 = vmatprep.subr.mxu0 0.0
    %846 = vmatpush1.msra.mxu0 0.0
    %847 = vmatprep.subr.mxu0 0.0
    %848 = vmatpush1.msra.mxu0 0.0
    %849 = vmatprep.subr.mxu0 0.0
    %850 = vmatpush1.msra.mxu0 0.0
    %851 = vmatprep.subr.mxu0 0.0
    %852 = vmatpush1.msra.mxu0 0.0
    %853 = vmatprep.subr.mxu0 0.0
    %854 = vmatpush1.msra.mxu0 0.0
    %855 = vmatprep.subr.mxu0 0.0
    %856 = vmatpush1.msra.mxu0 0.0
    %857 = vmatprep.subr.mxu0 0.0
    %858 = vmatpush1.msra.mxu0 0.0
    %859 = vmatprep.subr.mxu0 0.0
    %860 = vmatpush1.msra.mxu0 0.0
    %861 = vmatprep.subr.mxu0 0.0
    %862 = vmatpush1.msra.mxu0 0.0
    %863 = vmatprep.subr.mxu0 0.0
    %864 = vmatpush1.msra.mxu0 0.0
    %865 = vmatprep.subr.mxu0 0.0
    %866 = vmatpush1.msra.mxu0 0.0
    %867 = vmatprep.subr.mxu0 0.0
    %868 = vmatpush1.msra.mxu0 0.0
    %869 = vmatprep.subr.mxu0 0.0
    %870 = vmatpush1.msra.mxu0 0.0
    %871 = vmatprep.subr.mxu0 0.0
    %872 = vmatpush1.msra.mxu0 0.0
    %873 = vmatprep.subr.mxu0 0.0
    %874 = vmatpush1.msra.mxu0 0.0
    %875 = vmatprep.subr.mxu0 0.0
    %876 = vmatpush1.msra.mxu0 0.0
    %877 = vmatprep.subr.mxu0 0.0
    %878 = vmatpush1.msra.mxu0 0.0
    %879 = vmatprep.subr.mxu0 0.0
    %880 = vmatpush1.msra.mxu0 0.0
    %881 = vmatprep.subr.mxu0 0.0
    %882 = vmatpush1.msra.mxu0 0.0
    %883 = vmatprep.subr.mxu0 0.0
    %884 = vmatpush1.msra.mxu0 0.0
    %885 = vmatprep.subr.mxu0 0.0
    %886 = vmatpush1.msra.mxu0 0.0
    %887 = vmatprep.subr.mxu0 0.0
    %888 = vmatpush1.msra.mxu0 0.0
    %889 = vmatprep.subr.mxu0 0.0
    %890 = vmatpush1.msra.mxu0 0.0
    %891 = vmatprep.subr.mxu0 0.0
    %892 = vmatpush1.msra.mxu0 0.0
    %893 = vmatprep.mubr.f32.mxu0 0.0
    %v894 = vand.u32 %v80, 4294901760
    %895 = vmatmul.mubr.f32.gmra.mrb[0].mxu0 %v894
    %v896 = vpop.f32.mrb[0].mxu0
    %v897 = vadd.f32 %v718, %v896
    %v898 = vpop.f32.mrb[0].mxu0
    %899 = vmatprep.mubr.f32.mxu0 0.0
    %v900 = vand.u32 %v83, 4294901760
    %901 = vmatmul.mubr.f32.gmra.mrb[0].mxu0 %v900
    %v902 = vpop.f32.mrb[0].mxu0
    %v903 = vadd.f32 %v726, %v902
    %v904 = vpop.f32.mrb[0].mxu0
    %905 = vmatprep.mubr.f32.mxu0 0.0
    %v906 = vand.u32 %v86, 4294901760
    %907 = vmatmul.mubr.f32.gmra.mrb[0].mxu0 %v906
    %v908 = vpop.f32.mrb[0].mxu0
    %v909 = vadd.f32 %v734, %v908
    %v910 = vpop.f32.mrb[0].mxu0
    %911 = vmatprep.mubr.f32.mxu0 0.0
    %v912 = vand.u32 %v89, 4294901760
    %913 = vmatmul.mubr.f32.gmra.mrb[0].mxu0 %v912
    %v914 = vpop.f32.mrb[0].mxu0
    %v915 = vadd.f32 %v742, %v914
    %v916 = vpop.f32.mrb[0].mxu0
    %917 = vmatprep.mubr.f32.mxu0 0.0
    %v918 = vand.u32 %v92, 4294901760
    %919 = vmatmul.mubr.f32.gmra.mrb[0].mxu0 %v918
    %v920 = vpop.f32.mrb[0].mxu0
    %v921 = vadd.f32 %v750, %v920
    %v922 = vpop.f32.mrb[0].mxu0
    %923 = vmatprep.mubr.f32.mxu0 0.0
    %v924 = vand.u32 %v95, 4294901760
    %925 = vmatmul.mubr.f32.gmra.mrb[0].mxu0 %v924
    %v926 = vpop.f32.mrb[0].mxu0
    %v927 = vadd.f32 %v758, %v926
    %v928 = vpop.f32.mrb[0].mxu0
    %929 = vmatprep.mubr.f32.mxu0 0.0
    %v930 = vand.u32 %v98, 4294901760
    %931 = vmatmul.mubr.f32.gmra.mrb[0].mxu0 %v930
    %v932 = vpop.f32.mrb[0].mxu0
    %v933 = vadd.f32 %v766, %v932
    %v934 = vpop.f32.mrb[0].mxu0
    %935 = vmatprep.mubr.f32.mxu0 0.0
    %v936 = vand.u32 %v101, 4294901760
    %937 = vmatmul.mubr.f32.gmra.mrb[0].mxu0 %v936
    %v938 = vpop.f32.mrb[0].mxu0
    %v939 = vadd.f32 %v774, %v938
    %v940 = vpop.f32.mrb[0].mxu0
    %941 = vmatprep.mubr.f32.mxu0 0.0
    %v942 = vand.u32 %v104, 4294901760
    %943 = vmatmul.mubr.f32.gmra.mrb[0].mxu0 %v942
    %v944 = vpop.f32.mrb[0].mxu0
    %v945 = vadd.f32 %v782, %v944
    %v946 = vpop.f32.mrb[0].mxu0
    %947 = vmatprep.mubr.f32.mxu0 0.0
    %v948 = vand.u32 %v107, 4294901760
    %949 = vmatmul.mubr.f32.gmra.mrb[0].mxu0 %v948
    %v950 = vpop.f32.mrb[0].mxu0
    %v951 = vadd.f32 %v790, %v950
    %v952 = vpop.f32.mrb[0].mxu0
    %953 = vmatprep.mubr.f32.mxu0 0.0
    %v954 = vand.u32 %v110, 4294901760
    %955 = vmatmul.mubr.f32.gmra.mrb[0].mxu0 %v954
    %v956 = vpop.f32.mrb[0].mxu0
    %v957 = vadd.f32 %v798, %v956
    %v958 = vpop.f32.mrb[0].mxu0
    %959 = vmatprep.mubr.f32.mxu0 0.0
    %v960 = vand.u32 %v113, 4294901760
    %961 = vmatmul.mubr.f32.gmra.mrb[0].mxu0 %v960
    %v962 = vpop.f32.mrb[0].mxu0
    %v963 = vadd.f32 %v806, %v962
    %v964 = vpop.f32.mrb[0].mxu0
    %965 = vmatprep.mubr.f32.mxu0 0.0
    %v966 = vand.u32 %v116, 4294901760
    %967 = vmatmul.mubr.f32.gmra.mrb[0].mxu0 %v966
    %v968 = vpop.f32.mrb[0].mxu0
    %v969 = vadd.f32 %v814, %v968
    %v970 = vpop.f32.mrb[0].mxu0
    %971 = vdwg.mxu0
    %972 = vmatprep.subr.mxu0 0.0
    %v973 = vand.u32 %v67, 4294901760
    %974 = vmatpush1.msra.mxu0 %v973
    %975 = vmatprep.subr.mxu0 0.0
    %v976 = vand.u32 %v68, 4294901760
    %977 = vmatpush1.msra.mxu0 %v976
    %978 = vmatprep.subr.mxu0 0.0
    %v979 = vand.u32 %v69, 4294901760
    %980 = vmatpush1.msra.mxu0 %v979
    %981 = vmatprep.subr.mxu0 0.0
    %v982 = vand.u32 %v70, 4294901760
    %983 = vmatpush1.msra.mxu0 %v982
    %984 = vmatprep.subr.mxu0 0.0
    %985 = vmatpush1.msra.mxu0 0.0
    %986 = vmatprep.subr.mxu0 0.0
    %987 = vmatpush1.msra.mxu0 0.0
    %988 = vmatprep.subr.mxu0 0.0
    %989 = vmatpush1.msra.mxu0 0.0
    %990 = vmatprep.subr.mxu0 0.0
    %991 = vmatpush1.msra.mxu0 0.0
    %992 = vmatprep.subr.mxu0 0.0
    %993 = vmatpush1.msra.mxu0 0.0
    %994 = vmatprep.subr.mxu0 0.0
    %995 = vmatpush1.msra.mxu0 0.0
    %996 = vmatprep.subr.mxu0 0.0
    %997 = vmatpush1.msra.mxu0 0.0
    %998 = vmatprep.subr.mxu0 0.0
    %999 = vmatpush1.msra.mxu0 0.0
    %1000 = vmatprep.subr.mxu0 0.0
    %1001 = vmatpush1.msra.mxu0 0.0
    %1002 = vmatprep.subr.mxu0 0.0
    %1003 = vmatpush1.msra.mxu0 0.0
    %1004 = vmatprep.subr.mxu0 0.0
    %1005 = vmatpush1.msra.mxu0 0.0
    %1006 = vmatprep.subr.mxu0 0.0
    %1007 = vmatpush1.msra.mxu0 0.0
    %1008 = vmatprep.subr.mxu0 0.0
    %1009 = vmatpush1.msra.mxu0 0.0
    %1010 = vmatprep.subr.mxu0 0.0
    %1011 = vmatpush1.msra.mxu0 0.0
    %1012 = vmatprep.subr.mxu0 0.0
    %1013 = vmatpush1.msra.mxu0 0.0
    %1014 = vmatprep.subr.mxu0 0.0
    %1015 = vmatpush1.msra.mxu0 0.0
    %1016 = vmatprep.subr.mxu0 0.0
    %1017 = vmatpush1.msra.mxu0 0.0
    %1018 = vmatprep.subr.mxu0 0.0
    %1019 = vmatpush1.msra.mxu0 0.0
    %1020 = vmatprep.subr.mxu0 0.0
    %1021 = vmatpush1.msra.mxu0 0.0
    %1022 = vmatprep.subr.mxu0 0.0
    %1023 = vmatpush1.msra.mxu0 0.0
    %1024 = vmatprep.subr.mxu0 0.0
    %1025 = vmatpush1.msra.mxu0 0.0
    %1026 = vmatprep.subr.mxu0 0.0
    %1027 = vmatpush1.msra.mxu0 0.0
    %1028 = vmatprep.subr.mxu0 0.0
    %1029 = vmatpush1.msra.mxu0 0.0
    %1030 = vmatprep.subr.mxu0 0.0
    %1031 = vmatpush1.msra.mxu0 0.0
    %1032 = vmatprep.subr.mxu0 0.0
    %1033 = vmatpush1.msra.mxu0 0.0
    %1034 = vmatprep.subr.mxu0 0.0
    %1035 = vmatpush1.msra.mxu0 0.0
    %1036 = vmatprep.subr.mxu0 0.0
    %1037 = vmatpush1.msra.mxu0 0.0
    %1038 = vmatprep.subr.mxu0 0.0
    %1039 = vmatpush1.msra.mxu0 0.0
    %1040 = vmatprep.mubr.f32.mxu0 0.0
    %v1041 = vand.u32 %v80, 4294901760
    %1042 = vmatmul.mubr.f32.gmra.mrb[0].mxu0 %v1041
    %v1043 = vpop.f32.mrb[0].mxu0
    %v1044 = vadd.f32 %v897, %v1043
    %v1045 = vpop.f32.mrb[0].mxu0
    %1046 = vmatprep.mubr.f32.mxu0 0.0
    %v1047 = vand.u32 %v83, 4294901760
    %1048 = vmatmul.mubr.f32.gmra.mrb[0].mxu0 %v1047
    %v1049 = vpop.f32.mrb[0].mxu0
    %v1050 = vadd.f32 %v903, %v1049
    %v1051 = vpop.f32.mrb[0].mxu0
    %1052 = vmatprep.mubr.f32.mxu0 0.0
    %v1053 = vand.u32 %v86, 4294901760
    %1054 = vmatmul.mubr.f32.gmra.mrb[0].mxu0 %v1053
    %v1055 = vpop.f32.mrb[0].mxu0
    %v1056 = vadd.f32 %v909, %v1055
    %v1057 = vpop.f32.mrb[0].mxu0
    %1058 = vmatprep.mubr.f32.mxu0 0.0
    %v1059 = vand.u32 %v89, 4294901760
    %1060 = vmatmul.mubr.f32.gmra.mrb[0].mxu0 %v1059
    %v1061 = vpop.f32.mrb[0].mxu0
    %v1062 = vadd.f32 %v915, %v1061
    %v1063 = vpop.f32.mrb[0].mxu0
    %1064 = vmatprep.mubr.f32.mxu0 0.0
    %v1065 = vand.u32 %v92, 4294901760
    %1066 = vmatmul.mubr.f32.gmra.mrb[0].mxu0 %v1065
    %v1067 = vpop.f32.mrb[0].mxu0
    %v1068 = vadd.f32 %v921, %v1067
    %v1069 = vpop.f32.mrb[0].mxu0
    %1070 = vmatprep.mubr.f32.mxu0 0.0
    %v1071 = vand.u32 %v95, 4294901760
    %1072 = vmatmul.mubr.f32.gmra.mrb[0].mxu0 %v1071
    %v1073 = vpop.f32.mrb[0].mxu0
    %v1074 = vadd.f32 %v927, %v1073
    %v1075 = vpop.f32.mrb[0].mxu0
    %1076 = vmatprep.mubr.f32.mxu0 0.0
    %v1077 = vand.u32 %v98, 4294901760
    %1078 = vmatmul.mubr.f32.gmra.mrb[0].mxu0 %v1077
    %v1079 = vpop.f32.mrb[0].mxu0
    %v1080 = vadd.f32 %v933, %v1079
    %v1081 = vpop.f32.mrb[0].mxu0
    %1082 = vmatprep.mubr.f32.mxu0 0.0
    %v1083 = vand.u32 %v101, 4294901760
    %1084 = vmatmul.mubr.f32.gmra.mrb[0].mxu0 %v1083
    %v1085 = vpop.f32.mrb[0].mxu0
    %v1086 = vadd.f32 %v939, %v1085
    %v1087 = vpop.f32.mrb[0].mxu0
    %1088 = vmatprep.mubr.f32.mxu0 0.0
    %v1089 = vand.u32 %v104, 4294901760
    %1090 = vmatmul.mubr.f32.gmra.mrb[0].mxu0 %v1089
    %v1091 = vpop.f32.mrb[0].mxu0
    %v1092 = vadd.f32 %v945, %v1091
    %v1093 = vpop.f32.mrb[0].mxu0
    %1094 = vmatprep.mubr.f32.mxu0 0.0
    %v1095 = vand.u32 %v107, 4294901760
    %1096 = vmatmul.mubr.f32.gmra.mrb[0].mxu0 %v1095
    %v1097 = vpop.f32.mrb[0].mxu0
    %v1098 = vadd.f32 %v951, %v1097
    %v1099 = vpop.f32.mrb[0].mxu0
    %1100 = vmatprep.mubr.f32.mxu0 0.0
    %v1101 = vand.u32 %v110, 4294901760
    %1102 = vmatmul.mubr.f32.gmra.mrb[0].mxu0 %v1101
    %v1103 = vpop.f32.mrb[0].mxu0
    %v1104 = vadd.f32 %v957, %v1103
    %v1105 = vpop.f32.mrb[0].mxu0
    %1106 = vmatprep.mubr.f32.mxu0 0.0
    %v1107 = vand.u32 %v113, 4294901760
    %1108 = vmatmul.mubr.f32.gmra.mrb[0].mxu0 %v1107
    %v1109 = vpop.f32.mrb[0].mxu0
    %v1110 = vadd.f32 %v963, %v1109
    %v1111 = vpop.f32.mrb[0].mxu0
    %1112 = vmatprep.mubr.f32.mxu0 0.0
    %v1113 = vand.u32 %v116, 4294901760
    %1114 = vmatmul.mubr.f32.gmra.mrb[0].mxu0 %v1113
    %v1115 = vpop.f32.mrb[0].mxu0
    %v1116 = vadd.f32 %v969, %v1115
    %v1117 = vpop.f32.mrb[0].mxu0
    %1118 = vdwg.mxu0
    %v1119 = vmax.f32 %v1044, 0.0
    %v1120 = vmax.f32 %v1050, 0.0
    %v1121 = vmax.f32 %v1056, 0.0
    %v1122 = vmax.f32 %v1062, 0.0
    %v1123 = vmax.f32 %v1068, 0.0
    %v1124 = vmax.f32 %v1074, 0.0
    %v1125 = vmax.f32 %v1080, 0.0
    %v1126 = vmax.f32 %v1086, 0.0
    %v1127 = vmax.f32 %v1092, 0.0
    %v1128 = vmax.f32 %v1098, 0.0
    %v1129 = vmax.f32 %v1104, 0.0
    %v1130 = vmax.f32 %v1110, 0.0
    %v1131 = vmax.f32 %v1116, 0.0
    %v1132 = vld [vmem:[%s3] sm:$0xff]
    %v1133 = vld [vmem:[%s3 + $0x8] sm:$0xff]
    %v1134 = vld [vmem:[%s3 + $0x10] sm:$0xff]
    %v1135 = vld [vmem:[%s3 + $0x18] sm:$0xff]
    %v1136 = vld [vmem:[%s3 + $0x20] sm:$0xff]
    %v1137 = vld [vmem:[%s3 + $0x28] sm:$0xff]
    %v1138 = vld [vmem:[%s3 + $0x30] sm:$0xff]
    %v1139 = vld [vmem:[%s3 + $0x38] sm:$0xff]
    %v1140 = vld [vmem:[%s3 + $0x40] sm:$0xff]
    %v1141 = vld [vmem:[%s3 + $0x48] sm:$0xff]
    %v1142 = vld [vmem:[%s3 + $0x50] sm:$0xff]
    %v1143 = vld [vmem:[%s3 + $0x58] sm:$0xff]
    %v1144 = vld [vmem:[%s3 + $0x60] sm:$0xff]
    %v1145 = vld [vmem:[%s3 + $0x68] sm:$0xff]
    %v1146 = vld [vmem:[%s3 + $0x70] sm:$0xff]
    %v1147 = vld [vmem:[%s3 + $0x78] sm:$0xff]
    %v1148 = vld [vmem:[%s4] sm:$0x1]
    %v1150 = vlaneseq
    %v1151 = vshrl.u32 %v1150, 7
    %v1152 = vsub.s32 0, %v1151
    %v1153 = vrot.slane %v1148, %v1152
    %1155 = vmatprep.subr.mxu0 0.0
    %v1156 = vand.u32 %v1132, 4294901760
    %1157 = vmatpush1.msra.mxu0 %v1156
    %1158 = vmatprep.subr.mxu0 0.0
    %v1159 = vand.u32 %v1133, 4294901760
    %1160 = vmatpush1.msra.mxu0 %v1159
    %1161 = vmatprep.subr.mxu0 0.0
    %v1162 = vand.u32 %v1134, 4294901760
    %1163 = vmatpush1.msra.mxu0 %v1162
    %1164 = vmatprep.subr.mxu0 0.0
    %v1165 = vand.u32 %v1135, 4294901760
    %1166 = vmatpush1.msra.mxu0 %v1165
    %1167 = vmatprep.subr.mxu0 0.0
    %v1168 = vand.u32 %v1136, 4294901760
    %1169 = vmatpush1.msra.mxu0 %v1168
    %1170 = vmatprep.subr.mxu0 0.0
    %v1171 = vand.u32 %v1137, 4294901760
    %1172 = vmatpush1.msra.mxu0 %v1171
    %1173 = vmatprep.subr.mxu0 0.0
    %v1174 = vand.u32 %v1138, 4294901760
    %1175 = vmatpush1.msra.mxu0 %v1174
    %1176 = vmatprep.subr.mxu0 0.0
    %v1177 = vand.u32 %v1139, 4294901760
    %1178 = vmatpush1.msra.mxu0 %v1177
    %1179 = vmatprep.subr.mxu0 0.0
    %v1180 = vand.u32 %v1140, 4294901760
    %1181 = vmatpush1.msra.mxu0 %v1180
    %1182 = vmatprep.subr.mxu0 0.0
    %v1183 = vand.u32 %v1141, 4294901760
    %1184 = vmatpush1.msra.mxu0 %v1183
    %1185 = vmatprep.subr.mxu0 0.0
    %v1186 = vand.u32 %v1142, 4294901760
    %1187 = vmatpush1.msra.mxu0 %v1186
    %1188 = vmatprep.subr.mxu0 0.0
    %v1189 = vand.u32 %v1143, 4294901760
    %1190 = vmatpush1.msra.mxu0 %v1189
    %1191 = vmatprep.subr.mxu0 0.0
    %v1192 = vand.u32 %v1144, 4294901760
    %1193 = vmatpush1.msra.mxu0 %v1192
    %1194 = vmatprep.subr.mxu0 0.0
    %v1195 = vand.u32 %v1145, 4294901760
    %1196 = vmatpush1.msra.mxu0 %v1195
    %1197 = vmatprep.subr.mxu0 0.0
    %v1198 = vand.u32 %v1146, 4294901760
    %1199 = vmatpush1.msra.mxu0 %v1198
    %1200 = vmatprep.subr.mxu0 0.0
    %v1201 = vand.u32 %v1147, 4294901760
    %1202 = vmatpush1.msra.mxu0 %v1201
    %1203 = vmatprep.subr.mxu0 0.0
    %1204 = vmatpush1.msra.mxu0 0.0
    %1205 = vmatprep.subr.mxu0 0.0
    %1206 = vmatpush1.msra.mxu0 0.0
    %1207 = vmatprep.subr.mxu0 0.0
    %1208 = vmatpush1.msra.mxu0 0.0
    %1209 = vmatprep.subr.mxu0 0.0
    %1210 = vmatpush1.msra.mxu0 0.0
    %1211 = vmatprep.subr.mxu0 0.0
    %1212 = vmatpush1.msra.mxu0 0.0
    %1213 = vmatprep.subr.mxu0 0.0
    %1214 = vmatpush1.msra.mxu0 0.0
    %1215 = vmatprep.subr.mxu0 0.0
    %1216 = vmatpush1.msra.mxu0 0.0
    %1217 = vmatprep.subr.mxu0 0.0
    %1218 = vmatpush1.msra.mxu0 0.0
    %1219 = vmatprep.subr.mxu0 0.0
    %1220 = vmatpush1.msra.mxu0 0.0
    %1221 = vmatprep.subr.mxu0 0.0
    %1222 = vmatpush1.msra.mxu0 0.0
    %1223 = vmatprep.subr.mxu0 0.0
    %1224 = vmatpush1.msra.mxu0 0.0
    %1225 = vmatprep.subr.mxu0 0.0
    %1226 = vmatpush1.msra.mxu0 0.0
    %1227 = vmatprep.subr.mxu0 0.0
    %1228 = vmatpush1.msra.mxu0 0.0
    %1229 = vmatprep.subr.mxu0 0.0
    %1230 = vmatpush1.msra.mxu0 0.0
    %1231 = vmatprep.subr.mxu0 0.0
    %1232 = vmatpush1.msra.mxu0 0.0
    %1233 = vmatprep.subr.mxu0 0.0
    %1234 = vmatpush1.msra.mxu0 0.0
    %1235 = vmatprep.mubr.f32.mxu0 0.0
    %v1236 = vand.u32 %v1119, 4294901760
    %v1237 = vsub.f32 %v1119, %v1236
    %v1238 = vand.u32 %v1237, 4294901760
    %v1239 = vsub.f32 %v1237, %v1238
    %v1240 = vand.u32 %v1239, 4294901760
    %1241 = vmatmul.mubr.f32.gmra.mrb[0].mxu0 %v1240
    %v1242 = vpop.f32.mrb[0].mxu0
    %v1243 = vadd.f32 %v1153, %v1242
    %v1244 = vpop.f32.mrb[0].mxu0
    %1245 = vmatprep.mubr.f32.mxu0 0.0
    %v1246 = vand.u32 %v1120, 4294901760
    %v1247 = vsub.f32 %v1120, %v1246
    %v1248 = vand.u32 %v1247, 4294901760
    %v1249 = vsub.f32 %v1247, %v1248
    %v1250 = vand.u32 %v1249, 4294901760
    %1251 = vmatmul.mubr.f32.gmra.mrb[0].mxu0 %v1250
    %v1252 = vpop.f32.mrb[0].mxu0
    %v1253 = vadd.f32 %v1153, %v1252
    %v1254 = vpop.f32.mrb[0].mxu0
    %1255 = vmatprep.mubr.f32.mxu0 0.0
    %v1256 = vand.u32 %v1121, 4294901760
    %v1257 = vsub.f32 %v1121, %v1256
    %v1258 = vand.u32 %v1257, 4294901760
    %v1259 = vsub.f32 %v1257, %v1258
    %v1260 = vand.u32 %v1259, 4294901760
    %1261 = vmatmul.mubr.f32.gmra.mrb[0].mxu0 %v1260
    %v1262 = vpop.f32.mrb[0].mxu0
    %v1263 = vadd.f32 %v1153, %v1262
    %v1264 = vpop.f32.mrb[0].mxu0
    %1265 = vmatprep.mubr.f32.mxu0 0.0
    %v1266 = vand.u32 %v1122, 4294901760
    %v1267 = vsub.f32 %v1122, %v1266
    %v1268 = vand.u32 %v1267, 4294901760
    %v1269 = vsub.f32 %v1267, %v1268
    %v1270 = vand.u32 %v1269, 4294901760
    %1271 = vmatmul.mubr.f32.gmra.mrb[0].mxu0 %v1270
    %v1272 = vpop.f32.mrb[0].mxu0
    %v1273 = vadd.f32 %v1153, %v1272
    %v1274 = vpop.f32.mrb[0].mxu0
    %1275 = vmatprep.mubr.f32.mxu0 0.0
    %v1276 = vand.u32 %v1123, 4294901760
    %v1277 = vsub.f32 %v1123, %v1276
    %v1278 = vand.u32 %v1277, 4294901760
    %v1279 = vsub.f32 %v1277, %v1278
    %v1280 = vand.u32 %v1279, 4294901760
    %1281 = vmatmul.mubr.f32.gmra.mrb[0].mxu0 %v1280
    %v1282 = vpop.f32.mrb[0].mxu0
    %v1283 = vadd.f32 %v1153, %v1282
    %v1284 = vpop.f32.mrb[0].mxu0
    %1285 = vmatprep.mubr.f32.mxu0 0.0
    %v1286 = vand.u32 %v1124, 4294901760
    %v1287 = vsub.f32 %v1124, %v1286
    %v1288 = vand.u32 %v1287, 4294901760
    %v1289 = vsub.f32 %v1287, %v1288
    %v1290 = vand.u32 %v1289, 4294901760
    %1291 = vmatmul.mubr.f32.gmra.mrb[0].mxu0 %v1290
    %v1292 = vpop.f32.mrb[0].mxu0
    %v1293 = vadd.f32 %v1153, %v1292
    %v1294 = vpop.f32.mrb[0].mxu0
    %1295 = vmatprep.mubr.f32.mxu0 0.0
    %v1296 = vand.u32 %v1125, 4294901760
    %v1297 = vsub.f32 %v1125, %v1296
    %v1298 = vand.u32 %v1297, 4294901760
    %v1299 = vsub.f32 %v1297, %v1298
    %v1300 = vand.u32 %v1299, 4294901760
    %1301 = vmatmul.mubr.f32.gmra.mrb[0].mxu0 %v1300
    %v1302 = vpop.f32.mrb[0].mxu0
    %v1303 = vadd.f32 %v1153, %v1302
    %v1304 = vpop.f32.mrb[0].mxu0
    %1305 = vmatprep.mubr.f32.mxu0 0.0
    %v1306 = vand.u32 %v1126, 4294901760
    %v1307 = vsub.f32 %v1126, %v1306
    %v1308 = vand.u32 %v1307, 4294901760
    %v1309 = vsub.f32 %v1307, %v1308
    %v1310 = vand.u32 %v1309, 4294901760
    %1311 = vmatmul.mubr.f32.gmra.mrb[0].mxu0 %v1310
    %v1312 = vpop.f32.mrb[0].mxu0
    %v1313 = vadd.f32 %v1153, %v1312
    %v1314 = vpop.f32.mrb[0].mxu0
    %1315 = vmatprep.mubr.f32.mxu0 0.0
    %v1316 = vand.u32 %v1127, 4294901760
    %v1317 = vsub.f32 %v1127, %v1316
    %v1318 = vand.u32 %v1317, 4294901760
    %v1319 = vsub.f32 %v1317, %v1318
    %v1320 = vand.u32 %v1319, 4294901760
    %1321 = vmatmul.mubr.f32.gmra.mrb[0].mxu0 %v1320
    %v1322 = vpop.f32.mrb[0].mxu0
    %v1323 = vadd.f32 %v1153, %v1322
    %v1324 = vpop.f32.mrb[0].mxu0
    %1325 = vmatprep.mubr.f32.mxu0 0.0
    %v1326 = vand.u32 %v1128, 4294901760
    %v1327 = vsub.f32 %v1128, %v1326
    %v1328 = vand.u32 %v1327, 4294901760
    %v1329 = vsub.f32 %v1327, %v1328
    %v1330 = vand.u32 %v1329, 4294901760
    %1331 = vmatmul.mubr.f32.gmra.mrb[0].mxu0 %v1330
    %v1332 = vpop.f32.mrb[0].mxu0
    %v1333 = vadd.f32 %v1153, %v1332
    %v1334 = vpop.f32.mrb[0].mxu0
    %1335 = vmatprep.mubr.f32.mxu0 0.0
    %v1336 = vand.u32 %v1129, 4294901760
    %v1337 = vsub.f32 %v1129, %v1336
    %v1338 = vand.u32 %v1337, 4294901760
    %v1339 = vsub.f32 %v1337, %v1338
    %v1340 = vand.u32 %v1339, 4294901760
    %1341 = vmatmul.mubr.f32.gmra.mrb[0].mxu0 %v1340
    %v1342 = vpop.f32.mrb[0].mxu0
    %v1343 = vadd.f32 %v1153, %v1342
    %v1344 = vpop.f32.mrb[0].mxu0
    %1345 = vmatprep.mubr.f32.mxu0 0.0
    %v1346 = vand.u32 %v1130, 4294901760
    %v1347 = vsub.f32 %v1130, %v1346
    %v1348 = vand.u32 %v1347, 4294901760
    %v1349 = vsub.f32 %v1347, %v1348
    %v1350 = vand.u32 %v1349, 4294901760
    %1351 = vmatmul.mubr.f32.gmra.mrb[0].mxu0 %v1350
    %v1352 = vpop.f32.mrb[0].mxu0
    %v1353 = vadd.f32 %v1153, %v1352
    %v1354 = vpop.f32.mrb[0].mxu0
    %1355 = vmatprep.mubr.f32.mxu0 0.0
    %v1356 = vand.u32 %v1131, 4294901760
    %v1357 = vsub.f32 %v1131, %v1356
    %v1358 = vand.u32 %v1357, 4294901760
    %v1359 = vsub.f32 %v1357, %v1358
    %v1360 = vand.u32 %v1359, 4294901760
    %1361 = vmatmul.mubr.f32.gmra.mrb[0].mxu0 %v1360
    %v1362 = vpop.f32.mrb[0].mxu0
    %v1363 = vadd.f32 %v1153, %v1362
    %v1364 = vpop.f32.mrb[0].mxu0
    %1365 = vdwg.mxu0
    %1366 = vmatprep.subr.mxu0 0.0
    %v1367 = vand.u32 %v1132, 4294901760
    %v1368 = vsub.f32 %v1132, %v1367
    %v1369 = vand.u32 %v1368, 4294901760
    %v1370 = vsub.f32 %v1368, %v1369
    %v1371 = vand.u32 %v1370, 4294901760
    %1372 = vmatpush1.msra.mxu0 %v1371
    %1373 = vmatprep.subr.mxu0 0.0
    %v1374 = vand.u32 %v1133, 4294901760
    %v1375 = vsub.f32 %v1133, %v1374
    %v1376 = vand.u32 %v1375, 4294901760
    %v1377 = vsub.f32 %v1375, %v1376
    %v1378 = vand.u32 %v1377, 4294901760
    %1379 = vmatpush1.msra.mxu0 %v1378
    %1380 = vmatprep.subr.mxu0 0.0
    %v1381 = vand.u32 %v1134, 4294901760
    %v1382 = vsub.f32 %v1134, %v1381
    %v1383 = vand.u32 %v1382, 4294901760
    %v1384 = vsub.f32 %v1382, %v1383
    %v1385 = vand.u32 %v1384, 4294901760
    %1386 = vmatpush1.msra.mxu0 %v1385
    %1387 = vmatprep.subr.mxu0 0.0
    %v1388 = vand.u32 %v1135, 4294901760
    %v1389 = vsub.f32 %v1135, %v1388
    %v1390 = vand.u32 %v1389, 4294901760
    %v1391 = vsub.f32 %v1389, %v1390
    %v1392 = vand.u32 %v1391, 4294901760
    %1393 = vmatpush1.msra.mxu0 %v1392
    %1394 = vmatprep.subr.mxu0 0.0
    %v1395 = vand.u32 %v1136, 4294901760
    %v1396 = vsub.f32 %v1136, %v1395
    %v1397 = vand.u32 %v1396, 4294901760
    %v1398 = vsub.f32 %v1396, %v1397
    %v1399 = vand.u32 %v1398, 4294901760
    %1400 = vmatpush1.msra.mxu0 %v1399
    %1401 = vmatprep.subr.mxu0 0.0
    %v1402 = vand.u32 %v1137, 4294901760
    %v1403 = vsub.f32 %v1137, %v1402
    %v1404 = vand.u32 %v1403, 4294901760
    %v1405 = vsub.f32 %v1403, %v1404
    %v1406 = vand.u32 %v1405, 4294901760
    %1407 = vmatpush1.msra.mxu0 %v1406
    %1408 = vmatprep.subr.mxu0 0.0
    %v1409 = vand.u32 %v1138, 4294901760
    %v1410 = vsub.f32 %v1138, %v1409
    %v1411 = vand.u32 %v1410, 4294901760
    %v1412 = vsub.f32 %v1410, %v1411
    %v1413 = vand.u32 %v1412, 4294901760
    %1414 = vmatpush1.msra.mxu0 %v1413
    %1415 = vmatprep.subr.mxu0 0.0
    %v1416 = vand.u32 %v1139, 4294901760
    %v1417 = vsub.f32 %v1139, %v1416
    %v1418 = vand.u32 %v1417, 4294901760
    %v1419 = vsub.f32 %v1417, %v1418
    %v1420 = vand.u32 %v1419, 4294901760
    %1421 = vmatpush1.msra.mxu0 %v1420
    %1422 = vmatprep.subr.mxu0 0.0
    %v1423 = vand.u32 %v1140, 4294901760
    %v1424 = vsub.f32 %v1140, %v1423
    %v1425 = vand.u32 %v1424, 4294901760
    %v1426 = vsub.f32 %v1424, %v1425
    %v1427 = vand.u32 %v1426, 4294901760
    %1428 = vmatpush1.msra.mxu0 %v1427
    %1429 = vmatprep.subr.mxu0 0.0
    %v1430 = vand.u32 %v1141, 4294901760
    %v1431 = vsub.f32 %v1141, %v1430
    %v1432 = vand.u32 %v1431, 4294901760
    %v1433 = vsub.f32 %v1431, %v1432
    %v1434 = vand.u32 %v1433, 4294901760
    %1435 = vmatpush1.msra.mxu0 %v1434
    %1436 = vmatprep.subr.mxu0 0.0
    %v1437 = vand.u32 %v1142, 4294901760
    %v1438 = vsub.f32 %v1142, %v1437
    %v1439 = vand.u32 %v1438, 4294901760
    %v1440 = vsub.f32 %v1438, %v1439
    %v1441 = vand.u32 %v1440, 4294901760
    %1442 = vmatpush1.msra.mxu0 %v1441
    %1443 = vmatprep.subr.mxu0 0.0
    %v1444 = vand.u32 %v1143, 4294901760
    %v1445 = vsub.f32 %v1143, %v1444
    %v1446 = vand.u32 %v1445, 4294901760
    %v1447 = vsub.f32 %v1445, %v1446
    %v1448 = vand.u32 %v1447, 4294901760
    %1449 = vmatpush1.msra.mxu0 %v1448
    %1450 = vmatprep.subr.mxu0 0.0
    %v1451 = vand.u32 %v1144, 4294901760
    %v1452 = vsub.f32 %v1144, %v1451
    %v1453 = vand.u32 %v1452, 4294901760
    %v1454 = vsub.f32 %v1452, %v1453
    %v1455 = vand.u32 %v1454, 4294901760
    %1456 = vmatpush1.msra.mxu0 %v1455
    %1457 = vmatprep.subr.mxu0 0.0
    %v1458 = vand.u32 %v1145, 4294901760
    %v1459 = vsub.f32 %v1145, %v1458
    %v1460 = vand.u32 %v1459, 4294901760
    %v1461 = vsub.f32 %v1459, %v1460
    %v1462 = vand.u32 %v1461, 4294901760
    %1463 = vmatpush1.msra.mxu0 %v1462
    %1464 = vmatprep.subr.mxu0 0.0
    %v1465 = vand.u32 %v1146, 4294901760
    %v1466 = vsub.f32 %v1146, %v1465
    %v1467 = vand.u32 %v1466, 4294901760
    %v1468 = vsub.f32 %v1466, %v1467
    %v1469 = vand.u32 %v1468, 4294901760
    %1470 = vmatpush1.msra.mxu0 %v1469
    %1471 = vmatprep.subr.mxu0 0.0
    %v1472 = vand.u32 %v1147, 4294901760
    %v1473 = vsub.f32 %v1147, %v1472
    %v1474 = vand.u32 %v1473, 4294901760
    %v1475 = vsub.f32 %v1473, %v1474
    %v1476 = vand.u32 %v1475, 4294901760
    %1477 = vmatpush1.msra.mxu0 %v1476
    %1478 = vmatprep.subr.mxu0 0.0
    %1479 = vmatpush1.msra.mxu0 0.0
    %1480 = vmatprep.subr.mxu0 0.0
    %1481 = vmatpush1.msra.mxu0 0.0
    %1482 = vmatprep.subr.mxu0 0.0
    %1483 = vmatpush1.msra.mxu0 0.0
    %1484 = vmatprep.subr.mxu0 0.0
    %1485 = vmatpush1.msra.mxu0 0.0
    %1486 = vmatprep.subr.mxu0 0.0
    %1487 = vmatpush1.msra.mxu0 0.0
    %1488 = vmatprep.subr.mxu0 0.0
    %1489 = vmatpush1.msra.mxu0 0.0
    %1490 = vmatprep.subr.mxu0 0.0
    %1491 = vmatpush1.msra.mxu0 0.0
    %1492 = vmatprep.subr.mxu0 0.0
    %1493 = vmatpush1.msra.mxu0 0.0
    %1494 = vmatprep.subr.mxu0 0.0
    %1495 = vmatpush1.msra.mxu0 0.0
    %1496 = vmatprep.subr.mxu0 0.0
    %1497 = vmatpush1.msra.mxu0 0.0
    %1498 = vmatprep.subr.mxu0 0.0
    %1499 = vmatpush1.msra.mxu0 0.0
    %1500 = vmatprep.subr.mxu0 0.0
    %1501 = vmatpush1.msra.mxu0 0.0
    %1502 = vmatprep.subr.mxu0 0.0
    %1503 = vmatpush1.msra.mxu0 0.0
    %1504 = vmatprep.subr.mxu0 0.0
    %1505 = vmatpush1.msra.mxu0 0.0
    %1506 = vmatprep.subr.mxu0 0.0
    %1507 = vmatpush1.msra.mxu0 0.0
    %1508 = vmatprep.subr.mxu0 0.0
    %1509 = vmatpush1.msra.mxu0 0.0
    %1510 = vmatprep.mubr.f32.mxu0 0.0
    %v1511 = vand.u32 %v1119, 4294901760
    %1512 = vmatmul.mubr.f32.gmra.mrb[0].mxu0 %v1511
    %v1513 = vpop.f32.mrb[0].mxu0
    %v1514 = vadd.f32 %v1243, %v1513
    %v1515 = vpop.f32.mrb[0].mxu0
    %1516 = vmatprep.mubr.f32.mxu0 0.0
    %v1517 = vand.u32 %v1120, 4294901760
    %1518 = vmatmul.mubr.f32.gmra.mrb[0].mxu0 %v1517
    %v1519 = vpop.f32.mrb[0].mxu0
    %v1520 = vadd.f32 %v1253, %v1519
    %v1521 = vpop.f32.mrb[0].mxu0
    %1522 = vmatprep.mubr.f32.mxu0 0.0
    %v1523 = vand.u32 %v1121, 4294901760
    %1524 = vmatmul.mubr.f32.gmra.mrb[0].mxu0 %v1523
    %v1525 = vpop.f32.mrb[0].mxu0
    %v1526 = vadd.f32 %v1263, %v1525
    %v1527 = vpop.f32.mrb[0].mxu0
    %1528 = vmatprep.mubr.f32.mxu0 0.0
    %v1529 = vand.u32 %v1122, 4294901760
    %1530 = vmatmul.mubr.f32.gmra.mrb[0].mxu0 %v1529
    %v1531 = vpop.f32.mrb[0].mxu0
    %v1532 = vadd.f32 %v1273, %v1531
    %v1533 = vpop.f32.mrb[0].mxu0
    %1534 = vmatprep.mubr.f32.mxu0 0.0
    %v1535 = vand.u32 %v1123, 4294901760
    %1536 = vmatmul.mubr.f32.gmra.mrb[0].mxu0 %v1535
    %v1537 = vpop.f32.mrb[0].mxu0
    %v1538 = vadd.f32 %v1283, %v1537
    %v1539 = vpop.f32.mrb[0].mxu0
    %1540 = vmatprep.mubr.f32.mxu0 0.0
    %v1541 = vand.u32 %v1124, 4294901760
    %1542 = vmatmul.mubr.f32.gmra.mrb[0].mxu0 %v1541
    %v1543 = vpop.f32.mrb[0].mxu0
    %v1544 = vadd.f32 %v1293, %v1543
    %v1545 = vpop.f32.mrb[0].mxu0
    %1546 = vmatprep.mubr.f32.mxu0 0.0
    %v1547 = vand.u32 %v1125, 4294901760
    %1548 = vmatmul.mubr.f32.gmra.mrb[0].mxu0 %v1547
    %v1549 = vpop.f32.mrb[0].mxu0
    %v1550 = vadd.f32 %v1303, %v1549
    %v1551 = vpop.f32.mrb[0].mxu0
    %1552 = vmatprep.mubr.f32.mxu0 0.0
    %v1553 = vand.u32 %v1126, 4294901760
    %1554 = vmatmul.mubr.f32.gmra.mrb[0].mxu0 %v1553
    %v1555 = vpop.f32.mrb[0].mxu0
    %v1556 = vadd.f32 %v1313, %v1555
    %v1557 = vpop.f32.mrb[0].mxu0
    %1558 = vmatprep.mubr.f32.mxu0 0.0
    %v1559 = vand.u32 %v1127, 4294901760
    %1560 = vmatmul.mubr.f32.gmra.mrb[0].mxu0 %v1559
    %v1561 = vpop.f32.mrb[0].mxu0
    %v1562 = vadd.f32 %v1323, %v1561
    %v1563 = vpop.f32.mrb[0].mxu0
    %1564 = vmatprep.mubr.f32.mxu0 0.0
    %v1565 = vand.u32 %v1128, 4294901760
    %1566 = vmatmul.mubr.f32.gmra.mrb[0].mxu0 %v1565
    %v1567 = vpop.f32.mrb[0].mxu0
    %v1568 = vadd.f32 %v1333, %v1567
    %v1569 = vpop.f32.mrb[0].mxu0
    %1570 = vmatprep.mubr.f32.mxu0 0.0
    %v1571 = vand.u32 %v1129, 4294901760
    %1572 = vmatmul.mubr.f32.gmra.mrb[0].mxu0 %v1571
    %v1573 = vpop.f32.mrb[0].mxu0
    %v1574 = vadd.f32 %v1343, %v1573
    %v1575 = vpop.f32.mrb[0].mxu0
    %1576 = vmatprep.mubr.f32.mxu0 0.0
    %v1577 = vand.u32 %v1130, 4294901760
    %1578 = vmatmul.mubr.f32.gmra.mrb[0].mxu0 %v1577
    %v1579 = vpop.f32.mrb[0].mxu0
    %v1580 = vadd.f32 %v1353, %v1579
    %v1581 = vpop.f32.mrb[0].mxu0
    %1582 = vmatprep.mubr.f32.mxu0 0.0
    %v1583 = vand.u32 %v1131, 4294901760
    %1584 = vmatmul.mubr.f32.gmra.mrb[0].mxu0 %v1583
    %v1585 = vpop.f32.mrb[0].mxu0
    %v1586 = vadd.f32 %v1363, %v1585
    %v1587 = vpop.f32.mrb[0].mxu0
    %1588 = vdwg.mxu0
    %1589 = vmatprep.subr.mxu0 0.0
    %v1590 = vand.u32 %v1132, 4294901760
    %v1591 = vsub.f32 %v1132, %v1590
    %1592 = vmatpush1.msra.mxu0 %v1591
    %1593 = vmatprep.subr.mxu0 0.0
    %v1594 = vand.u32 %v1133, 4294901760
    %v1595 = vsub.f32 %v1133, %v1594
    %1596 = vmatpush1.msra.mxu0 %v1595
    %1597 = vmatprep.subr.mxu0 0.0
    %v1598 = vand.u32 %v1134, 4294901760
    %v1599 = vsub.f32 %v1134, %v1598
    %1600 = vmatpush1.msra.mxu0 %v1599
    %1601 = vmatprep.subr.mxu0 0.0
    %v1602 = vand.u32 %v1135, 4294901760
    %v1603 = vsub.f32 %v1135, %v1602
    %1604 = vmatpush1.msra.mxu0 %v1603
    %1605 = vmatprep.subr.mxu0 0.0
    %v1606 = vand.u32 %v1136, 4294901760
    %v1607 = vsub.f32 %v1136, %v1606
    %1608 = vmatpush1.msra.mxu0 %v1607
    %1609 = vmatprep.subr.mxu0 0.0
    %v1610 = vand.u32 %v1137, 4294901760
    %v1611 = vsub.f32 %v1137, %v1610
    %1612 = vmatpush1.msra.mxu0 %v1611
    %1613 = vmatprep.subr.mxu0 0.0
    %v1614 = vand.u32 %v1138, 4294901760
    %v1615 = vsub.f32 %v1138, %v1614
    %1616 = vmatpush1.msra.mxu0 %v1615
    %1617 = vmatprep.subr.mxu0 0.0
    %v1618 = vand.u32 %v1139, 4294901760
    %v1619 = vsub.f32 %v1139, %v1618
    %1620 = vmatpush1.msra.mxu0 %v1619
    %1621 = vmatprep.subr.mxu0 0.0
    %v1622 = vand.u32 %v1140, 4294901760
    %v1623 = vsub.f32 %v1140, %v1622
    %1624 = vmatpush1.msra.mxu0 %v1623
    %1625 = vmatprep.subr.mxu0 0.0
    %v1626 = vand.u32 %v1141, 4294901760
    %v1627 = vsub.f32 %v1141, %v1626
    %1628 = vmatpush1.msra.mxu0 %v1627
    %1629 = vmatprep.subr.mxu0 0.0
    %v1630 = vand.u32 %v1142, 4294901760
    %v1631 = vsub.f32 %v1142, %v1630
    %1632 = vmatpush1.msra.mxu0 %v1631
    %1633 = vmatprep.subr.mxu0 0.0
    %v1634 = vand.u32 %v1143, 4294901760
    %v1635 = vsub.f32 %v1143, %v1634
    %1636 = vmatpush1.msra.mxu0 %v1635
    %1637 = vmatprep.subr.mxu0 0.0
    %v1638 = vand.u32 %v1144, 4294901760
    %v1639 = vsub.f32 %v1144, %v1638
    %1640 = vmatpush1.msra.mxu0 %v1639
    %1641 = vmatprep.subr.mxu0 0.0
    %v1642 = vand.u32 %v1145, 4294901760
    %v1643 = vsub.f32 %v1145, %v1642
    %1644 = vmatpush1.msra.mxu0 %v1643
    %1645 = vmatprep.subr.mxu0 0.0
    %v1646 = vand.u32 %v1146, 4294901760
    %v1647 = vsub.f32 %v1146, %v1646
    %1648 = vmatpush1.msra.mxu0 %v1647
    %1649 = vmatprep.subr.mxu0 0.0
    %v1650 = vand.u32 %v1147, 4294901760
    %v1651 = vsub.f32 %v1147, %v1650
    %1652 = vmatpush1.msra.mxu0 %v1651
    %1653 = vmatprep.subr.mxu0 0.0
    %1654 = vmatpush1.msra.mxu0 0.0
    %1655 = vmatprep.subr.mxu0 0.0
    %1656 = vmatpush1.msra.mxu0 0.0
    %1657 = vmatprep.subr.mxu0 0.0
    %1658 = vmatpush1.msra.mxu0 0.0
    %1659 = vmatprep.subr.mxu0 0.0
    %1660 = vmatpush1.msra.mxu0 0.0
    %1661 = vmatprep.subr.mxu0 0.0
    %1662 = vmatpush1.msra.mxu0 0.0
    %1663 = vmatprep.subr.mxu0 0.0
    %1664 = vmatpush1.msra.mxu0 0.0
    %1665 = vmatprep.subr.mxu0 0.0
    %1666 = vmatpush1.msra.mxu0 0.0
    %1667 = vmatprep.subr.mxu0 0.0
    %1668 = vmatpush1.msra.mxu0 0.0
    %1669 = vmatprep.subr.mxu0 0.0
    %1670 = vmatpush1.msra.mxu0 0.0
    %1671 = vmatprep.subr.mxu0 0.0
    %1672 = vmatpush1.msra.mxu0 0.0
    %1673 = vmatprep.subr.mxu0 0.0
    %1674 = vmatpush1.msra.mxu0 0.0
    %1675 = vmatprep.subr.mxu0 0.0
    %1676 = vmatpush1.msra.mxu0 0.0
    %1677 = vmatprep.subr.mxu0 0.0
    %1678 = vmatpush1.msra.mxu0 0.0
    %1679 = vmatprep.subr.mxu0 0.0
    %1680 = vmatpush1.msra.mxu0 0.0
    %1681 = vmatprep.subr.mxu0 0.0
    %1682 = vmatpush1.msra.mxu0 0.0
    %1683 = vmatprep.subr.mxu0 0.0
    %1684 = vmatpush1.msra.mxu0 0.0
    %1685 = vmatprep.mubr.f32.mxu0 0.0
    %v1686 = vand.u32 %v1119, 4294901760
    %v1687 = vsub.f32 %v1119, %v1686
    %1688 = vmatmul.mubr.f32.gmra.mrb[0].mxu0 %v1687
    %v1689 = vpop.f32.mrb[0].mxu0
    %v1690 = vadd.f32 %v1514, %v1689
    %v1691 = vpop.f32.mrb[0].mxu0
    %1692 = vmatprep.mubr.f32.mxu0 0.0
    %v1693 = vand.u32 %v1120, 4294901760
    %v1694 = vsub.f32 %v1120, %v1693
    %1695 = vmatmul.mubr.f32.gmra.mrb[0].mxu0 %v1694
    %v1696 = vpop.f32.mrb[0].mxu0
    %v1697 = vadd.f32 %v1520, %v1696
    %v1698 = vpop.f32.mrb[0].mxu0
    %1699 = vmatprep.mubr.f32.mxu0 0.0
    %v1700 = vand.u32 %v1121, 4294901760
    %v1701 = vsub.f32 %v1121, %v1700
    %1702 = vmatmul.mubr.f32.gmra.mrb[0].mxu0 %v1701
    %v1703 = vpop.f32.mrb[0].mxu0
    %v1704 = vadd.f32 %v1526, %v1703
    %v1705 = vpop.f32.mrb[0].mxu0
    %1706 = vmatprep.mubr.f32.mxu0 0.0
    %v1707 = vand.u32 %v1122, 4294901760
    %v1708 = vsub.f32 %v1122, %v1707
    %1709 = vmatmul.mubr.f32.gmra.mrb[0].mxu0 %v1708
    %v1710 = vpop.f32.mrb[0].mxu0
    %v1711 = vadd.f32 %v1532, %v1710
    %v1712 = vpop.f32.mrb[0].mxu0
    %1713 = vmatprep.mubr.f32.mxu0 0.0
    %v1714 = vand.u32 %v1123, 4294901760
    %v1715 = vsub.f32 %v1123, %v1714
    %1716 = vmatmul.mubr.f32.gmra.mrb[0].mxu0 %v1715
    %v1717 = vpop.f32.mrb[0].mxu0
    %v1718 = vadd.f32 %v1538, %v1717
    %v1719 = vpop.f32.mrb[0].mxu0
    %1720 = vmatprep.mubr.f32.mxu0 0.0
    %v1721 = vand.u32 %v1124, 4294901760
    %v1722 = vsub.f32 %v1124, %v1721
    %1723 = vmatmul.mubr.f32.gmra.mrb[0].mxu0 %v1722
    %v1724 = vpop.f32.mrb[0].mxu0
    %v1725 = vadd.f32 %v1544, %v1724
    %v1726 = vpop.f32.mrb[0].mxu0
    %1727 = vmatprep.mubr.f32.mxu0 0.0
    %v1728 = vand.u32 %v1125, 4294901760
    %v1729 = vsub.f32 %v1125, %v1728
    %1730 = vmatmul.mubr.f32.gmra.mrb[0].mxu0 %v1729
    %v1731 = vpop.f32.mrb[0].mxu0
    %v1732 = vadd.f32 %v1550, %v1731
    %v1733 = vpop.f32.mrb[0].mxu0
    %1734 = vmatprep.mubr.f32.mxu0 0.0
    %v1735 = vand.u32 %v1126, 4294901760
    %v1736 = vsub.f32 %v1126, %v1735
    %1737 = vmatmul.mubr.f32.gmra.mrb[0].mxu0 %v1736
    %v1738 = vpop.f32.mrb[0].mxu0
    %v1739 = vadd.f32 %v1556, %v1738
    %v1740 = vpop.f32.mrb[0].mxu0
    %1741 = vmatprep.mubr.f32.mxu0 0.0
    %v1742 = vand.u32 %v1127, 4294901760
    %v1743 = vsub.f32 %v1127, %v1742
    %1744 = vmatmul.mubr.f32.gmra.mrb[0].mxu0 %v1743
    %v1745 = vpop.f32.mrb[0].mxu0
    %v1746 = vadd.f32 %v1562, %v1745
    %v1747 = vpop.f32.mrb[0].mxu0
    %1748 = vmatprep.mubr.f32.mxu0 0.0
    %v1749 = vand.u32 %v1128, 4294901760
    %v1750 = vsub.f32 %v1128, %v1749
    %1751 = vmatmul.mubr.f32.gmra.mrb[0].mxu0 %v1750
    %v1752 = vpop.f32.mrb[0].mxu0
    %v1753 = vadd.f32 %v1568, %v1752
    %v1754 = vpop.f32.mrb[0].mxu0
    %1755 = vmatprep.mubr.f32.mxu0 0.0
    %v1756 = vand.u32 %v1129, 4294901760
    %v1757 = vsub.f32 %v1129, %v1756
    %1758 = vmatmul.mubr.f32.gmra.mrb[0].mxu0 %v1757
    %v1759 = vpop.f32.mrb[0].mxu0
    %v1760 = vadd.f32 %v1574, %v1759
    %v1761 = vpop.f32.mrb[0].mxu0
    %1762 = vmatprep.mubr.f32.mxu0 0.0
    %v1763 = vand.u32 %v1130, 4294901760
    %v1764 = vsub.f32 %v1130, %v1763
    %1765 = vmatmul.mubr.f32.gmra.mrb[0].mxu0 %v1764
    %v1766 = vpop.f32.mrb[0].mxu0
    %v1767 = vadd.f32 %v1580, %v1766
    %v1768 = vpop.f32.mrb[0].mxu0
    %1769 = vmatprep.mubr.f32.mxu0 0.0
    %v1770 = vand.u32 %v1131, 4294901760
    %v1771 = vsub.f32 %v1131, %v1770
    %1772 = vmatmul.mubr.f32.gmra.mrb[0].mxu0 %v1771
    %v1773 = vpop.f32.mrb[0].mxu0
    %v1774 = vadd.f32 %v1586, %v1773
    %v1775 = vpop.f32.mrb[0].mxu0
    %1776 = vdwg.mxu0
    %1777 = vmatprep.subr.mxu0 0.0
    %v1778 = vand.u32 %v1132, 4294901760
    %1779 = vmatpush1.msra.mxu0 %v1778
    %1780 = vmatprep.subr.mxu0 0.0
    %v1781 = vand.u32 %v1133, 4294901760
    %1782 = vmatpush1.msra.mxu0 %v1781
    %1783 = vmatprep.subr.mxu0 0.0
    %v1784 = vand.u32 %v1134, 4294901760
    %1785 = vmatpush1.msra.mxu0 %v1784
    %1786 = vmatprep.subr.mxu0 0.0
    %v1787 = vand.u32 %v1135, 4294901760
    %1788 = vmatpush1.msra.mxu0 %v1787
    %1789 = vmatprep.subr.mxu0 0.0
    %v1790 = vand.u32 %v1136, 4294901760
    %1791 = vmatpush1.msra.mxu0 %v1790
    %1792 = vmatprep.subr.mxu0 0.0
    %v1793 = vand.u32 %v1137, 4294901760
    %1794 = vmatpush1.msra.mxu0 %v1793
    %1795 = vmatprep.subr.mxu0 0.0
    %v1796 = vand.u32 %v1138, 4294901760
    %1797 = vmatpush1.msra.mxu0 %v1796
    %1798 = vmatprep.subr.mxu0 0.0
    %v1799 = vand.u32 %v1139, 4294901760
    %1800 = vmatpush1.msra.mxu0 %v1799
    %1801 = vmatprep.subr.mxu0 0.0
    %v1802 = vand.u32 %v1140, 4294901760
    %1803 = vmatpush1.msra.mxu0 %v1802
    %1804 = vmatprep.subr.mxu0 0.0
    %v1805 = vand.u32 %v1141, 4294901760
    %1806 = vmatpush1.msra.mxu0 %v1805
    %1807 = vmatprep.subr.mxu0 0.0
    %v1808 = vand.u32 %v1142, 4294901760
    %1809 = vmatpush1.msra.mxu0 %v1808
    %1810 = vmatprep.subr.mxu0 0.0
    %v1811 = vand.u32 %v1143, 4294901760
    %1812 = vmatpush1.msra.mxu0 %v1811
    %1813 = vmatprep.subr.mxu0 0.0
    %v1814 = vand.u32 %v1144, 4294901760
    %1815 = vmatpush1.msra.mxu0 %v1814
    %1816 = vmatprep.subr.mxu0 0.0
    %v1817 = vand.u32 %v1145, 4294901760
    %1818 = vmatpush1.msra.mxu0 %v1817
    %1819 = vmatprep.subr.mxu0 0.0
    %v1820 = vand.u32 %v1146, 4294901760
    %1821 = vmatpush1.msra.mxu0 %v1820
    %1822 = vmatprep.subr.mxu0 0.0
    %v1823 = vand.u32 %v1147, 4294901760
    %1824 = vmatpush1.msra.mxu0 %v1823
    %1825 = vmatprep.subr.mxu0 0.0
    %1826 = vmatpush1.msra.mxu0 0.0
    %1827 = vmatprep.subr.mxu0 0.0
    %1828 = vmatpush1.msra.mxu0 0.0
    %1829 = vmatprep.subr.mxu0 0.0
    %1830 = vmatpush1.msra.mxu0 0.0
    %1831 = vmatprep.subr.mxu0 0.0
    %1832 = vmatpush1.msra.mxu0 0.0
    %1833 = vmatprep.subr.mxu0 0.0
    %1834 = vmatpush1.msra.mxu0 0.0
    %1835 = vmatprep.subr.mxu0 0.0
    %1836 = vmatpush1.msra.mxu0 0.0
    %1837 = vmatprep.subr.mxu0 0.0
    %1838 = vmatpush1.msra.mxu0 0.0
    %1839 = vmatprep.subr.mxu0 0.0
    %1840 = vmatpush1.msra.mxu0 0.0
    %1841 = vmatprep.subr.mxu0 0.0
    %1842 = vmatpush1.msra.mxu0 0.0
    %1843 = vmatprep.subr.mxu0 0.0
    %1844 = vmatpush1.msra.mxu0 0.0
    %1845 = vmatprep.subr.mxu0 0.0
    %1846 = vmatpush1.msra.mxu0 0.0
    %1847 = vmatprep.subr.mxu0 0.0
    %1848 = vmatpush1.msra.mxu0 0.0
    %1849 = vmatprep.subr.mxu0 0.0
    %1850 = vmatpush1.msra.mxu0 0.0
    %1851 = vmatprep.subr.mxu0 0.0
    %1852 = vmatpush1.msra.mxu0 0.0
    %1853 = vmatprep.subr.mxu0 0.0
    %1854 = vmatpush1.msra.mxu0 0.0
    %1855 = vmatprep.subr.mxu0 0.0
    %1856 = vmatpush1.msra.mxu0 0.0
    %1857 = vmatprep.mubr.f32.mxu0 0.0
    %v1858 = vand.u32 %v1119, 4294901760
    %v1859 = vsub.f32 %v1119, %v1858
    %v1860 = vand.u32 %v1859, 4294901760
    %1861 = vmatmul.mubr.f32.gmra.mrb[0].mxu0 %v1860
    %v1862 = vpop.f32.mrb[0].mxu0
    %v1863 = vadd.f32 %v1690, %v1862
    %v1864 = vpop.f32.mrb[0].mxu0
    %1865 = vmatprep.mubr.f32.mxu0 0.0
    %v1866 = vand.u32 %v1120, 4294901760
    %v1867 = vsub.f32 %v1120, %v1866
    %v1868 = vand.u32 %v1867, 4294901760
    %1869 = vmatmul.mubr.f32.gmra.mrb[0].mxu0 %v1868
    %v1870 = vpop.f32.mrb[0].mxu0
    %v1871 = vadd.f32 %v1697, %v1870
    %v1872 = vpop.f32.mrb[0].mxu0
    %1873 = vmatprep.mubr.f32.mxu0 0.0
    %v1874 = vand.u32 %v1121, 4294901760
    %v1875 = vsub.f32 %v1121, %v1874
    %v1876 = vand.u32 %v1875, 4294901760
    %1877 = vmatmul.mubr.f32.gmra.mrb[0].mxu0 %v1876
    %v1878 = vpop.f32.mrb[0].mxu0
    %v1879 = vadd.f32 %v1704, %v1878
    %v1880 = vpop.f32.mrb[0].mxu0
    %1881 = vmatprep.mubr.f32.mxu0 0.0
    %v1882 = vand.u32 %v1122, 4294901760
    %v1883 = vsub.f32 %v1122, %v1882
    %v1884 = vand.u32 %v1883, 4294901760
    %1885 = vmatmul.mubr.f32.gmra.mrb[0].mxu0 %v1884
    %v1886 = vpop.f32.mrb[0].mxu0
    %v1887 = vadd.f32 %v1711, %v1886
    %v1888 = vpop.f32.mrb[0].mxu0
    %1889 = vmatprep.mubr.f32.mxu0 0.0
    %v1890 = vand.u32 %v1123, 4294901760
    %v1891 = vsub.f32 %v1123, %v1890
    %v1892 = vand.u32 %v1891, 4294901760
    %1893 = vmatmul.mubr.f32.gmra.mrb[0].mxu0 %v1892
    %v1894 = vpop.f32.mrb[0].mxu0
    %v1895 = vadd.f32 %v1718, %v1894
    %v1896 = vpop.f32.mrb[0].mxu0
    %1897 = vmatprep.mubr.f32.mxu0 0.0
    %v1898 = vand.u32 %v1124, 4294901760
    %v1899 = vsub.f32 %v1124, %v1898
    %v1900 = vand.u32 %v1899, 4294901760
    %1901 = vmatmul.mubr.f32.gmra.mrb[0].mxu0 %v1900
    %v1902 = vpop.f32.mrb[0].mxu0
    %v1903 = vadd.f32 %v1725, %v1902
    %v1904 = vpop.f32.mrb[0].mxu0
    %1905 = vmatprep.mubr.f32.mxu0 0.0
    %v1906 = vand.u32 %v1125, 4294901760
    %v1907 = vsub.f32 %v1125, %v1906
    %v1908 = vand.u32 %v1907, 4294901760
    %1909 = vmatmul.mubr.f32.gmra.mrb[0].mxu0 %v1908
    %v1910 = vpop.f32.mrb[0].mxu0
    %v1911 = vadd.f32 %v1732, %v1910
    %v1912 = vpop.f32.mrb[0].mxu0
    %1913 = vmatprep.mubr.f32.mxu0 0.0
    %v1914 = vand.u32 %v1126, 4294901760
    %v1915 = vsub.f32 %v1126, %v1914
    %v1916 = vand.u32 %v1915, 4294901760
    %1917 = vmatmul.mubr.f32.gmra.mrb[0].mxu0 %v1916
    %v1918 = vpop.f32.mrb[0].mxu0
    %v1919 = vadd.f32 %v1739, %v1918
    %v1920 = vpop.f32.mrb[0].mxu0
    %1921 = vmatprep.mubr.f32.mxu0 0.0
    %v1922 = vand.u32 %v1127, 4294901760
    %v1923 = vsub.f32 %v1127, %v1922
    %v1924 = vand.u32 %v1923, 4294901760
    %1925 = vmatmul.mubr.f32.gmra.mrb[0].mxu0 %v1924
    %v1926 = vpop.f32.mrb[0].mxu0
    %v1927 = vadd.f32 %v1746, %v1926
    %v1928 = vpop.f32.mrb[0].mxu0
    %1929 = vmatprep.mubr.f32.mxu0 0.0
    %v1930 = vand.u32 %v1128, 4294901760
    %v1931 = vsub.f32 %v1128, %v1930
    %v1932 = vand.u32 %v1931, 4294901760
    %1933 = vmatmul.mubr.f32.gmra.mrb[0].mxu0 %v1932
    %v1934 = vpop.f32.mrb[0].mxu0
    %v1935 = vadd.f32 %v1753, %v1934
    %v1936 = vpop.f32.mrb[0].mxu0
    %1937 = vmatprep.mubr.f32.mxu0 0.0
    %v1938 = vand.u32 %v1129, 4294901760
    %v1939 = vsub.f32 %v1129, %v1938
    %v1940 = vand.u32 %v1939, 4294901760
    %1941 = vmatmul.mubr.f32.gmra.mrb[0].mxu0 %v1940
    %v1942 = vpop.f32.mrb[0].mxu0
    %v1943 = vadd.f32 %v1760, %v1942
    %v1944 = vpop.f32.mrb[0].mxu0
    %1945 = vmatprep.mubr.f32.mxu0 0.0
    %v1946 = vand.u32 %v1130, 4294901760
    %v1947 = vsub.f32 %v1130, %v1946
    %v1948 = vand.u32 %v1947, 4294901760
    %1949 = vmatmul.mubr.f32.gmra.mrb[0].mxu0 %v1948
    %v1950 = vpop.f32.mrb[0].mxu0
    %v1951 = vadd.f32 %v1767, %v1950
    %v1952 = vpop.f32.mrb[0].mxu0
    %1953 = vmatprep.mubr.f32.mxu0 0.0
    %v1954 = vand.u32 %v1131, 4294901760
    %v1955 = vsub.f32 %v1131, %v1954
    %v1956 = vand.u32 %v1955, 4294901760
    %1957 = vmatmul.mubr.f32.gmra.mrb[0].mxu0 %v1956
    %v1958 = vpop.f32.mrb[0].mxu0
    %v1959 = vadd.f32 %v1774, %v1958
    %v1960 = vpop.f32.mrb[0].mxu0
    %1961 = vdwg.mxu0
    %1962 = vmatprep.subr.mxu0 0.0
    %v1963 = vand.u32 %v1132, 4294901760
    %v1964 = vsub.f32 %v1132, %v1963
    %v1965 = vand.u32 %v1964, 4294901760
    %1966 = vmatpush1.msra.mxu0 %v1965
    %1967 = vmatprep.subr.mxu0 0.0
    %v1968 = vand.u32 %v1133, 4294901760
    %v1969 = vsub.f32 %v1133, %v1968
    %v1970 = vand.u32 %v1969, 4294901760
    %1971 = vmatpush1.msra.mxu0 %v1970
    %1972 = vmatprep.subr.mxu0 0.0
    %v1973 = vand.u32 %v1134, 4294901760
    %v1974 = vsub.f32 %v1134, %v1973
    %v1975 = vand.u32 %v1974, 4294901760
    %1976 = vmatpush1.msra.mxu0 %v1975
    %1977 = vmatprep.subr.mxu0 0.0
    %v1978 = vand.u32 %v1135, 4294901760
    %v1979 = vsub.f32 %v1135, %v1978
    %v1980 = vand.u32 %v1979, 4294901760
    %1981 = vmatpush1.msra.mxu0 %v1980
    %1982 = vmatprep.subr.mxu0 0.0
    %v1983 = vand.u32 %v1136, 4294901760
    %v1984 = vsub.f32 %v1136, %v1983
    %v1985 = vand.u32 %v1984, 4294901760
    %1986 = vmatpush1.msra.mxu0 %v1985
    %1987 = vmatprep.subr.mxu0 0.0
    %v1988 = vand.u32 %v1137, 4294901760
    %v1989 = vsub.f32 %v1137, %v1988
    %v1990 = vand.u32 %v1989, 4294901760
    %1991 = vmatpush1.msra.mxu0 %v1990
    %1992 = vmatprep.subr.mxu0 0.0
    %v1993 = vand.u32 %v1138, 4294901760
    %v1994 = vsub.f32 %v1138, %v1993
    %v1995 = vand.u32 %v1994, 4294901760
    %1996 = vmatpush1.msra.mxu0 %v1995
    %1997 = vmatprep.subr.mxu0 0.0
    %v1998 = vand.u32 %v1139, 4294901760
    %v1999 = vsub.f32 %v1139, %v1998
    %v2000 = vand.u32 %v1999, 4294901760
    %2001 = vmatpush1.msra.mxu0 %v2000
    %2002 = vmatprep.subr.mxu0 0.0
    %v2003 = vand.u32 %v1140, 4294901760
    %v2004 = vsub.f32 %v1140, %v2003
    %v2005 = vand.u32 %v2004, 4294901760
    %2006 = vmatpush1.msra.mxu0 %v2005
    %2007 = vmatprep.subr.mxu0 0.0
    %v2008 = vand.u32 %v1141, 4294901760
    %v2009 = vsub.f32 %v1141, %v2008
    %v2010 = vand.u32 %v2009, 4294901760
    %2011 = vmatpush1.msra.mxu0 %v2010
    %2012 = vmatprep.subr.mxu0 0.0
    %v2013 = vand.u32 %v1142, 4294901760
    %v2014 = vsub.f32 %v1142, %v2013
    %v2015 = vand.u32 %v2014, 4294901760
    %2016 = vmatpush1.msra.mxu0 %v2015
    %2017 = vmatprep.subr.mxu0 0.0
    %v2018 = vand.u32 %v1143, 4294901760
    %v2019 = vsub.f32 %v1143, %v2018
    %v2020 = vand.u32 %v2019, 4294901760
    %2021 = vmatpush1.msra.mxu0 %v2020
    %2022 = vmatprep.subr.mxu0 0.0
    %v2023 = vand.u32 %v1144, 4294901760
    %v2024 = vsub.f32 %v1144, %v2023
    %v2025 = vand.u32 %v2024, 4294901760
    %2026 = vmatpush1.msra.mxu0 %v2025
    %2027 = vmatprep.subr.mxu0 0.0
    %v2028 = vand.u32 %v1145, 4294901760
    %v2029 = vsub.f32 %v1145, %v2028
    %v2030 = vand.u32 %v2029, 4294901760
    %2031 = vmatpush1.msra.mxu0 %v2030
    %2032 = vmatprep.subr.mxu0 0.0
    %v2033 = vand.u32 %v1146, 4294901760
    %v2034 = vsub.f32 %v1146, %v2033
    %v2035 = vand.u32 %v2034, 4294901760
    %2036 = vmatpush1.msra.mxu0 %v2035
    %2037 = vmatprep.subr.mxu0 0.0
    %v2038 = vand.u32 %v1147, 4294901760
    %v2039 = vsub.f32 %v1147, %v2038
    %v2040 = vand.u32 %v2039, 4294901760
    %2041 = vmatpush1.msra.mxu0 %v2040
    %2042 = vmatprep.subr.mxu0 0.0
    %2043 = vmatpush1.msra.mxu0 0.0
    %2044 = vmatprep.subr.mxu0 0.0
    %2045 = vmatpush1.msra.mxu0 0.0
    %2046 = vmatprep.subr.mxu0 0.0
    %2047 = vmatpush1.msra.mxu0 0.0
    %2048 = vmatprep.subr.mxu0 0.0
    %2049 = vmatpush1.msra.mxu0 0.0
    %2050 = vmatprep.subr.mxu0 0.0
    %2051 = vmatpush1.msra.mxu0 0.0
    %2052 = vmatprep.subr.mxu0 0.0
    %2053 = vmatpush1.msra.mxu0 0.0
    %2054 = vmatprep.subr.mxu0 0.0
    %2055 = vmatpush1.msra.mxu0 0.0
    %2056 = vmatprep.subr.mxu0 0.0
    %2057 = vmatpush1.msra.mxu0 0.0
    %2058 = vmatprep.subr.mxu0 0.0
    %2059 = vmatpush1.msra.mxu0 0.0
    %2060 = vmatprep.subr.mxu0 0.0
    %2061 = vmatpush1.msra.mxu0 0.0
    %2062 = vmatprep.subr.mxu0 0.0
    %2063 = vmatpush1.msra.mxu0 0.0
    %2064 = vmatprep.subr.mxu0 0.0
    %2065 = vmatpush1.msra.mxu0 0.0
    %2066 = vmatprep.subr.mxu0 0.0
    %2067 = vmatpush1.msra.mxu0 0.0
    %2068 = vmatprep.subr.mxu0 0.0
    %2069 = vmatpush1.msra.mxu0 0.0
    %2070 = vmatprep.subr.mxu0 0.0
    %2071 = vmatpush1.msra.mxu0 0.0
    %2072 = vmatprep.subr.mxu0 0.0
    %2073 = vmatpush1.msra.mxu0 0.0
    %2074 = vmatprep.mubr.f32.mxu0 0.0
    %v2075 = vand.u32 %v1119, 4294901760
    %2076 = vmatmul.mubr.f32.gmra.mrb[0].mxu0 %v2075
    %v2077 = vpop.f32.mrb[0].mxu0
    %v2078 = vadd.f32 %v1863, %v2077
    %v2079 = vpop.f32.mrb[0].mxu0
    %2080 = vmatprep.mubr.f32.mxu0 0.0
    %v2081 = vand.u32 %v1120, 4294901760
    %2082 = vmatmul.mubr.f32.gmra.mrb[0].mxu0 %v2081
    %v2083 = vpop.f32.mrb[0].mxu0
    %v2084 = vadd.f32 %v1871, %v2083
    %v2085 = vpop.f32.mrb[0].mxu0
    %2086 = vmatprep.mubr.f32.mxu0 0.0
    %v2087 = vand.u32 %v1121, 4294901760
    %2088 = vmatmul.mubr.f32.gmra.mrb[0].mxu0 %v2087
    %v2089 = vpop.f32.mrb[0].mxu0
    %v2090 = vadd.f32 %v1879, %v2089
    %v2091 = vpop.f32.mrb[0].mxu0
    %2092 = vmatprep.mubr.f32.mxu0 0.0
    %v2093 = vand.u32 %v1122, 4294901760
    %2094 = vmatmul.mubr.f32.gmra.mrb[0].mxu0 %v2093
    %v2095 = vpop.f32.mrb[0].mxu0
    %v2096 = vadd.f32 %v1887, %v2095
    %v2097 = vpop.f32.mrb[0].mxu0
    %2098 = vmatprep.mubr.f32.mxu0 0.0
    %v2099 = vand.u32 %v1123, 4294901760
    %2100 = vmatmul.mubr.f32.gmra.mrb[0].mxu0 %v2099
    %v2101 = vpop.f32.mrb[0].mxu0
    %v2102 = vadd.f32 %v1895, %v2101
    %v2103 = vpop.f32.mrb[0].mxu0
    %2104 = vmatprep.mubr.f32.mxu0 0.0
    %v2105 = vand.u32 %v1124, 4294901760
    %2106 = vmatmul.mubr.f32.gmra.mrb[0].mxu0 %v2105
    %v2107 = vpop.f32.mrb[0].mxu0
    %v2108 = vadd.f32 %v1903, %v2107
    %v2109 = vpop.f32.mrb[0].mxu0
    %2110 = vmatprep.mubr.f32.mxu0 0.0
    %v2111 = vand.u32 %v1125, 4294901760
    %2112 = vmatmul.mubr.f32.gmra.mrb[0].mxu0 %v2111
    %v2113 = vpop.f32.mrb[0].mxu0
    %v2114 = vadd.f32 %v1911, %v2113
    %v2115 = vpop.f32.mrb[0].mxu0
    %2116 = vmatprep.mubr.f32.mxu0 0.0
    %v2117 = vand.u32 %v1126, 4294901760
    %2118 = vmatmul.mubr.f32.gmra.mrb[0].mxu0 %v2117
    %v2119 = vpop.f32.mrb[0].mxu0
    %v2120 = vadd.f32 %v1919, %v2119
    %v2121 = vpop.f32.mrb[0].mxu0
    %2122 = vmatprep.mubr.f32.mxu0 0.0
    %v2123 = vand.u32 %v1127, 4294901760
    %2124 = vmatmul.mubr.f32.gmra.mrb[0].mxu0 %v2123
    %v2125 = vpop.f32.mrb[0].mxu0
    %v2126 = vadd.f32 %v1927, %v2125
    %v2127 = vpop.f32.mrb[0].mxu0
    %2128 = vmatprep.mubr.f32.mxu0 0.0
    %v2129 = vand.u32 %v1128, 4294901760
    %2130 = vmatmul.mubr.f32.gmra.mrb[0].mxu0 %v2129
    %v2131 = vpop.f32.mrb[0].mxu0
    %v2132 = vadd.f32 %v1935, %v2131
    %v2133 = vpop.f32.mrb[0].mxu0
    %2134 = vmatprep.mubr.f32.mxu0 0.0
    %v2135 = vand.u32 %v1129, 4294901760
    %2136 = vmatmul.mubr.f32.gmra.mrb[0].mxu0 %v2135
    %v2137 = vpop.f32.mrb[0].mxu0
    %v2138 = vadd.f32 %v1943, %v2137
    %v2139 = vpop.f32.mrb[0].mxu0
    %2140 = vmatprep.mubr.f32.mxu0 0.0
    %v2141 = vand.u32 %v1130, 4294901760
    %2142 = vmatmul.mubr.f32.gmra.mrb[0].mxu0 %v2141
    %v2143 = vpop.f32.mrb[0].mxu0
    %v2144 = vadd.f32 %v1951, %v2143
    %v2145 = vpop.f32.mrb[0].mxu0
    %2146 = vmatprep.mubr.f32.mxu0 0.0
    %v2147 = vand.u32 %v1131, 4294901760
    %2148 = vmatmul.mubr.f32.gmra.mrb[0].mxu0 %v2147
    %v2149 = vpop.f32.mrb[0].mxu0
    %v2150 = vadd.f32 %v1959, %v2149
    %v2151 = vpop.f32.mrb[0].mxu0
    %2152 = vdwg.mxu0
    %2153 = vmatprep.subr.mxu0 0.0
    %v2154 = vand.u32 %v1132, 4294901760
    %2155 = vmatpush1.msra.mxu0 %v2154
    %2156 = vmatprep.subr.mxu0 0.0
    %v2157 = vand.u32 %v1133, 4294901760
    %2158 = vmatpush1.msra.mxu0 %v2157
    %2159 = vmatprep.subr.mxu0 0.0
    %v2160 = vand.u32 %v1134, 4294901760
    %2161 = vmatpush1.msra.mxu0 %v2160
    %2162 = vmatprep.subr.mxu0 0.0
    %v2163 = vand.u32 %v1135, 4294901760
    %2164 = vmatpush1.msra.mxu0 %v2163
    %2165 = vmatprep.subr.mxu0 0.0
    %v2166 = vand.u32 %v1136, 4294901760
    %2167 = vmatpush1.msra.mxu0 %v2166
    %2168 = vmatprep.subr.mxu0 0.0
    %v2169 = vand.u32 %v1137, 4294901760
    %2170 = vmatpush1.msra.mxu0 %v2169
    %2171 = vmatprep.subr.mxu0 0.0
    %v2172 = vand.u32 %v1138, 4294901760
    %2173 = vmatpush1.msra.mxu0 %v2172
    %2174 = vmatprep.subr.mxu0 0.0
    %v2175 = vand.u32 %v1139, 4294901760
    %2176 = vmatpush1.msra.mxu0 %v2175
    %2177 = vmatprep.subr.mxu0 0.0
    %v2178 = vand.u32 %v1140, 4294901760
    %2179 = vmatpush1.msra.mxu0 %v2178
    %2180 = vmatprep.subr.mxu0 0.0
    %v2181 = vand.u32 %v1141, 4294901760
    %2182 = vmatpush1.msra.mxu0 %v2181
    %2183 = vmatprep.subr.mxu0 0.0
    %v2184 = vand.u32 %v1142, 4294901760
    %2185 = vmatpush1.msra.mxu0 %v2184
    %2186 = vmatprep.subr.mxu0 0.0
    %v2187 = vand.u32 %v1143, 4294901760
    %2188 = vmatpush1.msra.mxu0 %v2187
    %2189 = vmatprep.subr.mxu0 0.0
    %v2190 = vand.u32 %v1144, 4294901760
    %2191 = vmatpush1.msra.mxu0 %v2190
    %2192 = vmatprep.subr.mxu0 0.0
    %v2193 = vand.u32 %v1145, 4294901760
    %2194 = vmatpush1.msra.mxu0 %v2193
    %2195 = vmatprep.subr.mxu0 0.0
    %v2196 = vand.u32 %v1146, 4294901760
    %2197 = vmatpush1.msra.mxu0 %v2196
    %2198 = vmatprep.subr.mxu0 0.0
    %v2199 = vand.u32 %v1147, 4294901760
    %2200 = vmatpush1.msra.mxu0 %v2199
    %2201 = vmatprep.subr.mxu0 0.0
    %2202 = vmatpush1.msra.mxu0 0.0
    %2203 = vmatprep.subr.mxu0 0.0
    %2204 = vmatpush1.msra.mxu0 0.0
    %2205 = vmatprep.subr.mxu0 0.0
    %2206 = vmatpush1.msra.mxu0 0.0
    %2207 = vmatprep.subr.mxu0 0.0
    %2208 = vmatpush1.msra.mxu0 0.0
    %2209 = vmatprep.subr.mxu0 0.0
    %2210 = vmatpush1.msra.mxu0 0.0
    %2211 = vmatprep.subr.mxu0 0.0
    %2212 = vmatpush1.msra.mxu0 0.0
    %2213 = vmatprep.subr.mxu0 0.0
    %2214 = vmatpush1.msra.mxu0 0.0
    %2215 = vmatprep.subr.mxu0 0.0
    %2216 = vmatpush1.msra.mxu0 0.0
    %2217 = vmatprep.subr.mxu0 0.0
    %2218 = vmatpush1.msra.mxu0 0.0
    %2219 = vmatprep.subr.mxu0 0.0
    %2220 = vmatpush1.msra.mxu0 0.0
    %2221 = vmatprep.subr.mxu0 0.0
    %2222 = vmatpush1.msra.mxu0 0.0
    %2223 = vmatprep.subr.mxu0 0.0
    %2224 = vmatpush1.msra.mxu0 0.0
    %2225 = vmatprep.subr.mxu0 0.0
    %2226 = vmatpush1.msra.mxu0 0.0
    %2227 = vmatprep.subr.mxu0 0.0
    %2228 = vmatpush1.msra.mxu0 0.0
    %2229 = vmatprep.subr.mxu0 0.0
    %2230 = vmatpush1.msra.mxu0 0.0
    %2231 = vmatprep.subr.mxu0 0.0
    %2232 = vmatpush1.msra.mxu0 0.0
    %2233 = vmatprep.mubr.f32.mxu0 0.0
    %v2234 = vand.u32 %v1119, 4294901760
    %2235 = vmatmul.mubr.f32.gmra.mrb[0].mxu0 %v2234
    %v2236 = vpop.f32.mrb[0].mxu0
    %v2237 = vadd.f32 %v2078, %v2236
    %v2238 = vpop.f32.mrb[0].mxu0
    %2239 = vmatprep.mubr.f32.mxu0 0.0
    %v2240 = vand.u32 %v1120, 4294901760
    %2241 = vmatmul.mubr.f32.gmra.mrb[0].mxu0 %v2240
    %v2242 = vpop.f32.mrb[0].mxu0
    %v2243 = vadd.f32 %v2084, %v2242
    %v2244 = vpop.f32.mrb[0].mxu0
    %2245 = vmatprep.mubr.f32.mxu0 0.0
    %v2246 = vand.u32 %v1121, 4294901760
    %2247 = vmatmul.mubr.f32.gmra.mrb[0].mxu0 %v2246
    %v2248 = vpop.f32.mrb[0].mxu0
    %v2249 = vadd.f32 %v2090, %v2248
    %v2250 = vpop.f32.mrb[0].mxu0
    %2251 = vmatprep.mubr.f32.mxu0 0.0
    %v2252 = vand.u32 %v1122, 4294901760
    %2253 = vmatmul.mubr.f32.gmra.mrb[0].mxu0 %v2252
    %v2254 = vpop.f32.mrb[0].mxu0
    %v2255 = vadd.f32 %v2096, %v2254
    %v2256 = vpop.f32.mrb[0].mxu0
    %2257 = vmatprep.mubr.f32.mxu0 0.0
    %v2258 = vand.u32 %v1123, 4294901760
    %2259 = vmatmul.mubr.f32.gmra.mrb[0].mxu0 %v2258
    %v2260 = vpop.f32.mrb[0].mxu0
    %v2261 = vadd.f32 %v2102, %v2260
    %v2262 = vpop.f32.mrb[0].mxu0
    %2263 = vmatprep.mubr.f32.mxu0 0.0
    %v2264 = vand.u32 %v1124, 4294901760
    %2265 = vmatmul.mubr.f32.gmra.mrb[0].mxu0 %v2264
    %v2266 = vpop.f32.mrb[0].mxu0
    %v2267 = vadd.f32 %v2108, %v2266
    %v2268 = vpop.f32.mrb[0].mxu0
    %2269 = vmatprep.mubr.f32.mxu0 0.0
    %v2270 = vand.u32 %v1125, 4294901760
    %2271 = vmatmul.mubr.f32.gmra.mrb[0].mxu0 %v2270
    %v2272 = vpop.f32.mrb[0].mxu0
    %v2273 = vadd.f32 %v2114, %v2272
    %v2274 = vpop.f32.mrb[0].mxu0
    %2275 = vmatprep.mubr.f32.mxu0 0.0
    %v2276 = vand.u32 %v1126, 4294901760
    %2277 = vmatmul.mubr.f32.gmra.mrb[0].mxu0 %v2276
    %v2278 = vpop.f32.mrb[0].mxu0
    %v2279 = vadd.f32 %v2120, %v2278
    %v2280 = vpop.f32.mrb[0].mxu0
    %2281 = vmatprep.mubr.f32.mxu0 0.0
    %v2282 = vand.u32 %v1127, 4294901760
    %2283 = vmatmul.mubr.f32.gmra.mrb[0].mxu0 %v2282
    %v2284 = vpop.f32.mrb[0].mxu0
    %v2285 = vadd.f32 %v2126, %v2284
    %v2286 = vpop.f32.mrb[0].mxu0
    %2287 = vmatprep.mubr.f32.mxu0 0.0
    %v2288 = vand.u32 %v1128, 4294901760
    %2289 = vmatmul.mubr.f32.gmra.mrb[0].mxu0 %v2288
    %v2290 = vpop.f32.mrb[0].mxu0
    %v2291 = vadd.f32 %v2132, %v2290
    %v2292 = vpop.f32.mrb[0].mxu0
    %2293 = vmatprep.mubr.f32.mxu0 0.0
    %v2294 = vand.u32 %v1129, 4294901760
    %2295 = vmatmul.mubr.f32.gmra.mrb[0].mxu0 %v2294
    %v2296 = vpop.f32.mrb[0].mxu0
    %v2297 = vadd.f32 %v2138, %v2296
    %v2298 = vpop.f32.mrb[0].mxu0
    %2299 = vmatprep.mubr.f32.mxu0 0.0
    %v2300 = vand.u32 %v1130, 4294901760
    %2301 = vmatmul.mubr.f32.gmra.mrb[0].mxu0 %v2300
    %v2302 = vpop.f32.mrb[0].mxu0
    %v2303 = vadd.f32 %v2144, %v2302
    %v2304 = vpop.f32.mrb[0].mxu0
    %2305 = vmatprep.mubr.f32.mxu0 0.0
    %v2306 = vand.u32 %v1131, 4294901760
    %2307 = vmatmul.mubr.f32.gmra.mrb[0].mxu0 %v2306
    %v2308 = vpop.f32.mrb[0].mxu0
    %v2309 = vadd.f32 %v2150, %v2308
    %v2310 = vpop.f32.mrb[0].mxu0
    %2311 = vdwg.mxu0
    %v2312 = vmax.f32 %v2237, 0.0
    %v2313 = vmax.f32 %v2243, 0.0
    %v2314 = vmax.f32 %v2249, 0.0
    %v2315 = vmax.f32 %v2255, 0.0
    %v2316 = vmax.f32 %v2261, 0.0
    %v2317 = vmax.f32 %v2267, 0.0
    %v2318 = vmax.f32 %v2273, 0.0
    %v2319 = vmax.f32 %v2279, 0.0
    %v2320 = vmax.f32 %v2285, 0.0
    %v2321 = vmax.f32 %v2291, 0.0
    %v2322 = vmax.f32 %v2297, 0.0
    %v2323 = vmax.f32 %v2303, 0.0
    %v2324 = vmax.f32 %v2309, 0.0
    %v2325 = vld [vmem:[#allocation4] sm:$0xff]
    %v2326 = vld [vmem:[#allocation4 + $0x8] sm:$0xff]
    %v2327 = vld [vmem:[#allocation4 + $0x10] sm:$0xff]
    %v2328 = vld [vmem:[#allocation4 + $0x18] sm:$0xff]
    %v2329 = vld [vmem:[#allocation4 + $0x20] sm:$0xff]
    %v2330 = vld [vmem:[#allocation4 + $0x28] sm:$0xff]
    %v2331 = vld [vmem:[#allocation4 + $0x30] sm:$0xff]
    %v2332 = vld [vmem:[#allocation4 + $0x38] sm:$0xff]
    %v2333 = vld [vmem:[#allocation4 + $0x40] sm:$0xff]
    %v2334 = vld [vmem:[#allocation4 + $0x48] sm:$0xff]
    %v2335 = vld [vmem:[#allocation4 + $0x50] sm:$0xff]
    %v2336 = vld [vmem:[#allocation4 + $0x58] sm:$0xff]
    %v2337 = vld [vmem:[#allocation4 + $0x60] sm:$0xff]
    %v2338 = vld [vmem:[#allocation4 + $0x68] sm:$0xff]
    %v2339 = vld [vmem:[#allocation4 + $0x70] sm:$0xff]
    %v2340 = vld [vmem:[#allocation4 + $0x78] sm:$0xff]
    %v2341 = vld [vmem:[%s6] sm:$0x1]
    %v2343 = vlaneseq
    %v2344 = vshrl.u32 %v2343, 7
    %v2345 = vsub.s32 0, %v2344
    %v2346 = vrot.slane %v2341, %v2345
    %2348 = vmatprep.subr.mxu0 0.0
    %v2349 = vand.u32 %v2325, 4294901760
    %2350 = vmatpush1.msra.mxu0 %v2349
    %2351 = vmatprep.subr.mxu0 0.0
    %v2352 = vand.u32 %v2326, 4294901760
    %2353 = vmatpush1.msra.mxu0 %v2352
    %2354 = vmatprep.subr.mxu0 0.0
    %v2355 = vand.u32 %v2327, 4294901760
    %2356 = vmatpush1.msra.mxu0 %v2355
    %2357 = vmatprep.subr.mxu0 0.0
    %v2358 = vand.u32 %v2328, 4294901760
    %2359 = vmatpush1.msra.mxu0 %v2358
    %2360 = vmatprep.subr.mxu0 0.0
    %v2361 = vand.u32 %v2329, 4294901760
    %2362 = vmatpush1.msra.mxu0 %v2361
    %2363 = vmatprep.subr.mxu0 0.0
    %v2364 = vand.u32 %v2330, 4294901760
    %2365 = vmatpush1.msra.mxu0 %v2364
    %2366 = vmatprep.subr.mxu0 0.0
    %v2367 = vand.u32 %v2331, 4294901760
    %2368 = vmatpush1.msra.mxu0 %v2367
    %2369 = vmatprep.subr.mxu0 0.0
    %v2370 = vand.u32 %v2332, 4294901760
    %2371 = vmatpush1.msra.mxu0 %v2370
    %2372 = vmatprep.subr.mxu0 0.0
    %v2373 = vand.u32 %v2333, 4294901760
    %2374 = vmatpush1.msra.mxu0 %v2373
    %2375 = vmatprep.subr.mxu0 0.0
    %v2376 = vand.u32 %v2334, 4294901760
    %2377 = vmatpush1.msra.mxu0 %v2376
    %2378 = vmatprep.subr.mxu0 0.0
    %v2379 = vand.u32 %v2335, 4294901760
    %2380 = vmatpush1.msra.mxu0 %v2379
    %2381 = vmatprep.subr.mxu0 0.0
    %v2382 = vand.u32 %v2336, 4294901760
    %2383 = vmatpush1.msra.mxu0 %v2382
    %2384 = vmatprep.subr.mxu0 0.0
    %v2385 = vand.u32 %v2337, 4294901760
    %2386 = vmatpush1.msra.mxu0 %v2385
    %2387 = vmatprep.subr.mxu0 0.0
    %v2388 = vand.u32 %v2338, 4294901760
    %2389 = vmatpush1.msra.mxu0 %v2388
    %2390 = vmatprep.subr.mxu0 0.0
    %v2391 = vand.u32 %v2339, 4294901760
    %2392 = vmatpush1.msra.mxu0 %v2391
    %2393 = vmatprep.subr.mxu0 0.0
    %v2394 = vand.u32 %v2340, 4294901760
    %2395 = vmatpush1.msra.mxu0 %v2394
    %2396 = vmatprep.subr.mxu0 0.0
    %2397 = vmatpush1.msra.mxu0 0.0
    %2398 = vmatprep.subr.mxu0 0.0
    %2399 = vmatpush1.msra.mxu0 0.0
    %2400 = vmatprep.subr.mxu0 0.0
    %2401 = vmatpush1.msra.mxu0 0.0
    %2402 = vmatprep.subr.mxu0 0.0
    %2403 = vmatpush1.msra.mxu0 0.0
    %2404 = vmatprep.subr.mxu0 0.0
    %2405 = vmatpush1.msra.mxu0 0.0
    %2406 = vmatprep.subr.mxu0 0.0
    %2407 = vmatpush1.msra.mxu0 0.0
    %2408 = vmatprep.subr.mxu0 0.0
    %2409 = vmatpush1.msra.mxu0 0.0
    %2410 = vmatprep.subr.mxu0 0.0
    %2411 = vmatpush1.msra.mxu0 0.0
    %2412 = vmatprep.subr.mxu0 0.0
    %2413 = vmatpush1.msra.mxu0 0.0
    %2414 = vmatprep.subr.mxu0 0.0
    %2415 = vmatpush1.msra.mxu0 0.0
    %2416 = vmatprep.subr.mxu0 0.0
    %2417 = vmatpush1.msra.mxu0 0.0
    %2418 = vmatprep.subr.mxu0 0.0
    %2419 = vmatpush1.msra.mxu0 0.0
    %2420 = vmatprep.subr.mxu0 0.0
    %2421 = vmatpush1.msra.mxu0 0.0
    %2422 = vmatprep.subr.mxu0 0.0
    %2423 = vmatpush1.msra.mxu0 0.0
    %2424 = vmatprep.subr.mxu0 0.0
    %2425 = vmatpush1.msra.mxu0 0.0
    %2426 = vmatprep.subr.mxu0 0.0
    %2427 = vmatpush1.msra.mxu0 0.0
    %2428 = vmatprep.mubr.f32.mxu0 0.0
    %v2429 = vand.u32 %v2312, 4294901760
    %v2430 = vsub.f32 %v2312, %v2429
    %v2431 = vand.u32 %v2430, 4294901760
    %v2432 = vsub.f32 %v2430, %v2431
    %v2433 = vand.u32 %v2432, 4294901760
    %2434 = vmatmul.mubr.f32.gmra.mrb[0].mxu0 %v2433
    %v2435 = vpop.f32.mrb[0].mxu0
    %v2436 = vadd.f32 %v2346, %v2435
    %v2437 = vpop.f32.mrb[0].mxu0
    %2438 = vmatprep.mubr.f32.mxu0 0.0
    %v2439 = vand.u32 %v2313, 4294901760
    %v2440 = vsub.f32 %v2313, %v2439
    %v2441 = vand.u32 %v2440, 4294901760
    %v2442 = vsub.f32 %v2440, %v2441
    %v2443 = vand.u32 %v2442, 4294901760
    %2444 = vmatmul.mubr.f32.gmra.mrb[0].mxu0 %v2443
    %v2445 = vpop.f32.mrb[0].mxu0
    %v2446 = vadd.f32 %v2346, %v2445
    %v2447 = vpop.f32.mrb[0].mxu0
    %2448 = vmatprep.mubr.f32.mxu0 0.0
    %v2449 = vand.u32 %v2314, 4294901760
    %v2450 = vsub.f32 %v2314, %v2449
    %v2451 = vand.u32 %v2450, 4294901760
    %v2452 = vsub.f32 %v2450, %v2451
    %v2453 = vand.u32 %v2452, 4294901760
    %2454 = vmatmul.mubr.f32.gmra.mrb[0].mxu0 %v2453
    %v2455 = vpop.f32.mrb[0].mxu0
    %v2456 = vadd.f32 %v2346, %v2455
    %v2457 = vpop.f32.mrb[0].mxu0
    %2458 = vmatprep.mubr.f32.mxu0 0.0
    %v2459 = vand.u32 %v2315, 4294901760
    %v2460 = vsub.f32 %v2315, %v2459
    %v2461 = vand.u32 %v2460, 4294901760
    %v2462 = vsub.f32 %v2460, %v2461
    %v2463 = vand.u32 %v2462, 4294901760
    %2464 = vmatmul.mubr.f32.gmra.mrb[0].mxu0 %v2463
    %v2465 = vpop.f32.mrb[0].mxu0
    %v2466 = vadd.f32 %v2346, %v2465
    %v2467 = vpop.f32.mrb[0].mxu0
    %2468 = vmatprep.mubr.f32.mxu0 0.0
    %v2469 = vand.u32 %v2316, 4294901760
    %v2470 = vsub.f32 %v2316, %v2469
    %v2471 = vand.u32 %v2470, 4294901760
    %v2472 = vsub.f32 %v2470, %v2471
    %v2473 = vand.u32 %v2472, 4294901760
    %2474 = vmatmul.mubr.f32.gmra.mrb[0].mxu0 %v2473
    %v2475 = vpop.f32.mrb[0].mxu0
    %v2476 = vadd.f32 %v2346, %v2475
    %v2477 = vpop.f32.mrb[0].mxu0
    %2478 = vmatprep.mubr.f32.mxu0 0.0
    %v2479 = vand.u32 %v2317, 4294901760
    %v2480 = vsub.f32 %v2317, %v2479
    %v2481 = vand.u32 %v2480, 4294901760
    %v2482 = vsub.f32 %v2480, %v2481
    %v2483 = vand.u32 %v2482, 4294901760
    %2484 = vmatmul.mubr.f32.gmra.mrb[0].mxu0 %v2483
    %v2485 = vpop.f32.mrb[0].mxu0
    %v2486 = vadd.f32 %v2346, %v2485
    %v2487 = vpop.f32.mrb[0].mxu0
    %2488 = vmatprep.mubr.f32.mxu0 0.0
    %v2489 = vand.u32 %v2318, 4294901760
    %v2490 = vsub.f32 %v2318, %v2489
    %v2491 = vand.u32 %v2490, 4294901760
    %v2492 = vsub.f32 %v2490, %v2491
    %v2493 = vand.u32 %v2492, 4294901760
    %2494 = vmatmul.mubr.f32.gmra.mrb[0].mxu0 %v2493
    %v2495 = vpop.f32.mrb[0].mxu0
    %v2496 = vadd.f32 %v2346, %v2495
    %v2497 = vpop.f32.mrb[0].mxu0
    %2498 = vmatprep.mubr.f32.mxu0 0.0
    %v2499 = vand.u32 %v2319, 4294901760
    %v2500 = vsub.f32 %v2319, %v2499
    %v2501 = vand.u32 %v2500, 4294901760
    %v2502 = vsub.f32 %v2500, %v2501
    %v2503 = vand.u32 %v2502, 4294901760
    %2504 = vmatmul.mubr.f32.gmra.mrb[0].mxu0 %v2503
    %v2505 = vpop.f32.mrb[0].mxu0
    %v2506 = vadd.f32 %v2346, %v2505
    %v2507 = vpop.f32.mrb[0].mxu0
    %2508 = vmatprep.mubr.f32.mxu0 0.0
    %v2509 = vand.u32 %v2320, 4294901760
    %v2510 = vsub.f32 %v2320, %v2509
    %v2511 = vand.u32 %v2510, 4294901760
    %v2512 = vsub.f32 %v2510, %v2511
    %v2513 = vand.u32 %v2512, 4294901760
    %2514 = vmatmul.mubr.f32.gmra.mrb[0].mxu0 %v2513
    %v2515 = vpop.f32.mrb[0].mxu0
    %v2516 = vadd.f32 %v2346, %v2515
    %v2517 = vpop.f32.mrb[0].mxu0
    %2518 = vmatprep.mubr.f32.mxu0 0.0
    %v2519 = vand.u32 %v2321, 4294901760
    %v2520 = vsub.f32 %v2321, %v2519
    %v2521 = vand.u32 %v2520, 4294901760
    %v2522 = vsub.f32 %v2520, %v2521
    %v2523 = vand.u32 %v2522, 4294901760
    %2524 = vmatmul.mubr.f32.gmra.mrb[0].mxu0 %v2523
    %v2525 = vpop.f32.mrb[0].mxu0
    %v2526 = vadd.f32 %v2346, %v2525
    %v2527 = vpop.f32.mrb[0].mxu0
    %2528 = vmatprep.mubr.f32.mxu0 0.0
    %v2529 = vand.u32 %v2322, 4294901760
    %v2530 = vsub.f32 %v2322, %v2529
    %v2531 = vand.u32 %v2530, 4294901760
    %v2532 = vsub.f32 %v2530, %v2531
    %v2533 = vand.u32 %v2532, 4294901760
    %2534 = vmatmul.mubr.f32.gmra.mrb[0].mxu0 %v2533
    %v2535 = vpop.f32.mrb[0].mxu0
    %v2536 = vadd.f32 %v2346, %v2535
    %v2537 = vpop.f32.mrb[0].mxu0
    %2538 = vmatprep.mubr.f32.mxu0 0.0
    %v2539 = vand.u32 %v2323, 4294901760
    %v2540 = vsub.f32 %v2323, %v2539
    %v2541 = vand.u32 %v2540, 4294901760
    %v2542 = vsub.f32 %v2540, %v2541
    %v2543 = vand.u32 %v2542, 4294901760
    %2544 = vmatmul.mubr.f32.gmra.mrb[0].mxu0 %v2543
    %v2545 = vpop.f32.mrb[0].mxu0
    %v2546 = vadd.f32 %v2346, %v2545
    %v2547 = vpop.f32.mrb[0].mxu0
    %2548 = vmatprep.mubr.f32.mxu0 0.0
    %v2549 = vand.u32 %v2324, 4294901760
    %v2550 = vsub.f32 %v2324, %v2549
    %v2551 = vand.u32 %v2550, 4294901760
    %v2552 = vsub.f32 %v2550, %v2551
    %v2553 = vand.u32 %v2552, 4294901760
    %2554 = vmatmul.mubr.f32.gmra.mrb[0].mxu0 %v2553
    %v2555 = vpop.f32.mrb[0].mxu0
    %v2556 = vadd.f32 %v2346, %v2555
    %v2557 = vpop.f32.mrb[0].mxu0
    %2558 = vdwg.mxu0
    %2559 = vmatprep.subr.mxu0 0.0
    %v2560 = vand.u32 %v2325, 4294901760
    %v2561 = vsub.f32 %v2325, %v2560
    %v2562 = vand.u32 %v2561, 4294901760
    %v2563 = vsub.f32 %v2561, %v2562
    %v2564 = vand.u32 %v2563, 4294901760
    %2565 = vmatpush1.msra.mxu0 %v2564
    %2566 = vmatprep.subr.mxu0 0.0
    %v2567 = vand.u32 %v2326, 4294901760
    %v2568 = vsub.f32 %v2326, %v2567
    %v2569 = vand.u32 %v2568, 4294901760
    %v2570 = vsub.f32 %v2568, %v2569
    %v2571 = vand.u32 %v2570, 4294901760
    %2572 = vmatpush1.msra.mxu0 %v2571
    %2573 = vmatprep.subr.mxu0 0.0
    %v2574 = vand.u32 %v2327, 4294901760
    %v2575 = vsub.f32 %v2327, %v2574
    %v2576 = vand.u32 %v2575, 4294901760
    %v2577 = vsub.f32 %v2575, %v2576
    %v2578 = vand.u32 %v2577, 4294901760
    %2579 = vmatpush1.msra.mxu0 %v2578
    %2580 = vmatprep.subr.mxu0 0.0
    %v2581 = vand.u32 %v2328, 4294901760
    %v2582 = vsub.f32 %v2328, %v2581
    %v2583 = vand.u32 %v2582, 4294901760
    %v2584 = vsub.f32 %v2582, %v2583
    %v2585 = vand.u32 %v2584, 4294901760
    %2586 = vmatpush1.msra.mxu0 %v2585
    %2587 = vmatprep.subr.mxu0 0.0
    %v2588 = vand.u32 %v2329, 4294901760
    %v2589 = vsub.f32 %v2329, %v2588
    %v2590 = vand.u32 %v2589, 4294901760
    %v2591 = vsub.f32 %v2589, %v2590
    %v2592 = vand.u32 %v2591, 4294901760
    %2593 = vmatpush1.msra.mxu0 %v2592
    %2594 = vmatprep.subr.mxu0 0.0
    %v2595 = vand.u32 %v2330, 4294901760
    %v2596 = vsub.f32 %v2330, %v2595
    %v2597 = vand.u32 %v2596, 4294901760
    %v2598 = vsub.f32 %v2596, %v2597
    %v2599 = vand.u32 %v2598, 4294901760
    %2600 = vmatpush1.msra.mxu0 %v2599
    %2601 = vmatprep.subr.mxu0 0.0
    %v2602 = vand.u32 %v2331, 4294901760
    %v2603 = vsub.f32 %v2331, %v2602
    %v2604 = vand.u32 %v2603, 4294901760
    %v2605 = vsub.f32 %v2603, %v2604
    %v2606 = vand.u32 %v2605, 4294901760
    %2607 = vmatpush1.msra.mxu0 %v2606
    %2608 = vmatprep.subr.mxu0 0.0
    %v2609 = vand.u32 %v2332, 4294901760
    %v2610 = vsub.f32 %v2332, %v2609
    %v2611 = vand.u32 %v2610, 4294901760
    %v2612 = vsub.f32 %v2610, %v2611
    %v2613 = vand.u32 %v2612, 4294901760
    %2614 = vmatpush1.msra.mxu0 %v2613
    %2615 = vmatprep.subr.mxu0 0.0
    %v2616 = vand.u32 %v2333, 4294901760
    %v2617 = vsub.f32 %v2333, %v2616
    %v2618 = vand.u32 %v2617, 4294901760
    %v2619 = vsub.f32 %v2617, %v2618
    %v2620 = vand.u32 %v2619, 4294901760
    %2621 = vmatpush1.msra.mxu0 %v2620
    %2622 = vmatprep.subr.mxu0 0.0
    %v2623 = vand.u32 %v2334, 4294901760
    %v2624 = vsub.f32 %v2334, %v2623
    %v2625 = vand.u32 %v2624, 4294901760
    %v2626 = vsub.f32 %v2624, %v2625
    %v2627 = vand.u32 %v2626, 4294901760
    %2628 = vmatpush1.msra.mxu0 %v2627
    %2629 = vmatprep.subr.mxu0 0.0
    %v2630 = vand.u32 %v2335, 4294901760
    %v2631 = vsub.f32 %v2335, %v2630
    %v2632 = vand.u32 %v2631, 4294901760
    %v2633 = vsub.f32 %v2631, %v2632
    %v2634 = vand.u32 %v2633, 4294901760
    %2635 = vmatpush1.msra.mxu0 %v2634
    %2636 = vmatprep.subr.mxu0 0.0
    %v2637 = vand.u32 %v2336, 4294901760
    %v2638 = vsub.f32 %v2336, %v2637
    %v2639 = vand.u32 %v2638, 4294901760
    %v2640 = vsub.f32 %v2638, %v2639
    %v2641 = vand.u32 %v2640, 4294901760
    %2642 = vmatpush1.msra.mxu0 %v2641
    %2643 = vmatprep.subr.mxu0 0.0
    %v2644 = vand.u32 %v2337, 4294901760
    %v2645 = vsub.f32 %v2337, %v2644
    %v2646 = vand.u32 %v2645, 4294901760
    %v2647 = vsub.f32 %v2645, %v2646
    %v2648 = vand.u32 %v2647, 4294901760
    %2649 = vmatpush1.msra.mxu0 %v2648
    %2650 = vmatprep.subr.mxu0 0.0
    %v2651 = vand.u32 %v2338, 4294901760
    %v2652 = vsub.f32 %v2338, %v2651
    %v2653 = vand.u32 %v2652, 4294901760
    %v2654 = vsub.f32 %v2652, %v2653
    %v2655 = vand.u32 %v2654, 4294901760
    %2656 = vmatpush1.msra.mxu0 %v2655
    %2657 = vmatprep.subr.mxu0 0.0
    %v2658 = vand.u32 %v2339, 4294901760
    %v2659 = vsub.f32 %v2339, %v2658
    %v2660 = vand.u32 %v2659, 4294901760
    %v2661 = vsub.f32 %v2659, %v2660
    %v2662 = vand.u32 %v2661, 4294901760
    %2663 = vmatpush1.msra.mxu0 %v2662
    %2664 = vmatprep.subr.mxu0 0.0
    %v2665 = vand.u32 %v2340, 4294901760
    %v2666 = vsub.f32 %v2340, %v2665
    %v2667 = vand.u32 %v2666, 4294901760
    %v2668 = vsub.f32 %v2666, %v2667
    %v2669 = vand.u32 %v2668, 4294901760
    %2670 = vmatpush1.msra.mxu0 %v2669
    %2671 = vmatprep.subr.mxu0 0.0
    %2672 = vmatpush1.msra.mxu0 0.0
    %2673 = vmatprep.subr.mxu0 0.0
    %2674 = vmatpush1.msra.mxu0 0.0
    %2675 = vmatprep.subr.mxu0 0.0
    %2676 = vmatpush1.msra.mxu0 0.0
    %2677 = vmatprep.subr.mxu0 0.0
    %2678 = vmatpush1.msra.mxu0 0.0
    %2679 = vmatprep.subr.mxu0 0.0
    %2680 = vmatpush1.msra.mxu0 0.0
    %2681 = vmatprep.subr.mxu0 0.0
    %2682 = vmatpush1.msra.mxu0 0.0
    %2683 = vmatprep.subr.mxu0 0.0
    %2684 = vmatpush1.msra.mxu0 0.0
    %2685 = vmatprep.subr.mxu0 0.0
    %2686 = vmatpush1.msra.mxu0 0.0
    %2687 = vmatprep.subr.mxu0 0.0
    %2688 = vmatpush1.msra.mxu0 0.0
    %2689 = vmatprep.subr.mxu0 0.0
    %2690 = vmatpush1.msra.mxu0 0.0
    %2691 = vmatprep.subr.mxu0 0.0
    %2692 = vmatpush1.msra.mxu0 0.0
    %2693 = vmatprep.subr.mxu0 0.0
    %2694 = vmatpush1.msra.mxu0 0.0
    %2695 = vmatprep.subr.mxu0 0.0
    %2696 = vmatpush1.msra.mxu0 0.0
    %2697 = vmatprep.subr.mxu0 0.0
    %2698 = vmatpush1.msra.mxu0 0.0
    %2699 = vmatprep.subr.mxu0 0.0
    %2700 = vmatpush1.msra.mxu0 0.0
    %2701 = vmatprep.subr.mxu0 0.0
    %2702 = vmatpush1.msra.mxu0 0.0
    %2703 = vmatprep.mubr.f32.mxu0 0.0
    %v2704 = vand.u32 %v2312, 4294901760
    %2705 = vmatmul.mubr.f32.gmra.mrb[0].mxu0 %v2704
    %v2706 = vpop.f32.mrb[0].mxu0
    %v2707 = vadd.f32 %v2436, %v2706
    %v2708 = vpop.f32.mrb[0].mxu0
    %2709 = vmatprep.mubr.f32.mxu0 0.0
    %v2710 = vand.u32 %v2313, 4294901760
    %2711 = vmatmul.mubr.f32.gmra.mrb[0].mxu0 %v2710
    %v2712 = vpop.f32.mrb[0].mxu0
    %v2713 = vadd.f32 %v2446, %v2712
    %v2714 = vpop.f32.mrb[0].mxu0
    %2715 = vmatprep.mubr.f32.mxu0 0.0
    %v2716 = vand.u32 %v2314, 4294901760
    %2717 = vmatmul.mubr.f32.gmra.mrb[0].mxu0 %v2716
    %v2718 = vpop.f32.mrb[0].mxu0
    %v2719 = vadd.f32 %v2456, %v2718
    %v2720 = vpop.f32.mrb[0].mxu0
    %2721 = vmatprep.mubr.f32.mxu0 0.0
    %v2722 = vand.u32 %v2315, 4294901760
    %2723 = vmatmul.mubr.f32.gmra.mrb[0].mxu0 %v2722
    %v2724 = vpop.f32.mrb[0].mxu0
    %v2725 = vadd.f32 %v2466, %v2724
    %v2726 = vpop.f32.mrb[0].mxu0
    %2727 = vmatprep.mubr.f32.mxu0 0.0
    %v2728 = vand.u32 %v2316, 4294901760
    %2729 = vmatmul.mubr.f32.gmra.mrb[0].mxu0 %v2728
    %v2730 = vpop.f32.mrb[0].mxu0
    %v2731 = vadd.f32 %v2476, %v2730
    %v2732 = vpop.f32.mrb[0].mxu0
    %2733 = vmatprep.mubr.f32.mxu0 0.0
    %v2734 = vand.u32 %v2317, 4294901760
    %2735 = vmatmul.mubr.f32.gmra.mrb[0].mxu0 %v2734
    %v2736 = vpop.f32.mrb[0].mxu0
    %v2737 = vadd.f32 %v2486, %v2736
    %v2738 = vpop.f32.mrb[0].mxu0
    %2739 = vmatprep.mubr.f32.mxu0 0.0
    %v2740 = vand.u32 %v2318, 4294901760
    %2741 = vmatmul.mubr.f32.gmra.mrb[0].mxu0 %v2740
    %v2742 = vpop.f32.mrb[0].mxu0
    %v2743 = vadd.f32 %v2496, %v2742
    %v2744 = vpop.f32.mrb[0].mxu0
    %2745 = vmatprep.mubr.f32.mxu0 0.0
    %v2746 = vand.u32 %v2319, 4294901760
    %2747 = vmatmul.mubr.f32.gmra.mrb[0].mxu0 %v2746
    %v2748 = vpop.f32.mrb[0].mxu0
    %v2749 = vadd.f32 %v2506, %v2748
    %v2750 = vpop.f32.mrb[0].mxu0
    %2751 = vmatprep.mubr.f32.mxu0 0.0
    %v2752 = vand.u32 %v2320, 4294901760
    %2753 = vmatmul.mubr.f32.gmra.mrb[0].mxu0 %v2752
    %v2754 = vpop.f32.mrb[0].mxu0
    %v2755 = vadd.f32 %v2516, %v2754
    %v2756 = vpop.f32.mrb[0].mxu0
    %2757 = vmatprep.mubr.f32.mxu0 0.0
    %v2758 = vand.u32 %v2321, 4294901760
    %2759 = vmatmul.mubr.f32.gmra.mrb[0].mxu0 %v2758
    %v2760 = vpop.f32.mrb[0].mxu0
    %v2761 = vadd.f32 %v2526, %v2760
    %v2762 = vpop.f32.mrb[0].mxu0
    %2763 = vmatprep.mubr.f32.mxu0 0.0
    %v2764 = vand.u32 %v2322, 4294901760
    %2765 = vmatmul.mubr.f32.gmra.mrb[0].mxu0 %v2764
    %v2766 = vpop.f32.mrb[0].mxu0
    %v2767 = vadd.f32 %v2536, %v2766
    %v2768 = vpop.f32.mrb[0].mxu0
    %2769 = vmatprep.mubr.f32.mxu0 0.0
    %v2770 = vand.u32 %v2323, 4294901760
    %2771 = vmatmul.mubr.f32.gmra.mrb[0].mxu0 %v2770
    %v2772 = vpop.f32.mrb[0].mxu0
    %v2773 = vadd.f32 %v2546, %v2772
    %v2774 = vpop.f32.mrb[0].mxu0
    %2775 = vmatprep.mubr.f32.mxu0 0.0
    %v2776 = vand.u32 %v2324, 4294901760
    %2777 = vmatmul.mubr.f32.gmra.mrb[0].mxu0 %v2776
    %v2778 = vpop.f32.mrb[0].mxu0
    %v2779 = vadd.f32 %v2556, %v2778
    %v2780 = vpop.f32.mrb[0].mxu0
    %2781 = vdwg.mxu0
    %2782 = vmatprep.subr.mxu0 0.0
    %v2783 = vand.u32 %v2325, 4294901760
    %v2784 = vsub.f32 %v2325, %v2783
    %2785 = vmatpush1.msra.mxu0 %v2784
    %2786 = vmatprep.subr.mxu0 0.0
    %v2787 = vand.u32 %v2326, 4294901760
    %v2788 = vsub.f32 %v2326, %v2787
    %2789 = vmatpush1.msra.mxu0 %v2788
    %2790 = vmatprep.subr.mxu0 0.0
    %v2791 = vand.u32 %v2327, 4294901760
    %v2792 = vsub.f32 %v2327, %v2791
    %2793 = vmatpush1.msra.mxu0 %v2792
    %2794 = vmatprep.subr.mxu0 0.0
    %v2795 = vand.u32 %v2328, 4294901760
    %v2796 = vsub.f32 %v2328, %v2795
    %2797 = vmatpush1.msra.mxu0 %v2796
    %2798 = vmatprep.subr.mxu0 0.0
    %v2799 = vand.u32 %v2329, 4294901760
    %v2800 = vsub.f32 %v2329, %v2799
    %2801 = vmatpush1.msra.mxu0 %v2800
    %2802 = vmatprep.subr.mxu0 0.0
    %v2803 = vand.u32 %v2330, 4294901760
    %v2804 = vsub.f32 %v2330, %v2803
    %2805 = vmatpush1.msra.mxu0 %v2804
    %2806 = vmatprep.subr.mxu0 0.0
    %v2807 = vand.u32 %v2331, 4294901760
    %v2808 = vsub.f32 %v2331, %v2807
    %2809 = vmatpush1.msra.mxu0 %v2808
    %2810 = vmatprep.subr.mxu0 0.0
    %v2811 = vand.u32 %v2332, 4294901760
    %v2812 = vsub.f32 %v2332, %v2811
    %2813 = vmatpush1.msra.mxu0 %v2812
    %2814 = vmatprep.subr.mxu0 0.0
    %v2815 = vand.u32 %v2333, 4294901760
    %v2816 = vsub.f32 %v2333, %v2815
    %2817 = vmatpush1.msra.mxu0 %v2816
    %2818 = vmatprep.subr.mxu0 0.0
    %v2819 = vand.u32 %v2334, 4294901760
    %v2820 = vsub.f32 %v2334, %v2819
    %2821 = vmatpush1.msra.mxu0 %v2820
    %2822 = vmatprep.subr.mxu0 0.0
    %v2823 = vand.u32 %v2335, 4294901760
    %v2824 = vsub.f32 %v2335, %v2823
    %2825 = vmatpush1.msra.mxu0 %v2824
    %2826 = vmatprep.subr.mxu0 0.0
    %v2827 = vand.u32 %v2336, 4294901760
    %v2828 = vsub.f32 %v2336, %v2827
    %2829 = vmatpush1.msra.mxu0 %v2828
    %2830 = vmatprep.subr.mxu0 0.0
    %v2831 = vand.u32 %v2337, 4294901760
    %v2832 = vsub.f32 %v2337, %v2831
    %2833 = vmatpush1.msra.mxu0 %v2832
    %2834 = vmatprep.subr.mxu0 0.0
    %v2835 = vand.u32 %v2338, 4294901760
    %v2836 = vsub.f32 %v2338, %v2835
    %2837 = vmatpush1.msra.mxu0 %v2836
    %2838 = vmatprep.subr.mxu0 0.0
    %v2839 = vand.u32 %v2339, 4294901760
    %v2840 = vsub.f32 %v2339, %v2839
    %2841 = vmatpush1.msra.mxu0 %v2840
    %2842 = vmatprep.subr.mxu0 0.0
    %v2843 = vand.u32 %v2340, 4294901760
    %v2844 = vsub.f32 %v2340, %v2843
    %2845 = vmatpush1.msra.mxu0 %v2844
    %2846 = vmatprep.subr.mxu0 0.0
    %2847 = vmatpush1.msra.mxu0 0.0
    %2848 = vmatprep.subr.mxu0 0.0
    %2849 = vmatpush1.msra.mxu0 0.0
    %2850 = vmatprep.subr.mxu0 0.0
    %2851 = vmatpush1.msra.mxu0 0.0
    %2852 = vmatprep.subr.mxu0 0.0
    %2853 = vmatpush1.msra.mxu0 0.0
    %2854 = vmatprep.subr.mxu0 0.0
    %2855 = vmatpush1.msra.mxu0 0.0
    %2856 = vmatprep.subr.mxu0 0.0
    %2857 = vmatpush1.msra.mxu0 0.0
    %2858 = vmatprep.subr.mxu0 0.0
    %2859 = vmatpush1.msra.mxu0 0.0
    %2860 = vmatprep.subr.mxu0 0.0
    %2861 = vmatpush1.msra.mxu0 0.0
    %2862 = vmatprep.subr.mxu0 0.0
    %2863 = vmatpush1.msra.mxu0 0.0
    %2864 = vmatprep.subr.mxu0 0.0
    %2865 = vmatpush1.msra.mxu0 0.0
    %2866 = vmatprep.subr.mxu0 0.0
    %2867 = vmatpush1.msra.mxu0 0.0
    %2868 = vmatprep.subr.mxu0 0.0
    %2869 = vmatpush1.msra.mxu0 0.0
    %2870 = vmatprep.subr.mxu0 0.0
    %2871 = vmatpush1.msra.mxu0 0.0
    %2872 = vmatprep.subr.mxu0 0.0
    %2873 = vmatpush1.msra.mxu0 0.0
    %2874 = vmatprep.subr.mxu0 0.0
    %2875 = vmatpush1.msra.mxu0 0.0
    %2876 = vmatprep.subr.mxu0 0.0
    %2877 = vmatpush1.msra.mxu0 0.0
    %2878 = vmatprep.mubr.f32.mxu0 0.0
    %v2879 = vand.u32 %v2312, 4294901760
    %v2880 = vsub.f32 %v2312, %v2879
    %2881 = vmatmul.mubr.f32.gmra.mrb[0].mxu0 %v2880
    %v2882 = vpop.f32.mrb[0].mxu0
    %v2883 = vadd.f32 %v2707, %v2882
    %v2884 = vpop.f32.mrb[0].mxu0
    %2885 = vmatprep.mubr.f32.mxu0 0.0
    %v2886 = vand.u32 %v2313, 4294901760
    %v2887 = vsub.f32 %v2313, %v2886
    %2888 = vmatmul.mubr.f32.gmra.mrb[0].mxu0 %v2887
    %v2889 = vpop.f32.mrb[0].mxu0
    %v2890 = vadd.f32 %v2713, %v2889
    %v2891 = vpop.f32.mrb[0].mxu0
    %2892 = vmatprep.mubr.f32.mxu0 0.0
    %v2893 = vand.u32 %v2314, 4294901760
    %v2894 = vsub.f32 %v2314, %v2893
    %2895 = vmatmul.mubr.f32.gmra.mrb[0].mxu0 %v2894
    %v2896 = vpop.f32.mrb[0].mxu0
    %v2897 = vadd.f32 %v2719, %v2896
    %v2898 = vpop.f32.mrb[0].mxu0
    %2899 = vmatprep.mubr.f32.mxu0 0.0
    %v2900 = vand.u32 %v2315, 4294901760
    %v2901 = vsub.f32 %v2315, %v2900
    %2902 = vmatmul.mubr.f32.gmra.mrb[0].mxu0 %v2901
    %v2903 = vpop.f32.mrb[0].mxu0
    %v2904 = vadd.f32 %v2725, %v2903
    %v2905 = vpop.f32.mrb[0].mxu0
    %2906 = vmatprep.mubr.f32.mxu0 0.0
    %v2907 = vand.u32 %v2316, 4294901760
    %v2908 = vsub.f32 %v2316, %v2907
    %2909 = vmatmul.mubr.f32.gmra.mrb[0].mxu0 %v2908
    %v2910 = vpop.f32.mrb[0].mxu0
    %v2911 = vadd.f32 %v2731, %v2910
    %v2912 = vpop.f32.mrb[0].mxu0
    %2913 = vmatprep.mubr.f32.mxu0 0.0
    %v2914 = vand.u32 %v2317, 4294901760
    %v2915 = vsub.f32 %v2317, %v2914
    %2916 = vmatmul.mubr.f32.gmra.mrb[0].mxu0 %v2915
    %v2917 = vpop.f32.mrb[0].mxu0
    %v2918 = vadd.f32 %v2737, %v2917
    %v2919 = vpop.f32.mrb[0].mxu0
    %2920 = vmatprep.mubr.f32.mxu0 0.0
    %v2921 = vand.u32 %v2318, 4294901760
    %v2922 = vsub.f32 %v2318, %v2921
    %2923 = vmatmul.mubr.f32.gmra.mrb[0].mxu0 %v2922
    %v2924 = vpop.f32.mrb[0].mxu0
    %v2925 = vadd.f32 %v2743, %v2924
    %v2926 = vpop.f32.mrb[0].mxu0
    %2927 = vmatprep.mubr.f32.mxu0 0.0
    %v2928 = vand.u32 %v2319, 4294901760
    %v2929 = vsub.f32 %v2319, %v2928
    %2930 = vmatmul.mubr.f32.gmra.mrb[0].mxu0 %v2929
    %v2931 = vpop.f32.mrb[0].mxu0
    %v2932 = vadd.f32 %v2749, %v2931
    %v2933 = vpop.f32.mrb[0].mxu0
    %2934 = vmatprep.mubr.f32.mxu0 0.0
    %v2935 = vand.u32 %v2320, 4294901760
    %v2936 = vsub.f32 %v2320, %v2935
    %2937 = vmatmul.mubr.f32.gmra.mrb[0].mxu0 %v2936
    %v2938 = vpop.f32.mrb[0].mxu0
    %v2939 = vadd.f32 %v2755, %v2938
    %v2940 = vpop.f32.mrb[0].mxu0
    %2941 = vmatprep.mubr.f32.mxu0 0.0
    %v2942 = vand.u32 %v2321, 4294901760
    %v2943 = vsub.f32 %v2321, %v2942
    %2944 = vmatmul.mubr.f32.gmra.mrb[0].mxu0 %v2943
    %v2945 = vpop.f32.mrb[0].mxu0
    %v2946 = vadd.f32 %v2761, %v2945
    %v2947 = vpop.f32.mrb[0].mxu0
    %2948 = vmatprep.mubr.f32.mxu0 0.0
    %v2949 = vand.u32 %v2322, 4294901760
    %v2950 = vsub.f32 %v2322, %v2949
    %2951 = vmatmul.mubr.f32.gmra.mrb[0].mxu0 %v2950
    %v2952 = vpop.f32.mrb[0].mxu0
    %v2953 = vadd.f32 %v2767, %v2952
    %v2954 = vpop.f32.mrb[0].mxu0
    %2955 = vmatprep.mubr.f32.mxu0 0.0
    %v2956 = vand.u32 %v2323, 4294901760
    %v2957 = vsub.f32 %v2323, %v2956
    %2958 = vmatmul.mubr.f32.gmra.mrb[0].mxu0 %v2957
    %v2959 = vpop.f32.mrb[0].mxu0
    %v2960 = vadd.f32 %v2773, %v2959
    %v2961 = vpop.f32.mrb[0].mxu0
    %2962 = vmatprep.mubr.f32.mxu0 0.0
    %v2963 = vand.u32 %v2324, 4294901760
    %v2964 = vsub.f32 %v2324, %v2963
    %2965 = vmatmul.mubr.f32.gmra.mrb[0].mxu0 %v2964
    %v2966 = vpop.f32.mrb[0].mxu0
    %v2967 = vadd.f32 %v2779, %v2966
    %v2968 = vpop.f32.mrb[0].mxu0
    %2969 = vdwg.mxu0
    %2970 = vmatprep.subr.mxu0 0.0
    %v2971 = vand.u32 %v2325, 4294901760
    %2972 = vmatpush1.msra.mxu0 %v2971
    %2973 = vmatprep.subr.mxu0 0.0
    %v2974 = vand.u32 %v2326, 4294901760
    %2975 = vmatpush1.msra.mxu0 %v2974
    %2976 = vmatprep.subr.mxu0 0.0
    %v2977 = vand.u32 %v2327, 4294901760
    %2978 = vmatpush1.msra.mxu0 %v2977
    %2979 = vmatprep.subr.mxu0 0.0
    %v2980 = vand.u32 %v2328, 4294901760
    %2981 = vmatpush1.msra.mxu0 %v2980
    %2982 = vmatprep.subr.mxu0 0.0
    %v2983 = vand.u32 %v2329, 4294901760
    %2984 = vmatpush1.msra.mxu0 %v2983
    %2985 = vmatprep.subr.mxu0 0.0
    %v2986 = vand.u32 %v2330, 4294901760
    %2987 = vmatpush1.msra.mxu0 %v2986
    %2988 = vmatprep.subr.mxu0 0.0
    %v2989 = vand.u32 %v2331, 4294901760
    %2990 = vmatpush1.msra.mxu0 %v2989
    %2991 = vmatprep.subr.mxu0 0.0
    %v2992 = vand.u32 %v2332, 4294901760
    %2993 = vmatpush1.msra.mxu0 %v2992
    %2994 = vmatprep.subr.mxu0 0.0
    %v2995 = vand.u32 %v2333, 4294901760
    %2996 = vmatpush1.msra.mxu0 %v2995
    %2997 = vmatprep.subr.mxu0 0.0
    %v2998 = vand.u32 %v2334, 4294901760
    %2999 = vmatpush1.msra.mxu0 %v2998
    %3000 = vmatprep.subr.mxu0 0.0
    %v3001 = vand.u32 %v2335, 4294901760
    %3002 = vmatpush1.msra.mxu0 %v3001
    %3003 = vmatprep.subr.mxu0 0.0
    %v3004 = vand.u32 %v2336, 4294901760
    %3005 = vmatpush1.msra.mxu0 %v3004
    %3006 = vmatprep.subr.mxu0 0.0
    %v3007 = vand.u32 %v2337, 4294901760
    %3008 = vmatpush1.msra.mxu0 %v3007
    %3009 = vmatprep.subr.mxu0 0.0
    %v3010 = vand.u32 %v2338, 4294901760
    %3011 = vmatpush1.msra.mxu0 %v3010
    %3012 = vmatprep.subr.mxu0 0.0
    %v3013 = vand.u32 %v2339, 4294901760
    %3014 = vmatpush1.msra.mxu0 %v3013
    %3015 = vmatprep.subr.mxu0 0.0
    %v3016 = vand.u32 %v2340, 4294901760
    %3017 = vmatpush1.msra.mxu0 %v3016
    %3018 = vmatprep.subr.mxu0 0.0
    %3019 = vmatpush1.msra.mxu0 0.0
    %3020 = vmatprep.subr.mxu0 0.0
    %3021 = vmatpush1.msra.mxu0 0.0
    %3022 = vmatprep.subr.mxu0 0.0
    %3023 = vmatpush1.msra.mxu0 0.0
    %3024 = vmatprep.subr.mxu0 0.0
    %3025 = vmatpush1.msra.mxu0 0.0
    %3026 = vmatprep.subr.mxu0 0.0
    %3027 = vmatpush1.msra.mxu0 0.0
    %3028 = vmatprep.subr.mxu0 0.0
    %3029 = vmatpush1.msra.mxu0 0.0
    %3030 = vmatprep.subr.mxu0 0.0
    %3031 = vmatpush1.msra.mxu0 0.0
    %3032 = vmatprep.subr.mxu0 0.0
    %3033 = vmatpush1.msra.mxu0 0.0
    %3034 = vmatprep.subr.mxu0 0.0
    %3035 = vmatpush1.msra.mxu0 0.0
    %3036 = vmatprep.subr.mxu0 0.0
    %3037 = vmatpush1.msra.mxu0 0.0
    %3038 = vmatprep.subr.mxu0 0.0
    %3039 = vmatpush1.msra.mxu0 0.0
    %3040 = vmatprep.subr.mxu0 0.0
    %3041 = vmatpush1.msra.mxu0 0.0
    %3042 = vmatprep.subr.mxu0 0.0
    %3043 = vmatpush1.msra.mxu0 0.0
    %3044 = vmatprep.subr.mxu0 0.0
    %3045 = vmatpush1.msra.mxu0 0.0
    %3046 = vmatprep.subr.mxu0 0.0
    %3047 = vmatpush1.msra.mxu0 0.0
    %3048 = vmatprep.subr.mxu0 0.0
    %3049 = vmatpush1.msra.mxu0 0.0
    %3050 = vmatprep.mubr.f32.mxu0 0.0
    %v3051 = vand.u32 %v2312, 4294901760
    %v3052 = vsub.f32 %v2312, %v3051
    %v3053 = vand.u32 %v3052, 4294901760
    %3054 = vmatmul.mubr.f32.gmra.mrb[0].mxu0 %v3053
    %v3055 = vpop.f32.mrb[0].mxu0
    %v3056 = vadd.f32 %v2883, %v3055
    %v3057 = vpop.f32.mrb[0].mxu0
    %3058 = vmatprep.mubr.f32.mxu0 0.0
    %v3059 = vand.u32 %v2313, 4294901760
    %v3060 = vsub.f32 %v2313, %v3059
    %v3061 = vand.u32 %v3060, 4294901760
    %3062 = vmatmul.mubr.f32.gmra.mrb[0].mxu0 %v3061
    %v3063 = vpop.f32.mrb[0].mxu0
    %v3064 = vadd.f32 %v2890, %v3063
    %v3065 = vpop.f32.mrb[0].mxu0
    %3066 = vmatprep.mubr.f32.mxu0 0.0
    %v3067 = vand.u32 %v2314, 4294901760
    %v3068 = vsub.f32 %v2314, %v3067
    %v3069 = vand.u32 %v3068, 4294901760
    %3070 = vmatmul.mubr.f32.gmra.mrb[0].mxu0 %v3069
    %v3071 = vpop.f32.mrb[0].mxu0
    %v3072 = vadd.f32 %v2897, %v3071
    %v3073 = vpop.f32.mrb[0].mxu0
    %3074 = vmatprep.mubr.f32.mxu0 0.0
    %v3075 = vand.u32 %v2315, 4294901760
    %v3076 = vsub.f32 %v2315, %v3075
    %v3077 = vand.u32 %v3076, 4294901760
    %3078 = vmatmul.mubr.f32.gmra.mrb[0].mxu0 %v3077
    %v3079 = vpop.f32.mrb[0].mxu0
    %v3080 = vadd.f32 %v2904, %v3079
    %v3081 = vpop.f32.mrb[0].mxu0
    %3082 = vmatprep.mubr.f32.mxu0 0.0
    %v3083 = vand.u32 %v2316, 4294901760
    %v3084 = vsub.f32 %v2316, %v3083
    %v3085 = vand.u32 %v3084, 4294901760
    %3086 = vmatmul.mubr.f32.gmra.mrb[0].mxu0 %v3085
    %v3087 = vpop.f32.mrb[0].mxu0
    %v3088 = vadd.f32 %v2911, %v3087
    %v3089 = vpop.f32.mrb[0].mxu0
    %3090 = vmatprep.mubr.f32.mxu0 0.0
    %v3091 = vand.u32 %v2317, 4294901760
    %v3092 = vsub.f32 %v2317, %v3091
    %v3093 = vand.u32 %v3092, 4294901760
    %3094 = vmatmul.mubr.f32.gmra.mrb[0].mxu0 %v3093
    %v3095 = vpop.f32.mrb[0].mxu0
    %v3096 = vadd.f32 %v2918, %v3095
    %v3097 = vpop.f32.mrb[0].mxu0
    %3098 = vmatprep.mubr.f32.mxu0 0.0
    %v3099 = vand.u32 %v2318, 4294901760
    %v3100 = vsub.f32 %v2318, %v3099
    %v3101 = vand.u32 %v3100, 4294901760
    %3102 = vmatmul.mubr.f32.gmra.mrb[0].mxu0 %v3101
    %v3103 = vpop.f32.mrb[0].mxu0
    %v3104 = vadd.f32 %v2925, %v3103
    %v3105 = vpop.f32.mrb[0].mxu0
    %3106 = vmatprep.mubr.f32.mxu0 0.0
    %v3107 = vand.u32 %v2319, 4294901760
    %v3108 = vsub.f32 %v2319, %v3107
    %v3109 = vand.u32 %v3108, 4294901760
    %3110 = vmatmul.mubr.f32.gmra.mrb[0].mxu0 %v3109
    %v3111 = vpop.f32.mrb[0].mxu0
    %v3112 = vadd.f32 %v2932, %v3111
    %v3113 = vpop.f32.mrb[0].mxu0
    %3114 = vmatprep.mubr.f32.mxu0 0.0
    %v3115 = vand.u32 %v2320, 4294901760
    %v3116 = vsub.f32 %v2320, %v3115
    %v3117 = vand.u32 %v3116, 4294901760
    %3118 = vmatmul.mubr.f32.gmra.mrb[0].mxu0 %v3117
    %v3119 = vpop.f32.mrb[0].mxu0
    %v3120 = vadd.f32 %v2939, %v3119
    %v3121 = vpop.f32.mrb[0].mxu0
    %3122 = vmatprep.mubr.f32.mxu0 0.0
    %v3123 = vand.u32 %v2321, 4294901760
    %v3124 = vsub.f32 %v2321, %v3123
    %v3125 = vand.u32 %v3124, 4294901760
    %3126 = vmatmul.mubr.f32.gmra.mrb[0].mxu0 %v3125
    %v3127 = vpop.f32.mrb[0].mxu0
    %v3128 = vadd.f32 %v2946, %v3127
    %v3129 = vpop.f32.mrb[0].mxu0
    %3130 = vmatprep.mubr.f32.mxu0 0.0
    %v3131 = vand.u32 %v2322, 4294901760
    %v3132 = vsub.f32 %v2322, %v3131
    %v3133 = vand.u32 %v3132, 4294901760
    %3134 = vmatmul.mubr.f32.gmra.mrb[0].mxu0 %v3133
    %v3135 = vpop.f32.mrb[0].mxu0
    %v3136 = vadd.f32 %v2953, %v3135
    %v3137 = vpop.f32.mrb[0].mxu0
    %3138 = vmatprep.mubr.f32.mxu0 0.0
    %v3139 = vand.u32 %v2323, 4294901760
    %v3140 = vsub.f32 %v2323, %v3139
    %v3141 = vand.u32 %v3140, 4294901760
    %3142 = vmatmul.mubr.f32.gmra.mrb[0].mxu0 %v3141
    %v3143 = vpop.f32.mrb[0].mxu0
    %v3144 = vadd.f32 %v2960, %v3143
    %v3145 = vpop.f32.mrb[0].mxu0
    %3146 = vmatprep.mubr.f32.mxu0 0.0
    %v3147 = vand.u32 %v2324, 4294901760
    %v3148 = vsub.f32 %v2324, %v3147
    %v3149 = vand.u32 %v3148, 4294901760
    %3150 = vmatmul.mubr.f32.gmra.mrb[0].mxu0 %v3149
    %v3151 = vpop.f32.mrb[0].mxu0
    %v3152 = vadd.f32 %v2967, %v3151
    %v3153 = vpop.f32.mrb[0].mxu0
    %3154 = vdwg.mxu0
    %3155 = vmatprep.subr.mxu0 0.0
    %v3156 = vand.u32 %v2325, 4294901760
    %v3157 = vsub.f32 %v2325, %v3156
    %v3158 = vand.u32 %v3157, 4294901760
    %3159 = vmatpush1.msra.mxu0 %v3158
    %3160 = vmatprep.subr.mxu0 0.0
    %v3161 = vand.u32 %v2326, 4294901760
    %v3162 = vsub.f32 %v2326, %v3161
    %v3163 = vand.u32 %v3162, 4294901760
    %3164 = vmatpush1.msra.mxu0 %v3163
    %3165 = vmatprep.subr.mxu0 0.0
    %v3166 = vand.u32 %v2327, 4294901760
    %v3167 = vsub.f32 %v2327, %v3166
    %v3168 = vand.u32 %v3167, 4294901760
    %3169 = vmatpush1.msra.mxu0 %v3168
    %3170 = vmatprep.subr.mxu0 0.0
    %v3171 = vand.u32 %v2328, 4294901760
    %v3172 = vsub.f32 %v2328, %v3171
    %v3173 = vand.u32 %v3172, 4294901760
    %3174 = vmatpush1.msra.mxu0 %v3173
    %3175 = vmatprep.subr.mxu0 0.0
    %v3176 = vand.u32 %v2329, 4294901760
    %v3177 = vsub.f32 %v2329, %v3176
    %v3178 = vand.u32 %v3177, 4294901760
    %3179 = vmatpush1.msra.mxu0 %v3178
    %3180 = vmatprep.subr.mxu0 0.0
    %v3181 = vand.u32 %v2330, 4294901760
    %v3182 = vsub.f32 %v2330, %v3181
    %v3183 = vand.u32 %v3182, 4294901760
    %3184 = vmatpush1.msra.mxu0 %v3183
    %3185 = vmatprep.subr.mxu0 0.0
    %v3186 = vand.u32 %v2331, 4294901760
    %v3187 = vsub.f32 %v2331, %v3186
    %v3188 = vand.u32 %v3187, 4294901760
    %3189 = vmatpush1.msra.mxu0 %v3188
    %3190 = vmatprep.subr.mxu0 0.0
    %v3191 = vand.u32 %v2332, 4294901760
    %v3192 = vsub.f32 %v2332, %v3191
    %v3193 = vand.u32 %v3192, 4294901760
    %3194 = vmatpush1.msra.mxu0 %v3193
    %3195 = vmatprep.subr.mxu0 0.0
    %v3196 = vand.u32 %v2333, 4294901760
    %v3197 = vsub.f32 %v2333, %v3196
    %v3198 = vand.u32 %v3197, 4294901760
    %3199 = vmatpush1.msra.mxu0 %v3198
    %3200 = vmatprep.subr.mxu0 0.0
    %v3201 = vand.u32 %v2334, 4294901760
    %v3202 = vsub.f32 %v2334, %v3201
    %v3203 = vand.u32 %v3202, 4294901760
    %3204 = vmatpush1.msra.mxu0 %v3203
    %3205 = vmatprep.subr.mxu0 0.0
    %v3206 = vand.u32 %v2335, 4294901760
    %v3207 = vsub.f32 %v2335, %v3206
    %v3208 = vand.u32 %v3207, 4294901760
    %3209 = vmatpush1.msra.mxu0 %v3208
    %3210 = vmatprep.subr.mxu0 0.0
    %v3211 = vand.u32 %v2336, 4294901760
    %v3212 = vsub.f32 %v2336, %v3211
    %v3213 = vand.u32 %v3212, 4294901760
    %3214 = vmatpush1.msra.mxu0 %v3213
    %3215 = vmatprep.subr.mxu0 0.0
    %v3216 = vand.u32 %v2337, 4294901760
    %v3217 = vsub.f32 %v2337, %v3216
    %v3218 = vand.u32 %v3217, 4294901760
    %3219 = vmatpush1.msra.mxu0 %v3218
    %3220 = vmatprep.subr.mxu0 0.0
    %v3221 = vand.u32 %v2338, 4294901760
    %v3222 = vsub.f32 %v2338, %v3221
    %v3223 = vand.u32 %v3222, 4294901760
    %3224 = vmatpush1.msra.mxu0 %v3223
    %3225 = vmatprep.subr.mxu0 0.0
    %v3226 = vand.u32 %v2339, 4294901760
    %v3227 = vsub.f32 %v2339, %v3226
    %v3228 = vand.u32 %v3227, 4294901760
    %3229 = vmatpush1.msra.mxu0 %v3228
    %3230 = vmatprep.subr.mxu0 0.0
    %v3231 = vand.u32 %v2340, 4294901760
    %v3232 = vsub.f32 %v2340, %v3231
    %v3233 = vand.u32 %v3232, 4294901760
    %3234 = vmatpush1.msra.mxu0 %v3233
    %3235 = vmatprep.subr.mxu0 0.0
    %3236 = vmatpush1.msra.mxu0 0.0
    %3237 = vmatprep.subr.mxu0 0.0
    %3238 = vmatpush1.msra.mxu0 0.0
    %3239 = vmatprep.subr.mxu0 0.0
    %3240 = vmatpush1.msra.mxu0 0.0
    %3241 = vmatprep.subr.mxu0 0.0
    %3242 = vmatpush1.msra.mxu0 0.0
    %3243 = vmatprep.subr.mxu0 0.0
    %3244 = vmatpush1.msra.mxu0 0.0
    %3245 = vmatprep.subr.mxu0 0.0
    %3246 = vmatpush1.msra.mxu0 0.0
    %3247 = vmatprep.subr.mxu0 0.0
    %3248 = vmatpush1.msra.mxu0 0.0
    %3249 = vmatprep.subr.mxu0 0.0
    %3250 = vmatpush1.msra.mxu0 0.0
    %3251 = vmatprep.subr.mxu0 0.0
    %3252 = vmatpush1.msra.mxu0 0.0
    %3253 = vmatprep.subr.mxu0 0.0
    %3254 = vmatpush1.msra.mxu0 0.0
    %3255 = vmatprep.subr.mxu0 0.0
    %3256 = vmatpush1.msra.mxu0 0.0
    %3257 = vmatprep.subr.mxu0 0.0
    %3258 = vmatpush1.msra.mxu0 0.0
    %3259 = vmatprep.subr.mxu0 0.0
    %3260 = vmatpush1.msra.mxu0 0.0
    %3261 = vmatprep.subr.mxu0 0.0
    %3262 = vmatpush1.msra.mxu0 0.0
    %3263 = vmatprep.subr.mxu0 0.0
    %3264 = vmatpush1.msra.mxu0 0.0
    %3265 = vmatprep.subr.mxu0 0.0
    %3266 = vmatpush1.msra.mxu0 0.0
    %3267 = vmatprep.mubr.f32.mxu0 0.0
    %v3268 = vand.u32 %v2312, 4294901760
    %3269 = vmatmul.mubr.f32.gmra.mrb[0].mxu0 %v3268
    %v3270 = vpop.f32.mrb[0].mxu0
    %v3271 = vadd.f32 %v3056, %v3270
    %v3272 = vpop.f32.mrb[0].mxu0
    %3273 = vmatprep.mubr.f32.mxu0 0.0
    %v3274 = vand.u32 %v2313, 4294901760
    %3275 = vmatmul.mubr.f32.gmra.mrb[0].mxu0 %v3274
    %v3276 = vpop.f32.mrb[0].mxu0
    %v3277 = vadd.f32 %v3064, %v3276
    %v3278 = vpop.f32.mrb[0].mxu0
    %3279 = vmatprep.mubr.f32.mxu0 0.0
    %v3280 = vand.u32 %v2314, 4294901760
    %3281 = vmatmul.mubr.f32.gmra.mrb[0].mxu0 %v3280
    %v3282 = vpop.f32.mrb[0].mxu0
    %v3283 = vadd.f32 %v3072, %v3282
    %v3284 = vpop.f32.mrb[0].mxu0
    %3285 = vmatprep.mubr.f32.mxu0 0.0
    %v3286 = vand.u32 %v2315, 4294901760
    %3287 = vmatmul.mubr.f32.gmra.mrb[0].mxu0 %v3286
    %v3288 = vpop.f32.mrb[0].mxu0
    %v3289 = vadd.f32 %v3080, %v3288
    %v3290 = vpop.f32.mrb[0].mxu0
    %3291 = vmatprep.mubr.f32.mxu0 0.0
    %v3292 = vand.u32 %v2316, 4294901760
    %3293 = vmatmul.mubr.f32.gmra.mrb[0].mxu0 %v3292
    %v3294 = vpop.f32.mrb[0].mxu0
    %v3295 = vadd.f32 %v3088, %v3294
    %v3296 = vpop.f32.mrb[0].mxu0
    %3297 = vmatprep.mubr.f32.mxu0 0.0
    %v3298 = vand.u32 %v2317, 4294901760
    %3299 = vmatmul.mubr.f32.gmra.mrb[0].mxu0 %v3298
    %v3300 = vpop.f32.mrb[0].mxu0
    %v3301 = vadd.f32 %v3096, %v3300
    %v3302 = vpop.f32.mrb[0].mxu0
    %3303 = vmatprep.mubr.f32.mxu0 0.0
    %v3304 = vand.u32 %v2318, 4294901760
    %3305 = vmatmul.mubr.f32.gmra.mrb[0].mxu0 %v3304
    %v3306 = vpop.f32.mrb[0].mxu0
    %v3307 = vadd.f32 %v3104, %v3306
    %v3308 = vpop.f32.mrb[0].mxu0
    %3309 = vmatprep.mubr.f32.mxu0 0.0
    %v3310 = vand.u32 %v2319, 4294901760
    %3311 = vmatmul.mubr.f32.gmra.mrb[0].mxu0 %v3310
    %v3312 = vpop.f32.mrb[0].mxu0
    %v3313 = vadd.f32 %v3112, %v3312
    %v3314 = vpop.f32.mrb[0].mxu0
    %3315 = vmatprep.mubr.f32.mxu0 0.0
    %v3316 = vand.u32 %v2320, 4294901760
    %3317 = vmatmul.mubr.f32.gmra.mrb[0].mxu0 %v3316
    %v3318 = vpop.f32.mrb[0].mxu0
    %v3319 = vadd.f32 %v3120, %v3318
    %v3320 = vpop.f32.mrb[0].mxu0
    %3321 = vmatprep.mubr.f32.mxu0 0.0
    %v3322 = vand.u32 %v2321, 4294901760
    %3323 = vmatmul.mubr.f32.gmra.mrb[0].mxu0 %v3322
    %v3324 = vpop.f32.mrb[0].mxu0
    %v3325 = vadd.f32 %v3128, %v3324
    %v3326 = vpop.f32.mrb[0].mxu0
    %3327 = vmatprep.mubr.f32.mxu0 0.0
    %v3328 = vand.u32 %v2322, 4294901760
    %3329 = vmatmul.mubr.f32.gmra.mrb[0].mxu0 %v3328
    %v3330 = vpop.f32.mrb[0].mxu0
    %v3331 = vadd.f32 %v3136, %v3330
    %v3332 = vpop.f32.mrb[0].mxu0
    %3333 = vmatprep.mubr.f32.mxu0 0.0
    %v3334 = vand.u32 %v2323, 4294901760
    %3335 = vmatmul.mubr.f32.gmra.mrb[0].mxu0 %v3334
    %v3336 = vpop.f32.mrb[0].mxu0
    %v3337 = vadd.f32 %v3144, %v3336
    %v3338 = vpop.f32.mrb[0].mxu0
    %3339 = vmatprep.mubr.f32.mxu0 0.0
    %v3340 = vand.u32 %v2324, 4294901760
    %3341 = vmatmul.mubr.f32.gmra.mrb[0].mxu0 %v3340
    %v3342 = vpop.f32.mrb[0].mxu0
    %v3343 = vadd.f32 %v3152, %v3342
    %v3344 = vpop.f32.mrb[0].mxu0
    %3345 = vdwg.mxu0
    %3346 = vmatprep.subr.mxu0 0.0
    %v3347 = vand.u32 %v2325, 4294901760
    %3348 = vmatpush1.msra.mxu0 %v3347
    %3349 = vmatprep.subr.mxu0 0.0
    %v3350 = vand.u32 %v2326, 4294901760
    %3351 = vmatpush1.msra.mxu0 %v3350
    %3352 = vmatprep.subr.mxu0 0.0
    %v3353 = vand.u32 %v2327, 4294901760
    %3354 = vmatpush1.msra.mxu0 %v3353
    %3355 = vmatprep.subr.mxu0 0.0
    %v3356 = vand.u32 %v2328, 4294901760
    %3357 = vmatpush1.msra.mxu0 %v3356
    %3358 = vmatprep.subr.mxu0 0.0
    %v3359 = vand.u32 %v2329, 4294901760
    %3360 = vmatpush1.msra.mxu0 %v3359
    %3361 = vmatprep.subr.mxu0 0.0
    %v3362 = vand.u32 %v2330, 4294901760
    %3363 = vmatpush1.msra.mxu0 %v3362
    %3364 = vmatprep.subr.mxu0 0.0
    %v3365 = vand.u32 %v2331, 4294901760
    %3366 = vmatpush1.msra.mxu0 %v3365
    %3367 = vmatprep.subr.mxu0 0.0
    %v3368 = vand.u32 %v2332, 4294901760
    %3369 = vmatpush1.msra.mxu0 %v3368
    %3370 = vmatprep.subr.mxu0 0.0
    %v3371 = vand.u32 %v2333, 4294901760
    %3372 = vmatpush1.msra.mxu0 %v3371
    %3373 = vmatprep.subr.mxu0 0.0
    %v3374 = vand.u32 %v2334, 4294901760
    %3375 = vmatpush1.msra.mxu0 %v3374
    %3376 = vmatprep.subr.mxu0 0.0
    %v3377 = vand.u32 %v2335, 4294901760
    %3378 = vmatpush1.msra.mxu0 %v3377
    %3379 = vmatprep.subr.mxu0 0.0
    %v3380 = vand.u32 %v2336, 4294901760
    %3381 = vmatpush1.msra.mxu0 %v3380
    %3382 = vmatprep.subr.mxu0 0.0
    %v3383 = vand.u32 %v2337, 4294901760
    %3384 = vmatpush1.msra.mxu0 %v3383
    %3385 = vmatprep.subr.mxu0 0.0
    %v3386 = vand.u32 %v2338, 4294901760
    %3387 = vmatpush1.msra.mxu0 %v3386
    %3388 = vmatprep.subr.mxu0 0.0
    %v3389 = vand.u32 %v2339, 4294901760
    %3390 = vmatpush1.msra.mxu0 %v3389
    %3391 = vmatprep.subr.mxu0 0.0
    %v3392 = vand.u32 %v2340, 4294901760
    %3393 = vmatpush1.msra.mxu0 %v3392
    %3394 = vmatprep.subr.mxu0 0.0
    %3395 = vmatpush1.msra.mxu0 0.0
    %3396 = vmatprep.subr.mxu0 0.0
    %3397 = vmatpush1.msra.mxu0 0.0
    %3398 = vmatprep.subr.mxu0 0.0
    %3399 = vmatpush1.msra.mxu0 0.0
    %3400 = vmatprep.subr.mxu0 0.0
    %3401 = vmatpush1.msra.mxu0 0.0
    %3402 = vmatprep.subr.mxu0 0.0
    %3403 = vmatpush1.msra.mxu0 0.0
    %3404 = vmatprep.subr.mxu0 0.0
    %3405 = vmatpush1.msra.mxu0 0.0
    %3406 = vmatprep.subr.mxu0 0.0
    %3407 = vmatpush1.msra.mxu0 0.0
    %3408 = vmatprep.subr.mxu0 0.0
    %3409 = vmatpush1.msra.mxu0 0.0
    %3410 = vmatprep.subr.mxu0 0.0
    %3411 = vmatpush1.msra.mxu0 0.0
    %3412 = vmatprep.subr.mxu0 0.0
    %3413 = vmatpush1.msra.mxu0 0.0
    %3414 = vmatprep.subr.mxu0 0.0
    %3415 = vmatpush1.msra.mxu0 0.0
    %3416 = vmatprep.subr.mxu0 0.0
    %3417 = vmatpush1.msra.mxu0 0.0
    %3418 = vmatprep.subr.mxu0 0.0
    %3419 = vmatpush1.msra.mxu0 0.0
    %3420 = vmatprep.subr.mxu0 0.0
    %3421 = vmatpush1.msra.mxu0 0.0
    %3422 = vmatprep.subr.mxu0 0.0
    %3423 = vmatpush1.msra.mxu0 0.0
    %3424 = vmatprep.subr.mxu0 0.0
    %3425 = vmatpush1.msra.mxu0 0.0
    %3426 = vmatprep.mubr.f32.mxu0 0.0
    %v3427 = vand.u32 %v2312, 4294901760
    %3428 = vmatmul.mubr.f32.gmra.mrb[0].mxu0 %v3427
    %v3429 = vpop.f32.mrb[0].mxu0
    %v3430 = vadd.f32 %v3271, %v3429
    %v3431 = vpop.f32.mrb[0].mxu0
    %3432 = vmatprep.mubr.f32.mxu0 0.0
    %v3433 = vand.u32 %v2313, 4294901760
    %3434 = vmatmul.mubr.f32.gmra.mrb[0].mxu0 %v3433
    %v3435 = vpop.f32.mrb[0].mxu0
    %v3436 = vadd.f32 %v3277, %v3435
    %v3437 = vpop.f32.mrb[0].mxu0
    %3438 = vmatprep.mubr.f32.mxu0 0.0
    %v3439 = vand.u32 %v2314, 4294901760
    %3440 = vmatmul.mubr.f32.gmra.mrb[0].mxu0 %v3439
    %v3441 = vpop.f32.mrb[0].mxu0
    %v3442 = vadd.f32 %v3283, %v3441
    %v3443 = vpop.f32.mrb[0].mxu0
    %3444 = vmatprep.mubr.f32.mxu0 0.0
    %v3445 = vand.u32 %v2315, 4294901760
    %3446 = vmatmul.mubr.f32.gmra.mrb[0].mxu0 %v3445
    %v3447 = vpop.f32.mrb[0].mxu0
    %v3448 = vadd.f32 %v3289, %v3447
    %v3449 = vpop.f32.mrb[0].mxu0
    %3450 = vmatprep.mubr.f32.mxu0 0.0
    %v3451 = vand.u32 %v2316, 4294901760
    %3452 = vmatmul.mubr.f32.gmra.mrb[0].mxu0 %v3451
    %v3453 = vpop.f32.mrb[0].mxu0
    %v3454 = vadd.f32 %v3295, %v3453
    %v3455 = vpop.f32.mrb[0].mxu0
    %3456 = vmatprep.mubr.f32.mxu0 0.0
    %v3457 = vand.u32 %v2317, 4294901760
    %3458 = vmatmul.mubr.f32.gmra.mrb[0].mxu0 %v3457
    %v3459 = vpop.f32.mrb[0].mxu0
    %v3460 = vadd.f32 %v3301, %v3459
    %v3461 = vpop.f32.mrb[0].mxu0
    %3462 = vmatprep.mubr.f32.mxu0 0.0
    %v3463 = vand.u32 %v2318, 4294901760
    %3464 = vmatmul.mubr.f32.gmra.mrb[0].mxu0 %v3463
    %v3465 = vpop.f32.mrb[0].mxu0
    %v3466 = vadd.f32 %v3307, %v3465
    %v3467 = vpop.f32.mrb[0].mxu0
    %3468 = vmatprep.mubr.f32.mxu0 0.0
    %v3469 = vand.u32 %v2319, 4294901760
    %3470 = vmatmul.mubr.f32.gmra.mrb[0].mxu0 %v3469
    %v3471 = vpop.f32.mrb[0].mxu0
    %v3472 = vadd.f32 %v3313, %v3471
    %v3473 = vpop.f32.mrb[0].mxu0
    %3474 = vmatprep.mubr.f32.mxu0 0.0
    %v3475 = vand.u32 %v2320, 4294901760
    %3476 = vmatmul.mubr.f32.gmra.mrb[0].mxu0 %v3475
    %v3477 = vpop.f32.mrb[0].mxu0
    %v3478 = vadd.f32 %v3319, %v3477
    %v3479 = vpop.f32.mrb[0].mxu0
    %3480 = vmatprep.mubr.f32.mxu0 0.0
    %v3481 = vand.u32 %v2321, 4294901760
    %3482 = vmatmul.mubr.f32.gmra.mrb[0].mxu0 %v3481
    %v3483 = vpop.f32.mrb[0].mxu0
    %v3484 = vadd.f32 %v3325, %v3483
    %v3485 = vpop.f32.mrb[0].mxu0
    %3486 = vmatprep.mubr.f32.mxu0 0.0
    %v3487 = vand.u32 %v2322, 4294901760
    %3488 = vmatmul.mubr.f32.gmra.mrb[0].mxu0 %v3487
    %v3489 = vpop.f32.mrb[0].mxu0
    %v3490 = vadd.f32 %v3331, %v3489
    %v3491 = vpop.f32.mrb[0].mxu0
    %3492 = vmatprep.mubr.f32.mxu0 0.0
    %v3493 = vand.u32 %v2323, 4294901760
    %3494 = vmatmul.mubr.f32.gmra.mrb[0].mxu0 %v3493
    %v3495 = vpop.f32.mrb[0].mxu0
    %v3496 = vadd.f32 %v3337, %v3495
    %v3497 = vpop.f32.mrb[0].mxu0
    %3498 = vmatprep.mubr.f32.mxu0 0.0
    %v3499 = vand.u32 %v2324, 4294901760
    %3500 = vmatmul.mubr.f32.gmra.mrb[0].mxu0 %v3499
    %v3501 = vpop.f32.mrb[0].mxu0
    %v3502 = vadd.f32 %v3343, %v3501
    %v3503 = vpop.f32.mrb[0].mxu0
    %3504 = vdwg.mxu0
    %vm3505 = vcmask 7168
    %3506 = vst.msk [vmem:[%s7] sm:$0xff] %vm3505, %v3430
    %3507 = vst.msk [vmem:[%s7 + $0x8] sm:$0xff] %vm3505, %v3436
    %3508 = vst.msk [vmem:[%s7 + $0x10] sm:$0xff] %vm3505, %v3442
    %3509 = vst.msk [vmem:[%s7 + $0x18] sm:$0xff] %vm3505, %v3448
    %3510 = vst.msk [vmem:[%s7 + $0x20] sm:$0xff] %vm3505, %v3454
    %3511 = vst.msk [vmem:[%s7 + $0x28] sm:$0xff] %vm3505, %v3460
    %3512 = vst.msk [vmem:[%s7 + $0x30] sm:$0xff] %vm3505, %v3466
    %3513 = vst.msk [vmem:[%s7 + $0x38] sm:$0xff] %vm3505, %v3472
    %3514 = vst.msk [vmem:[%s7 + $0x40] sm:$0xff] %vm3505, %v3478
    %3515 = vst.msk [vmem:[%s7 + $0x48] sm:$0xff] %vm3505, %v3484
    %3516 = vst.msk [vmem:[%s7 + $0x50] sm:$0xff] %vm3505, %v3490
    %3517 = vst.msk [vmem:[%s7 + $0x58] sm:$0xff] %vm3505, %v3496
    %3518 = vst.msk [vmem:[%s7 + $0x60] sm:$0xff] %vm3505, %v3502
    // Predicated region
    $region38: #{tpu_custom_call.1} parent=1 // pred_check
      _
    $region39: #{tpu_custom_call.1} parent=1 // pred_check_branch
      %3520 = sbr.rel (0) target = $region41
    $region40: #{tpu_custom_call.1} parent=1 // pred_region
      _
    $region41: #{tpu_custom_call.1} parent=1 // pred_fallthru
      _
    // Predicated region
    $region42: #{tpu_custom_call.1} parent=1 // pred_check
      _
    $region43: #{tpu_custom_call.1} parent=1 // pred_check_branch
      %3522 = sbr.rel (0) target = $region45
    $region44: #{tpu_custom_call.1} parent=1 // pred_region
      _
    $region45: #{tpu_custom_call.1} parent=1 // pred_fallthru
      _
    %3523 = vsyncpa [#allocation3], 1
    %3524 = vsyncpa [#allocation5], 1

// kernel: tpu_custom_call.1
$region0: #{tpu_custom_call.1}
  #allocation0 [shape = 'u32[]', space=smem, size = 0x4, offset = 0x4, fixed_abs, tag = 'smem constant byte address 0x4 - core index']
  #allocation1 [shape = 'u32[144,128]{1,0:T(1,128)}', space=vmem, size = 0x12000, scoped, tag = 'internal scratch']
  %s0 = inlined_call_operand.vmem [shape: f32[100,32], index: 0, kind: input, shape index: {}]
  %s1 = inlined_call_operand.hbm [shape: f32[32,128], index: 1, kind: input, shape index: {}]
  %s2 = inlined_call_operand.vmem [shape: f32[1,128], index: 2, kind: input, shape index: {}]
  %s3 = inlined_call_operand.vmem [shape: f32[128,128], index: 3, kind: input, shape index: {}]
  %s4 = inlined_call_operand.vmem [shape: f32[1,128], index: 4, kind: input, shape index: {}]
  %s5 = inlined_call_operand.hbm [shape: f32[128,128], index: 5, kind: input, shape index: {}]
  %s6 = inlined_call_operand.vmem [shape: f32[1,128], index: 6, kind: input, shape index: {}]
  %s7 = inlined_call_operand.vmem [shape: f32[100,1], index: 7, kind: output, shape index: {}]
  %s8 = sld [smem:[#allocation0]]
  $region46: #{tpu_custom_call.1} parent=0
    _
  %s10 = ssub.s32 1, %s8
  %s11 = scalar_select 0, %s10, %s8
  $region1: #{tpu_custom_call.1} parent=0
    #allocation2 [shape = 'u8[16384]{0}', space=vmem, size = 0x4000, scoped, tag = 'input window, operand 1, single buffered']
    #allocation3 [shape = 's32[1]{0}', space=sflag, size = 0x4, scoped, tag = 'scoped memory for tpu_custom_call.1']
    #allocation4 [shape = 'u8[65536]{0}', space=vmem, size = 0x10000, scoped, tag = 'input window, operand 5, single buffered']
    #allocation5 [shape = 's32[1]{0}', space=sflag, size = 0x4, scoped, tag = 'scoped memory for tpu_custom_call.1']
    %12 = vsyncpa [#allocation3], 0
    %13 = vsyncpa [#allocation5], 0
    // Predicated region
    $region2: #{tpu_custom_call.1} parent=1 // pred_check
      _
    $region3: #{tpu_custom_call.1} parent=1 // pred_check_branch
      %15 = sbr.rel (0) target = $region5
    $region4: #{tpu_custom_call.1} parent=1 // pred_region
      _
    $region5: #{tpu_custom_call.1} parent=1 // pred_fallthru
      _
    // Predicated region
    $region6: #{tpu_custom_call.1} parent=1 // pred_check
      _
    $region7: #{tpu_custom_call.1} parent=1 // pred_check_branch
      %17 = sbr.rel (0) target = $region9
    $region8: #{tpu_custom_call.1} parent=1 // pred_region
      %s19 = ssub.s32 512, 512
      %20 = vsyncadd [#allocation3], %s19
      %s21 = sshll.u32 [#allocation2], 4
      %s22 = int_to_ptr.vmem [resolvable:$true] %s21
      %27 = dma.hbm_to_vmem [thread:$0]  %s1, 512, %s22, [#allocation3], 128, 128, 8
    $region9: #{tpu_custom_call.1} parent=1 // pred_fallthru
      _
    // Predicated region
    $region10: #{tpu_custom_call.1} parent=1 // pred_check
      _
    $region11: #{tpu_custom_call.1} parent=1 // pred_check_branch
      %29 = sbr.rel (0) target = $region13
    $region12: #{tpu_custom_call.1} parent=1 // pred_region
      _
    $region13: #{tpu_custom_call.1} parent=1 // pred_fallthru
      _
    // Predicated region
    $region14: #{tpu_custom_call.1} parent=1 // pred_check
      _
    $region15: #{tpu_custom_call.1} parent=1 // pred_check_branch
      %31 = sbr.rel (0) target = $region17
    $region16: #{tpu_custom_call.1} parent=1 // pred_region
      _
    $region17: #{tpu_custom_call.1} parent=1 // pred_fallthru
      _
    // Predicated region
    $region18: #{tpu_custom_call.1} parent=1 // pred_check
      _
    $region19: #{tpu_custom_call.1} parent=1 // pred_check_branch
      %33 = sbr.rel (0) target = $region21
    $region20: #{tpu_custom_call.1} parent=1 // pred_region
      _
    $region21: #{tpu_custom_call.1} parent=1 // pred_fallthru
      _
    // Predicated region
    $region22: #{tpu_custom_call.1} parent=1 // pred_check
      _
    $region23: #{tpu_custom_call.1} parent=1 // pred_check_branch
      %35 = sbr.rel (0) target = $region25
    $region24: #{tpu_custom_call.1} parent=1 // pred_region
      %s37 = ssub.s32 2048, 2048
      %38 = vsyncadd [#allocation5], %s37
      %s39 = sshll.u32 [#allocation4], 4
      %s40 = int_to_ptr.vmem [resolvable:$true] %s39
      %45 = dma.hbm_to_vmem [thread:$0]  %s5, 2048, %s40, [#allocation5], 128, 128, 8
    $region25: #{tpu_custom_call.1} parent=1 // pred_fallthru
      _
    // Predicated region
    $region26: #{tpu_custom_call.1} parent=1 // pred_check
      _
    $region27: #{tpu_custom_call.1} parent=1 // pred_check_branch
      %47 = sbr.rel (0) target = $region29
    $region28: #{tpu_custom_call.1} parent=1 // pred_region
      _
    $region29: #{tpu_custom_call.1} parent=1 // pred_fallthru
      _
    // Predicated region
    $region30: #{tpu_custom_call.1} parent=1 // pred_check
      _
    $region31: #{tpu_custom_call.1} parent=1 // pred_check_branch
      %49 = sbr.rel (0) target = $region33
    $region32: #{tpu_custom_call.1} parent=1 // pred_region
      %50 = dma.done [#allocation3], 512
    $region33: #{tpu_custom_call.1} parent=1 // pred_fallthru
      _
    // Predicated region
    $region34: #{tpu_custom_call.1} parent=1 // pred_check
      _
    $region35: #{tpu_custom_call.1} parent=1 // pred_check_branch
      %52 = sbr.rel (0) target = $region37
    $region36: #{tpu_custom_call.1} parent=1 // pred_region
      %53 = dma.done [#allocation5], 2048
    $region37: #{tpu_custom_call.1} parent=1 // pred_fallthru
      _
    %v54 = vld [vmem:[%s0] sm:$0xff]
    %v55 = vld [vmem:[%s0 + $0x8] sm:$0xff]
    %v56 = vld [vmem:[%s0 + $0x10] sm:$0xff]
    %v57 = vld [vmem:[%s0 + $0x18] sm:$0xff]
    %v58 = vld [vmem:[%s0 + $0x20] sm:$0xff]
    %v59 = vld [vmem:[%s0 + $0x28] sm:$0xff]
    %v60 = vld [vmem:[%s0 + $0x30] sm:$0xff]
    %v61 = vld [vmem:[%s0 + $0x38] sm:$0xff]
    %v62 = vld [vmem:[%s0 + $0x40] sm:$0xff]
    %v63 = vld [vmem:[%s0 + $0x48] sm:$0xff]
    %v64 = vld [vmem:[%s0 + $0x50] sm:$0xff]
    %v65 = vld [vmem:[%s0 + $0x58] sm:$0xff]
    %v66 = vld [vmem:[%s0 + $0x60] sm:$0xff]
    %v67 = vld [vmem:[#allocation2] sm:$0xff]
    %v68 = vld [vmem:[#allocation2 + $0x8] sm:$0xff]
    %v69 = vld [vmem:[#allocation2 + $0x10] sm:$0xff]
    %v70 = vld [vmem:[#allocation2 + $0x18] sm:$0xff]
    %v71 = vld [vmem:[%s2] sm:$0x1]
    %v73 = vlaneseq
    %v74 = vshrl.u32 %v73, 7
    %v75 = vsub.s32 0, %v74
    %v76 = vrot.slane %v71, %v75
    %vm78 = vcmask 261120
    %v80 = vsel %vm78, %v54, 0
    %v83 = vsel %vm78, %v55, 0
    %v86 = vsel %vm78, %v56, 0
    %v89 = vsel %vm78, %v57, 0
    %v92 = vsel %vm78, %v58, 0
    %v95 = vsel %vm78, %v59, 0
    %v98 = vsel %vm78, %v60, 0
    %v101 = vsel %vm78, %v61, 0
    %v104 = vsel %vm78, %v62, 0
    %v107 = vsel %vm78, %v63, 0
    %v110 = vsel %vm78, %v64, 0
    %v113 = vsel %vm78, %v65, 0
    %v116 = vsel %vm78, %v66, 0
    %118 = vmatprep.subr.mxu0 0.0
    %v119 = vand.u32 %v67, 4294901760
    %120 = vmatpush1.msra.mxu0 %v119
    %121 = vmatprep.subr.mxu0 0.0
    %v122 = vand.u32 %v68, 4294901760
    %123 = vmatpush1.msra.mxu0 %v122
    %124 = vmatprep.subr.mxu0 0.0
    %v125 = vand.u32 %v69, 4294901760
    %126 = vmatpush1.msra.mxu0 %v125
    %127 = vmatprep.subr.mxu0 0.0
    %v128 = vand.u32 %v70, 4294901760
    %129 = vmatpush1.msra.mxu0 %v128
    %130 = vmatprep.subr.mxu0 0.0
    %131 = vmatpush1.msra.mxu0 0.0
    %132 = vmatprep.subr.mxu0 0.0
    %133 = vmatpush1.msra.mxu0 0.0
    %134 = vmatprep.subr.mxu0 0.0
    %135 = vmatpush1.msra.mxu0 0.0
    %136 = vmatprep.subr.mxu0 0.0
    %137 = vmatpush1.msra.mxu0 0.0
    %138 = vmatprep.subr.mxu0 0.0
    %139 = vmatpush1.msra.mxu0 0.0
    %140 = vmatprep.subr.mxu0 0.0
    %141 = vmatpush1.msra.mxu0 0.0
    %142 = vmatprep.subr.mxu0 0.0
    %143 = vmatpush1.msra.mxu0 0.0
    %144 = vmatprep.subr.mxu0 0.0
    %145 = vmatpush1.msra.mxu0 0.0
    %146 = vmatprep.subr.mxu0 0.0
    %147 = vmatpush1.msra.mxu0 0.0
    %148 = vmatprep.subr.mxu0 0.0
    %149 = vmatpush1.msra.mxu0 0.0
    %150 = vmatprep.subr.mxu0 0.0
    %151 = vmatpush1.msra.mxu0 0.0
    %152 = vmatprep.subr.mxu0 0.0
    %153 = vmatpush1.msra.mxu0 0.0
    %154 = vmatprep.subr.mxu0 0.0
    %155 = vmatpush1.msra.mxu0 0.0
    %156 = vmatprep.subr.mxu0 0.0
    %157 = vmatpush1.msra.mxu0 0.0
    %158 = vmatprep.subr.mxu0 0.0
    %159 = vmatpush1.msra.mxu0 0.0
    %160 = vmatprep.subr.mxu0 0.0
    %161 = vmatpush1.msra.mxu0 0.0
    %162 = vmatprep.subr.mxu0 0.0
    %163 = vmatpush1.msra.mxu0 0.0
    %164 = vmatprep.subr.mxu0 0.0
    %165 = vmatpush1.msra.mxu0 0.0
    %166 = vmatprep.subr.mxu0 0.0
    %167 = vmatpush1.msra.mxu0 0.0
    %168 = vmatprep.subr.mxu0 0.0
    %169 = vmatpush1.msra.mxu0 0.0
    %170 = vmatprep.subr.mxu0 0.0
    %171 = vmatpush1.msra.mxu0 0.0
    %172 = vmatprep.subr.mxu0 0.0
    %173 = vmatpush1.msra.mxu0 0.0
    %174 = vmatprep.subr.mxu0 0.0
    %175 = vmatpush1.msra.mxu0 0.0
    %176 = vmatprep.subr.mxu0 0.0
    %177 = vmatpush1.msra.mxu0 0.0
    %178 = vmatprep.subr.mxu0 0.0
    %179 = vmatpush1.msra.mxu0 0.0
    %180 = vmatprep.subr.mxu0 0.0
    %181 = vmatpush1.msra.mxu0 0.0
    %182 = vmatprep.subr.mxu0 0.0
    %183 = vmatpush1.msra.mxu0 0.0
    %184 = vmatprep.subr.mxu0 0.0
    %185 = vmatpush1.msra.mxu0 0.0
    %186 = vmatprep.mubr.f32.mxu0 0.0
    %v187 = vand.u32 %v80, 4294901760
    %v188 = vsub.f32 %v80, %v187
    %v189 = vand.u32 %v188, 4294901760
    %v190 = vsub.f32 %v188, %v189
    %v191 = vand.u32 %v190, 4294901760
    %192 = vmatmul.mubr.f32.gmra.mrb[0].mxu0 %v191
    %v193 = vpop.f32.mrb[0].mxu0
    %v194 = vadd.f32 %v76, %v193
    %v195 = vpop.f32.mrb[0].mxu0
    %196 = vmatprep.mubr.f32.mxu0 0.0
    %v197 = vand.u32 %v83, 4294901760
    %v198 = vsub.f32 %v83, %v197
    %v199 = vand.u32 %v198, 4294901760
    %v200 = vsub.f32 %v198, %v199
    %v201 = vand.u32 %v200, 4294901760
    %202 = vmatmul.mubr.f32.gmra.mrb[0].mxu0 %v201
    %v203 = vpop.f32.mrb[0].mxu0
    %v204 = vadd.f32 %v76, %v203
    %v205 = vpop.f32.mrb[0].mxu0
    %206 = vmatprep.mubr.f32.mxu0 0.0
    %v207 = vand.u32 %v86, 4294901760
    %v208 = vsub.f32 %v86, %v207
    %v209 = vand.u32 %v208, 4294901760
    %v210 = vsub.f32 %v208, %v209
    %v211 = vand.u32 %v210, 4294901760
    %212 = vmatmul.mubr.f32.gmra.mrb[0].mxu0 %v211
    %v213 = vpop.f32.mrb[0].mxu0
    %v214 = vadd.f32 %v76, %v213
    %v215 = vpop.f32.mrb[0].mxu0
    %216 = vmatprep.mubr.f32.mxu0 0.0
    %v217 = vand.u32 %v89, 4294901760
    %v218 = vsub.f32 %v89, %v217
    %v219 = vand.u32 %v218, 4294901760
    %v220 = vsub.f32 %v218, %v219
    %v221 = vand.u32 %v220, 4294901760
    %222 = vmatmul.mubr.f32.gmra.mrb[0].mxu0 %v221
    %v223 = vpop.f32.mrb[0].mxu0
    %v224 = vadd.f32 %v76, %v223
    %v225 = vpop.f32.mrb[0].mxu0
    %226 = vmatprep.mubr.f32.mxu0 0.0
    %v227 = vand.u32 %v92, 4294901760
    %v228 = vsub.f32 %v92, %v227
    %v229 = vand.u32 %v228, 4294901760
    %v230 = vsub.f32 %v228, %v229
    %v231 = vand.u32 %v230, 4294901760
    %232 = vmatmul.mubr.f32.gmra.mrb[0].mxu0 %v231
    %v233 = vpop.f32.mrb[0].mxu0
    %v234 = vadd.f32 %v76, %v233
    %v235 = vpop.f32.mrb[0].mxu0
    %236 = vmatprep.mubr.f32.mxu0 0.0
    %v237 = vand.u32 %v95, 4294901760
    %v238 = vsub.f32 %v95, %v237
    %v239 = vand.u32 %v238, 4294901760
    %v240 = vsub.f32 %v238, %v239
    %v241 = vand.u32 %v240, 4294901760
    %242 = vmatmul.mubr.f32.gmra.mrb[0].mxu0 %v241
    %v243 = vpop.f32.mrb[0].mxu0
    %v244 = vadd.f32 %v76, %v243
    %v245 = vpop.f32.mrb[0].mxu0
    %246 = vmatprep.mubr.f32.mxu0 0.0
    %v247 = vand.u32 %v98, 4294901760
    %v248 = vsub.f32 %v98, %v247
    %v249 = vand.u32 %v248, 4294901760
    %v250 = vsub.f32 %v248, %v249
    %v251 = vand.u32 %v250, 4294901760
    %252 = vmatmul.mubr.f32.gmra.mrb[0].mxu0 %v251
    %v253 = vpop.f32.mrb[0].mxu0
    %v254 = vadd.f32 %v76, %v253
    %v255 = vpop.f32.mrb[0].mxu0
    %256 = vmatprep.mubr.f32.mxu0 0.0
    %v257 = vand.u32 %v101, 4294901760
    %v258 = vsub.f32 %v101, %v257
    %v259 = vand.u32 %v258, 4294901760
    %v260 = vsub.f32 %v258, %v259
    %v261 = vand.u32 %v260, 4294901760
    %262 = vmatmul.mubr.f32.gmra.mrb[0].mxu0 %v261
    %v263 = vpop.f32.mrb[0].mxu0
    %v264 = vadd.f32 %v76, %v263
    %v265 = vpop.f32.mrb[0].mxu0
    %266 = vmatprep.mubr.f32.mxu0 0.0
    %v267 = vand.u32 %v104, 4294901760
    %v268 = vsub.f32 %v104, %v267
    %v269 = vand.u32 %v268, 4294901760
    %v270 = vsub.f32 %v268, %v269
    %v271 = vand.u32 %v270, 4294901760
    %272 = vmatmul.mubr.f32.gmra.mrb[0].mxu0 %v271
    %v273 = vpop.f32.mrb[0].mxu0
    %v274 = vadd.f32 %v76, %v273
    %v275 = vpop.f32.mrb[0].mxu0
    %276 = vmatprep.mubr.f32.mxu0 0.0
    %v277 = vand.u32 %v107, 4294901760
    %v278 = vsub.f32 %v107, %v277
    %v279 = vand.u32 %v278, 4294901760
    %v280 = vsub.f32 %v278, %v279
    %v281 = vand.u32 %v280, 4294901760
    %282 = vmatmul.mubr.f32.gmra.mrb[0].mxu0 %v281
    %v283 = vpop.f32.mrb[0].mxu0
    %v284 = vadd.f32 %v76, %v283
    %v285 = vpop.f32.mrb[0].mxu0
    %286 = vmatprep.mubr.f32.mxu0 0.0
    %v287 = vand.u32 %v110, 4294901760
    %v288 = vsub.f32 %v110, %v287
    %v289 = vand.u32 %v288, 4294901760
    %v290 = vsub.f32 %v288, %v289
    %v291 = vand.u32 %v290, 4294901760
    %292 = vmatmul.mubr.f32.gmra.mrb[0].mxu0 %v291
    %v293 = vpop.f32.mrb[0].mxu0
    %v294 = vadd.f32 %v76, %v293
    %v295 = vpop.f32.mrb[0].mxu0
    %296 = vmatprep.mubr.f32.mxu0 0.0
    %v297 = vand.u32 %v113, 4294901760
    %v298 = vsub.f32 %v113, %v297
    %v299 = vand.u32 %v298, 4294901760
    %v300 = vsub.f32 %v298, %v299
    %v301 = vand.u32 %v300, 4294901760
    %302 = vmatmul.mubr.f32.gmra.mrb[0].mxu0 %v301
    %v303 = vpop.f32.mrb[0].mxu0
    %v304 = vadd.f32 %v76, %v303
    %v305 = vpop.f32.mrb[0].mxu0
    %306 = vmatprep.mubr.f32.mxu0 0.0
    %v307 = vand.u32 %v116, 4294901760
    %v308 = vsub.f32 %v116, %v307
    %v309 = vand.u32 %v308, 4294901760
    %v310 = vsub.f32 %v308, %v309
    %v311 = vand.u32 %v310, 4294901760
    %312 = vmatmul.mubr.f32.gmra.mrb[0].mxu0 %v311
    %v313 = vpop.f32.mrb[0].mxu0
    %v314 = vadd.f32 %v76, %v313
    %v315 = vpop.f32.mrb[0].mxu0
    %316 = vdwg.mxu0
    %317 = vmatprep.subr.mxu0 0.0
    %v318 = vand.u32 %v67, 4294901760
    %v319 = vsub.f32 %v67, %v318
    %v320 = vand.u32 %v319, 4294901760
    %v321 = vsub.f32 %v319, %v320
    %v322 = vand.u32 %v321, 4294901760
    %323 = vmatpush1.msra.mxu0 %v322
    %324 = vmatprep.subr.mxu0 0.0
    %v325 = vand.u32 %v68, 4294901760
    %v326 = vsub.f32 %v68, %v325
    %v327 = vand.u32 %v326, 4294901760
    %v328 = vsub.f32 %v326, %v327
    %v329 = vand.u32 %v328, 4294901760
    %330 = vmatpush1.msra.mxu0 %v329
    %331 = vmatprep.subr.mxu0 0.0
    %v332 = vand.u32 %v69, 4294901760
    %v333 = vsub.f32 %v69, %v332
    %v334 = vand.u32 %v333, 4294901760
    %v335 = vsub.f32 %v333, %v334
    %v336 = vand.u32 %v335, 4294901760
    %337 = vmatpush1.msra.mxu0 %v336
    %338 = vmatprep.subr.mxu0 0.0
    %v339 = vand.u32 %v70, 4294901760
    %v340 = vsub.f32 %v70, %v339
    %v341 = vand.u32 %v340, 4294901760
    %v342 = vsub.f32 %v340, %v341
    %v343 = vand.u32 %v342, 4294901760
    %344 = vmatpush1.msra.mxu0 %v343
    %345 = vmatprep.subr.mxu0 0.0
    %346 = vmatpush1.msra.mxu0 0.0
    %347 = vmatprep.subr.mxu0 0.0
    %348 = vmatpush1.msra.mxu0 0.0
    %349 = vmatprep.subr.mxu0 0.0
    %350 = vmatpush1.msra.mxu0 0.0
    %351 = vmatprep.subr.mxu0 0.0
    %352 = vmatpush1.msra.mxu0 0.0
    %353 = vmatprep.subr.mxu0 0.0
    %354 = vmatpush1.msra.mxu0 0.0
    %355 = vmatprep.subr.mxu0 0.0
    %356 = vmatpush1.msra.mxu0 0.0
    %357 = vmatprep.subr.mxu0 0.0
    %358 = vmatpush1.msra.mxu0 0.0
    %359 = vmatprep.subr.mxu0 0.0
    %360 = vmatpush1.msra.mxu0 0.0
    %361 = vmatprep.subr.mxu0 0.0
    %362 = vmatpush1.msra.mxu0 0.0
    %363 = vmatprep.subr.mxu0 0.0
    %364 = vmatpush1.msra.mxu0 0.0
    %365 = vmatprep.subr.mxu0 0.0
    %366 = vmatpush1.msra.mxu0 0.0
    %367 = vmatprep.subr.mxu0 0.0
    %368 = vmatpush1.msra.mxu0 0.0
    %369 = vmatprep.subr.mxu0 0.0
    %370 = vmatpush1.msra.mxu0 0.0
    %371 = vmatprep.subr.mxu0 0.0
    %372 = vmatpush1.msra.mxu0 0.0
    %373 = vmatprep.subr.mxu0 0.0
    %374 = vmatpush1.msra.mxu0 0.0
    %375 = vmatprep.subr.mxu0 0.0
    %376 = vmatpush1.msra.mxu0 0.0
    %377 = vmatprep.subr.mxu0 0.0
    %378 = vmatpush1.msra.mxu0 0.0
    %379 = vmatprep.subr.mxu0 0.0
    %380 = vmatpush1.msra.mxu0 0.0
    %381 = vmatprep.subr.mxu0 0.0
    %382 = vmatpush1.msra.mxu0 0.0
    %383 = vmatprep.subr.mxu0 0.0
    %384 = vmatpush1.msra.mxu0 0.0
    %385 = vmatprep.subr.mxu0 0.0
    %386 = vmatpush1.msra.mxu0 0.0
    %387 = vmatprep.subr.mxu0 0.0
    %388 = vmatpush1.msra.mxu0 0.0
    %389 = vmatprep.subr.mxu0 0.0
    %390 = vmatpush1.msra.mxu0 0.0
    %391 = vmatprep.subr.mxu0 0.0
    %392 = vmatpush1.msra.mxu0 0.0
    %393 = vmatprep.subr.mxu0 0.0
    %394 = vmatpush1.msra.mxu0 0.0
    %395 = vmatprep.subr.mxu0 0.0
    %396 = vmatpush1.msra.mxu0 0.0
    %397 = vmatprep.subr.mxu0 0.0
    %398 = vmatpush1.msra.mxu0 0.0
    %399 = vmatprep.subr.mxu0 0.0
    %400 = vmatpush1.msra.mxu0 0.0
    %401 = vmatprep.mubr.f32.mxu0 0.0
    %v402 = vand.u32 %v80, 4294901760
    %403 = vmatmul.mubr.f32.gmra.mrb[0].mxu0 %v402
    %v404 = vpop.f32.mrb[0].mxu0
    %v405 = vadd.f32 %v194, %v404
    %v406 = vpop.f32.mrb[0].mxu0
    %407 = vmatprep.mubr.f32.mxu0 0.0
    %v408 = vand.u32 %v83, 4294901760
    %409 = vmatmul.mubr.f32.gmra.mrb[0].mxu0 %v408
    %v410 = vpop.f32.mrb[0].mxu0
    %v411 = vadd.f32 %v204, %v410
    %v412 = vpop.f32.mrb[0].mxu0
    %413 = vmatprep.mubr.f32.mxu0 0.0
    %v414 = vand.u32 %v86, 4294901760
    %415 = vmatmul.mubr.f32.gmra.mrb[0].mxu0 %v414
    %v416 = vpop.f32.mrb[0].mxu0
    %v417 = vadd.f32 %v214, %v416
    %v418 = vpop.f32.mrb[0].mxu0
    %419 = vmatprep.mubr.f32.mxu0 0.0
    %v420 = vand.u32 %v89, 4294901760
    %421 = vmatmul.mubr.f32.gmra.mrb[0].mxu0 %v420
    %v422 = vpop.f32.mrb[0].mxu0
    %v423 = vadd.f32 %v224, %v422
    %v424 = vpop.f32.mrb[0].mxu0
    %425 = vmatprep.mubr.f32.mxu0 0.0
    %v426 = vand.u32 %v92, 4294901760
    %427 = vmatmul.mubr.f32.gmra.mrb[0].mxu0 %v426
    %v428 = vpop.f32.mrb[0].mxu0
    %v429 = vadd.f32 %v234, %v428
    %v430 = vpop.f32.mrb[0].mxu0
    %431 = vmatprep.mubr.f32.mxu0 0.0
    %v432 = vand.u32 %v95, 4294901760
    %433 = vmatmul.mubr.f32.gmra.mrb[0].mxu0 %v432
    %v434 = vpop.f32.mrb[0].mxu0
    %v435 = vadd.f32 %v244, %v434
    %v436 = vpop.f32.mrb[0].mxu0
    %437 = vmatprep.mubr.f32.mxu0 0.0
    %v438 = vand.u32 %v98, 4294901760
    %439 = vmatmul.mubr.f32.gmra.mrb[0].mxu0 %v438
    %v440 = vpop.f32.mrb[0].mxu0
    %v441 = vadd.f32 %v254, %v440
    %v442 = vpop.f32.mrb[0].mxu0
    %443 = vmatprep.mubr.f32.mxu0 0.0
    %v444 = vand.u32 %v101, 4294901760
    %445 = vmatmul.mubr.f32.gmra.mrb[0].mxu0 %v444
    %v446 = vpop.f32.mrb[0].mxu0
    %v447 = vadd.f32 %v264, %v446
    %v448 = vpop.f32.mrb[0].mxu0
    %449 = vmatprep.mubr.f32.mxu0 0.0
    %v450 = vand.u32 %v104, 4294901760
    %451 = vmatmul.mubr.f32.gmra.mrb[0].mxu0 %v450
    %v452 = vpop.f32.mrb[0].mxu0
    %v453 = vadd.f32 %v274, %v452
    %v454 = vpop.f32.mrb[0].mxu0
    %455 = vmatprep.mubr.f32.mxu0 0.0
    %v456 = vand.u32 %v107, 4294901760
    %457 = vmatmul.mubr.f32.gmra.mrb[0].mxu0 %v456
    %v458 = vpop.f32.mrb[0].mxu0
    %v459 = vadd.f32 %v284, %v458
    %v460 = vpop.f32.mrb[0].mxu0
    %461 = vmatprep.mubr.f32.mxu0 0.0
    %v462 = vand.u32 %v110, 4294901760
    %463 = vmatmul.mubr.f32.gmra.mrb[0].mxu0 %v462
    %v464 = vpop.f32.mrb[0].mxu0
    %v465 = vadd.f32 %v294, %v464
    %v466 = vpop.f32.mrb[0].mxu0
    %467 = vmatprep.mubr.f32.mxu0 0.0
    %v468 = vand.u32 %v113, 4294901760
    %469 = vmatmul.mubr.f32.gmra.mrb[0].mxu0 %v468
    %v470 = vpop.f32.mrb[0].mxu0
    %v471 = vadd.f32 %v304, %v470
    %v472 = vpop.f32.mrb[0].mxu0
    %473 = vmatprep.mubr.f32.mxu0 0.0
    %v474 = vand.u32 %v116, 4294901760
    %475 = vmatmul.mubr.f32.gmra.mrb[0].mxu0 %v474
    %v476 = vpop.f32.mrb[0].mxu0
    %v477 = vadd.f32 %v314, %v476
    %v478 = vpop.f32.mrb[0].mxu0
    %479 = vdwg.mxu0
    %480 = vmatprep.subr.mxu0 0.0
    %v481 = vand.u32 %v67, 4294901760
    %v482 = vsub.f32 %v67, %v481
    %483 = vmatpush1.msra.mxu0 %v482
    %484 = vmatprep.subr.mxu0 0.0
    %v485 = vand.u32 %v68, 4294901760
    %v486 = vsub.f32 %v68, %v485
    %487 = vmatpush1.msra.mxu0 %v486
    %488 = vmatprep.subr.mxu0 0.0
    %v489 = vand.u32 %v69, 4294901760
    %v490 = vsub.f32 %v69, %v489
    %491 = vmatpush1.msra.mxu0 %v490
    %492 = vmatprep.subr.mxu0 0.0
    %v493 = vand.u32 %v70, 4294901760
    %v494 = vsub.f32 %v70, %v493
    %495 = vmatpush1.msra.mxu0 %v494
    %496 = vmatprep.subr.mxu0 0.0
    %497 = vmatpush1.msra.mxu0 0.0
    %498 = vmatprep.subr.mxu0 0.0
    %499 = vmatpush1.msra.mxu0 0.0
    %500 = vmatprep.subr.mxu0 0.0
    %501 = vmatpush1.msra.mxu0 0.0
    %502 = vmatprep.subr.mxu0 0.0
    %503 = vmatpush1.msra.mxu0 0.0
    %504 = vmatprep.subr.mxu0 0.0
    %505 = vmatpush1.msra.mxu0 0.0
    %506 = vmatprep.subr.mxu0 0.0
    %507 = vmatpush1.msra.mxu0 0.0
    %508 = vmatprep.subr.mxu0 0.0
    %509 = vmatpush1.msra.mxu0 0.0
    %510 = vmatprep.subr.mxu0 0.0
    %511 = vmatpush1.msra.mxu0 0.0
    %512 = vmatprep.subr.mxu0 0.0
    %513 = vmatpush1.msra.mxu0 0.0
    %514 = vmatprep.subr.mxu0 0.0
    %515 = vmatpush1.msra.mxu0 0.0
    %516 = vmatprep.subr.mxu0 0.0
    %517 = vmatpush1.msra.mxu0 0.0
    %518 = vmatprep.subr.mxu0 0.0
    %519 = vmatpush1.msra.mxu0 0.0
    %520 = vmatprep.subr.mxu0 0.0
    %521 = vmatpush1.msra.mxu0 0.0
    %522 = vmatprep.subr.mxu0 0.0
    %523 = vmatpush1.msra.mxu0 0.0
    %524 = vmatprep.subr.mxu0 0.0
    %525 = vmatpush1.msra.mxu0 0.0
    %526 = vmatprep.subr.mxu0 0.0
    %527 = vmatpush1.msra.mxu0 0.0
    %528 = vmatprep.subr.mxu0 0.0
    %529 = vmatpush1.msra.mxu0 0.0
    %530 = vmatprep.subr.mxu0 0.0
    %531 = vmatpush1.msra.mxu0 0.0
    %532 = vmatprep.subr.mxu0 0.0
    %533 = vmatpush1.msra.mxu0 0.0
    %534 = vmatprep.subr.mxu0 0.0
    %535 = vmatpush1.msra.mxu0 0.0
    %536 = vmatprep.subr.mxu0 0.0
    %537 = vmatpush1.msra.mxu0 0.0
    %538 = vmatprep.subr.mxu0 0.0
    %539 = vmatpush1.msra.mxu0 0.0
    %540 = vmatprep.subr.mxu0 0.0
    %541 = vmatpush1.msra.mxu0 0.0
    %542 = vmatprep.subr.mxu0 0.0
    %543 = vmatpush1.msra.mxu0 0.0
    %544 = vmatprep.subr.mxu0 0.0
    %545 = vmatpush1.msra.mxu0 0.0
    %546 = vmatprep.subr.mxu0 0.0
    %547 = vmatpush1.msra.mxu0 0.0
    %548 = vmatprep.subr.mxu0 0.0
    %549 = vmatpush1.msra.mxu0 0.0
    %550 = vmatprep.subr.mxu0 0.0
    %551 = vmatpush1.msra.mxu0 0.0
    %552 = vmatprep.mubr.f32.mxu0 0.0
    %v553 = vand.u32 %v80, 4294901760
    %v554 = vsub.f32 %v80, %v553
    %555 = vmatmul.mubr.f32.gmra.mrb[0].mxu0 %v554
    %v556 = vpop.f32.mrb[0].mxu0
    %v557 = vadd.f32 %v405, %v556
    %v558 = vpop.f32.mrb[0].mxu0
    %559 = vmatprep.mubr.f32.mxu0 0.0
    %v560 = vand.u32 %v83, 4294901760
    %v561 = vsub.f32 %v83, %v560
    %562 = vmatmul.mubr.f32.gmra.mrb[0].mxu0 %v561
    %v563 = vpop.f32.mrb[0].mxu0
    %v564 = vadd.f32 %v411, %v563
    %v565 = vpop.f32.mrb[0].mxu0
    %566 = vmatprep.mubr.f32.mxu0 0.0
    %v567 = vand.u32 %v86, 4294901760
    %v568 = vsub.f32 %v86, %v567
    %569 = vmatmul.mubr.f32.gmra.mrb[0].mxu0 %v568
    %v570 = vpop.f32.mrb[0].mxu0
    %v571 = vadd.f32 %v417, %v570
    %v572 = vpop.f32.mrb[0].mxu0
    %573 = vmatprep.mubr.f32.mxu0 0.0
    %v574 = vand.u32 %v89, 4294901760
    %v575 = vsub.f32 %v89, %v574
    %576 = vmatmul.mubr.f32.gmra.mrb[0].mxu0 %v575
    %v577 = vpop.f32.mrb[0].mxu0
    %v578 = vadd.f32 %v423, %v577
    %v579 = vpop.f32.mrb[0].mxu0
    %580 = vmatprep.mubr.f32.mxu0 0.0
    %v581 = vand.u32 %v92, 4294901760
    %v582 = vsub.f32 %v92, %v581
    %583 = vmatmul.mubr.f32.gmra.mrb[0].mxu0 %v582
    %v584 = vpop.f32.mrb[0].mxu0
    %v585 = vadd.f32 %v429, %v584
    %v586 = vpop.f32.mrb[0].mxu0
    %587 = vmatprep.mubr.f32.mxu0 0.0
    %v588 = vand.u32 %v95, 4294901760
    %v589 = vsub.f32 %v95, %v588
    %590 = vmatmul.mubr.f32.gmra.mrb[0].mxu0 %v589
    %v591 = vpop.f32.mrb[0].mxu0
    %v592 = vadd.f32 %v435, %v591
    %v593 = vpop.f32.mrb[0].mxu0
    %594 = vmatprep.mubr.f32.mxu0 0.0
    %v595 = vand.u32 %v98, 4294901760
    %v596 = vsub.f32 %v98, %v595
    %597 = vmatmul.mubr.f32.gmra.mrb[0].mxu0 %v596
    %v598 = vpop.f32.mrb[0].mxu0
    %v599 = vadd.f32 %v441, %v598
    %v600 = vpop.f32.mrb[0].mxu0
    %601 = vmatprep.mubr.f32.mxu0 0.0
    %v602 = vand.u32 %v101, 4294901760
    %v603 = vsub.f32 %v101, %v602
    %604 = vmatmul.mubr.f32.gmra.mrb[0].mxu0 %v603
    %v605 = vpop.f32.mrb[0].mxu0
    %v606 = vadd.f32 %v447, %v605
    %v607 = vpop.f32.mrb[0].mxu0
    %608 = vmatprep.mubr.f32.mxu0 0.0
    %v609 = vand.u32 %v104, 4294901760
    %v610 = vsub.f32 %v104, %v609
    %611 = vmatmul.mubr.f32.gmra.mrb[0].mxu0 %v610
    %v612 = vpop.f32.mrb[0].mxu0
    %v613 = vadd.f32 %v453, %v612
    %v614 = vpop.f32.mrb[0].mxu0
    %615 = vmatprep.mubr.f32.mxu0 0.0
    %v616 = vand.u32 %v107, 4294901760
    %v617 = vsub.f32 %v107, %v616
    %618 = vmatmul.mubr.f32.gmra.mrb[0].mxu0 %v617
    %v619 = vpop.f32.mrb[0].mxu0
    %v620 = vadd.f32 %v459, %v619
    %v621 = vpop.f32.mrb[0].mxu0
    %622 = vmatprep.mubr.f32.mxu0 0.0
    %v623 = vand.u32 %v110, 4294901760
    %v624 = vsub.f32 %v110, %v623
    %625 = vmatmul.mubr.f32.gmra.mrb[0].mxu0 %v624
    %v626 = vpop.f32.mrb[0].mxu0
    %v627 = vadd.f32 %v465, %v626
    %v628 = vpop.f32.mrb[0].mxu0
    %629 = vmatprep.mubr.f32.mxu0 0.0
    %v630 = vand.u32 %v113, 4294901760
    %v631 = vsub.f32 %v113, %v630
    %632 = vmatmul.mubr.f32.gmra.mrb[0].mxu0 %v631
    %v633 = vpop.f32.mrb[0].mxu0
    %v634 = vadd.f32 %v471, %v633
    %v635 = vpop.f32.mrb[0].mxu0
    %636 = vmatprep.mubr.f32.mxu0 0.0
    %v637 = vand.u32 %v116, 4294901760
    %v638 = vsub.f32 %v116, %v637
    %639 = vmatmul.mubr.f32.gmra.mrb[0].mxu0 %v638
    %v640 = vpop.f32.mrb[0].mxu0
    %v641 = vadd.f32 %v477, %v640
    %v642 = vpop.f32.mrb[0].mxu0
    %643 = vdwg.mxu0
    %644 = vmatprep.subr.mxu0 0.0
    %v645 = vand.u32 %v67, 4294901760
    %646 = vmatpush1.msra.mxu0 %v645
    %647 = vmatprep.subr.mxu0 0.0
    %v648 = vand.u32 %v68, 4294901760
    %649 = vmatpush1.msra.mxu0 %v648
    %650 = vmatprep.subr.mxu0 0.0
    %v651 = vand.u32 %v69, 4294901760
    %652 = vmatpush1.msra.mxu0 %v651
    %653 = vmatprep.subr.mxu0 0.0
    %v654 = vand.u32 %v70, 4294901760
    %655 = vmatpush1.msra.mxu0 %v654
    %656 = vmatprep.subr.mxu0 0.0
    %657 = vmatpush1.msra.mxu0 0.0
    %658 = vmatprep.subr.mxu0 0.0
    %659 = vmatpush1.msra.mxu0 0.0
    %660 = vmatprep.subr.mxu0 0.0
    %661 = vmatpush1.msra.mxu0 0.0
    %662 = vmatprep.subr.mxu0 0.0
    %663 = vmatpush1.msra.mxu0 0.0
    %664 = vmatprep.subr.mxu0 0.0
    %665 = vmatpush1.msra.mxu0 0.0
    %666 = vmatprep.subr.mxu0 0.0
    %667 = vmatpush1.msra.mxu0 0.0
    %668 = vmatprep.subr.mxu0 0.0
    %669 = vmatpush1.msra.mxu0 0.0
    %670 = vmatprep.subr.mxu0 0.0
    %671 = vmatpush1.msra.mxu0 0.0
    %672 = vmatprep.subr.mxu0 0.0
    %673 = vmatpush1.msra.mxu0 0.0
    %674 = vmatprep.subr.mxu0 0.0
    %675 = vmatpush1.msra.mxu0 0.0
    %676 = vmatprep.subr.mxu0 0.0
    %677 = vmatpush1.msra.mxu0 0.0
    %678 = vmatprep.subr.mxu0 0.0
    %679 = vmatpush1.msra.mxu0 0.0
    %680 = vmatprep.subr.mxu0 0.0
    %681 = vmatpush1.msra.mxu0 0.0
    %682 = vmatprep.subr.mxu0 0.0
    %683 = vmatpush1.msra.mxu0 0.0
    %684 = vmatprep.subr.mxu0 0.0
    %685 = vmatpush1.msra.mxu0 0.0
    %686 = vmatprep.subr.mxu0 0.0
    %687 = vmatpush1.msra.mxu0 0.0
    %688 = vmatprep.subr.mxu0 0.0
    %689 = vmatpush1.msra.mxu0 0.0
    %690 = vmatprep.subr.mxu0 0.0
    %691 = vmatpush1.msra.mxu0 0.0
    %692 = vmatprep.subr.mxu0 0.0
    %693 = vmatpush1.msra.mxu0 0.0
    %694 = vmatprep.subr.mxu0 0.0
    %695 = vmatpush1.msra.mxu0 0.0
    %696 = vmatprep.subr.mxu0 0.0
    %697 = vmatpush1.msra.mxu0 0.0
    %698 = vmatprep.subr.mxu0 0.0
    %699 = vmatpush1.msra.mxu0 0.0
    %700 = vmatprep.subr.mxu0 0.0
    %701 = vmatpush1.msra.mxu0 0.0
    %702 = vmatprep.subr.mxu0 0.0
    %703 = vmatpush1.msra.mxu0 0.0
    %704 = vmatprep.subr.mxu0 0.0
    %705 = vmatpush1.msra.mxu0 0.0
    %706 = vmatprep.subr.mxu0 0.0
    %707 = vmatpush1.msra.mxu0 0.0
    %708 = vmatprep.subr.mxu0 0.0
    %709 = vmatpush1.msra.mxu0 0.0
    %710 = vmatprep.subr.mxu0 0.0
    %711 = vmatpush1.msra.mxu0 0.0
    %712 = vmatprep.mubr.f32.mxu0 0.0
    %v713 = vand.u32 %v80, 4294901760
    %v714 = vsub.f32 %v80, %v713
    %v715 = vand.u32 %v714, 4294901760
    %716 = vmatmul.mubr.f32.gmra.mrb[0].mxu0 %v715
    %v717 = vpop.f32.mrb[0].mxu0
    %v718 = vadd.f32 %v557, %v717
    %v719 = vpop.f32.mrb[0].mxu0
    %720 = vmatprep.mubr.f32.mxu0 0.0
    %v721 = vand.u32 %v83, 4294901760
    %v722 = vsub.f32 %v83, %v721
    %v723 = vand.u32 %v722, 4294901760
    %724 = vmatmul.mubr.f32.gmra.mrb[0].mxu0 %v723
    %v725 = vpop.f32.mrb[0].mxu0
    %v726 = vadd.f32 %v564, %v725
    %v727 = vpop.f32.mrb[0].mxu0
    %728 = vmatprep.mubr.f32.mxu0 0.0
    %v729 = vand.u32 %v86, 4294901760
    %v730 = vsub.f32 %v86, %v729
    %v731 = vand.u32 %v730, 4294901760
    %732 = vmatmul.mubr.f32.gmra.mrb[0].mxu0 %v731
    %v733 = vpop.f32.mrb[0].mxu0
    %v734 = vadd.f32 %v571, %v733
    %v735 = vpop.f32.mrb[0].mxu0
    %736 = vmatprep.mubr.f32.mxu0 0.0
    %v737 = vand.u32 %v89, 4294901760
    %v738 = vsub.f32 %v89, %v737
    %v739 = vand.u32 %v738, 4294901760
    %740 = vmatmul.mubr.f32.gmra.mrb[0].mxu0 %v739
    %v741 = vpop.f32.mrb[0].mxu0
    %v742 = vadd.f32 %v578, %v741
    %v743 = vpop.f32.mrb[0].mxu0
    %744 = vmatprep.mubr.f32.mxu0 0.0
    %v745 = vand.u32 %v92, 4294901760
    %v746 = vsub.f32 %v92, %v745
    %v747 = vand.u32 %v746, 4294901760
    %748 = vmatmul.mubr.f32.gmra.mrb[0].mxu0 %v747
    %v749 = vpop.f32.mrb[0].mxu0
    %v750 = vadd.f32 %v585, %v749
    %v751 = vpop.f32.mrb[0].mxu0
    %752 = vmatprep.mubr.f32.mxu0 0.0
    %v753 = vand.u32 %v95, 4294901760
    %v754 = vsub.f32 %v95, %v753
    %v755 = vand.u32 %v754, 4294901760
    %756 = vmatmul.mubr.f32.gmra.mrb[0].mxu0 %v755
    %v757 = vpop.f32.mrb[0].mxu0
    %v758 = vadd.f32 %v592, %v757
    %v759 = vpop.f32.mrb[0].mxu0
    %760 = vmatprep.mubr.f32.mxu0 0.0
    %v761 = vand.u32 %v98, 4294901760
    %v762 = vsub.f32 %v98, %v761
    %v763 = vand.u32 %v762, 4294901760
    %764 = vmatmul.mubr.f32.gmra.mrb[0].mxu0 %v763
    %v765 = vpop.f32.mrb[0].mxu0
    %v766 = vadd.f32 %v599, %v765
    %v767 = vpop.f32.mrb[0].mxu0
    %768 = vmatprep.mubr.f32.mxu0 0.0
    %v769 = vand.u32 %v101, 4294901760
    %v770 = vsub.f32 %v101, %v769
    %v771 = vand.u32 %v770, 4294901760
    %772 = vmatmul.mubr.f32.gmra.mrb[0].mxu0 %v771
    %v773 = vpop.f32.mrb[0].mxu0
    %v774 = vadd.f32 %v606, %v773
    %v775 = vpop.f32.mrb[0].mxu0
    %776 = vmatprep.mubr.f32.mxu0 0.0
    %v777 = vand.u32 %v104, 4294901760
    %v778 = vsub.f32 %v104, %v777
    %v779 = vand.u32 %v778, 4294901760
    %780 = vmatmul.mubr.f32.gmra.mrb[0].mxu0 %v779
    %v781 = vpop.f32.mrb[0].mxu0
    %v782 = vadd.f32 %v613, %v781
    %v783 = vpop.f32.mrb[0].mxu0
    %784 = vmatprep.mubr.f32.mxu0 0.0
    %v785 = vand.u32 %v107, 4294901760
    %v786 = vsub.f32 %v107, %v785
    %v787 = vand.u32 %v786, 4294901760
    %788 = vmatmul.mubr.f32.gmra.mrb[0].mxu0 %v787
    %v789 = vpop.f32.mrb[0].mxu0
    %v790 = vadd.f32 %v620, %v789
    %v791 = vpop.f32.mrb[0].mxu0
    %792 = vmatprep.mubr.f32.mxu0 0.0
    %v793 = vand.u32 %v110, 4294901760
    %v794 = vsub.f32 %v110, %v793
    %v795 = vand.u32 %v794, 4294901760
    %796 = vmatmul.mubr.f32.gmra.mrb[0].mxu0 %v795
    %v797 = vpop.f32.mrb[0].mxu0
    %v798 = vadd.f32 %v627, %v797
    %v799 = vpop.f32.mrb[0].mxu0
    %800 = vmatprep.mubr.f32.mxu0 0.0
    %v801 = vand.u32 %v113, 4294901760
    %v802 = vsub.f32 %v113, %v801
    %v803 = vand.u32 %v802, 4294901760
    %804 = vmatmul.mubr.f32.gmra.mrb[0].mxu0 %v803
    %v805 = vpop.f32.mrb[0].mxu0
    %v806 = vadd.f32 %v634, %v805
    %v807 = vpop.f32.mrb[0].mxu0
    %808 = vmatprep.mubr.f32.mxu0 0.0
    %v809 = vand.u32 %v116, 4294901760
    %v810 = vsub.f32 %v116, %v809
    %v811 = vand.u32 %v810, 4294901760
    %812 = vmatmul.mubr.f32.gmra.mrb[0].mxu0 %v811
    %v813 = vpop.f32.mrb[0].mxu0
    %v814 = vadd.f32 %v641, %v813
    %v815 = vpop.f32.mrb[0].mxu0
    %816 = vdwg.mxu0
    %817 = vmatprep.subr.mxu0 0.0
    %v818 = vand.u32 %v67, 4294901760
    %v819 = vsub.f32 %v67, %v818
    %v820 = vand.u32 %v819, 4294901760
    %821 = vmatpush1.msra.mxu0 %v820
    %822 = vmatprep.subr.mxu0 0.0
    %v823 = vand.u32 %v68, 4294901760
    %v824 = vsub.f32 %v68, %v823
    %v825 = vand.u32 %v824, 4294901760
    %826 = vmatpush1.msra.mxu0 %v825
    %827 = vmatprep.subr.mxu0 0.0
    %v828 = vand.u32 %v69, 4294901760
    %v829 = vsub.f32 %v69, %v828
    %v830 = vand.u32 %v829, 4294901760
    %831 = vmatpush1.msra.mxu0 %v830
    %832 = vmatprep.subr.mxu0 0.0
    %v833 = vand.u32 %v70, 4294901760
    %v834 = vsub.f32 %v70, %v833
    %v835 = vand.u32 %v834, 4294901760
    %836 = vmatpush1.msra.mxu0 %v835
    %837 = vmatprep.subr.mxu0 0.0
    %838 = vmatpush1.msra.mxu0 0.0
    %839 = vmatprep.subr.mxu0 0.0
    %840 = vmatpush1.msra.mxu0 0.0
    %841 = vmatprep.subr.mxu0 0.0
    %842 = vmatpush1.msra.mxu0 0.0
    %843 = vmatprep.subr.mxu0 0.0
    %844 = vmatpush1.msra.mxu0 0.0
    %845 = vmatprep.subr.mxu0 0.0
    %846 = vmatpush1.msra.mxu0 0.0
    %847 = vmatprep.subr.mxu0 0.0
    %848 = vmatpush1.msra.mxu0 0.0
    %849 = vmatprep.subr.mxu0 0.0
    %850 = vmatpush1.msra.mxu0 0.0
    %851 = vmatprep.subr.mxu0 0.0
    %852 = vmatpush1.msra.mxu0 0.0
    %853 = vmatprep.subr.mxu0 0.0
    %854 = vmatpush1.msra.mxu0 0.0
    %855 = vmatprep.subr.mxu0 0.0
    %856 = vmatpush1.msra.mxu0 0.0
    %857 = vmatprep.subr.mxu0 0.0
    %858 = vmatpush1.msra.mxu0 0.0
    %859 = vmatprep.subr.mxu0 0.0
    %860 = vmatpush1.msra.mxu0 0.0
    %861 = vmatprep.subr.mxu0 0.0
    %862 = vmatpush1.msra.mxu0 0.0
    %863 = vmatprep.subr.mxu0 0.0
    %864 = vmatpush1.msra.mxu0 0.0
    %865 = vmatprep.subr.mxu0 0.0
    %866 = vmatpush1.msra.mxu0 0.0
    %867 = vmatprep.subr.mxu0 0.0
    %868 = vmatpush1.msra.mxu0 0.0
    %869 = vmatprep.subr.mxu0 0.0
    %870 = vmatpush1.msra.mxu0 0.0
    %871 = vmatprep.subr.mxu0 0.0
    %872 = vmatpush1.msra.mxu0 0.0
    %873 = vmatprep.subr.mxu0 0.0
    %874 = vmatpush1.msra.mxu0 0.0
    %875 = vmatprep.subr.mxu0 0.0
    %876 = vmatpush1.msra.mxu0 0.0
    %877 = vmatprep.subr.mxu0 0.0
    %878 = vmatpush1.msra.mxu0 0.0
    %879 = vmatprep.subr.mxu0 0.0
    %880 = vmatpush1.msra.mxu0 0.0
    %881 = vmatprep.subr.mxu0 0.0
    %882 = vmatpush1.msra.mxu0 0.0
    %883 = vmatprep.subr.mxu0 0.0
    %884 = vmatpush1.msra.mxu0 0.0
    %885 = vmatprep.subr.mxu0 0.0
    %886 = vmatpush1.msra.mxu0 0.0
    %887 = vmatprep.subr.mxu0 0.0
    %888 = vmatpush1.msra.mxu0 0.0
    %889 = vmatprep.subr.mxu0 0.0
    %890 = vmatpush1.msra.mxu0 0.0
    %891 = vmatprep.subr.mxu0 0.0
    %892 = vmatpush1.msra.mxu0 0.0
    %893 = vmatprep.mubr.f32.mxu0 0.0
    %v894 = vand.u32 %v80, 4294901760
    %895 = vmatmul.mubr.f32.gmra.mrb[0].mxu0 %v894
    %v896 = vpop.f32.mrb[0].mxu0
    %v897 = vadd.f32 %v718, %v896
    %v898 = vpop.f32.mrb[0].mxu0
    %899 = vmatprep.mubr.f32.mxu0 0.0
    %v900 = vand.u32 %v83, 4294901760
    %901 = vmatmul.mubr.f32.gmra.mrb[0].mxu0 %v900
    %v902 = vpop.f32.mrb[0].mxu0
    %v903 = vadd.f32 %v726, %v902
    %v904 = vpop.f32.mrb[0].mxu0
    %905 = vmatprep.mubr.f32.mxu0 0.0
    %v906 = vand.u32 %v86, 4294901760
    %907 = vmatmul.mubr.f32.gmra.mrb[0].mxu0 %v906
    %v908 = vpop.f32.mrb[0].mxu0
    %v909 = vadd.f32 %v734, %v908
    %v910 = vpop.f32.mrb[0].mxu0
    %911 = vmatprep.mubr.f32.mxu0 0.0
    %v912 = vand.u32 %v89, 4294901760
    %913 = vmatmul.mubr.f32.gmra.mrb[0].mxu0 %v912
    %v914 = vpop.f32.mrb[0].mxu0
    %v915 = vadd.f32 %v742, %v914
    %v916 = vpop.f32.mrb[0].mxu0
    %917 = vmatprep.mubr.f32.mxu0 0.0
    %v918 = vand.u32 %v92, 4294901760
    %919 = vmatmul.mubr.f32.gmra.mrb[0].mxu0 %v918
    %v920 = vpop.f32.mrb[0].mxu0
    %v921 = vadd.f32 %v750, %v920
    %v922 = vpop.f32.mrb[0].mxu0
    %923 = vmatprep.mubr.f32.mxu0 0.0
    %v924 = vand.u32 %v95, 4294901760
    %925 = vmatmul.mubr.f32.gmra.mrb[0].mxu0 %v924
    %v926 = vpop.f32.mrb[0].mxu0
    %v927 = vadd.f32 %v758, %v926
    %v928 = vpop.f32.mrb[0].mxu0
    %929 = vmatprep.mubr.f32.mxu0 0.0
    %v930 = vand.u32 %v98, 4294901760
    %931 = vmatmul.mubr.f32.gmra.mrb[0].mxu0 %v930
    %v932 = vpop.f32.mrb[0].mxu0
    %v933 = vadd.f32 %v766, %v932
    %v934 = vpop.f32.mrb[0].mxu0
    %935 = vmatprep.mubr.f32.mxu0 0.0
    %v936 = vand.u32 %v101, 4294901760
    %937 = vmatmul.mubr.f32.gmra.mrb[0].mxu0 %v936
    %v938 = vpop.f32.mrb[0].mxu0
    %v939 = vadd.f32 %v774, %v938
    %v940 = vpop.f32.mrb[0].mxu0
    %941 = vmatprep.mubr.f32.mxu0 0.0
    %v942 = vand.u32 %v104, 4294901760
    %943 = vmatmul.mubr.f32.gmra.mrb[0].mxu0 %v942
    %v944 = vpop.f32.mrb[0].mxu0
    %v945 = vadd.f32 %v782, %v944
    %v946 = vpop.f32.mrb[0].mxu0
    %947 = vmatprep.mubr.f32.mxu0 0.0
    %v948 = vand.u32 %v107, 4294901760
    %949 = vmatmul.mubr.f32.gmra.mrb[0].mxu0 %v948
    %v950 = vpop.f32.mrb[0].mxu0
    %v951 = vadd.f32 %v790, %v950
    %v952 = vpop.f32.mrb[0].mxu0
    %953 = vmatprep.mubr.f32.mxu0 0.0
    %v954 = vand.u32 %v110, 4294901760
    %955 = vmatmul.mubr.f32.gmra.mrb[0].mxu0 %v954
    %v956 = vpop.f32.mrb[0].mxu0
    %v957 = vadd.f32 %v798, %v956
    %v958 = vpop.f32.mrb[0].mxu0
    %959 = vmatprep.mubr.f32.mxu0 0.0
    %v960 = vand.u32 %v113, 4294901760
    %961 = vmatmul.mubr.f32.gmra.mrb[0].mxu0 %v960
    %v962 = vpop.f32.mrb[0].mxu0
    %v963 = vadd.f32 %v806, %v962
    %v964 = vpop.f32.mrb[0].mxu0
    %965 = vmatprep.mubr.f32.mxu0 0.0
    %v966 = vand.u32 %v116, 4294901760
    %967 = vmatmul.mubr.f32.gmra.mrb[0].mxu0 %v966
    %v968 = vpop.f32.mrb[0].mxu0
    %v969 = vadd.f32 %v814, %v968
    %v970 = vpop.f32.mrb[0].mxu0
    %971 = vdwg.mxu0
    %972 = vmatprep.subr.mxu0 0.0
    %v973 = vand.u32 %v67, 4294901760
    %974 = vmatpush1.msra.mxu0 %v973
    %975 = vmatprep.subr.mxu0 0.0
    %v976 = vand.u32 %v68, 4294901760
    %977 = vmatpush1.msra.mxu0 %v976
    %978 = vmatprep.subr.mxu0 0.0
    %v979 = vand.u32 %v69, 4294901760
    %980 = vmatpush1.msra.mxu0 %v979
    %981 = vmatprep.subr.mxu0 0.0
    %v982 = vand.u32 %v70, 4294901760
    %983 = vmatpush1.msra.mxu0 %v982
    %984 = vmatprep.subr.mxu0 0.0
    %985 = vmatpush1.msra.mxu0 0.0
    %986 = vmatprep.subr.mxu0 0.0
    %987 = vmatpush1.msra.mxu0 0.0
    %988 = vmatprep.subr.mxu0 0.0
    %989 = vmatpush1.msra.mxu0 0.0
    %990 = vmatprep.subr.mxu0 0.0
    %991 = vmatpush1.msra.mxu0 0.0
    %992 = vmatprep.subr.mxu0 0.0
    %993 = vmatpush1.msra.mxu0 0.0
    %994 = vmatprep.subr.mxu0 0.0
    %995 = vmatpush1.msra.mxu0 0.0
    %996 = vmatprep.subr.mxu0 0.0
    %997 = vmatpush1.msra.mxu0 0.0
    %998 = vmatprep.subr.mxu0 0.0
    %999 = vmatpush1.msra.mxu0 0.0
    %1000 = vmatprep.subr.mxu0 0.0
    %1001 = vmatpush1.msra.mxu0 0.0
    %1002 = vmatprep.subr.mxu0 0.0
    %1003 = vmatpush1.msra.mxu0 0.0
    %1004 = vmatprep.subr.mxu0 0.0
    %1005 = vmatpush1.msra.mxu0 0.0
    %1006 = vmatprep.subr.mxu0 0.0
    %1007 = vmatpush1.msra.mxu0 0.0
    %1008 = vmatprep.subr.mxu0 0.0
    %1009 = vmatpush1.msra.mxu0 0.0
    %1010 = vmatprep.subr.mxu0 0.0
    %1011 = vmatpush1.msra.mxu0 0.0
    %1012 = vmatprep.subr.mxu0 0.0
    %1013 = vmatpush1.msra.mxu0 0.0
    %1014 = vmatprep.subr.mxu0 0.0
    %1015 = vmatpush1.msra.mxu0 0.0
    %1016 = vmatprep.subr.mxu0 0.0
    %1017 = vmatpush1.msra.mxu0 0.0
    %1018 = vmatprep.subr.mxu0 0.0
    %1019 = vmatpush1.msra.mxu0 0.0
    %1020 = vmatprep.subr.mxu0 0.0
    %1021 = vmatpush1.msra.mxu0 0.0
    %1022 = vmatprep.subr.mxu0 0.0
    %1023 = vmatpush1.msra.mxu0 0.0
    %1024 = vmatprep.subr.mxu0 0.0
    %1025 = vmatpush1.msra.mxu0 0.0
    %1026 = vmatprep.subr.mxu0 0.0
    %1027 = vmatpush1.msra.mxu0 0.0
    %1028 = vmatprep.subr.mxu0 0.0
    %1029 = vmatpush1.msra.mxu0 0.0
    %1030 = vmatprep.subr.mxu0 0.0
    %1031 = vmatpush1.msra.mxu0 0.0
    %1032 = vmatprep.subr.mxu0 0.0
    %1033 = vmatpush1.msra.mxu0 0.0
    %1034 = vmatprep.subr.mxu0 0.0
    %1035 = vmatpush1.msra.mxu0 0.0
    %1036 = vmatprep.subr.mxu0 0.0
    %1037 = vmatpush1.msra.mxu0 0.0
    %1038 = vmatprep.subr.mxu0 0.0
    %1039 = vmatpush1.msra.mxu0 0.0
    %1040 = vmatprep.mubr.f32.mxu0 0.0
    %v1041 = vand.u32 %v80, 4294901760
    %1042 = vmatmul.mubr.f32.gmra.mrb[0].mxu0 %v1041
    %v1043 = vpop.f32.mrb[0].mxu0
    %v1044 = vadd.f32 %v897, %v1043
    %v1045 = vpop.f32.mrb[0].mxu0
    %1046 = vmatprep.mubr.f32.mxu0 0.0
    %v1047 = vand.u32 %v83, 4294901760
    %1048 = vmatmul.mubr.f32.gmra.mrb[0].mxu0 %v1047
    %v1049 = vpop.f32.mrb[0].mxu0
    %v1050 = vadd.f32 %v903, %v1049
    %v1051 = vpop.f32.mrb[0].mxu0
    %1052 = vmatprep.mubr.f32.mxu0 0.0
    %v1053 = vand.u32 %v86, 4294901760
    %1054 = vmatmul.mubr.f32.gmra.mrb[0].mxu0 %v1053
    %v1055 = vpop.f32.mrb[0].mxu0
    %v1056 = vadd.f32 %v909, %v1055
    %v1057 = vpop.f32.mrb[0].mxu0
    %1058 = vmatprep.mubr.f32.mxu0 0.0
    %v1059 = vand.u32 %v89, 4294901760
    %1060 = vmatmul.mubr.f32.gmra.mrb[0].mxu0 %v1059
    %v1061 = vpop.f32.mrb[0].mxu0
    %v1062 = vadd.f32 %v915, %v1061
    %v1063 = vpop.f32.mrb[0].mxu0
    %1064 = vmatprep.mubr.f32.mxu0 0.0
    %v1065 = vand.u32 %v92, 4294901760
    %1066 = vmatmul.mubr.f32.gmra.mrb[0].mxu0 %v1065
    %v1067 = vpop.f32.mrb[0].mxu0
    %v1068 = vadd.f32 %v921, %v1067
    %v1069 = vpop.f32.mrb[0].mxu0
    %1070 = vmatprep.mubr.f32.mxu0 0.0
    %v1071 = vand.u32 %v95, 4294901760
    %1072 = vmatmul.mubr.f32.gmra.mrb[0].mxu0 %v1071
    %v1073 = vpop.f32.mrb[0].mxu0
    %v1074 = vadd.f32 %v927, %v1073
    %v1075 = vpop.f32.mrb[0].mxu0
    %1076 = vmatprep.mubr.f32.mxu0 0.0
    %v1077 = vand.u32 %v98, 4294901760
    %1078 = vmatmul.mubr.f32.gmra.mrb[0].mxu0 %v1077
    %v1079 = vpop.f32.mrb[0].mxu0
    %v1080 = vadd.f32 %v933, %v1079
    %v1081 = vpop.f32.mrb[0].mxu0
    %1082 = vmatprep.mubr.f32.mxu0 0.0
    %v1083 = vand.u32 %v101, 4294901760
    %1084 = vmatmul.mubr.f32.gmra.mrb[0].mxu0 %v1083
    %v1085 = vpop.f32.mrb[0].mxu0
    %v1086 = vadd.f32 %v939, %v1085
    %v1087 = vpop.f32.mrb[0].mxu0
    %1088 = vmatprep.mubr.f32.mxu0 0.0
    %v1089 = vand.u32 %v104, 4294901760
    %1090 = vmatmul.mubr.f32.gmra.mrb[0].mxu0 %v1089
    %v1091 = vpop.f32.mrb[0].mxu0
    %v1092 = vadd.f32 %v945, %v1091
    %v1093 = vpop.f32.mrb[0].mxu0
    %1094 = vmatprep.mubr.f32.mxu0 0.0
    %v1095 = vand.u32 %v107, 4294901760
    %1096 = vmatmul.mubr.f32.gmra.mrb[0].mxu0 %v1095
    %v1097 = vpop.f32.mrb[0].mxu0
    %v1098 = vadd.f32 %v951, %v1097
    %v1099 = vpop.f32.mrb[0].mxu0
    %1100 = vmatprep.mubr.f32.mxu0 0.0
    %v1101 = vand.u32 %v110, 4294901760
    %1102 = vmatmul.mubr.f32.gmra.mrb[0].mxu0 %v1101
    %v1103 = vpop.f32.mrb[0].mxu0
    %v1104 = vadd.f32 %v957, %v1103
    %v1105 = vpop.f32.mrb[0].mxu0
    %1106 = vmatprep.mubr.f32.mxu0 0.0
    %v1107 = vand.u32 %v113, 4294901760
    %1108 = vmatmul.mubr.f32.gmra.mrb[0].mxu0 %v1107
    %v1109 = vpop.f32.mrb[0].mxu0
    %v1110 = vadd.f32 %v963, %v1109
    %v1111 = vpop.f32.mrb[0].mxu0
    %1112 = vmatprep.mubr.f32.mxu0 0.0
    %v1113 = vand.u32 %v116, 4294901760
    %1114 = vmatmul.mubr.f32.gmra.mrb[0].mxu0 %v1113
    %v1115 = vpop.f32.mrb[0].mxu0
    %v1116 = vadd.f32 %v969, %v1115
    %v1117 = vpop.f32.mrb[0].mxu0
    %1118 = vdwg.mxu0
    %v1119 = vmax.f32 %v1044, 0.0
    %v1120 = vmax.f32 %v1050, 0.0
    %v1121 = vmax.f32 %v1056, 0.0
    %v1122 = vmax.f32 %v1062, 0.0
    %v1123 = vmax.f32 %v1068, 0.0
    %v1124 = vmax.f32 %v1074, 0.0
    %v1125 = vmax.f32 %v1080, 0.0
    %v1126 = vmax.f32 %v1086, 0.0
    %v1127 = vmax.f32 %v1092, 0.0
    %v1128 = vmax.f32 %v1098, 0.0
    %v1129 = vmax.f32 %v1104, 0.0
    %v1130 = vmax.f32 %v1110, 0.0
    %v1131 = vmax.f32 %v1116, 0.0
    %v1132 = vld [vmem:[%s3] sm:$0xff]
    %v1133 = vld [vmem:[%s3 + $0x8] sm:$0xff]
    %v1134 = vld [vmem:[%s3 + $0x10] sm:$0xff]
    %v1135 = vld [vmem:[%s3 + $0x18] sm:$0xff]
    %v1136 = vld [vmem:[%s3 + $0x20] sm:$0xff]
    %v1137 = vld [vmem:[%s3 + $0x28] sm:$0xff]
    %v1138 = vld [vmem:[%s3 + $0x30] sm:$0xff]
    %v1139 = vld [vmem:[%s3 + $0x38] sm:$0xff]
    %v1140 = vld [vmem:[%s3 + $0x40] sm:$0xff]
    %v1141 = vld [vmem:[%s3 + $0x48] sm:$0xff]
    %v1142 = vld [vmem:[%s3 + $0x50] sm:$0xff]
    %v1143 = vld [vmem:[%s3 + $0x58] sm:$0xff]
    %v1144 = vld [vmem:[%s3 + $0x60] sm:$0xff]
    %v1145 = vld [vmem:[%s3 + $0x68] sm:$0xff]
    %v1146 = vld [vmem:[%s3 + $0x70] sm:$0xff]
    %v1147 = vld [vmem:[%s3 + $0x78] sm:$0xff]
    %v1148 = vld [vmem:[%s4] sm:$0x1]
    %v1150 = vlaneseq
    %v1151 = vshrl.u32 %v1150, 7
    %v1152 = vsub.s32 0, %v1151
    %v1153 = vrot.slane %v1148, %v1152
    %1155 = vmatprep.subr.mxu0 0.0
    %v1156 = vand.u32 %v1132, 4294901760
    %1157 = vmatpush1.msra.mxu0 %v1156
    %1158 = vmatprep.subr.mxu0 0.0
    %v1159 = vand.u32 %v1133, 4294901760
    %1160 = vmatpush1.msra.mxu0 %v1159
    %1161 = vmatprep.subr.mxu0 0.0
    %v1162 = vand.u32 %v1134, 4294901760
    %1163 = vmatpush1.msra.mxu0 %v1162
    %1164 = vmatprep.subr.mxu0 0.0
    %v1165 = vand.u32 %v1135, 4294901760
    %1166 = vmatpush1.msra.mxu0 %v1165
    %1167 = vmatprep.subr.mxu0 0.0
    %v1168 = vand.u32 %v1136, 4294901760
    %1169 = vmatpush1.msra.mxu0 %v1168
    %1170 = vmatprep.subr.mxu0 0.0
    %v1171 = vand.u32 %v1137, 4294901760
    %1172 = vmatpush1.msra.mxu0 %v1171
    %1173 = vmatprep.subr.mxu0 0.0
    %v1174 = vand.u32 %v1138, 4294901760
    %1175 = vmatpush1.msra.mxu0 %v1174
    %1176 = vmatprep.subr.mxu0 0.0
    %v1177 = vand.u32 %v1139, 4294901760
    %1178 = vmatpush1.msra.mxu0 %v1177
    %1179 = vmatprep.subr.mxu0 0.0
    %v1180 = vand.u32 %v1140, 4294901760
    %1181 = vmatpush1.msra.mxu0 %v1180
    %1182 = vmatprep.subr.mxu0 0.0
    %v1183 = vand.u32 %v1141, 4294901760
    %1184 = vmatpush1.msra.mxu0 %v1183
    %1185 = vmatprep.subr.mxu0 0.0
    %v1186 = vand.u32 %v1142, 4294901760
    %1187 = vmatpush1.msra.mxu0 %v1186
    %1188 = vmatprep.subr.mxu0 0.0
    %v1189 = vand.u32 %v1143, 4294901760
    %1190 = vmatpush1.msra.mxu0 %v1189
    %1191 = vmatprep.subr.mxu0 0.0
    %v1192 = vand.u32 %v1144, 4294901760
    %1193 = vmatpush1.msra.mxu0 %v1192
    %1194 = vmatprep.subr.mxu0 0.0
    %v1195 = vand.u32 %v1145, 4294901760
    %1196 = vmatpush1.msra.mxu0 %v1195
    %1197 = vmatprep.subr.mxu0 0.0
    %v1198 = vand.u32 %v1146, 4294901760
    %1199 = vmatpush1.msra.mxu0 %v1198
    %1200 = vmatprep.subr.mxu0 0.0
    %v1201 = vand.u32 %v1147, 4294901760
    %1202 = vmatpush1.msra.mxu0 %v1201
    %1203 = vmatprep.subr.mxu0 0.0
    %1204 = vmatpush1.msra.mxu0 0.0
    %1205 = vmatprep.subr.mxu0 0.0
    %1206 = vmatpush1.msra.mxu0 0.0
    %1207 = vmatprep.subr.mxu0 0.0
    %1208 = vmatpush1.msra.mxu0 0.0
    %1209 = vmatprep.subr.mxu0 0.0
    %1210 = vmatpush1.msra.mxu0 0.0
    %1211 = vmatprep.subr.mxu0 0.0
    %1212 = vmatpush1.msra.mxu0 0.0
    %1213 = vmatprep.subr.mxu0 0.0
    %1214 = vmatpush1.msra.mxu0 0.0
    %1215 = vmatprep.subr.mxu0 0.0
    %1216 = vmatpush1.msra.mxu0 0.0
    %1217 = vmatprep.subr.mxu0 0.0
    %1218 = vmatpush1.msra.mxu0 0.0
    %1219 = vmatprep.subr.mxu0 0.0
    %1220 = vmatpush1.msra.mxu0 0.0
    %1221 = vmatprep.subr.mxu0 0.0
    %1222 = vmatpush1.msra.mxu0 0.0
    %1223 = vmatprep.subr.mxu0 0.0
    %1224 = vmatpush1.msra.mxu0 0.0
    %1225 = vmatprep.subr.mxu0 0.0
    %1226 = vmatpush1.msra.mxu0 0.0
    %1227 = vmatprep.subr.mxu0 0.0
    %1228 = vmatpush1.msra.mxu0 0.0
    %1229 = vmatprep.subr.mxu0 0.0
    %1230 = vmatpush1.msra.mxu0 0.0
    %1231 = vmatprep.subr.mxu0 0.0
    %1232 = vmatpush1.msra.mxu0 0.0
    %1233 = vmatprep.subr.mxu0 0.0
    %1234 = vmatpush1.msra.mxu0 0.0
    %1235 = vmatprep.mubr.f32.mxu0 0.0
    %v1236 = vand.u32 %v1119, 4294901760
    %v1237 = vsub.f32 %v1119, %v1236
    %v1238 = vand.u32 %v1237, 4294901760
    %v1239 = vsub.f32 %v1237, %v1238
    %v1240 = vand.u32 %v1239, 4294901760
    %1241 = vmatmul.mubr.f32.gmra.mrb[0].mxu0 %v1240
    %v1242 = vpop.f32.mrb[0].mxu0
    %v1243 = vadd.f32 %v1153, %v1242
    %v1244 = vpop.f32.mrb[0].mxu0
    %1245 = vmatprep.mubr.f32.mxu0 0.0
    %v1246 = vand.u32 %v1120, 4294901760
    %v1247 = vsub.f32 %v1120, %v1246
    %v1248 = vand.u32 %v1247, 4294901760
    %v1249 = vsub.f32 %v1247, %v1248
    %v1250 = vand.u32 %v1249, 4294901760
    %1251 = vmatmul.mubr.f32.gmra.mrb[0].mxu0 %v1250
    %v1252 = vpop.f32.mrb[0].mxu0
    %v1253 = vadd.f32 %v1153, %v1252
    %v1254 = vpop.f32.mrb[0].mxu0
    %1255 = vmatprep.mubr.f32.mxu0 0.0
    %v1256 = vand.u32 %v1121, 4294901760
    %v1257 = vsub.f32 %v1121, %v1256
    %v1258 = vand.u32 %v1257, 4294901760
    %v1259 = vsub.f32 %v1257, %v1258
    %v1260 = vand.u32 %v1259, 4294901760
    %1261 = vmatmul.mubr.f32.gmra.mrb[0].mxu0 %v1260
    %v1262 = vpop.f32.mrb[0].mxu0
    %v1263 = vadd.f32 %v1153, %v1262
    %v1264 = vpop.f32.mrb[0].mxu0
    %1265 = vmatprep.mubr.f32.mxu0 0.0
    %v1266 = vand.u32 %v1122, 4294901760
    %v1267 = vsub.f32 %v1122, %v1266
    %v1268 = vand.u32 %v1267, 4294901760
    %v1269 = vsub.f32 %v1267, %v1268
    %v1270 = vand.u32 %v1269, 4294901760
    %1271 = vmatmul.mubr.f32.gmra.mrb[0].mxu0 %v1270
    %v1272 = vpop.f32.mrb[0].mxu0
    %v1273 = vadd.f32 %v1153, %v1272
    %v1274 = vpop.f32.mrb[0].mxu0
    %1275 = vmatprep.mubr.f32.mxu0 0.0
    %v1276 = vand.u32 %v1123, 4294901760
    %v1277 = vsub.f32 %v1123, %v1276
    %v1278 = vand.u32 %v1277, 4294901760
    %v1279 = vsub.f32 %v1277, %v1278
    %v1280 = vand.u32 %v1279, 4294901760
    %1281 = vmatmul.mubr.f32.gmra.mrb[0].mxu0 %v1280
    %v1282 = vpop.f32.mrb[0].mxu0
    %v1283 = vadd.f32 %v1153, %v1282
    %v1284 = vpop.f32.mrb[0].mxu0
    %1285 = vmatprep.mubr.f32.mxu0 0.0
    %v1286 = vand.u32 %v1124, 4294901760
    %v1287 = vsub.f32 %v1124, %v1286
    %v1288 = vand.u32 %v1287, 4294901760
    %v1289 = vsub.f32 %v1287, %v1288
    %v1290 = vand.u32 %v1289, 4294901760
    %1291 = vmatmul.mubr.f32.gmra.mrb[0].mxu0 %v1290
    %v1292 = vpop.f32.mrb[0].mxu0
    %v1293 = vadd.f32 %v1153, %v1292
    %v1294 = vpop.f32.mrb[0].mxu0
    %1295 = vmatprep.mubr.f32.mxu0 0.0
    %v1296 = vand.u32 %v1125, 4294901760
    %v1297 = vsub.f32 %v1125, %v1296
    %v1298 = vand.u32 %v1297, 4294901760
    %v1299 = vsub.f32 %v1297, %v1298
    %v1300 = vand.u32 %v1299, 4294901760
    %1301 = vmatmul.mubr.f32.gmra.mrb[0].mxu0 %v1300
    %v1302 = vpop.f32.mrb[0].mxu0
    %v1303 = vadd.f32 %v1153, %v1302
    %v1304 = vpop.f32.mrb[0].mxu0
    %1305 = vmatprep.mubr.f32.mxu0 0.0
    %v1306 = vand.u32 %v1126, 4294901760
    %v1307 = vsub.f32 %v1126, %v1306
    %v1308 = vand.u32 %v1307, 4294901760
    %v1309 = vsub.f32 %v1307, %v1308
    %v1310 = vand.u32 %v1309, 4294901760
    %1311 = vmatmul.mubr.f32.gmra.mrb[0].mxu0 %v1310
    %v1312 = vpop.f32.mrb[0].mxu0
    %v1313 = vadd.f32 %v1153, %v1312
    %v1314 = vpop.f32.mrb[0].mxu0
    %1315 = vmatprep.mubr.f32.mxu0 0.0
    %v1316 = vand.u32 %v1127, 4294901760
    %v1317 = vsub.f32 %v1127, %v1316
    %v1318 = vand.u32 %v1317, 4294901760
    %v1319 = vsub.f32 %v1317, %v1318
    %v1320 = vand.u32 %v1319, 4294901760
    %1321 = vmatmul.mubr.f32.gmra.mrb[0].mxu0 %v1320
    %v1322 = vpop.f32.mrb[0].mxu0
    %v1323 = vadd.f32 %v1153, %v1322
    %v1324 = vpop.f32.mrb[0].mxu0
    %1325 = vmatprep.mubr.f32.mxu0 0.0
    %v1326 = vand.u32 %v1128, 4294901760
    %v1327 = vsub.f32 %v1128, %v1326
    %v1328 = vand.u32 %v1327, 4294901760
    %v1329 = vsub.f32 %v1327, %v1328
    %v1330 = vand.u32 %v1329, 4294901760
    %1331 = vmatmul.mubr.f32.gmra.mrb[0].mxu0 %v1330
    %v1332 = vpop.f32.mrb[0].mxu0
    %v1333 = vadd.f32 %v1153, %v1332
    %v1334 = vpop.f32.mrb[0].mxu0
    %1335 = vmatprep.mubr.f32.mxu0 0.0
    %v1336 = vand.u32 %v1129, 4294901760
    %v1337 = vsub.f32 %v1129, %v1336
    %v1338 = vand.u32 %v1337, 4294901760
    %v1339 = vsub.f32 %v1337, %v1338
    %v1340 = vand.u32 %v1339, 4294901760
    %1341 = vmatmul.mubr.f32.gmra.mrb[0].mxu0 %v1340
    %v1342 = vpop.f32.mrb[0].mxu0
    %v1343 = vadd.f32 %v1153, %v1342
    %v1344 = vpop.f32.mrb[0].mxu0
    %1345 = vmatprep.mubr.f32.mxu0 0.0
    %v1346 = vand.u32 %v1130, 4294901760
    %v1347 = vsub.f32 %v1130, %v1346
    %v1348 = vand.u32 %v1347, 4294901760
    %v1349 = vsub.f32 %v1347, %v1348
    %v1350 = vand.u32 %v1349, 4294901760
    %1351 = vmatmul.mubr.f32.gmra.mrb[0].mxu0 %v1350
    %v1352 = vpop.f32.mrb[0].mxu0
    %v1353 = vadd.f32 %v1153, %v1352
    %v1354 = vpop.f32.mrb[0].mxu0
    %1355 = vmatprep.mubr.f32.mxu0 0.0
    %v1356 = vand.u32 %v1131, 4294901760
    %v1357 = vsub.f32 %v1131, %v1356
    %v1358 = vand.u32 %v1357, 4294901760
    %v1359 = vsub.f32 %v1357, %v1358
    %v1360 = vand.u32 %v1359, 4294901760
    %1361 = vmatmul.mubr.f32.gmra.mrb[0].mxu0 %v1360
    %v1362 = vpop.f32.mrb[0].mxu0
    %v1363 = vadd.f32 %v1153, %v1362
    %v1364 = vpop.f32.mrb[0].mxu0
    %1365 = vdwg.mxu0
    %1366 = vmatprep.subr.mxu0 0.0
    %v1367 = vand.u32 %v1132, 4294901760
    %v1368 = vsub.f32 %v1132, %v1367
    %v1369 = vand.u32 %v1368, 4294901760
    %v1370 = vsub.f32 %v1368, %v1369
    %v1371 = vand.u32 %v1370, 4294901760
    %1372 = vmatpush1.msra.mxu0 %v1371
    %1373 = vmatprep.subr.mxu0 0.0
    %v1374 = vand.u32 %v1133, 4294901760
    %v1375 = vsub.f32 %v1133, %v1374
    %v1376 = vand.u32 %v1375, 4294901760
    %v1377 = vsub.f32 %v1375, %v1376
    %v1378 = vand.u32 %v1377, 4294901760
    %1379 = vmatpush1.msra.mxu0 %v1378
    %1380 = vmatprep.subr.mxu0 0.0
    %v1381 = vand.u32 %v1134, 4294901760
    %v1382 = vsub.f32 %v1134, %v1381
    %v1383 = vand.u32 %v1382, 4294901760
    %v1384 = vsub.f32 %v1382, %v1383
    %v1385 = vand.u32 %v1384, 4294901760
    %1386 = vmatpush1.msra.mxu0 %v1385
    %1387 = vmatprep.subr.mxu0 0.0
    %v1388 = vand.u32 %v1135, 4294901760
    %v1389 = vsub.f32 %v1135, %v1388
    %v1390 = vand.u32 %v1389, 4294901760
    %v1391 = vsub.f32 %v1389, %v1390
    %v1392 = vand.u32 %v1391, 4294901760
    %1393 = vmatpush1.msra.mxu0 %v1392
    %1394 = vmatprep.subr.mxu0 0.0
    %v1395 = vand.u32 %v1136, 4294901760
    %v1396 = vsub.f32 %v1136, %v1395
    %v1397 = vand.u32 %v1396, 4294901760
    %v1398 = vsub.f32 %v1396, %v1397
    %v1399 = vand.u32 %v1398, 4294901760
    %1400 = vmatpush1.msra.mxu0 %v1399
    %1401 = vmatprep.subr.mxu0 0.0
    %v1402 = vand.u32 %v1137, 4294901760
    %v1403 = vsub.f32 %v1137, %v1402
    %v1404 = vand.u32 %v1403, 4294901760
    %v1405 = vsub.f32 %v1403, %v1404
    %v1406 = vand.u32 %v1405, 4294901760
    %1407 = vmatpush1.msra.mxu0 %v1406
    %1408 = vmatprep.subr.mxu0 0.0
    %v1409 = vand.u32 %v1138, 4294901760
    %v1410 = vsub.f32 %v1138, %v1409
    %v1411 = vand.u32 %v1410, 4294901760
    %v1412 = vsub.f32 %v1410, %v1411
    %v1413 = vand.u32 %v1412, 4294901760
    %1414 = vmatpush1.msra.mxu0 %v1413
    %1415 = vmatprep.subr.mxu0 0.0
    %v1416 = vand.u32 %v1139, 4294901760
    %v1417 = vsub.f32 %v1139, %v1416
    %v1418 = vand.u32 %v1417, 4294901760
    %v1419 = vsub.f32 %v1417, %v1418
    %v1420 = vand.u32 %v1419, 4294901760
    %1421 = vmatpush1.msra.mxu0 %v1420
    %1422 = vmatprep.subr.mxu0 0.0
    %v1423 = vand.u32 %v1140, 4294901760
    %v1424 = vsub.f32 %v1140, %v1423
    %v1425 = vand.u32 %v1424, 4294901760
    %v1426 = vsub.f32 %v1424, %v1425
    %v1427 = vand.u32 %v1426, 4294901760
    %1428 = vmatpush1.msra.mxu0 %v1427
    %1429 = vmatprep.subr.mxu0 0.0
    %v1430 = vand.u32 %v1141, 4294901760
    %v1431 = vsub.f32 %v1141, %v1430
    %v1432 = vand.u32 %v1431, 4294901760
    %v1433 = vsub.f32 %v1431, %v1432
    %v1434 = vand.u32 %v1433, 4294901760
    %1435 = vmatpush1.msra.mxu0 %v1434
    %1436 = vmatprep.subr.mxu0 0.0
    %v1437 = vand.u32 %v1142, 4294901760
    %v1438 = vsub.f32 %v1142, %v1437
    %v1439 = vand.u32 %v1438, 4294901760
    %v1440 = vsub.f32 %v1438, %v1439
    %v1441 = vand.u32 %v1440, 4294901760
    %1442 = vmatpush1.msra.mxu0 %v1441
    %1443 = vmatprep.subr.mxu0 0.0
    %v1444 = vand.u32 %v1143, 4294901760
    %v1445 = vsub.f32 %v1143, %v1444
    %v1446 = vand.u32 %v1445, 4294901760
    %v1447 = vsub.f32 %v1445, %v1446
    %v1448 = vand.u32 %v1447, 4294901760
    %1449 = vmatpush1.msra.mxu0 %v1448
    %1450 = vmatprep.subr.mxu0 0.0
    %v1451 = vand.u32 %v1144, 4294901760
    %v1452 = vsub.f32 %v1144, %v1451
    %v1453 = vand.u32 %v1452, 4294901760
    %v1454 = vsub.f32 %v1452, %v1453
    %v1455 = vand.u32 %v1454, 4294901760
    %1456 = vmatpush1.msra.mxu0 %v1455
    %1457 = vmatprep.subr.mxu0 0.0
    %v1458 = vand.u32 %v1145, 4294901760
    %v1459 = vsub.f32 %v1145, %v1458
    %v1460 = vand.u32 %v1459, 4294901760
    %v1461 = vsub.f32 %v1459, %v1460
    %v1462 = vand.u32 %v1461, 4294901760
    %1463 = vmatpush1.msra.mxu0 %v1462
    %1464 = vmatprep.subr.mxu0 0.0
    %v1465 = vand.u32 %v1146, 4294901760
    %v1466 = vsub.f32 %v1146, %v1465
    %v1467 = vand.u32 %v1466, 4294901760
    %v1468 = vsub.f32 %v1466, %v1467
    %v1469 = vand.u32 %v1468, 4294901760
    %1470 = vmatpush1.msra.mxu0 %v1469
    %1471 = vmatprep.subr.mxu0 0.0
    %v1472 = vand.u32 %v1147, 4294901760
    %v1473 = vsub.f32 %v1147, %v1472
    %v1474 = vand.u32 %v1473, 4294901760
    %v1475 = vsub.f32 %v1473, %v1474
    %v1476 = vand.u32 %v1475, 4294901760
    %1477 = vmatpush1.msra.mxu0 %v1476
    %1478 = vmatprep.subr.mxu0 0.0
    %1479 = vmatpush1.msra.mxu0 0.0
    %1480 = vmatprep.subr.mxu0 0.0
    %1481 = vmatpush1.msra.mxu0 0.0
    %1482 = vmatprep.subr.mxu0 0.0
    %1483 = vmatpush1.msra.mxu0 0.0
    %1484 = vmatprep.subr.mxu0 0.0
    %1485 = vmatpush1.msra.mxu0 0.0
    %1486 = vmatprep.subr.mxu0 0.0
    %1487 = vmatpush1.msra.mxu0 0.0
    %1488 = vmatprep.subr.mxu0 0.0
    %1489 = vmatpush1.msra.mxu0 0.0
    %1490 = vmatprep.subr.mxu0 0.0
    %1491 = vmatpush1.msra.mxu0 0.0
    %1492 = vmatprep.subr.mxu0 0.0
    %1493 = vmatpush1.msra.mxu0 0.0
    %1494 = vmatprep.subr.mxu0 0.0
    %1495 = vmatpush1.msra.mxu0 0.0
    %1496 = vmatprep.subr.mxu0 0.0
    %1497 = vmatpush1.msra.mxu0 0.0
    %1498 = vmatprep.subr.mxu0 0.0
    %1499 = vmatpush1.msra.mxu0 0.0
    %1500 = vmatprep.subr.mxu0 0.0
    %1501 = vmatpush1.msra.mxu0 0.0
    %1502 = vmatprep.subr.mxu0 0.0
    %1503 = vmatpush1.msra.mxu0 0.0
    %1504 = vmatprep.subr.mxu0 0.0
    %1505 = vmatpush1.msra.mxu0 0.0
    %1506 = vmatprep.subr.mxu0 0.0
    %1507 = vmatpush1.msra.mxu0 0.0
    %1508 = vmatprep.subr.mxu0 0.0
    %1509 = vmatpush1.msra.mxu0 0.0
    %1510 = vmatprep.mubr.f32.mxu0 0.0
    %v1511 = vand.u32 %v1119, 4294901760
    %1512 = vmatmul.mubr.f32.gmra.mrb[0].mxu0 %v1511
    %v1513 = vpop.f32.mrb[0].mxu0
    %v1514 = vadd.f32 %v1243, %v1513
    %v1515 = vpop.f32.mrb[0].mxu0
    %1516 = vmatprep.mubr.f32.mxu0 0.0
    %v1517 = vand.u32 %v1120, 4294901760
    %1518 = vmatmul.mubr.f32.gmra.mrb[0].mxu0 %v1517
    %v1519 = vpop.f32.mrb[0].mxu0
    %v1520 = vadd.f32 %v1253, %v1519
    %v1521 = vpop.f32.mrb[0].mxu0
    %1522 = vmatprep.mubr.f32.mxu0 0.0
    %v1523 = vand.u32 %v1121, 4294901760
    %1524 = vmatmul.mubr.f32.gmra.mrb[0].mxu0 %v1523
    %v1525 = vpop.f32.mrb[0].mxu0
    %v1526 = vadd.f32 %v1263, %v1525
    %v1527 = vpop.f32.mrb[0].mxu0
    %1528 = vmatprep.mubr.f32.mxu0 0.0
    %v1529 = vand.u32 %v1122, 4294901760
    %1530 = vmatmul.mubr.f32.gmra.mrb[0].mxu0 %v1529
    %v1531 = vpop.f32.mrb[0].mxu0
    %v1532 = vadd.f32 %v1273, %v1531
    %v1533 = vpop.f32.mrb[0].mxu0
    %1534 = vmatprep.mubr.f32.mxu0 0.0
    %v1535 = vand.u32 %v1123, 4294901760
    %1536 = vmatmul.mubr.f32.gmra.mrb[0].mxu0 %v1535
    %v1537 = vpop.f32.mrb[0].mxu0
    %v1538 = vadd.f32 %v1283, %v1537
    %v1539 = vpop.f32.mrb[0].mxu0
    %1540 = vmatprep.mubr.f32.mxu0 0.0
    %v1541 = vand.u32 %v1124, 4294901760
    %1542 = vmatmul.mubr.f32.gmra.mrb[0].mxu0 %v1541
    %v1543 = vpop.f32.mrb[0].mxu0
    %v1544 = vadd.f32 %v1293, %v1543
    %v1545 = vpop.f32.mrb[0].mxu0
    %1546 = vmatprep.mubr.f32.mxu0 0.0
    %v1547 = vand.u32 %v1125, 4294901760
    %1548 = vmatmul.mubr.f32.gmra.mrb[0].mxu0 %v1547
    %v1549 = vpop.f32.mrb[0].mxu0
    %v1550 = vadd.f32 %v1303, %v1549
    %v1551 = vpop.f32.mrb[0].mxu0
    %1552 = vmatprep.mubr.f32.mxu0 0.0
    %v1553 = vand.u32 %v1126, 4294901760
    %1554 = vmatmul.mubr.f32.gmra.mrb[0].mxu0 %v1553
    %v1555 = vpop.f32.mrb[0].mxu0
    %v1556 = vadd.f32 %v1313, %v1555
    %v1557 = vpop.f32.mrb[0].mxu0
    %1558 = vmatprep.mubr.f32.mxu0 0.0
    %v1559 = vand.u32 %v1127, 4294901760
    %1560 = vmatmul.mubr.f32.gmra.mrb[0].mxu0 %v1559
    %v1561 = vpop.f32.mrb[0].mxu0
    %v1562 = vadd.f32 %v1323, %v1561
    %v1563 = vpop.f32.mrb[0].mxu0
    %1564 = vmatprep.mubr.f32.mxu0 0.0
    %v1565 = vand.u32 %v1128, 4294901760
    %1566 = vmatmul.mubr.f32.gmra.mrb[0].mxu0 %v1565
    %v1567 = vpop.f32.mrb[0].mxu0
    %v1568 = vadd.f32 %v1333, %v1567
    %v1569 = vpop.f32.mrb[0].mxu0
    %1570 = vmatprep.mubr.f32.mxu0 0.0
    %v1571 = vand.u32 %v1129, 4294901760
    %1572 = vmatmul.mubr.f32.gmra.mrb[0].mxu0 %v1571
    %v1573 = vpop.f32.mrb[0].mxu0
    %v1574 = vadd.f32 %v1343, %v1573
    %v1575 = vpop.f32.mrb[0].mxu0
    %1576 = vmatprep.mubr.f32.mxu0 0.0
    %v1577 = vand.u32 %v1130, 4294901760
    %1578 = vmatmul.mubr.f32.gmra.mrb[0].mxu0 %v1577
    %v1579 = vpop.f32.mrb[0].mxu0
    %v1580 = vadd.f32 %v1353, %v1579
    %v1581 = vpop.f32.mrb[0].mxu0
    %1582 = vmatprep.mubr.f32.mxu0 0.0
    %v1583 = vand.u32 %v1131, 4294901760
    %1584 = vmatmul.mubr.f32.gmra.mrb[0].mxu0 %v1583
    %v1585 = vpop.f32.mrb[0].mxu0
    %v1586 = vadd.f32 %v1363, %v1585
    %v1587 = vpop.f32.mrb[0].mxu0
    %1588 = vdwg.mxu0
    %1589 = vmatprep.subr.mxu0 0.0
    %v1590 = vand.u32 %v1132, 4294901760
    %v1591 = vsub.f32 %v1132, %v1590
    %1592 = vmatpush1.msra.mxu0 %v1591
    %1593 = vmatprep.subr.mxu0 0.0
    %v1594 = vand.u32 %v1133, 4294901760
    %v1595 = vsub.f32 %v1133, %v1594
    %1596 = vmatpush1.msra.mxu0 %v1595
    %1597 = vmatprep.subr.mxu0 0.0
    %v1598 = vand.u32 %v1134, 4294901760
    %v1599 = vsub.f32 %v1134, %v1598
    %1600 = vmatpush1.msra.mxu0 %v1599
    %1601 = vmatprep.subr.mxu0 0.0
    %v1602 = vand.u32 %v1135, 4294901760
    %v1603 = vsub.f32 %v1135, %v1602
    %1604 = vmatpush1.msra.mxu0 %v1603
    %1605 = vmatprep.subr.mxu0 0.0
    %v1606 = vand.u32 %v1136, 4294901760
    %v1607 = vsub.f32 %v1136, %v1606
    %1608 = vmatpush1.msra.mxu0 %v1607
    %1609 = vmatprep.subr.mxu0 0.0
    %v1610 = vand.u32 %v1137, 4294901760
    %v1611 = vsub.f32 %v1137, %v1610
    %1612 = vmatpush1.msra.mxu0 %v1611
    %1613 = vmatprep.subr.mxu0 0.0
    %v1614 = vand.u32 %v1138, 4294901760
    %v1615 = vsub.f32 %v1138, %v1614
    %1616 = vmatpush1.msra.mxu0 %v1615
    %1617 = vmatprep.subr.mxu0 0.0
    %v1618 = vand.u32 %v1139, 4294901760
    %v1619 = vsub.f32 %v1139, %v1618
    %1620 = vmatpush1.msra.mxu0 %v1619
    %1621 = vmatprep.subr.mxu0 0.0
    %v1622 = vand.u32 %v1140, 4294901760
    %v1623 = vsub.f32 %v1140, %v1622
    %1624 = vmatpush1.msra.mxu0 %v1623
    %1625 = vmatprep.subr.mxu0 0.0
    %v1626 = vand.u32 %v1141, 4294901760
    %v1627 = vsub.f32 %v1141, %v1626
    %1628 = vmatpush1.msra.mxu0 %v1627
    %1629 = vmatprep.subr.mxu0 0.0
    %v1630 = vand.u32 %v1142, 4294901760
    %v1631 = vsub.f32 %v1142, %v1630
    %1632 = vmatpush1.msra.mxu0 %v1631
    %1633 = vmatprep.subr.mxu0 0.0
    %v1634 = vand.u32 %v1143, 4294901760
    %v1635 = vsub.f32 %v1143, %v1634
    %1636 = vmatpush1.msra.mxu0 %v1635
    %1637 = vmatprep.subr.mxu0 0.0
    %v1638 = vand.u32 %v1144, 4294901760
    %v1639 = vsub.f32 %v1144, %v1638
    %1640 = vmatpush1.msra.mxu0 %v1639
    %1641 = vmatprep.subr.mxu0 0.0
    %v1642 = vand.u32 %v1145, 4294901760
    %v1643 = vsub.f32 %v1145, %v1642
    %1644 = vmatpush1.msra.mxu0 %v1643
    %1645 = vmatprep.subr.mxu0 0.0
    %v1646 = vand.u32 %v1146, 4294901760
    %v1647 = vsub.f32 %v1146, %v1646
    %1648 = vmatpush1.msra.mxu0 %v1647
    %1649 = vmatprep.subr.mxu0 0.0
    %v1650 = vand.u32 %v1147, 4294901760
    %v1651 = vsub.f32 %v1147, %v1650
    %1652 = vmatpush1.msra.mxu0 %v1651
    %1653 = vmatprep.subr.mxu0 0.0
    %1654 = vmatpush1.msra.mxu0 0.0
    %1655 = vmatprep.subr.mxu0 0.0
    %1656 = vmatpush1.msra.mxu0 0.0
    %1657 = vmatprep.subr.mxu0 0.0
    %1658 = vmatpush1.msra.mxu0 0.0
    %1659 = vmatprep.subr.mxu0 0.0
    %1660 = vmatpush1.msra.mxu0 0.0
    %1661 = vmatprep.subr.mxu0 0.0
    %1662 = vmatpush1.msra.mxu0 0.0
    %1663 = vmatprep.subr.mxu0 0.0
    %1664 = vmatpush1.msra.mxu0 0.0
    %1665 = vmatprep.subr.mxu0 0.0
    %1666 = vmatpush1.msra.mxu0 0.0
    %1667 = vmatprep.subr.mxu0 0.0
    %1668 = vmatpush1.msra.mxu0 0.0
    %1669 = vmatprep.subr.mxu0 0.0
    %1670 = vmatpush1.msra.mxu0 0.0
    %1671 = vmatprep.subr.mxu0 0.0
    %1672 = vmatpush1.msra.mxu0 0.0
    %1673 = vmatprep.subr.mxu0 0.0
    %1674 = vmatpush1.msra.mxu0 0.0
    %1675 = vmatprep.subr.mxu0 0.0
    %1676 = vmatpush1.msra.mxu0 0.0
    %1677 = vmatprep.subr.mxu0 0.0
    %1678 = vmatpush1.msra.mxu0 0.0
    %1679 = vmatprep.subr.mxu0 0.0
    %1680 = vmatpush1.msra.mxu0 0.0
    %1681 = vmatprep.subr.mxu0 0.0
    %1682 = vmatpush1.msra.mxu0 0.0
    %1683 = vmatprep.subr.mxu0 0.0
    %1684 = vmatpush1.msra.mxu0 0.0
    %1685 = vmatprep.mubr.f32.mxu0 0.0
    %v1686 = vand.u32 %v1119, 4294901760
    %v1687 = vsub.f32 %v1119, %v1686
    %1688 = vmatmul.mubr.f32.gmra.mrb[0].mxu0 %v1687
    %v1689 = vpop.f32.mrb[0].mxu0
    %v1690 = vadd.f32 %v1514, %v1689
    %v1691 = vpop.f32.mrb[0].mxu0
    %1692 = vmatprep.mubr.f32.mxu0 0.0
    %v1693 = vand.u32 %v1120, 4294901760
    %v1694 = vsub.f32 %v1120, %v1693
    %1695 = vmatmul.mubr.f32.gmra.mrb[0].mxu0 %v1694
    %v1696 = vpop.f32.mrb[0].mxu0
    %v1697 = vadd.f32 %v1520, %v1696
    %v1698 = vpop.f32.mrb[0].mxu0
    %1699 = vmatprep.mubr.f32.mxu0 0.0
    %v1700 = vand.u32 %v1121, 4294901760
    %v1701 = vsub.f32 %v1121, %v1700
    %1702 = vmatmul.mubr.f32.gmra.mrb[0].mxu0 %v1701
    %v1703 = vpop.f32.mrb[0].mxu0
    %v1704 = vadd.f32 %v1526, %v1703
    %v1705 = vpop.f32.mrb[0].mxu0
    %1706 = vmatprep.mubr.f32.mxu0 0.0
    %v1707 = vand.u32 %v1122, 4294901760
    %v1708 = vsub.f32 %v1122, %v1707
    %1709 = vmatmul.mubr.f32.gmra.mrb[0].mxu0 %v1708
    %v1710 = vpop.f32.mrb[0].mxu0
    %v1711 = vadd.f32 %v1532, %v1710
    %v1712 = vpop.f32.mrb[0].mxu0
    %1713 = vmatprep.mubr.f32.mxu0 0.0
    %v1714 = vand.u32 %v1123, 4294901760
    %v1715 = vsub.f32 %v1123, %v1714
    %1716 = vmatmul.mubr.f32.gmra.mrb[0].mxu0 %v1715
    %v1717 = vpop.f32.mrb[0].mxu0
    %v1718 = vadd.f32 %v1538, %v1717
    %v1719 = vpop.f32.mrb[0].mxu0
    %1720 = vmatprep.mubr.f32.mxu0 0.0
    %v1721 = vand.u32 %v1124, 4294901760
    %v1722 = vsub.f32 %v1124, %v1721
    %1723 = vmatmul.mubr.f32.gmra.mrb[0].mxu0 %v1722
    %v1724 = vpop.f32.mrb[0].mxu0
    %v1725 = vadd.f32 %v1544, %v1724
    %v1726 = vpop.f32.mrb[0].mxu0
    %1727 = vmatprep.mubr.f32.mxu0 0.0
    %v1728 = vand.u32 %v1125, 4294901760
    %v1729 = vsub.f32 %v1125, %v1728
    %1730 = vmatmul.mubr.f32.gmra.mrb[0].mxu0 %v1729
    %v1731 = vpop.f32.mrb[0].mxu0
    %v1732 = vadd.f32 %v1550, %v1731
    %v1733 = vpop.f32.mrb[0].mxu0
    %1734 = vmatprep.mubr.f32.mxu0 0.0
    %v1735 = vand.u32 %v1126, 4294901760
    %v1736 = vsub.f32 %v1126, %v1735
    %1737 = vmatmul.mubr.f32.gmra.mrb[0].mxu0 %v1736
    %v1738 = vpop.f32.mrb[0].mxu0
    %v1739 = vadd.f32 %v1556, %v1738
    %v1740 = vpop.f32.mrb[0].mxu0
    %1741 = vmatprep.mubr.f32.mxu0 0.0
    %v1742 = vand.u32 %v1127, 4294901760
    %v1743 = vsub.f32 %v1127, %v1742
    %1744 = vmatmul.mubr.f32.gmra.mrb[0].mxu0 %v1743
    %v1745 = vpop.f32.mrb[0].mxu0
    %v1746 = vadd.f32 %v1562, %v1745
    %v1747 = vpop.f32.mrb[0].mxu0
    %1748 = vmatprep.mubr.f32.mxu0 0.0
    %v1749 = vand.u32 %v1128, 4294901760
    %v1750 = vsub.f32 %v1128, %v1749
    %1751 = vmatmul.mubr.f32.gmra.mrb[0].mxu0 %v1750
    %v1752 = vpop.f32.mrb[0].mxu0
    %v1753 = vadd.f32 %v1568, %v1752
    %v1754 = vpop.f32.mrb[0].mxu0
    %1755 = vmatprep.mubr.f32.mxu0 0.0
    %v1756 = vand.u32 %v1129, 4294901760
    %v1757 = vsub.f32 %v1129, %v1756
    %1758 = vmatmul.mubr.f32.gmra.mrb[0].mxu0 %v1757
    %v1759 = vpop.f32.mrb[0].mxu0
    %v1760 = vadd.f32 %v1574, %v1759
    %v1761 = vpop.f32.mrb[0].mxu0
    %1762 = vmatprep.mubr.f32.mxu0 0.0
    %v1763 = vand.u32 %v1130, 4294901760
    %v1764 = vsub.f32 %v1130, %v1763
    %1765 = vmatmul.mubr.f32.gmra.mrb[0].mxu0 %v1764
    %v1766 = vpop.f32.mrb[0].mxu0
    %v1767 = vadd.f32 %v1580, %v1766
    %v1768 = vpop.f32.mrb[0].mxu0
    %1769 = vmatprep.mubr.f32.mxu0 0.0
    %v1770 = vand.u32 %v1131, 4294901760
    %v1771 = vsub.f32 %v1131, %v1770
    %1772 = vmatmul.mubr.f32.gmra.mrb[0].mxu0 %v1771
    %v1773 = vpop.f32.mrb[0].mxu0
    %v1774 = vadd.f32 %v1586, %v1773
    %v1775 = vpop.f32.mrb[0].mxu0
    %1776 = vdwg.mxu0
    %1777 = vmatprep.subr.mxu0 0.0
    %v1778 = vand.u32 %v1132, 4294901760
    %1779 = vmatpush1.msra.mxu0 %v1778
    %1780 = vmatprep.subr.mxu0 0.0
    %v1781 = vand.u32 %v1133, 4294901760
    %1782 = vmatpush1.msra.mxu0 %v1781
    %1783 = vmatprep.subr.mxu0 0.0
    %v1784 = vand.u32 %v1134, 4294901760
    %1785 = vmatpush1.msra.mxu0 %v1784
    %1786 = vmatprep.subr.mxu0 0.0
    %v1787 = vand.u32 %v1135, 4294901760
    %1788 = vmatpush1.msra.mxu0 %v1787
    %1789 = vmatprep.subr.mxu0 0.0
    %v1790 = vand.u32 %v1136, 4294901760
    %1791 = vmatpush1.msra.mxu0 %v1790
    %1792 = vmatprep.subr.mxu0 0.0
    %v1793 = vand.u32 %v1137, 4294901760
    %1794 = vmatpush1.msra.mxu0 %v1793
    %1795 = vmatprep.subr.mxu0 0.0
    %v1796 = vand.u32 %v1138, 4294901760
    %1797 = vmatpush1.msra.mxu0 %v1796
    %1798 = vmatprep.subr.mxu0 0.0
    %v1799 = vand.u32 %v1139, 4294901760
    %1800 = vmatpush1.msra.mxu0 %v1799
    %1801 = vmatprep.subr.mxu0 0.0
    %v1802 = vand.u32 %v1140, 4294901760
    %1803 = vmatpush1.msra.mxu0 %v1802
    %1804 = vmatprep.subr.mxu0 0.0
    %v1805 = vand.u32 %v1141, 4294901760
    %1806 = vmatpush1.msra.mxu0 %v1805
    %1807 = vmatprep.subr.mxu0 0.0
    %v1808 = vand.u32 %v1142, 4294901760
    %1809 = vmatpush1.msra.mxu0 %v1808
    %1810 = vmatprep.subr.mxu0 0.0
    %v1811 = vand.u32 %v1143, 4294901760
    %1812 = vmatpush1.msra.mxu0 %v1811
    %1813 = vmatprep.subr.mxu0 0.0
    %v1814 = vand.u32 %v1144, 4294901760
    %1815 = vmatpush1.msra.mxu0 %v1814
    %1816 = vmatprep.subr.mxu0 0.0
    %v1817 = vand.u32 %v1145, 4294901760
    %1818 = vmatpush1.msra.mxu0 %v1817
    %1819 = vmatprep.subr.mxu0 0.0
    %v1820 = vand.u32 %v1146, 4294901760
    %1821 = vmatpush1.msra.mxu0 %v1820
    %1822 = vmatprep.subr.mxu0 0.0
    %v1823 = vand.u32 %v1147, 4294901760
    %1824 = vmatpush1.msra.mxu0 %v1823
    %1825 = vmatprep.subr.mxu0 0.0
    %1826 = vmatpush1.msra.mxu0 0.0
    %1827 = vmatprep.subr.mxu0 0.0
    %1828 = vmatpush1.msra.mxu0 0.0
    %1829 = vmatprep.subr.mxu0 0.0
    %1830 = vmatpush1.msra.mxu0 0.0
    %1831 = vmatprep.subr.mxu0 0.0
    %1832 = vmatpush1.msra.mxu0 0.0
    %1833 = vmatprep.subr.mxu0 0.0
    %1834 = vmatpush1.msra.mxu0 0.0
    %1835 = vmatprep.subr.mxu0 0.0
    %1836 = vmatpush1.msra.mxu0 0.0
    %1837 = vmatprep.subr.mxu0 0.0
    %1838 = vmatpush1.msra.mxu0 0.0
    %1839 = vmatprep.subr.mxu0 0.0
    %1840 = vmatpush1.msra.mxu0 0.0
    %1841 = vmatprep.subr.mxu0 0.0
    %1842 = vmatpush1.msra.mxu0 0.0
    %1843 = vmatprep.subr.mxu0 0.0
    %1844 = vmatpush1.msra.mxu0 0.0
    %1845 = vmatprep.subr.mxu0 0.0
    %1846 = vmatpush1.msra.mxu0 0.0
    %1847 = vmatprep.subr.mxu0 0.0
    %1848 = vmatpush1.msra.mxu0 0.0
    %1849 = vmatprep.subr.mxu0 0.0
    %1850 = vmatpush1.msra.mxu0 0.0
    %1851 = vmatprep.subr.mxu0 0.0
    %1852 = vmatpush1.msra.mxu0 0.0
    %1853 = vmatprep.subr.mxu0 0.0
    %1854 = vmatpush1.msra.mxu0 0.0
    %1855 = vmatprep.subr.mxu0 0.0
    %1856 = vmatpush1.msra.mxu0 0.0
    %1857 = vmatprep.mubr.f32.mxu0 0.0
    %v1858 = vand.u32 %v1119, 4294901760
    %v1859 = vsub.f32 %v1119, %v1858
    %v1860 = vand.u32 %v1859, 4294901760
    %1861 = vmatmul.mubr.f32.gmra.mrb[0].mxu0 %v1860
    %v1862 = vpop.f32.mrb[0].mxu0
    %v1863 = vadd.f32 %v1690, %v1862
    %v1864 = vpop.f32.mrb[0].mxu0
    %1865 = vmatprep.mubr.f32.mxu0 0.0
    %v1866 = vand.u32 %v1120, 4294901760
    %v1867 = vsub.f32 %v1120, %v1866
    %v1868 = vand.u32 %v1867, 4294901760
    %1869 = vmatmul.mubr.f32.gmra.mrb[0].mxu0 %v1868
    %v1870 = vpop.f32.mrb[0].mxu0
    %v1871 = vadd.f32 %v1697, %v1870
    %v1872 = vpop.f32.mrb[0].mxu0
    %1873 = vmatprep.mubr.f32.mxu0 0.0
    %v1874 = vand.u32 %v1121, 4294901760
    %v1875 = vsub.f32 %v1121, %v1874
    %v1876 = vand.u32 %v1875, 4294901760
    %1877 = vmatmul.mubr.f32.gmra.mrb[0].mxu0 %v1876
    %v1878 = vpop.f32.mrb[0].mxu0
    %v1879 = vadd.f32 %v1704, %v1878
    %v1880 = vpop.f32.mrb[0].mxu0
    %1881 = vmatprep.mubr.f32.mxu0 0.0
    %v1882 = vand.u32 %v1122, 4294901760
    %v1883 = vsub.f32 %v1122, %v1882
    %v1884 = vand.u32 %v1883, 4294901760
    %1885 = vmatmul.mubr.f32.gmra.mrb[0].mxu0 %v1884
    %v1886 = vpop.f32.mrb[0].mxu0
    %v1887 = vadd.f32 %v1711, %v1886
    %v1888 = vpop.f32.mrb[0].mxu0
    %1889 = vmatprep.mubr.f32.mxu0 0.0
    %v1890 = vand.u32 %v1123, 4294901760
    %v1891 = vsub.f32 %v1123, %v1890
    %v1892 = vand.u32 %v1891, 4294901760
    %1893 = vmatmul.mubr.f32.gmra.mrb[0].mxu0 %v1892
    %v1894 = vpop.f32.mrb[0].mxu0
    %v1895 = vadd.f32 %v1718, %v1894
    %v1896 = vpop.f32.mrb[0].mxu0
    %1897 = vmatprep.mubr.f32.mxu0 0.0
    %v1898 = vand.u32 %v1124, 4294901760
    %v1899 = vsub.f32 %v1124, %v1898
    %v1900 = vand.u32 %v1899, 4294901760
    %1901 = vmatmul.mubr.f32.gmra.mrb[0].mxu0 %v1900
    %v1902 = vpop.f32.mrb[0].mxu0
    %v1903 = vadd.f32 %v1725, %v1902
    %v1904 = vpop.f32.mrb[0].mxu0
    %1905 = vmatprep.mubr.f32.mxu0 0.0
    %v1906 = vand.u32 %v1125, 4294901760
    %v1907 = vsub.f32 %v1125, %v1906
    %v1908 = vand.u32 %v1907, 4294901760
    %1909 = vmatmul.mubr.f32.gmra.mrb[0].mxu0 %v1908
    %v1910 = vpop.f32.mrb[0].mxu0
    %v1911 = vadd.f32 %v1732, %v1910
    %v1912 = vpop.f32.mrb[0].mxu0
    %1913 = vmatprep.mubr.f32.mxu0 0.0
    %v1914 = vand.u32 %v1126, 4294901760
    %v1915 = vsub.f32 %v1126, %v1914
    %v1916 = vand.u32 %v1915, 4294901760
    %1917 = vmatmul.mubr.f32.gmra.mrb[0].mxu0 %v1916
    %v1918 = vpop.f32.mrb[0].mxu0
    %v1919 = vadd.f32 %v1739, %v1918
    %v1920 = vpop.f32.mrb[0].mxu0
    %1921 = vmatprep.mubr.f32.mxu0 0.0
    %v1922 = vand.u32 %v1127, 4294901760
    %v1923 = vsub.f32 %v1127, %v1922
    %v1924 = vand.u32 %v1923, 4294901760
    %1925 = vmatmul.mubr.f32.gmra.mrb[0].mxu0 %v1924
    %v1926 = vpop.f32.mrb[0].mxu0
    %v1927 = vadd.f32 %v1746, %v1926
    %v1928 = vpop.f32.mrb[0].mxu0
    %1929 = vmatprep.mubr.f32.mxu0 0.0
    %v1930 = vand.u32 %v1128, 4294901760
    %v1931 = vsub.f32 %v1128, %v1930
    %v1932 = vand.u32 %v1931, 4294901760
    %1933 = vmatmul.mubr.f32.gmra.mrb[0].mxu0 %v1932
    %v1934 = vpop.f32.mrb[0].mxu0
    %v1935 = vadd.f32 %v1753, %v1934
    %v1936 = vpop.f32.mrb[0].mxu0
    %1937 = vmatprep.mubr.f32.mxu0 0.0
    %v1938 = vand.u32 %v1129, 4294901760
    %v1939 = vsub.f32 %v1129, %v1938
    %v1940 = vand.u32 %v1939, 4294901760
    %1941 = vmatmul.mubr.f32.gmra.mrb[0].mxu0 %v1940
    %v1942 = vpop.f32.mrb[0].mxu0
    %v1943 = vadd.f32 %v1760, %v1942
    %v1944 = vpop.f32.mrb[0].mxu0
    %1945 = vmatprep.mubr.f32.mxu0 0.0
    %v1946 = vand.u32 %v1130, 4294901760
    %v1947 = vsub.f32 %v1130, %v1946
    %v1948 = vand.u32 %v1947, 4294901760
    %1949 = vmatmul.mubr.f32.gmra.mrb[0].mxu0 %v1948
    %v1950 = vpop.f32.mrb[0].mxu0
    %v1951 = vadd.f32 %v1767, %v1950
    %v1952 = vpop.f32.mrb[0].mxu0
    %1953 = vmatprep.mubr.f32.mxu0 0.0
    %v1954 = vand.u32 %v1131, 4294901760
    %v1955 = vsub.f32 %v1131, %v1954
    %v1956 = vand.u32 %v1955, 4294901760
    %1957 = vmatmul.mubr.f32.gmra.mrb[0].mxu0 %v1956
    %v1958 = vpop.f32.mrb[0].mxu0
    %v1959 = vadd.f32 %v1774, %v1958
    %v1960 = vpop.f32.mrb[0].mxu0
    %1961 = vdwg.mxu0
    %1962 = vmatprep.subr.mxu0 0.0
    %v1963 = vand.u32 %v1132, 4294901760
    %v1964 = vsub.f32 %v1132, %v1963
    %v1965 = vand.u32 %v1964, 4294901760
    %1966 = vmatpush1.msra.mxu0 %v1965
    %1967 = vmatprep.subr.mxu0 0.0
    %v1968 = vand.u32 %v1133, 4294901760
    %v1969 = vsub.f32 %v1133, %v1968
    %v1970 = vand.u32 %v1969, 4294901760
    %1971 = vmatpush1.msra.mxu0 %v1970
    %1972 = vmatprep.subr.mxu0 0.0
    %v1973 = vand.u32 %v1134, 4294901760
    %v1974 = vsub.f32 %v1134, %v1973
    %v1975 = vand.u32 %v1974, 4294901760
    %1976 = vmatpush1.msra.mxu0 %v1975
    %1977 = vmatprep.subr.mxu0 0.0
    %v1978 = vand.u32 %v1135, 4294901760
    %v1979 = vsub.f32 %v1135, %v1978
    %v1980 = vand.u32 %v1979, 4294901760
    %1981 = vmatpush1.msra.mxu0 %v1980
    %1982 = vmatprep.subr.mxu0 0.0
    %v1983 = vand.u32 %v1136, 4294901760
    %v1984 = vsub.f32 %v1136, %v1983
    %v1985 = vand.u32 %v1984, 4294901760
    %1986 = vmatpush1.msra.mxu0 %v1985
    %1987 = vmatprep.subr.mxu0 0.0
    %v1988 = vand.u32 %v1137, 4294901760
    %v1989 = vsub.f32 %v1137, %v1988
    %v1990 = vand.u32 %v1989, 4294901760
    %1991 = vmatpush1.msra.mxu0 %v1990
    %1992 = vmatprep.subr.mxu0 0.0
    %v1993 = vand.u32 %v1138, 4294901760
    %v1994 = vsub.f32 %v1138, %v1993
    %v1995 = vand.u32 %v1994, 4294901760
    %1996 = vmatpush1.msra.mxu0 %v1995
    %1997 = vmatprep.subr.mxu0 0.0
    %v1998 = vand.u32 %v1139, 4294901760
    %v1999 = vsub.f32 %v1139, %v1998
    %v2000 = vand.u32 %v1999, 4294901760
    %2001 = vmatpush1.msra.mxu0 %v2000
    %2002 = vmatprep.subr.mxu0 0.0
    %v2003 = vand.u32 %v1140, 4294901760
    %v2004 = vsub.f32 %v1140, %v2003
    %v2005 = vand.u32 %v2004, 4294901760
    %2006 = vmatpush1.msra.mxu0 %v2005
    %2007 = vmatprep.subr.mxu0 0.0
    %v2008 = vand.u32 %v1141, 4294901760
    %v2009 = vsub.f32 %v1141, %v2008
    %v2010 = vand.u32 %v2009, 4294901760
    %2011 = vmatpush1.msra.mxu0 %v2010
    %2012 = vmatprep.subr.mxu0 0.0
    %v2013 = vand.u32 %v1142, 4294901760
    %v2014 = vsub.f32 %v1142, %v2013
    %v2015 = vand.u32 %v2014, 4294901760
    %2016 = vmatpush1.msra.mxu0 %v2015
    %2017 = vmatprep.subr.mxu0 0.0
    %v2018 = vand.u32 %v1143, 4294901760
    %v2019 = vsub.f32 %v1143, %v2018
    %v2020 = vand.u32 %v2019, 4294901760
    %2021 = vmatpush1.msra.mxu0 %v2020
    %2022 = vmatprep.subr.mxu0 0.0
    %v2023 = vand.u32 %v1144, 4294901760
    %v2024 = vsub.f32 %v1144, %v2023
    %v2025 = vand.u32 %v2024, 4294901760
    %2026 = vmatpush1.msra.mxu0 %v2025
    %2027 = vmatprep.subr.mxu0 0.0
    %v2028 = vand.u32 %v1145, 4294901760
    %v2029 = vsub.f32 %v1145, %v2028
    %v2030 = vand.u32 %v2029, 4294901760
    %2031 = vmatpush1.msra.mxu0 %v2030
    %2032 = vmatprep.subr.mxu0 0.0
    %v2033 = vand.u32 %v1146, 4294901760
    %v2034 = vsub.f32 %v1146, %v2033
    %v2035 = vand.u32 %v2034, 4294901760
    %2036 = vmatpush1.msra.mxu0 %v2035
    %2037 = vmatprep.subr.mxu0 0.0
    %v2038 = vand.u32 %v1147, 4294901760
    %v2039 = vsub.f32 %v1147, %v2038
    %v2040 = vand.u32 %v2039, 4294901760
    %2041 = vmatpush1.msra.mxu0 %v2040
    %2042 = vmatprep.subr.mxu0 0.0
    %2043 = vmatpush1.msra.mxu0 0.0
    %2044 = vmatprep.subr.mxu0 0.0
    %2045 = vmatpush1.msra.mxu0 0.0
    %2046 = vmatprep.subr.mxu0 0.0
    %2047 = vmatpush1.msra.mxu0 0.0
    %2048 = vmatprep.subr.mxu0 0.0
    %2049 = vmatpush1.msra.mxu0 0.0
    %2050 = vmatprep.subr.mxu0 0.0
    %2051 = vmatpush1.msra.mxu0 0.0
    %2052 = vmatprep.subr.mxu0 0.0
    %2053 = vmatpush1.msra.mxu0 0.0
    %2054 = vmatprep.subr.mxu0 0.0
    %2055 = vmatpush1.msra.mxu0 0.0
    %2056 = vmatprep.subr.mxu0 0.0
    %2057 = vmatpush1.msra.mxu0 0.0
    %2058 = vmatprep.subr.mxu0 0.0
    %2059 = vmatpush1.msra.mxu0 0.0
    %2060 = vmatprep.subr.mxu0 0.0
    %2061 = vmatpush1.msra.mxu0 0.0
    %2062 = vmatprep.subr.mxu0 0.0
    %2063 = vmatpush1.msra.mxu0 0.0
    %2064 = vmatprep.subr.mxu0 0.0
    %2065 = vmatpush1.msra.mxu0 0.0
    %2066 = vmatprep.subr.mxu0 0.0
    %2067 = vmatpush1.msra.mxu0 0.0
    %2068 = vmatprep.subr.mxu0 0.0
    %2069 = vmatpush1.msra.mxu0 0.0
    %2070 = vmatprep.subr.mxu0 0.0
    %2071 = vmatpush1.msra.mxu0 0.0
    %2072 = vmatprep.subr.mxu0 0.0
    %2073 = vmatpush1.msra.mxu0 0.0
    %2074 = vmatprep.mubr.f32.mxu0 0.0
    %v2075 = vand.u32 %v1119, 4294901760
    %2076 = vmatmul.mubr.f32.gmra.mrb[0].mxu0 %v2075
    %v2077 = vpop.f32.mrb[0].mxu0
    %v2078 = vadd.f32 %v1863, %v2077
    %v2079 = vpop.f32.mrb[0].mxu0
    %2080 = vmatprep.mubr.f32.mxu0 0.0
    %v2081 = vand.u32 %v1120, 4294901760
    %2082 = vmatmul.mubr.f32.gmra.mrb[0].mxu0 %v2081
    %v2083 = vpop.f32.mrb[0].mxu0
    %v2084 = vadd.f32 %v1871, %v2083
    %v2085 = vpop.f32.mrb[0].mxu0
    %2086 = vmatprep.mubr.f32.mxu0 0.0
    %v2087 = vand.u32 %v1121, 4294901760
    %2088 = vmatmul.mubr.f32.gmra.mrb[0].mxu0 %v2087
    %v2089 = vpop.f32.mrb[0].mxu0
    %v2090 = vadd.f32 %v1879, %v2089
    %v2091 = vpop.f32.mrb[0].mxu0
    %2092 = vmatprep.mubr.f32.mxu0 0.0
    %v2093 = vand.u32 %v1122, 4294901760
    %2094 = vmatmul.mubr.f32.gmra.mrb[0].mxu0 %v2093
    %v2095 = vpop.f32.mrb[0].mxu0
    %v2096 = vadd.f32 %v1887, %v2095
    %v2097 = vpop.f32.mrb[0].mxu0
    %2098 = vmatprep.mubr.f32.mxu0 0.0
    %v2099 = vand.u32 %v1123, 4294901760
    %2100 = vmatmul.mubr.f32.gmra.mrb[0].mxu0 %v2099
    %v2101 = vpop.f32.mrb[0].mxu0
    %v2102 = vadd.f32 %v1895, %v2101
    %v2103 = vpop.f32.mrb[0].mxu0
    %2104 = vmatprep.mubr.f32.mxu0 0.0
    %v2105 = vand.u32 %v1124, 4294901760
    %2106 = vmatmul.mubr.f32.gmra.mrb[0].mxu0 %v2105
    %v2107 = vpop.f32.mrb[0].mxu0
    %v2108 = vadd.f32 %v1903, %v2107
    %v2109 = vpop.f32.mrb[0].mxu0
    %2110 = vmatprep.mubr.f32.mxu0 0.0
    %v2111 = vand.u32 %v1125, 4294901760
    %2112 = vmatmul.mubr.f32.gmra.mrb[0].mxu0 %v2111
    %v2113 = vpop.f32.mrb[0].mxu0
    %v2114 = vadd.f32 %v1911, %v2113
    %v2115 = vpop.f32.mrb[0].mxu0
    %2116 = vmatprep.mubr.f32.mxu0 0.0
    %v2117 = vand.u32 %v1126, 4294901760
    %2118 = vmatmul.mubr.f32.gmra.mrb[0].mxu0 %v2117
    %v2119 = vpop.f32.mrb[0].mxu0
    %v2120 = vadd.f32 %v1919, %v2119
    %v2121 = vpop.f32.mrb[0].mxu0
    %2122 = vmatprep.mubr.f32.mxu0 0.0
    %v2123 = vand.u32 %v1127, 4294901760
    %2124 = vmatmul.mubr.f32.gmra.mrb[0].mxu0 %v2123
    %v2125 = vpop.f32.mrb[0].mxu0
    %v2126 = vadd.f32 %v1927, %v2125
    %v2127 = vpop.f32.mrb[0].mxu0
    %2128 = vmatprep.mubr.f32.mxu0 0.0
    %v2129 = vand.u32 %v1128, 4294901760
    %2130 = vmatmul.mubr.f32.gmra.mrb[0].mxu0 %v2129
    %v2131 = vpop.f32.mrb[0].mxu0
    %v2132 = vadd.f32 %v1935, %v2131
    %v2133 = vpop.f32.mrb[0].mxu0
    %2134 = vmatprep.mubr.f32.mxu0 0.0
    %v2135 = vand.u32 %v1129, 4294901760
    %2136 = vmatmul.mubr.f32.gmra.mrb[0].mxu0 %v2135
    %v2137 = vpop.f32.mrb[0].mxu0
    %v2138 = vadd.f32 %v1943, %v2137
    %v2139 = vpop.f32.mrb[0].mxu0
    %2140 = vmatprep.mubr.f32.mxu0 0.0
    %v2141 = vand.u32 %v1130, 4294901760
    %2142 = vmatmul.mubr.f32.gmra.mrb[0].mxu0 %v2141
    %v2143 = vpop.f32.mrb[0].mxu0
    %v2144 = vadd.f32 %v1951, %v2143
    %v2145 = vpop.f32.mrb[0].mxu0
    %2146 = vmatprep.mubr.f32.mxu0 0.0
    %v2147 = vand.u32 %v1131, 4294901760
    %2148 = vmatmul.mubr.f32.gmra.mrb[0].mxu0 %v2147
    %v2149 = vpop.f32.mrb[0].mxu0
    %v2150 = vadd.f32 %v1959, %v2149
    %v2151 = vpop.f32.mrb[0].mxu0
    %2152 = vdwg.mxu0
    %2153 = vmatprep.subr.mxu0 0.0
    %v2154 = vand.u32 %v1132, 4294901760
    %2155 = vmatpush1.msra.mxu0 %v2154
    %2156 = vmatprep.subr.mxu0 0.0
    %v2157 = vand.u32 %v1133, 4294901760
    %2158 = vmatpush1.msra.mxu0 %v2157
    %2159 = vmatprep.subr.mxu0 0.0
    %v2160 = vand.u32 %v1134, 4294901760
    %2161 = vmatpush1.msra.mxu0 %v2160
    %2162 = vmatprep.subr.mxu0 0.0
    %v2163 = vand.u32 %v1135, 4294901760
    %2164 = vmatpush1.msra.mxu0 %v2163
    %2165 = vmatprep.subr.mxu0 0.0
    %v2166 = vand.u32 %v1136, 4294901760
    %2167 = vmatpush1.msra.mxu0 %v2166
    %2168 = vmatprep.subr.mxu0 0.0
    %v2169 = vand.u32 %v1137, 4294901760
    %2170 = vmatpush1.msra.mxu0 %v2169
    %2171 = vmatprep.subr.mxu0 0.0
    %v2172 = vand.u32 %v1138, 4294901760
    %2173 = vmatpush1.msra.mxu0 %v2172
    %2174 = vmatprep.subr.mxu0 0.0
    %v2175 = vand.u32 %v1139, 4294901760
    %2176 = vmatpush1.msra.mxu0 %v2175
    %2177 = vmatprep.subr.mxu0 0.0
    %v2178 = vand.u32 %v1140, 4294901760
    %2179 = vmatpush1.msra.mxu0 %v2178
    %2180 = vmatprep.subr.mxu0 0.0
    %v2181 = vand.u32 %v1141, 4294901760
    %2182 = vmatpush1.msra.mxu0 %v2181
    %2183 = vmatprep.subr.mxu0 0.0
    %v2184 = vand.u32 %v1142, 4294901760
    %2185 = vmatpush1.msra.mxu0 %v2184
    %2186 = vmatprep.subr.mxu0 0.0
    %v2187 = vand.u32 %v1143, 4294901760
    %2188 = vmatpush1.msra.mxu0 %v2187
    %2189 = vmatprep.subr.mxu0 0.0
    %v2190 = vand.u32 %v1144, 4294901760
    %2191 = vmatpush1.msra.mxu0 %v2190
    %2192 = vmatprep.subr.mxu0 0.0
    %v2193 = vand.u32 %v1145, 4294901760
    %2194 = vmatpush1.msra.mxu0 %v2193
    %2195 = vmatprep.subr.mxu0 0.0
    %v2196 = vand.u32 %v1146, 4294901760
    %2197 = vmatpush1.msra.mxu0 %v2196
    %2198 = vmatprep.subr.mxu0 0.0
    %v2199 = vand.u32 %v1147, 4294901760
    %2200 = vmatpush1.msra.mxu0 %v2199
    %2201 = vmatprep.subr.mxu0 0.0
    %2202 = vmatpush1.msra.mxu0 0.0
    %2203 = vmatprep.subr.mxu0 0.0
    %2204 = vmatpush1.msra.mxu0 0.0
    %2205 = vmatprep.subr.mxu0 0.0
    %2206 = vmatpush1.msra.mxu0 0.0
    %2207 = vmatprep.subr.mxu0 0.0
    %2208 = vmatpush1.msra.mxu0 0.0
    %2209 = vmatprep.subr.mxu0 0.0
    %2210 = vmatpush1.msra.mxu0 0.0
    %2211 = vmatprep.subr.mxu0 0.0
    %2212 = vmatpush1.msra.mxu0 0.0
    %2213 = vmatprep.subr.mxu0 0.0
    %2214 = vmatpush1.msra.mxu0 0.0
    %2215 = vmatprep.subr.mxu0 0.0
    %2216 = vmatpush1.msra.mxu0 0.0
    %2217 = vmatprep.subr.mxu0 0.0
    %2218 = vmatpush1.msra.mxu0 0.0
    %2219 = vmatprep.subr.mxu0 0.0
    %2220 = vmatpush1.msra.mxu0 0.0
    %2221 = vmatprep.subr.mxu0 0.0
    %2222 = vmatpush1.msra.mxu0 0.0
    %2223 = vmatprep.subr.mxu0 0.0
    %2224 = vmatpush1.msra.mxu0 0.0
    %2225 = vmatprep.subr.mxu0 0.0
    %2226 = vmatpush1.msra.mxu0 0.0
    %2227 = vmatprep.subr.mxu0 0.0
    %2228 = vmatpush1.msra.mxu0 0.0
    %2229 = vmatprep.subr.mxu0 0.0
    %2230 = vmatpush1.msra.mxu0 0.0
    %2231 = vmatprep.subr.mxu0 0.0
    %2232 = vmatpush1.msra.mxu0 0.0
    %2233 = vmatprep.mubr.f32.mxu0 0.0
    %v2234 = vand.u32 %v1119, 4294901760
    %2235 = vmatmul.mubr.f32.gmra.mrb[0].mxu0 %v2234
    %v2236 = vpop.f32.mrb[0].mxu0
    %v2237 = vadd.f32 %v2078, %v2236
    %v2238 = vpop.f32.mrb[0].mxu0
    %2239 = vmatprep.mubr.f32.mxu0 0.0
    %v2240 = vand.u32 %v1120, 4294901760
    %2241 = vmatmul.mubr.f32.gmra.mrb[0].mxu0 %v2240
    %v2242 = vpop.f32.mrb[0].mxu0
    %v2243 = vadd.f32 %v2084, %v2242
    %v2244 = vpop.f32.mrb[0].mxu0
    %2245 = vmatprep.mubr.f32.mxu0 0.0
    %v2246 = vand.u32 %v1121, 4294901760
    %2247 = vmatmul.mubr.f32.gmra.mrb[0].mxu0 %v2246
    %v2248 = vpop.f32.mrb[0].mxu0
    %v2249 = vadd.f32 %v2090, %v2248
    %v2250 = vpop.f32.mrb[0].mxu0
    %2251 = vmatprep.mubr.f32.mxu0 0.0
    %v2252 = vand.u32 %v1122, 4294901760
    %2253 = vmatmul.mubr.f32.gmra.mrb[0].mxu0 %v2252
    %v2254 = vpop.f32.mrb[0].mxu0
    %v2255 = vadd.f32 %v2096, %v2254
    %v2256 = vpop.f32.mrb[0].mxu0
    %2257 = vmatprep.mubr.f32.mxu0 0.0
    %v2258 = vand.u32 %v1123, 4294901760
    %2259 = vmatmul.mubr.f32.gmra.mrb[0].mxu0 %v2258
    %v2260 = vpop.f32.mrb[0].mxu0
    %v2261 = vadd.f32 %v2102, %v2260
    %v2262 = vpop.f32.mrb[0].mxu0
    %2263 = vmatprep.mubr.f32.mxu0 0.0
    %v2264 = vand.u32 %v1124, 4294901760
    %2265 = vmatmul.mubr.f32.gmra.mrb[0].mxu0 %v2264
    %v2266 = vpop.f32.mrb[0].mxu0
    %v2267 = vadd.f32 %v2108, %v2266
    %v2268 = vpop.f32.mrb[0].mxu0
    %2269 = vmatprep.mubr.f32.mxu0 0.0
    %v2270 = vand.u32 %v1125, 4294901760
    %2271 = vmatmul.mubr.f32.gmra.mrb[0].mxu0 %v2270
    %v2272 = vpop.f32.mrb[0].mxu0
    %v2273 = vadd.f32 %v2114, %v2272
    %v2274 = vpop.f32.mrb[0].mxu0
    %2275 = vmatprep.mubr.f32.mxu0 0.0
    %v2276 = vand.u32 %v1126, 4294901760
    %2277 = vmatmul.mubr.f32.gmra.mrb[0].mxu0 %v2276
    %v2278 = vpop.f32.mrb[0].mxu0
    %v2279 = vadd.f32 %v2120, %v2278
    %v2280 = vpop.f32.mrb[0].mxu0
    %2281 = vmatprep.mubr.f32.mxu0 0.0
    %v2282 = vand.u32 %v1127, 4294901760
    %2283 = vmatmul.mubr.f32.gmra.mrb[0].mxu0 %v2282
    %v2284 = vpop.f32.mrb[0].mxu0
    %v2285 = vadd.f32 %v2126, %v2284
    %v2286 = vpop.f32.mrb[0].mxu0
    %2287 = vmatprep.mubr.f32.mxu0 0.0
    %v2288 = vand.u32 %v1128, 4294901760
    %2289 = vmatmul.mubr.f32.gmra.mrb[0].mxu0 %v2288
    %v2290 = vpop.f32.mrb[0].mxu0
    %v2291 = vadd.f32 %v2132, %v2290
    %v2292 = vpop.f32.mrb[0].mxu0
    %2293 = vmatprep.mubr.f32.mxu0 0.0
    %v2294 = vand.u32 %v1129, 4294901760
    %2295 = vmatmul.mubr.f32.gmra.mrb[0].mxu0 %v2294
    %v2296 = vpop.f32.mrb[0].mxu0
    %v2297 = vadd.f32 %v2138, %v2296
    %v2298 = vpop.f32.mrb[0].mxu0
    %2299 = vmatprep.mubr.f32.mxu0 0.0
    %v2300 = vand.u32 %v1130, 4294901760
    %2301 = vmatmul.mubr.f32.gmra.mrb[0].mxu0 %v2300
    %v2302 = vpop.f32.mrb[0].mxu0
    %v2303 = vadd.f32 %v2144, %v2302
    %v2304 = vpop.f32.mrb[0].mxu0
    %2305 = vmatprep.mubr.f32.mxu0 0.0
    %v2306 = vand.u32 %v1131, 4294901760
    %2307 = vmatmul.mubr.f32.gmra.mrb[0].mxu0 %v2306
    %v2308 = vpop.f32.mrb[0].mxu0
    %v2309 = vadd.f32 %v2150, %v2308
    %v2310 = vpop.f32.mrb[0].mxu0
    %2311 = vdwg.mxu0
    %v2312 = vmax.f32 %v2237, 0.0
    %v2313 = vmax.f32 %v2243, 0.0
    %v2314 = vmax.f32 %v2249, 0.0
    %v2315 = vmax.f32 %v2255, 0.0
    %v2316 = vmax.f32 %v2261, 0.0
    %v2317 = vmax.f32 %v2267, 0.0
    %v2318 = vmax.f32 %v2273, 0.0
    %v2319 = vmax.f32 %v2279, 0.0
    %v2320 = vmax.f32 %v2285, 0.0
    %v2321 = vmax.f32 %v2291, 0.0
    %v2322 = vmax.f32 %v2297, 0.0
    %v2323 = vmax.f32 %v2303, 0.0
    %v2324 = vmax.f32 %v2309, 0.0
    %v2325 = vld [vmem:[#allocation4] sm:$0xff]
    %v2326 = vld [vmem:[#allocation4 + $0x8] sm:$0xff]
    %v2327 = vld [vmem:[#allocation4 + $0x10] sm:$0xff]
    %v2328 = vld [vmem:[#allocation4 + $0x18] sm:$0xff]
    %v2329 = vld [vmem:[#allocation4 + $0x20] sm:$0xff]
    %v2330 = vld [vmem:[#allocation4 + $0x28] sm:$0xff]
    %v2331 = vld [vmem:[#allocation4 + $0x30] sm:$0xff]
    %v2332 = vld [vmem:[#allocation4 + $0x38] sm:$0xff]
    %v2333 = vld [vmem:[#allocation4 + $0x40] sm:$0xff]
    %v2334 = vld [vmem:[#allocation4 + $0x48] sm:$0xff]
    %v2335 = vld [vmem:[#allocation4 + $0x50] sm:$0xff]
    %v2336 = vld [vmem:[#allocation4 + $0x58] sm:$0xff]
    %v2337 = vld [vmem:[#allocation4 + $0x60] sm:$0xff]
    %v2338 = vld [vmem:[#allocation4 + $0x68] sm:$0xff]
    %v2339 = vld [vmem:[#allocation4 + $0x70] sm:$0xff]
    %v2340 = vld [vmem:[#allocation4 + $0x78] sm:$0xff]
    %v2341 = vld [vmem:[%s6] sm:$0x1]
    %v2343 = vlaneseq
    %v2344 = vshrl.u32 %v2343, 7
    %v2345 = vsub.s32 0, %v2344
    %v2346 = vrot.slane %v2341, %v2345
    %2348 = vmatprep.subr.mxu0 0.0
    %v2349 = vand.u32 %v2325, 4294901760
    %2350 = vmatpush1.msra.mxu0 %v2349
    %2351 = vmatprep.subr.mxu0 0.0
    %v2352 = vand.u32 %v2326, 4294901760
    %2353 = vmatpush1.msra.mxu0 %v2352
    %2354 = vmatprep.subr.mxu0 0.0
    %v2355 = vand.u32 %v2327, 4294901760
    %2356 = vmatpush1.msra.mxu0 %v2355
    %2357 = vmatprep.subr.mxu0 0.0
    %v2358 = vand.u32 %v2328, 4294901760
    %2359 = vmatpush1.msra.mxu0 %v2358
    %2360 = vmatprep.subr.mxu0 0.0
    %v2361 = vand.u32 %v2329, 4294901760
    %2362 = vmatpush1.msra.mxu0 %v2361
    %2363 = vmatprep.subr.mxu0 0.0
    %v2364 = vand.u32 %v2330, 4294901760
    %2365 = vmatpush1.msra.mxu0 %v2364
    %2366 = vmatprep.subr.mxu0 0.0
    %v2367 = vand.u32 %v2331, 4294901760
    %2368 = vmatpush1.msra.mxu0 %v2367
    %2369 = vmatprep.subr.mxu0 0.0
    %v2370 = vand.u32 %v2332, 4294901760
    %2371 = vmatpush1.msra.mxu0 %v2370
    %2372 = vmatprep.subr.mxu0 0.0
    %v2373 = vand.u32 %v2333, 4294901760
    %2374 = vmatpush1.msra.mxu0 %v2373
    %2375 = vmatprep.subr.mxu0 0.0
    %v2376 = vand.u32 %v2334, 4294901760
    %2377 = vmatpush1.msra.mxu0 %v2376
    %2378 = vmatprep.subr.mxu0 0.0
    %v2379 = vand.u32 %v2335, 4294901760
    %2380 = vmatpush1.msra.mxu0 %v2379
    %2381 = vmatprep.subr.mxu0 0.0
    %v2382 = vand.u32 %v2336, 4294901760
    %2383 = vmatpush1.msra.mxu0 %v2382
    %2384 = vmatprep.subr.mxu0 0.0
    %v2385 = vand.u32 %v2337, 4294901760
    %2386 = vmatpush1.msra.mxu0 %v2385
    %2387 = vmatprep.subr.mxu0 0.0
    %v2388 = vand.u32 %v2338, 4294901760
    %2389 = vmatpush1.msra.mxu0 %v2388
    %2390 = vmatprep.subr.mxu0 0.0
    %v2391 = vand.u32 %v2339, 4294901760
    %2392 = vmatpush1.msra.mxu0 %v2391
    %2393 = vmatprep.subr.mxu0 0.0
    %v2394 = vand.u32 %v2340, 4294901760
    %2395 = vmatpush1.msra.mxu0 %v2394
    %2396 = vmatprep.subr.mxu0 0.0
    %2397 = vmatpush1.msra.mxu0 0.0
    %2398 = vmatprep.subr.mxu0 0.0
    %2399 = vmatpush1.msra.mxu0 0.0
    %2400 = vmatprep.subr.mxu0 0.0
    %2401 = vmatpush1.msra.mxu0 0.0
    %2402 = vmatprep.subr.mxu0 0.0
    %2403 = vmatpush1.msra.mxu0 0.0
    %2404 = vmatprep.subr.mxu0 0.0
    %2405 = vmatpush1.msra.mxu0 0.0
    %2406 = vmatprep.subr.mxu0 0.0
    %2407 = vmatpush1.msra.mxu0 0.0
    %2408 = vmatprep.subr.mxu0 0.0
    %2409 = vmatpush1.msra.mxu0 0.0
    %2410 = vmatprep.subr.mxu0 0.0
    %2411 = vmatpush1.msra.mxu0 0.0
    %2412 = vmatprep.subr.mxu0 0.0
    %2413 = vmatpush1.msra.mxu0 0.0
    %2414 = vmatprep.subr.mxu0 0.0
    %2415 = vmatpush1.msra.mxu0 0.0
    %2416 = vmatprep.subr.mxu0 0.0
    %2417 = vmatpush1.msra.mxu0 0.0
    %2418 = vmatprep.subr.mxu0 0.0
    %2419 = vmatpush1.msra.mxu0 0.0
    %2420 = vmatprep.subr.mxu0 0.0
    %2421 = vmatpush1.msra.mxu0 0.0
    %2422 = vmatprep.subr.mxu0 0.0
    %2423 = vmatpush1.msra.mxu0 0.0
    %2424 = vmatprep.subr.mxu0 0.0
    %2425 = vmatpush1.msra.mxu0 0.0
    %2426 = vmatprep.subr.mxu0 0.0
    %2427 = vmatpush1.msra.mxu0 0.0
    %2428 = vmatprep.mubr.f32.mxu0 0.0
    %v2429 = vand.u32 %v2312, 4294901760
    %v2430 = vsub.f32 %v2312, %v2429
    %v2431 = vand.u32 %v2430, 4294901760
    %v2432 = vsub.f32 %v2430, %v2431
    %v2433 = vand.u32 %v2432, 4294901760
    %2434 = vmatmul.mubr.f32.gmra.mrb[0].mxu0 %v2433
    %v2435 = vpop.f32.mrb[0].mxu0
    %v2436 = vadd.f32 %v2346, %v2435
    %v2437 = vpop.f32.mrb[0].mxu0
    %2438 = vmatprep.mubr.f32.mxu0 0.0
    %v2439 = vand.u32 %v2313, 4294901760
    %v2440 = vsub.f32 %v2313, %v2439
    %v2441 = vand.u32 %v2440, 4294901760
    %v2442 = vsub.f32 %v2440, %v2441
    %v2443 = vand.u32 %v2442, 4294901760
    %2444 = vmatmul.mubr.f32.gmra.mrb[0].mxu0 %v2443
    %v2445 = vpop.f32.mrb[0].mxu0
    %v2446 = vadd.f32 %v2346, %v2445
    %v2447 = vpop.f32.mrb[0].mxu0
    %2448 = vmatprep.mubr.f32.mxu0 0.0
    %v2449 = vand.u32 %v2314, 4294901760
    %v2450 = vsub.f32 %v2314, %v2449
    %v2451 = vand.u32 %v2450, 4294901760
    %v2452 = vsub.f32 %v2450, %v2451
    %v2453 = vand.u32 %v2452, 4294901760
    %2454 = vmatmul.mubr.f32.gmra.mrb[0].mxu0 %v2453
    %v2455 = vpop.f32.mrb[0].mxu0
    %v2456 = vadd.f32 %v2346, %v2455
    %v2457 = vpop.f32.mrb[0].mxu0
    %2458 = vmatprep.mubr.f32.mxu0 0.0
    %v2459 = vand.u32 %v2315, 4294901760
    %v2460 = vsub.f32 %v2315, %v2459
    %v2461 = vand.u32 %v2460, 4294901760
    %v2462 = vsub.f32 %v2460, %v2461
    %v2463 = vand.u32 %v2462, 4294901760
    %2464 = vmatmul.mubr.f32.gmra.mrb[0].mxu0 %v2463
    %v2465 = vpop.f32.mrb[0].mxu0
    %v2466 = vadd.f32 %v2346, %v2465
    %v2467 = vpop.f32.mrb[0].mxu0
    %2468 = vmatprep.mubr.f32.mxu0 0.0
    %v2469 = vand.u32 %v2316, 4294901760
    %v2470 = vsub.f32 %v2316, %v2469
    %v2471 = vand.u32 %v2470, 4294901760
    %v2472 = vsub.f32 %v2470, %v2471
    %v2473 = vand.u32 %v2472, 4294901760
    %2474 = vmatmul.mubr.f32.gmra.mrb[0].mxu0 %v2473
    %v2475 = vpop.f32.mrb[0].mxu0
    %v2476 = vadd.f32 %v2346, %v2475
    %v2477 = vpop.f32.mrb[0].mxu0
    %2478 = vmatprep.mubr.f32.mxu0 0.0
    %v2479 = vand.u32 %v2317, 4294901760
    %v2480 = vsub.f32 %v2317, %v2479
    %v2481 = vand.u32 %v2480, 4294901760
    %v2482 = vsub.f32 %v2480, %v2481
    %v2483 = vand.u32 %v2482, 4294901760
    %2484 = vmatmul.mubr.f32.gmra.mrb[0].mxu0 %v2483
    %v2485 = vpop.f32.mrb[0].mxu0
    %v2486 = vadd.f32 %v2346, %v2485
    %v2487 = vpop.f32.mrb[0].mxu0
    %2488 = vmatprep.mubr.f32.mxu0 0.0
    %v2489 = vand.u32 %v2318, 4294901760
    %v2490 = vsub.f32 %v2318, %v2489
    %v2491 = vand.u32 %v2490, 4294901760
    %v2492 = vsub.f32 %v2490, %v2491
    %v2493 = vand.u32 %v2492, 4294901760
    %2494 = vmatmul.mubr.f32.gmra.mrb[0].mxu0 %v2493
    %v2495 = vpop.f32.mrb[0].mxu0
    %v2496 = vadd.f32 %v2346, %v2495
    %v2497 = vpop.f32.mrb[0].mxu0
    %2498 = vmatprep.mubr.f32.mxu0 0.0
    %v2499 = vand.u32 %v2319, 4294901760
    %v2500 = vsub.f32 %v2319, %v2499
    %v2501 = vand.u32 %v2500, 4294901760
    %v2502 = vsub.f32 %v2500, %v2501
    %v2503 = vand.u32 %v2502, 4294901760
    %2504 = vmatmul.mubr.f32.gmra.mrb[0].mxu0 %v2503
    %v2505 = vpop.f32.mrb[0].mxu0
    %v2506 = vadd.f32 %v2346, %v2505
    %v2507 = vpop.f32.mrb[0].mxu0
    %2508 = vmatprep.mubr.f32.mxu0 0.0
    %v2509 = vand.u32 %v2320, 4294901760
    %v2510 = vsub.f32 %v2320, %v2509
    %v2511 = vand.u32 %v2510, 4294901760
    %v2512 = vsub.f32 %v2510, %v2511
    %v2513 = vand.u32 %v2512, 4294901760
    %2514 = vmatmul.mubr.f32.gmra.mrb[0].mxu0 %v2513
    %v2515 = vpop.f32.mrb[0].mxu0
    %v2516 = vadd.f32 %v2346, %v2515
    %v2517 = vpop.f32.mrb[0].mxu0
    %2518 = vmatprep.mubr.f32.mxu0 0.0
    %v2519 = vand.u32 %v2321, 4294901760
    %v2520 = vsub.f32 %v2321, %v2519
    %v2521 = vand.u32 %v2520, 4294901760
    %v2522 = vsub.f32 %v2520, %v2521
    %v2523 = vand.u32 %v2522, 4294901760
    %2524 = vmatmul.mubr.f32.gmra.mrb[0].mxu0 %v2523
    %v2525 = vpop.f32.mrb[0].mxu0
    %v2526 = vadd.f32 %v2346, %v2525
    %v2527 = vpop.f32.mrb[0].mxu0
    %2528 = vmatprep.mubr.f32.mxu0 0.0
    %v2529 = vand.u32 %v2322, 4294901760
    %v2530 = vsub.f32 %v2322, %v2529
    %v2531 = vand.u32 %v2530, 4294901760
    %v2532 = vsub.f32 %v2530, %v2531
    %v2533 = vand.u32 %v2532, 4294901760
    %2534 = vmatmul.mubr.f32.gmra.mrb[0].mxu0 %v2533
    %v2535 = vpop.f32.mrb[0].mxu0
    %v2536 = vadd.f32 %v2346, %v2535
    %v2537 = vpop.f32.mrb[0].mxu0
    %2538 = vmatprep.mubr.f32.mxu0 0.0
    %v2539 = vand.u32 %v2323, 4294901760
    %v2540 = vsub.f32 %v2323, %v2539
    %v2541 = vand.u32 %v2540, 4294901760
    %v2542 = vsub.f32 %v2540, %v2541
    %v2543 = vand.u32 %v2542, 4294901760
    %2544 = vmatmul.mubr.f32.gmra.mrb[0].mxu0 %v2543
    %v2545 = vpop.f32.mrb[0].mxu0
    %v2546 = vadd.f32 %v2346, %v2545
    %v2547 = vpop.f32.mrb[0].mxu0
    %2548 = vmatprep.mubr.f32.mxu0 0.0
    %v2549 = vand.u32 %v2324, 4294901760
    %v2550 = vsub.f32 %v2324, %v2549
    %v2551 = vand.u32 %v2550, 4294901760
    %v2552 = vsub.f32 %v2550, %v2551
    %v2553 = vand.u32 %v2552, 4294901760
    %2554 = vmatmul.mubr.f32.gmra.mrb[0].mxu0 %v2553
    %v2555 = vpop.f32.mrb[0].mxu0
    %v2556 = vadd.f32 %v2346, %v2555
    %v2557 = vpop.f32.mrb[0].mxu0
    %2558 = vdwg.mxu0
    %2559 = vmatprep.subr.mxu0 0.0
    %v2560 = vand.u32 %v2325, 4294901760
    %v2561 = vsub.f32 %v2325, %v2560
    %v2562 = vand.u32 %v2561, 4294901760
    %v2563 = vsub.f32 %v2561, %v2562
    %v2564 = vand.u32 %v2563, 4294901760
    %2565 = vmatpush1.msra.mxu0 %v2564
    %2566 = vmatprep.subr.mxu0 0.0
    %v2567 = vand.u32 %v2326, 4294901760
    %v2568 = vsub.f32 %v2326, %v2567
    %v2569 = vand.u32 %v2568, 4294901760
    %v2570 = vsub.f32 %v2568, %v2569
    %v2571 = vand.u32 %v2570, 4294901760
    %2572 = vmatpush1.msra.mxu0 %v2571
    %2573 = vmatprep.subr.mxu0 0.0
    %v2574 = vand.u32 %v2327, 4294901760
    %v2575 = vsub.f32 %v2327, %v2574
    %v2576 = vand.u32 %v2575, 4294901760
    %v2577 = vsub.f32 %v2575, %v2576
    %v2578 = vand.u32 %v2577, 4294901760
    %2579 = vmatpush1.msra.mxu0 %v2578
    %2580 = vmatprep.subr.mxu0 0.0
    %v2581 = vand.u32 %v2328, 4294901760
    %v2582 = vsub.f32 %v2328, %v2581
    %v2583 = vand.u32 %v2582, 4294901760
    %v2584 = vsub.f32 %v2582, %v2583
    %v2585 = vand.u32 %v2584, 4294901760
    %2586 = vmatpush1.msra.mxu0 %v2585
    %2587 = vmatprep.subr.mxu0 0.0
    %v2588 = vand.u32 %v2329, 4294901760
    %v2589 = vsub.f32 %v2329, %v2588
    %v2590 = vand.u32 %v2589, 4294901760
    %v2591 = vsub.f32 %v2589, %v2590
    %v2592 = vand.u32 %v2591, 4294901760
    %2593 = vmatpush1.msra.mxu0 %v2592
    %2594 = vmatprep.subr.mxu0 0.0
    %v2595 = vand.u32 %v2330, 4294901760
    %v2596 = vsub.f32 %v2330, %v2595
    %v2597 = vand.u32 %v2596, 4294901760
    %v2598 = vsub.f32 %v2596, %v2597
    %v2599 = vand.u32 %v2598, 4294901760
    %2600 = vmatpush1.msra.mxu0 %v2599
    %2601 = vmatprep.subr.mxu0 0.0
    %v2602 = vand.u32 %v2331, 4294901760
    %v2603 = vsub.f32 %v2331, %v2602
    %v2604 = vand.u32 %v2603, 4294901760
    %v2605 = vsub.f32 %v2603, %v2604
    %v2606 = vand.u32 %v2605, 4294901760
    %2607 = vmatpush1.msra.mxu0 %v2606
    %2608 = vmatprep.subr.mxu0 0.0
    %v2609 = vand.u32 %v2332, 4294901760
    %v2610 = vsub.f32 %v2332, %v2609
    %v2611 = vand.u32 %v2610, 4294901760
    %v2612 = vsub.f32 %v2610, %v2611
    %v2613 = vand.u32 %v2612, 4294901760
    %2614 = vmatpush1.msra.mxu0 %v2613
    %2615 = vmatprep.subr.mxu0 0.0
    %v2616 = vand.u32 %v2333, 4294901760
    %v2617 = vsub.f32 %v2333, %v2616
    %v2618 = vand.u32 %v2617, 4294901760
    %v2619 = vsub.f32 %v2617, %v2618
    %v2620 = vand.u32 %v2619, 4294901760
    %2621 = vmatpush1.msra.mxu0 %v2620
    %2622 = vmatprep.subr.mxu0 0.0
    %v2623 = vand.u32 %v2334, 4294901760
    %v2624 = vsub.f32 %v2334, %v2623
    %v2625 = vand.u32 %v2624, 4294901760
    %v2626 = vsub.f32 %v2624, %v2625
    %v2627 = vand.u32 %v2626, 4294901760
    %2628 = vmatpush1.msra.mxu0 %v2627
    %2629 = vmatprep.subr.mxu0 0.0
    %v2630 = vand.u32 %v2335, 4294901760
    %v2631 = vsub.f32 %v2335, %v2630
    %v2632 = vand.u32 %v2631, 4294901760
    %v2633 = vsub.f32 %v2631, %v2632
    %v2634 = vand.u32 %v2633, 4294901760
    %2635 = vmatpush1.msra.mxu0 %v2634
    %2636 = vmatprep.subr.mxu0 0.0
    %v2637 = vand.u32 %v2336, 4294901760
    %v2638 = vsub.f32 %v2336, %v2637
    %v2639 = vand.u32 %v2638, 4294901760
    %v2640 = vsub.f32 %v2638, %v2639
    %v2641 = vand.u32 %v2640, 4294901760
    %2642 = vmatpush1.msra.mxu0 %v2641
    %2643 = vmatprep.subr.mxu0 0.0
    %v2644 = vand.u32 %v2337, 4294901760
    %v2645 = vsub.f32 %v2337, %v2644
    %v2646 = vand.u32 %v2645, 4294901760
    %v2647 = vsub.f32 %v2645, %v2646
    %v2648 = vand.u32 %v2647, 4294901760
    %2649 = vmatpush1.msra.mxu0 %v2648
    %2650 = vmatprep.subr.mxu0 0.0
    %v2651 = vand.u32 %v2338, 4294901760
    %v2652 = vsub.f32 %v2338, %v2651
    %v2653 = vand.u32 %v2652, 4294901760
    %v2654 = vsub.f32 %v2652, %v2653
    %v2655 = vand.u32 %v2654, 4294901760
    %2656 = vmatpush1.msra.mxu0 %v2655
    %2657 = vmatprep.subr.mxu0 0.0
    %v2658 = vand.u32 %v2339, 4294901760
    %v2659 = vsub.f32 %v2339, %v2658
    %v2660 = vand.u32 %v2659, 4294901760
    %v2661 = vsub.f32 %v2659, %v2660
    %v2662 = vand.u32 %v2661, 4294901760
    %2663 = vmatpush1.msra.mxu0 %v2662
    %2664 = vmatprep.subr.mxu0 0.0
    %v2665 = vand.u32 %v2340, 4294901760
    %v2666 = vsub.f32 %v2340, %v2665
    %v2667 = vand.u32 %v2666, 4294901760
    %v2668 = vsub.f32 %v2666, %v2667
    %v2669 = vand.u32 %v2668, 4294901760
    %2670 = vmatpush1.msra.mxu0 %v2669
    %2671 = vmatprep.subr.mxu0 0.0
    %2672 = vmatpush1.msra.mxu0 0.0
    %2673 = vmatprep.subr.mxu0 0.0
    %2674 = vmatpush1.msra.mxu0 0.0
    %2675 = vmatprep.subr.mxu0 0.0
    %2676 = vmatpush1.msra.mxu0 0.0
    %2677 = vmatprep.subr.mxu0 0.0
    %2678 = vmatpush1.msra.mxu0 0.0
    %2679 = vmatprep.subr.mxu0 0.0
    %2680 = vmatpush1.msra.mxu0 0.0
    %2681 = vmatprep.subr.mxu0 0.0
    %2682 = vmatpush1.msra.mxu0 0.0
    %2683 = vmatprep.subr.mxu0 0.0
    %2684 = vmatpush1.msra.mxu0 0.0
    %2685 = vmatprep.subr.mxu0 0.0
    %2686 = vmatpush1.msra.mxu0 0.0
    %2687 = vmatprep.subr.mxu0 0.0
    %2688 = vmatpush1.msra.mxu0 0.0
    %2689 = vmatprep.subr.mxu0 0.0
    %2690 = vmatpush1.msra.mxu0 0.0
    %2691 = vmatprep.subr.mxu0 0.0
    %2692 = vmatpush1.msra.mxu0 0.0
    %2693 = vmatprep.subr.mxu0 0.0
    %2694 = vmatpush1.msra.mxu0 0.0
    %2695 = vmatprep.subr.mxu0 0.0
    %2696 = vmatpush1.msra.mxu0 0.0
    %2697 = vmatprep.subr.mxu0 0.0
    %2698 = vmatpush1.msra.mxu0 0.0
    %2699 = vmatprep.subr.mxu0 0.0
    %2700 = vmatpush1.msra.mxu0 0.0
    %2701 = vmatprep.subr.mxu0 0.0
    %2702 = vmatpush1.msra.mxu0 0.0
    %2703 = vmatprep.mubr.f32.mxu0 0.0
    %v2704 = vand.u32 %v2312, 4294901760
    %2705 = vmatmul.mubr.f32.gmra.mrb[0].mxu0 %v2704
    %v2706 = vpop.f32.mrb[0].mxu0
    %v2707 = vadd.f32 %v2436, %v2706
    %v2708 = vpop.f32.mrb[0].mxu0
    %2709 = vmatprep.mubr.f32.mxu0 0.0
    %v2710 = vand.u32 %v2313, 4294901760
    %2711 = vmatmul.mubr.f32.gmra.mrb[0].mxu0 %v2710
    %v2712 = vpop.f32.mrb[0].mxu0
    %v2713 = vadd.f32 %v2446, %v2712
    %v2714 = vpop.f32.mrb[0].mxu0
    %2715 = vmatprep.mubr.f32.mxu0 0.0
    %v2716 = vand.u32 %v2314, 4294901760
    %2717 = vmatmul.mubr.f32.gmra.mrb[0].mxu0 %v2716
    %v2718 = vpop.f32.mrb[0].mxu0
    %v2719 = vadd.f32 %v2456, %v2718
    %v2720 = vpop.f32.mrb[0].mxu0
    %2721 = vmatprep.mubr.f32.mxu0 0.0
    %v2722 = vand.u32 %v2315, 4294901760
    %2723 = vmatmul.mubr.f32.gmra.mrb[0].mxu0 %v2722
    %v2724 = vpop.f32.mrb[0].mxu0
    %v2725 = vadd.f32 %v2466, %v2724
    %v2726 = vpop.f32.mrb[0].mxu0
    %2727 = vmatprep.mubr.f32.mxu0 0.0
    %v2728 = vand.u32 %v2316, 4294901760
    %2729 = vmatmul.mubr.f32.gmra.mrb[0].mxu0 %v2728
    %v2730 = vpop.f32.mrb[0].mxu0
    %v2731 = vadd.f32 %v2476, %v2730
    %v2732 = vpop.f32.mrb[0].mxu0
    %2733 = vmatprep.mubr.f32.mxu0 0.0
    %v2734 = vand.u32 %v2317, 4294901760
    %2735 = vmatmul.mubr.f32.gmra.mrb[0].mxu0 %v2734
    %v2736 = vpop.f32.mrb[0].mxu0
    %v2737 = vadd.f32 %v2486, %v2736
    %v2738 = vpop.f32.mrb[0].mxu0
    %2739 = vmatprep.mubr.f32.mxu0 0.0
    %v2740 = vand.u32 %v2318, 4294901760
    %2741 = vmatmul.mubr.f32.gmra.mrb[0].mxu0 %v2740
    %v2742 = vpop.f32.mrb[0].mxu0
    %v2743 = vadd.f32 %v2496, %v2742
    %v2744 = vpop.f32.mrb[0].mxu0
    %2745 = vmatprep.mubr.f32.mxu0 0.0
    %v2746 = vand.u32 %v2319, 4294901760
    %2747 = vmatmul.mubr.f32.gmra.mrb[0].mxu0 %v2746
    %v2748 = vpop.f32.mrb[0].mxu0
    %v2749 = vadd.f32 %v2506, %v2748
    %v2750 = vpop.f32.mrb[0].mxu0
    %2751 = vmatprep.mubr.f32.mxu0 0.0
    %v2752 = vand.u32 %v2320, 4294901760
    %2753 = vmatmul.mubr.f32.gmra.mrb[0].mxu0 %v2752
    %v2754 = vpop.f32.mrb[0].mxu0
    %v2755 = vadd.f32 %v2516, %v2754
    %v2756 = vpop.f32.mrb[0].mxu0
    %2757 = vmatprep.mubr.f32.mxu0 0.0
    %v2758 = vand.u32 %v2321, 4294901760
    %2759 = vmatmul.mubr.f32.gmra.mrb[0].mxu0 %v2758
    %v2760 = vpop.f32.mrb[0].mxu0
    %v2761 = vadd.f32 %v2526, %v2760
    %v2762 = vpop.f32.mrb[0].mxu0
    %2763 = vmatprep.mubr.f32.mxu0 0.0
    %v2764 = vand.u32 %v2322, 4294901760
    %2765 = vmatmul.mubr.f32.gmra.mrb[0].mxu0 %v2764
    %v2766 = vpop.f32.mrb[0].mxu0
    %v2767 = vadd.f32 %v2536, %v2766
    %v2768 = vpop.f32.mrb[0].mxu0
    %2769 = vmatprep.mubr.f32.mxu0 0.0
    %v2770 = vand.u32 %v2323, 4294901760
    %2771 = vmatmul.mubr.f32.gmra.mrb[0].mxu0 %v2770
    %v2772 = vpop.f32.mrb[0].mxu0
    %v2773 = vadd.f32 %v2546, %v2772
    %v2774 = vpop.f32.mrb[0].mxu0
    %2775 = vmatprep.mubr.f32.mxu0 0.0
    %v2776 = vand.u32 %v2324, 4294901760
    %2777 = vmatmul.mubr.f32.gmra.mrb[0].mxu0 %v2776
    %v2778 = vpop.f32.mrb[0].mxu0
    %v2779 = vadd.f32 %v2556, %v2778
    %v2780 = vpop.f32.mrb[0].mxu0
    %2781 = vdwg.mxu0
    %2782 = vmatprep.subr.mxu0 0.0
    %v2783 = vand.u32 %v2325, 4294901760
    %v2784 = vsub.f32 %v2325, %v2783
    %2785 = vmatpush1.msra.mxu0 %v2784
    %2786 = vmatprep.subr.mxu0 0.0
    %v2787 = vand.u32 %v2326, 4294901760
    %v2788 = vsub.f32 %v2326, %v2787
    %2789 = vmatpush1.msra.mxu0 %v2788
    %2790 = vmatprep.subr.mxu0 0.0
    %v2791 = vand.u32 %v2327, 4294901760
    %v2792 = vsub.f32 %v2327, %v2791
    %2793 = vmatpush1.msra.mxu0 %v2792
    %2794 = vmatprep.subr.mxu0 0.0
    %v2795 = vand.u32 %v2328, 4294901760
    %v2796 = vsub.f32 %v2328, %v2795
    %2797 = vmatpush1.msra.mxu0 %v2796
    %2798 = vmatprep.subr.mxu0 0.0
    %v2799 = vand.u32 %v2329, 4294901760
    %v2800 = vsub.f32 %v2329, %v2799
    %2801 = vmatpush1.msra.mxu0 %v2800
    %2802 = vmatprep.subr.mxu0 0.0
    %v2803 = vand.u32 %v2330, 4294901760
    %v2804 = vsub.f32 %v2330, %v2803
    %2805 = vmatpush1.msra.mxu0 %v2804
    %2806 = vmatprep.subr.mxu0 0.0
    %v2807 = vand.u32 %v2331, 4294901760
    %v2808 = vsub.f32 %v2331, %v2807
    %2809 = vmatpush1.msra.mxu0 %v2808
    %2810 = vmatprep.subr.mxu0 0.0
    %v2811 = vand.u32 %v2332, 4294901760
    %v2812 = vsub.f32 %v2332, %v2811
    %2813 = vmatpush1.msra.mxu0 %v2812
    %2814 = vmatprep.subr.mxu0 0.0
    %v2815 = vand.u32 %v2333, 4294901760
    %v2816 = vsub.f32 %v2333, %v2815
    %2817 = vmatpush1.msra.mxu0 %v2816
    %2818 = vmatprep.subr.mxu0 0.0
    %v2819 = vand.u32 %v2334, 4294901760
    %v2820 = vsub.f32 %v2334, %v2819
    %2821 = vmatpush1.msra.mxu0 %v2820
    %2822 = vmatprep.subr.mxu0 0.0
    %v2823 = vand.u32 %v2335, 4294901760
    %v2824 = vsub.f32 %v2335, %v2823
    %2825 = vmatpush1.msra.mxu0 %v2824
    %2826 = vmatprep.subr.mxu0 0.0
    %v2827 = vand.u32 %v2336, 4294901760
    %v2828 = vsub.f32 %v2336, %v2827
    %2829 = vmatpush1.msra.mxu0 %v2828
    %2830 = vmatprep.subr.mxu0 0.0
    %v2831 = vand.u32 %v2337, 4294901760
    %v2832 = vsub.f32 %v2337, %v2831
    %2833 = vmatpush1.msra.mxu0 %v2832
    %2834 = vmatprep.subr.mxu0 0.0
    %v2835 = vand.u32 %v2338, 4294901760
    %v2836 = vsub.f32 %v2338, %v2835
    %2837 = vmatpush1.msra.mxu0 %v2836
    %2838 = vmatprep.subr.mxu0 0.0
    %v2839 = vand.u32 %v2339, 4294901760
    %v2840 = vsub.f32 %v2339, %v2839
    %2841 = vmatpush1.msra.mxu0 %v2840
    %2842 = vmatprep.subr.mxu0 0.0
    %v2843 = vand.u32 %v2340, 4294901760
    %v2844 = vsub.f32 %v2340, %v2843
    %2845 = vmatpush1.msra.mxu0 %v2844
    %2846 = vmatprep.subr.mxu0 0.0
    %2847 = vmatpush1.msra.mxu0 0.0
    %2848 = vmatprep.subr.mxu0 0.0
    %2849 = vmatpush1.msra.mxu0 0.0
    %2850 = vmatprep.subr.mxu0 0.0
    %2851 = vmatpush1.msra.mxu0 0.0
    %2852 = vmatprep.subr.mxu0 0.0
    %2853 = vmatpush1.msra.mxu0 0.0
    %2854 = vmatprep.subr.mxu0 0.0
    %2855 = vmatpush1.msra.mxu0 0.0
    %2856 = vmatprep.subr.mxu0 0.0
    %2857 = vmatpush1.msra.mxu0 0.0
    %2858 = vmatprep.subr.mxu0 0.0
    %2859 = vmatpush1.msra.mxu0 0.0
    %2860 = vmatprep.subr.mxu0 0.0
    %2861 = vmatpush1.msra.mxu0 0.0
    %2862 = vmatprep.subr.mxu0 0.0
    %2863 = vmatpush1.msra.mxu0 0.0
    %2864 = vmatprep.subr.mxu0 0.0
    %2865 = vmatpush1.msra.mxu0 0.0
    %2866 = vmatprep.subr.mxu0 0.0
    %2867 = vmatpush1.msra.mxu0 0.0
    %2868 = vmatprep.subr.mxu0 0.0
    %2869 = vmatpush1.msra.mxu0 0.0
    %2870 = vmatprep.subr.mxu0 0.0
    %2871 = vmatpush1.msra.mxu0 0.0
    %2872 = vmatprep.subr.mxu0 0.0
    %2873 = vmatpush1.msra.mxu0 0.0
    %2874 = vmatprep.subr.mxu0 0.0
    %2875 = vmatpush1.msra.mxu0 0.0
    %2876 = vmatprep.subr.mxu0 0.0
    %2877 = vmatpush1.msra.mxu0 0.0
    %2878 = vmatprep.mubr.f32.mxu0 0.0
    %v2879 = vand.u32 %v2312, 4294901760
    %v2880 = vsub.f32 %v2312, %v2879
    %2881 = vmatmul.mubr.f32.gmra.mrb[0].mxu0 %v2880
    %v2882 = vpop.f32.mrb[0].mxu0
    %v2883 = vadd.f32 %v2707, %v2882
    %v2884 = vpop.f32.mrb[0].mxu0
    %2885 = vmatprep.mubr.f32.mxu0 0.0
    %v2886 = vand.u32 %v2313, 4294901760
    %v2887 = vsub.f32 %v2313, %v2886
    %2888 = vmatmul.mubr.f32.gmra.mrb[0].mxu0 %v2887
    %v2889 = vpop.f32.mrb[0].mxu0
    %v2890 = vadd.f32 %v2713, %v2889
    %v2891 = vpop.f32.mrb[0].mxu0
    %2892 = vmatprep.mubr.f32.mxu0 0.0
    %v2893 = vand.u32 %v2314, 4294901760
    %v2894 = vsub.f32 %v2314, %v2893
    %2895 = vmatmul.mubr.f32.gmra.mrb[0].mxu0 %v2894
    %v2896 = vpop.f32.mrb[0].mxu0
    %v2897 = vadd.f32 %v2719, %v2896
    %v2898 = vpop.f32.mrb[0].mxu0
    %2899 = vmatprep.mubr.f32.mxu0 0.0
    %v2900 = vand.u32 %v2315, 4294901760
    %v2901 = vsub.f32 %v2315, %v2900
    %2902 = vmatmul.mubr.f32.gmra.mrb[0].mxu0 %v2901
    %v2903 = vpop.f32.mrb[0].mxu0
    %v2904 = vadd.f32 %v2725, %v2903
    %v2905 = vpop.f32.mrb[0].mxu0
    %2906 = vmatprep.mubr.f32.mxu0 0.0
    %v2907 = vand.u32 %v2316, 4294901760
    %v2908 = vsub.f32 %v2316, %v2907
    %2909 = vmatmul.mubr.f32.gmra.mrb[0].mxu0 %v2908
    %v2910 = vpop.f32.mrb[0].mxu0
    %v2911 = vadd.f32 %v2731, %v2910
    %v2912 = vpop.f32.mrb[0].mxu0
    %2913 = vmatprep.mubr.f32.mxu0 0.0
    %v2914 = vand.u32 %v2317, 4294901760
    %v2915 = vsub.f32 %v2317, %v2914
    %2916 = vmatmul.mubr.f32.gmra.mrb[0].mxu0 %v2915
    %v2917 = vpop.f32.mrb[0].mxu0
    %v2918 = vadd.f32 %v2737, %v2917
    %v2919 = vpop.f32.mrb[0].mxu0
    %2920 = vmatprep.mubr.f32.mxu0 0.0
    %v2921 = vand.u32 %v2318, 4294901760
    %v2922 = vsub.f32 %v2318, %v2921
    %2923 = vmatmul.mubr.f32.gmra.mrb[0].mxu0 %v2922
    %v2924 = vpop.f32.mrb[0].mxu0
    %v2925 = vadd.f32 %v2743, %v2924
    %v2926 = vpop.f32.mrb[0].mxu0
    %2927 = vmatprep.mubr.f32.mxu0 0.0
    %v2928 = vand.u32 %v2319, 4294901760
    %v2929 = vsub.f32 %v2319, %v2928
    %2930 = vmatmul.mubr.f32.gmra.mrb[0].mxu0 %v2929
    %v2931 = vpop.f32.mrb[0].mxu0
    %v2932 = vadd.f32 %v2749, %v2931
    %v2933 = vpop.f32.mrb[0].mxu0
    %2934 = vmatprep.mubr.f32.mxu0 0.0
    %v2935 = vand.u32 %v2320, 4294901760
    %v2936 = vsub.f32 %v2320, %v2935
    %2937 = vmatmul.mubr.f32.gmra.mrb[0].mxu0 %v2936
    %v2938 = vpop.f32.mrb[0].mxu0
    %v2939 = vadd.f32 %v2755, %v2938
    %v2940 = vpop.f32.mrb[0].mxu0
    %2941 = vmatprep.mubr.f32.mxu0 0.0
    %v2942 = vand.u32 %v2321, 4294901760
    %v2943 = vsub.f32 %v2321, %v2942
    %2944 = vmatmul.mubr.f32.gmra.mrb[0].mxu0 %v2943
    %v2945 = vpop.f32.mrb[0].mxu0
    %v2946 = vadd.f32 %v2761, %v2945
    %v2947 = vpop.f32.mrb[0].mxu0
    %2948 = vmatprep.mubr.f32.mxu0 0.0
    %v2949 = vand.u32 %v2322, 4294901760
    %v2950 = vsub.f32 %v2322, %v2949
    %2951 = vmatmul.mubr.f32.gmra.mrb[0].mxu0 %v2950
    %v2952 = vpop.f32.mrb[0].mxu0
    %v2953 = vadd.f32 %v2767, %v2952
    %v2954 = vpop.f32.mrb[0].mxu0
    %2955 = vmatprep.mubr.f32.mxu0 0.0
    %v2956 = vand.u32 %v2323, 4294901760
    %v2957 = vsub.f32 %v2323, %v2956
    %2958 = vmatmul.mubr.f32.gmra.mrb[0].mxu0 %v2957
    %v2959 = vpop.f32.mrb[0].mxu0
    %v2960 = vadd.f32 %v2773, %v2959
    %v2961 = vpop.f32.mrb[0].mxu0
    %2962 = vmatprep.mubr.f32.mxu0 0.0
    %v2963 = vand.u32 %v2324, 4294901760
    %v2964 = vsub.f32 %v2324, %v2963
    %2965 = vmatmul.mubr.f32.gmra.mrb[0].mxu0 %v2964
    %v2966 = vpop.f32.mrb[0].mxu0
    %v2967 = vadd.f32 %v2779, %v2966
    %v2968 = vpop.f32.mrb[0].mxu0
    %2969 = vdwg.mxu0
    %2970 = vmatprep.subr.mxu0 0.0
    %v2971 = vand.u32 %v2325, 4294901760
    %2972 = vmatpush1.msra.mxu0 %v2971
    %2973 = vmatprep.subr.mxu0 0.0
    %v2974 = vand.u32 %v2326, 4294901760
    %2975 = vmatpush1.msra.mxu0 %v2974
    %2976 = vmatprep.subr.mxu0 0.0
    %v2977 = vand.u32 %v2327, 4294901760
    %2978 = vmatpush1.msra.mxu0 %v2977
    %2979 = vmatprep.subr.mxu0 0.0
    %v2980 = vand.u32 %v2328, 4294901760
    %2981 = vmatpush1.msra.mxu0 %v2980
    %2982 = vmatprep.subr.mxu0 0.0
    %v2983 = vand.u32 %v2329, 4294901760
    %2984 = vmatpush1.msra.mxu0 %v2983
    %2985 = vmatprep.subr.mxu0 0.0
    %v2986 = vand.u32 %v2330, 4294901760
    %2987 = vmatpush1.msra.mxu0 %v2986
    %2988 = vmatprep.subr.mxu0 0.0
    %v2989 = vand.u32 %v2331, 4294901760
    %2990 = vmatpush1.msra.mxu0 %v2989
    %2991 = vmatprep.subr.mxu0 0.0
    %v2992 = vand.u32 %v2332, 4294901760
    %2993 = vmatpush1.msra.mxu0 %v2992
    %2994 = vmatprep.subr.mxu0 0.0
    %v2995 = vand.u32 %v2333, 4294901760
    %2996 = vmatpush1.msra.mxu0 %v2995
    %2997 = vmatprep.subr.mxu0 0.0
    %v2998 = vand.u32 %v2334, 4294901760
    %2999 = vmatpush1.msra.mxu0 %v2998
    %3000 = vmatprep.subr.mxu0 0.0
    %v3001 = vand.u32 %v2335, 4294901760
    %3002 = vmatpush1.msra.mxu0 %v3001
    %3003 = vmatprep.subr.mxu0 0.0
    %v3004 = vand.u32 %v2336, 4294901760
    %3005 = vmatpush1.msra.mxu0 %v3004
    %3006 = vmatprep.subr.mxu0 0.0
    %v3007 = vand.u32 %v2337, 4294901760
    %3008 = vmatpush1.msra.mxu0 %v3007
    %3009 = vmatprep.subr.mxu0 0.0
    %v3010 = vand.u32 %v2338, 4294901760
    %3011 = vmatpush1.msra.mxu0 %v3010
    %3012 = vmatprep.subr.mxu0 0.0
    %v3013 = vand.u32 %v2339, 4294901760
    %3014 = vmatpush1.msra.mxu0 %v3013
    %3015 = vmatprep.subr.mxu0 0.0
    %v3016 = vand.u32 %v2340, 4294901760
    %3017 = vmatpush1.msra.mxu0 %v3016
    %3018 = vmatprep.subr.mxu0 0.0
    %3019 = vmatpush1.msra.mxu0 0.0
    %3020 = vmatprep.subr.mxu0 0.0
    %3021 = vmatpush1.msra.mxu0 0.0
    %3022 = vmatprep.subr.mxu0 0.0
    %3023 = vmatpush1.msra.mxu0 0.0
    %3024 = vmatprep.subr.mxu0 0.0
    %3025 = vmatpush1.msra.mxu0 0.0
    %3026 = vmatprep.subr.mxu0 0.0
    %3027 = vmatpush1.msra.mxu0 0.0
    %3028 = vmatprep.subr.mxu0 0.0
    %3029 = vmatpush1.msra.mxu0 0.0
    %3030 = vmatprep.subr.mxu0 0.0
    %3031 = vmatpush1.msra.mxu0 0.0
    %3032 = vmatprep.subr.mxu0 0.0
    %3033 = vmatpush1.msra.mxu0 0.0
    %3034 = vmatprep.subr.mxu0 0.0
    %3035 = vmatpush1.msra.mxu0 0.0
    %3036 = vmatprep.subr.mxu0 0.0
    %3037 = vmatpush1.msra.mxu0 0.0
    %3038 = vmatprep.subr.mxu0 0.0
    %3039 = vmatpush1.msra.mxu0 0.0
    %3040 = vmatprep.subr.mxu0 0.0
    %3041 = vmatpush1.msra.mxu0 0.0
    %3042 = vmatprep.subr.mxu0 0.0
    %3043 = vmatpush1.msra.mxu0 0.0
    %3044 = vmatprep.subr.mxu0 0.0
    %3045 = vmatpush1.msra.mxu0 0.0
    %3046 = vmatprep.subr.mxu0 0.0
    %3047 = vmatpush1.msra.mxu0 0.0
    %3048 = vmatprep.subr.mxu0 0.0
    %3049 = vmatpush1.msra.mxu0 0.0
    %3050 = vmatprep.mubr.f32.mxu0 0.0
    %v3051 = vand.u32 %v2312, 4294901760
    %v3052 = vsub.f32 %v2312, %v3051
    %v3053 = vand.u32 %v3052, 4294901760
    %3054 = vmatmul.mubr.f32.gmra.mrb[0].mxu0 %v3053
    %v3055 = vpop.f32.mrb[0].mxu0
    %v3056 = vadd.f32 %v2883, %v3055
    %v3057 = vpop.f32.mrb[0].mxu0
    %3058 = vmatprep.mubr.f32.mxu0 0.0
    %v3059 = vand.u32 %v2313, 4294901760
    %v3060 = vsub.f32 %v2313, %v3059
    %v3061 = vand.u32 %v3060, 4294901760
    %3062 = vmatmul.mubr.f32.gmra.mrb[0].mxu0 %v3061
    %v3063 = vpop.f32.mrb[0].mxu0
    %v3064 = vadd.f32 %v2890, %v3063
    %v3065 = vpop.f32.mrb[0].mxu0
    %3066 = vmatprep.mubr.f32.mxu0 0.0
    %v3067 = vand.u32 %v2314, 4294901760
    %v3068 = vsub.f32 %v2314, %v3067
    %v3069 = vand.u32 %v3068, 4294901760
    %3070 = vmatmul.mubr.f32.gmra.mrb[0].mxu0 %v3069
    %v3071 = vpop.f32.mrb[0].mxu0
    %v3072 = vadd.f32 %v2897, %v3071
    %v3073 = vpop.f32.mrb[0].mxu0
    %3074 = vmatprep.mubr.f32.mxu0 0.0
    %v3075 = vand.u32 %v2315, 4294901760
    %v3076 = vsub.f32 %v2315, %v3075
    %v3077 = vand.u32 %v3076, 4294901760
    %3078 = vmatmul.mubr.f32.gmra.mrb[0].mxu0 %v3077
    %v3079 = vpop.f32.mrb[0].mxu0
    %v3080 = vadd.f32 %v2904, %v3079
    %v3081 = vpop.f32.mrb[0].mxu0
    %3082 = vmatprep.mubr.f32.mxu0 0.0
    %v3083 = vand.u32 %v2316, 4294901760
    %v3084 = vsub.f32 %v2316, %v3083
    %v3085 = vand.u32 %v3084, 4294901760
    %3086 = vmatmul.mubr.f32.gmra.mrb[0].mxu0 %v3085
    %v3087 = vpop.f32.mrb[0].mxu0
    %v3088 = vadd.f32 %v2911, %v3087
    %v3089 = vpop.f32.mrb[0].mxu0
    %3090 = vmatprep.mubr.f32.mxu0 0.0
    %v3091 = vand.u32 %v2317, 4294901760
    %v3092 = vsub.f32 %v2317, %v3091
    %v3093 = vand.u32 %v3092, 4294901760
    %3094 = vmatmul.mubr.f32.gmra.mrb[0].mxu0 %v3093
    %v3095 = vpop.f32.mrb[0].mxu0
    %v3096 = vadd.f32 %v2918, %v3095
    %v3097 = vpop.f32.mrb[0].mxu0
    %3098 = vmatprep.mubr.f32.mxu0 0.0
    %v3099 = vand.u32 %v2318, 4294901760
    %v3100 = vsub.f32 %v2318, %v3099
    %v3101 = vand.u32 %v3100, 4294901760
    %3102 = vmatmul.mubr.f32.gmra.mrb[0].mxu0 %v3101
    %v3103 = vpop.f32.mrb[0].mxu0
    %v3104 = vadd.f32 %v2925, %v3103
    %v3105 = vpop.f32.mrb[0].mxu0
    %3106 = vmatprep.mubr.f32.mxu0 0.0
    %v3107 = vand.u32 %v2319, 4294901760
    %v3108 = vsub.f32 %v2319, %v3107
    %v3109 = vand.u32 %v3108, 4294901760
    %3110 = vmatmul.mubr.f32.gmra.mrb[0].mxu0 %v3109
    %v3111 = vpop.f32.mrb[0].mxu0
    %v3112 = vadd.f32 %v2932, %v3111
    %v3113 = vpop.f32.mrb[0].mxu0
    %3114 = vmatprep.mubr.f32.mxu0 0.0
    %v3115 = vand.u32 %v2320, 4294901760
    %v3116 = vsub.f32 %v2320, %v3115
    %v3117 = vand.u32 %v3116, 4294901760
    %3118 = vmatmul.mubr.f32.gmra.mrb[0].mxu0 %v3117
    %v3119 = vpop.f32.mrb[0].mxu0
    %v3120 = vadd.f32 %v2939, %v3119
    %v3121 = vpop.f32.mrb[0].mxu0
    %3122 = vmatprep.mubr.f32.mxu0 0.0
    %v3123 = vand.u32 %v2321, 4294901760
    %v3124 = vsub.f32 %v2321, %v3123
    %v3125 = vand.u32 %v3124, 4294901760
    %3126 = vmatmul.mubr.f32.gmra.mrb[0].mxu0 %v3125
    %v3127 = vpop.f32.mrb[0].mxu0
    %v3128 = vadd.f32 %v2946, %v3127
    %v3129 = vpop.f32.mrb[0].mxu0
    %3130 = vmatprep.mubr.f32.mxu0 0.0
    %v3131 = vand.u32 %v2322, 4294901760
    %v3132 = vsub.f32 %v2322, %v3131
    %v3133 = vand.u32 %v3132, 4294901760
    %3134 = vmatmul.mubr.f32.gmra.mrb[0].mxu0 %v3133
    %v3135 = vpop.f32.mrb[0].mxu0
    %v3136 = vadd.f32 %v2953, %v3135
    %v3137 = vpop.f32.mrb[0].mxu0
    %3138 = vmatprep.mubr.f32.mxu0 0.0
    %v3139 = vand.u32 %v2323, 4294901760
    %v3140 = vsub.f32 %v2323, %v3139
    %v3141 = vand.u32 %v3140, 4294901760
    %3142 = vmatmul.mubr.f32.gmra.mrb[0].mxu0 %v3141
    %v3143 = vpop.f32.mrb[0].mxu0
    %v3144 = vadd.f32 %v2960, %v3143
    %v3145 = vpop.f32.mrb[0].mxu0
    %3146 = vmatprep.mubr.f32.mxu0 0.0
    %v3147 = vand.u32 %v2324, 4294901760
    %v3148 = vsub.f32 %v2324, %v3147
    %v3149 = vand.u32 %v3148, 4294901760
    %3150 = vmatmul.mubr.f32.gmra.mrb[0].mxu0 %v3149
    %v3151 = vpop.f32.mrb[0].mxu0
    %v3152 = vadd.f32 %v2967, %v3151
    %v3153 = vpop.f32.mrb[0].mxu0
    %3154 = vdwg.mxu0
    %3155 = vmatprep.subr.mxu0 0.0
    %v3156 = vand.u32 %v2325, 4294901760
    %v3157 = vsub.f32 %v2325, %v3156
    %v3158 = vand.u32 %v3157, 4294901760
    %3159 = vmatpush1.msra.mxu0 %v3158
    %3160 = vmatprep.subr.mxu0 0.0
    %v3161 = vand.u32 %v2326, 4294901760
    %v3162 = vsub.f32 %v2326, %v3161
    %v3163 = vand.u32 %v3162, 4294901760
    %3164 = vmatpush1.msra.mxu0 %v3163
    %3165 = vmatprep.subr.mxu0 0.0
    %v3166 = vand.u32 %v2327, 4294901760
    %v3167 = vsub.f32 %v2327, %v3166
    %v3168 = vand.u32 %v3167, 4294901760
    %3169 = vmatpush1.msra.mxu0 %v3168
    %3170 = vmatprep.subr.mxu0 0.0
    %v3171 = vand.u32 %v2328, 4294901760
    %v3172 = vsub.f32 %v2328, %v3171
    %v3173 = vand.u32 %v3172, 4294901760
    %3174 = vmatpush1.msra.mxu0 %v3173
    %3175 = vmatprep.subr.mxu0 0.0
    %v3176 = vand.u32 %v2329, 4294901760
    %v3177 = vsub.f32 %v2329, %v3176
    %v3178 = vand.u32 %v3177, 4294901760
    %3179 = vmatpush1.msra.mxu0 %v3178
    %3180 = vmatprep.subr.mxu0 0.0
    %v3181 = vand.u32 %v2330, 4294901760
    %v3182 = vsub.f32 %v2330, %v3181
    %v3183 = vand.u32 %v3182, 4294901760
    %3184 = vmatpush1.msra.mxu0 %v3183
    %3185 = vmatprep.subr.mxu0 0.0
    %v3186 = vand.u32 %v2331, 4294901760
    %v3187 = vsub.f32 %v2331, %v3186
    %v3188 = vand.u32 %v3187, 4294901760
    %3189 = vmatpush1.msra.mxu0 %v3188
    %3190 = vmatprep.subr.mxu0 0.0
    %v3191 = vand.u32 %v2332, 4294901760
    %v3192 = vsub.f32 %v2332, %v3191
    %v3193 = vand.u32 %v3192, 4294901760
    %3194 = vmatpush1.msra.mxu0 %v3193
    %3195 = vmatprep.subr.mxu0 0.0
    %v3196 = vand.u32 %v2333, 4294901760
    %v3197 = vsub.f32 %v2333, %v3196
    %v3198 = vand.u32 %v3197, 4294901760
    %3199 = vmatpush1.msra.mxu0 %v3198
    %3200 = vmatprep.subr.mxu0 0.0
    %v3201 = vand.u32 %v2334, 4294901760
    %v3202 = vsub.f32 %v2334, %v3201
    %v3203 = vand.u32 %v3202, 4294901760
    %3204 = vmatpush1.msra.mxu0 %v3203
    %3205 = vmatprep.subr.mxu0 0.0
    %v3206 = vand.u32 %v2335, 4294901760
    %v3207 = vsub.f32 %v2335, %v3206
    %v3208 = vand.u32 %v3207, 4294901760
    %3209 = vmatpush1.msra.mxu0 %v3208
    %3210 = vmatprep.subr.mxu0 0.0
    %v3211 = vand.u32 %v2336, 4294901760
    %v3212 = vsub.f32 %v2336, %v3211
    %v3213 = vand.u32 %v3212, 4294901760
    %3214 = vmatpush1.msra.mxu0 %v3213
    %3215 = vmatprep.subr.mxu0 0.0
    %v3216 = vand.u32 %v2337, 4294901760
    %v3217 = vsub.f32 %v2337, %v3216
    %v3218 = vand.u32 %v3217, 4294901760
    %3219 = vmatpush1.msra.mxu0 %v3218
    %3220 = vmatprep.subr.mxu0 0.0
    %v3221 = vand.u32 %v2338, 4294901760
    %v3222 = vsub.f32 %v2338, %v3221
    %v3223 = vand.u32 %v3222, 4294901760
    %3224 = vmatpush1.msra.mxu0 %v3223
    %3225 = vmatprep.subr.mxu0 0.0
    %v3226 = vand.u32 %v2339, 4294901760
    %v3227 = vsub.f32 %v2339, %v3226
    %v3228 = vand.u32 %v3227, 4294901760
    %3229 = vmatpush1.msra.mxu0 %v3228
    %3230 = vmatprep.subr.mxu0 0.0
    %v3231 = vand.u32 %v2340, 4294901760
    %v3232 = vsub.f32 %v2340, %v3231
    %v3233 = vand.u32 %v3232, 4294901760
    %3234 = vmatpush1.msra.mxu0 %v3233
    %3235 = vmatprep.subr.mxu0 0.0
    %3236 = vmatpush1.msra.mxu0 0.0
    %3237 = vmatprep.subr.mxu0 0.0
    %3238 = vmatpush1.msra.mxu0 0.0
    %3239 = vmatprep.subr.mxu0 0.0
    %3240 = vmatpush1.msra.mxu0 0.0
    %3241 = vmatprep.subr.mxu0 0.0
    %3242 = vmatpush1.msra.mxu0 0.0
    %3243 = vmatprep.subr.mxu0 0.0
    %3244 = vmatpush1.msra.mxu0 0.0
    %3245 = vmatprep.subr.mxu0 0.0
    %3246 = vmatpush1.msra.mxu0 0.0
    %3247 = vmatprep.subr.mxu0 0.0
    %3248 = vmatpush1.msra.mxu0 0.0
    %3249 = vmatprep.subr.mxu0 0.0
    %3250 = vmatpush1.msra.mxu0 0.0
    %3251 = vmatprep.subr.mxu0 0.0
    %3252 = vmatpush1.msra.mxu0 0.0
    %3253 = vmatprep.subr.mxu0 0.0
    %3254 = vmatpush1.msra.mxu0 0.0
    %3255 = vmatprep.subr.mxu0 0.0
    %3256 = vmatpush1.msra.mxu0 0.0
    %3257 = vmatprep.subr.mxu0 0.0
    %3258 = vmatpush1.msra.mxu0 0.0
    %3259 = vmatprep.subr.mxu0 0.0
    %3260 = vmatpush1.msra.mxu0 0.0
    %3261 = vmatprep.subr.mxu0 0.0
    %3262 = vmatpush1.msra.mxu0 0.0
    %3263 = vmatprep.subr.mxu0 0.0
    %3264 = vmatpush1.msra.mxu0 0.0
    %3265 = vmatprep.subr.mxu0 0.0
    %3266 = vmatpush1.msra.mxu0 0.0
    %3267 = vmatprep.mubr.f32.mxu0 0.0
    %v3268 = vand.u32 %v2312, 4294901760
    %3269 = vmatmul.mubr.f32.gmra.mrb[0].mxu0 %v3268
    %v3270 = vpop.f32.mrb[0].mxu0
    %v3271 = vadd.f32 %v3056, %v3270
    %v3272 = vpop.f32.mrb[0].mxu0
    %3273 = vmatprep.mubr.f32.mxu0 0.0
    %v3274 = vand.u32 %v2313, 4294901760
    %3275 = vmatmul.mubr.f32.gmra.mrb[0].mxu0 %v3274
    %v3276 = vpop.f32.mrb[0].mxu0
    %v3277 = vadd.f32 %v3064, %v3276
    %v3278 = vpop.f32.mrb[0].mxu0
    %3279 = vmatprep.mubr.f32.mxu0 0.0
    %v3280 = vand.u32 %v2314, 4294901760
    %3281 = vmatmul.mubr.f32.gmra.mrb[0].mxu0 %v3280
    %v3282 = vpop.f32.mrb[0].mxu0
    %v3283 = vadd.f32 %v3072, %v3282
    %v3284 = vpop.f32.mrb[0].mxu0
    %3285 = vmatprep.mubr.f32.mxu0 0.0
    %v3286 = vand.u32 %v2315, 4294901760
    %3287 = vmatmul.mubr.f32.gmra.mrb[0].mxu0 %v3286
    %v3288 = vpop.f32.mrb[0].mxu0
    %v3289 = vadd.f32 %v3080, %v3288
    %v3290 = vpop.f32.mrb[0].mxu0
    %3291 = vmatprep.mubr.f32.mxu0 0.0
    %v3292 = vand.u32 %v2316, 4294901760
    %3293 = vmatmul.mubr.f32.gmra.mrb[0].mxu0 %v3292
    %v3294 = vpop.f32.mrb[0].mxu0
    %v3295 = vadd.f32 %v3088, %v3294
    %v3296 = vpop.f32.mrb[0].mxu0
    %3297 = vmatprep.mubr.f32.mxu0 0.0
    %v3298 = vand.u32 %v2317, 4294901760
    %3299 = vmatmul.mubr.f32.gmra.mrb[0].mxu0 %v3298
    %v3300 = vpop.f32.mrb[0].mxu0
    %v3301 = vadd.f32 %v3096, %v3300
    %v3302 = vpop.f32.mrb[0].mxu0
    %3303 = vmatprep.mubr.f32.mxu0 0.0
    %v3304 = vand.u32 %v2318, 4294901760
    %3305 = vmatmul.mubr.f32.gmra.mrb[0].mxu0 %v3304
    %v3306 = vpop.f32.mrb[0].mxu0
    %v3307 = vadd.f32 %v3104, %v3306
    %v3308 = vpop.f32.mrb[0].mxu0
    %3309 = vmatprep.mubr.f32.mxu0 0.0
    %v3310 = vand.u32 %v2319, 4294901760
    %3311 = vmatmul.mubr.f32.gmra.mrb[0].mxu0 %v3310
    %v3312 = vpop.f32.mrb[0].mxu0
    %v3313 = vadd.f32 %v3112, %v3312
    %v3314 = vpop.f32.mrb[0].mxu0
    %3315 = vmatprep.mubr.f32.mxu0 0.0
    %v3316 = vand.u32 %v2320, 4294901760
    %3317 = vmatmul.mubr.f32.gmra.mrb[0].mxu0 %v3316
    %v3318 = vpop.f32.mrb[0].mxu0
    %v3319 = vadd.f32 %v3120, %v3318
    %v3320 = vpop.f32.mrb[0].mxu0
    %3321 = vmatprep.mubr.f32.mxu0 0.0
    %v3322 = vand.u32 %v2321, 4294901760
    %3323 = vmatmul.mubr.f32.gmra.mrb[0].mxu0 %v3322
    %v3324 = vpop.f32.mrb[0].mxu0
    %v3325 = vadd.f32 %v3128, %v3324
    %v3326 = vpop.f32.mrb[0].mxu0
    %3327 = vmatprep.mubr.f32.mxu0 0.0
    %v3328 = vand.u32 %v2322, 4294901760
    %3329 = vmatmul.mubr.f32.gmra.mrb[0].mxu0 %v3328
    %v3330 = vpop.f32.mrb[0].mxu0
    %v3331 = vadd.f32 %v3136, %v3330
    %v3332 = vpop.f32.mrb[0].mxu0
    %3333 = vmatprep.mubr.f32.mxu0 0.0
    %v3334 = vand.u32 %v2323, 4294901760
    %3335 = vmatmul.mubr.f32.gmra.mrb[0].mxu0 %v3334
    %v3336 = vpop.f32.mrb[0].mxu0
    %v3337 = vadd.f32 %v3144, %v3336
    %v3338 = vpop.f32.mrb[0].mxu0
    %3339 = vmatprep.mubr.f32.mxu0 0.0
    %v3340 = vand.u32 %v2324, 4294901760
    %3341 = vmatmul.mubr.f32.gmra.mrb[0].mxu0 %v3340
    %v3342 = vpop.f32.mrb[0].mxu0
    %v3343 = vadd.f32 %v3152, %v3342
    %v3344 = vpop.f32.mrb[0].mxu0
    %3345 = vdwg.mxu0
    %3346 = vmatprep.subr.mxu0 0.0
    %v3347 = vand.u32 %v2325, 4294901760
    %3348 = vmatpush1.msra.mxu0 %v3347
    %3349 = vmatprep.subr.mxu0 0.0
    %v3350 = vand.u32 %v2326, 4294901760
    %3351 = vmatpush1.msra.mxu0 %v3350
    %3352 = vmatprep.subr.mxu0 0.0
    %v3353 = vand.u32 %v2327, 4294901760
    %3354 = vmatpush1.msra.mxu0 %v3353
    %3355 = vmatprep.subr.mxu0 0.0
    %v3356 = vand.u32 %v2328, 4294901760
    %3357 = vmatpush1.msra.mxu0 %v3356
    %3358 = vmatprep.subr.mxu0 0.0
    %v3359 = vand.u32 %v2329, 4294901760
    %3360 = vmatpush1.msra.mxu0 %v3359
    %3361 = vmatprep.subr.mxu0 0.0
    %v3362 = vand.u32 %v2330, 4294901760
    %3363 = vmatpush1.msra.mxu0 %v3362
    %3364 = vmatprep.subr.mxu0 0.0
    %v3365 = vand.u32 %v2331, 4294901760
    %3366 = vmatpush1.msra.mxu0 %v3365
    %3367 = vmatprep.subr.mxu0 0.0
    %v3368 = vand.u32 %v2332, 4294901760
    %3369 = vmatpush1.msra.mxu0 %v3368
    %3370 = vmatprep.subr.mxu0 0.0
    %v3371 = vand.u32 %v2333, 4294901760
    %3372 = vmatpush1.msra.mxu0 %v3371
    %3373 = vmatprep.subr.mxu0 0.0
    %v3374 = vand.u32 %v2334, 4294901760
    %3375 = vmatpush1.msra.mxu0 %v3374
    %3376 = vmatprep.subr.mxu0 0.0
    %v3377 = vand.u32 %v2335, 4294901760
    %3378 = vmatpush1.msra.mxu0 %v3377
    %3379 = vmatprep.subr.mxu0 0.0
    %v3380 = vand.u32 %v2336, 4294901760
    %3381 = vmatpush1.msra.mxu0 %v3380
    %3382 = vmatprep.subr.mxu0 0.0
    %v3383 = vand.u32 %v2337, 4294901760
    %3384 = vmatpush1.msra.mxu0 %v3383
    %3385 = vmatprep.subr.mxu0 0.0
    %v3386 = vand.u32 %v2338, 4294901760
    %3387 = vmatpush1.msra.mxu0 %v3386
    %3388 = vmatprep.subr.mxu0 0.0
    %v3389 = vand.u32 %v2339, 4294901760
    %3390 = vmatpush1.msra.mxu0 %v3389
    %3391 = vmatprep.subr.mxu0 0.0
    %v3392 = vand.u32 %v2340, 4294901760
    %3393 = vmatpush1.msra.mxu0 %v3392
    %3394 = vmatprep.subr.mxu0 0.0
    %3395 = vmatpush1.msra.mxu0 0.0
    %3396 = vmatprep.subr.mxu0 0.0
    %3397 = vmatpush1.msra.mxu0 0.0
    %3398 = vmatprep.subr.mxu0 0.0
    %3399 = vmatpush1.msra.mxu0 0.0
    %3400 = vmatprep.subr.mxu0 0.0
    %3401 = vmatpush1.msra.mxu0 0.0
    %3402 = vmatprep.subr.mxu0 0.0
    %3403 = vmatpush1.msra.mxu0 0.0
    %3404 = vmatprep.subr.mxu0 0.0
    %3405 = vmatpush1.msra.mxu0 0.0
    %3406 = vmatprep.subr.mxu0 0.0
    %3407 = vmatpush1.msra.mxu0 0.0
    %3408 = vmatprep.subr.mxu0 0.0
    %3409 = vmatpush1.msra.mxu0 0.0
    %3410 = vmatprep.subr.mxu0 0.0
    %3411 = vmatpush1.msra.mxu0 0.0
    %3412 = vmatprep.subr.mxu0 0.0
    %3413 = vmatpush1.msra.mxu0 0.0
    %3414 = vmatprep.subr.mxu0 0.0
    %3415 = vmatpush1.msra.mxu0 0.0
    %3416 = vmatprep.subr.mxu0 0.0
    %3417 = vmatpush1.msra.mxu0 0.0
    %3418 = vmatprep.subr.mxu0 0.0
    %3419 = vmatpush1.msra.mxu0 0.0
    %3420 = vmatprep.subr.mxu0 0.0
    %3421 = vmatpush1.msra.mxu0 0.0
    %3422 = vmatprep.subr.mxu0 0.0
    %3423 = vmatpush1.msra.mxu0 0.0
    %3424 = vmatprep.subr.mxu0 0.0
    %3425 = vmatpush1.msra.mxu0 0.0
    %3426 = vmatprep.mubr.f32.mxu0 0.0
    %v3427 = vand.u32 %v2312, 4294901760
    %3428 = vmatmul.mubr.f32.gmra.mrb[0].mxu0 %v3427
    %v3429 = vpop.f32.mrb[0].mxu0
    %v3430 = vadd.f32 %v3271, %v3429
    %v3431 = vpop.f32.mrb[0].mxu0
    %3432 = vmatprep.mubr.f32.mxu0 0.0
    %v3433 = vand.u32 %v2313, 4294901760
    %3434 = vmatmul.mubr.f32.gmra.mrb[0].mxu0 %v3433
    %v3435 = vpop.f32.mrb[0].mxu0
    %v3436 = vadd.f32 %v3277, %v3435
    %v3437 = vpop.f32.mrb[0].mxu0
    %3438 = vmatprep.mubr.f32.mxu0 0.0
    %v3439 = vand.u32 %v2314, 4294901760
    %3440 = vmatmul.mubr.f32.gmra.mrb[0].mxu0 %v3439
    %v3441 = vpop.f32.mrb[0].mxu0
    %v3442 = vadd.f32 %v3283, %v3441
    %v3443 = vpop.f32.mrb[0].mxu0
    %3444 = vmatprep.mubr.f32.mxu0 0.0
    %v3445 = vand.u32 %v2315, 4294901760
    %3446 = vmatmul.mubr.f32.gmra.mrb[0].mxu0 %v3445
    %v3447 = vpop.f32.mrb[0].mxu0
    %v3448 = vadd.f32 %v3289, %v3447
    %v3449 = vpop.f32.mrb[0].mxu0
    %3450 = vmatprep.mubr.f32.mxu0 0.0
    %v3451 = vand.u32 %v2316, 4294901760
    %3452 = vmatmul.mubr.f32.gmra.mrb[0].mxu0 %v3451
    %v3453 = vpop.f32.mrb[0].mxu0
    %v3454 = vadd.f32 %v3295, %v3453
    %v3455 = vpop.f32.mrb[0].mxu0
    %3456 = vmatprep.mubr.f32.mxu0 0.0
    %v3457 = vand.u32 %v2317, 4294901760
    %3458 = vmatmul.mubr.f32.gmra.mrb[0].mxu0 %v3457
    %v3459 = vpop.f32.mrb[0].mxu0
    %v3460 = vadd.f32 %v3301, %v3459
    %v3461 = vpop.f32.mrb[0].mxu0
    %3462 = vmatprep.mubr.f32.mxu0 0.0
    %v3463 = vand.u32 %v2318, 4294901760
    %3464 = vmatmul.mubr.f32.gmra.mrb[0].mxu0 %v3463
    %v3465 = vpop.f32.mrb[0].mxu0
    %v3466 = vadd.f32 %v3307, %v3465
    %v3467 = vpop.f32.mrb[0].mxu0
    %3468 = vmatprep.mubr.f32.mxu0 0.0
    %v3469 = vand.u32 %v2319, 4294901760
    %3470 = vmatmul.mubr.f32.gmra.mrb[0].mxu0 %v3469
    %v3471 = vpop.f32.mrb[0].mxu0
    %v3472 = vadd.f32 %v3313, %v3471
    %v3473 = vpop.f32.mrb[0].mxu0
    %3474 = vmatprep.mubr.f32.mxu0 0.0
    %v3475 = vand.u32 %v2320, 4294901760
    %3476 = vmatmul.mubr.f32.gmra.mrb[0].mxu0 %v3475
    %v3477 = vpop.f32.mrb[0].mxu0
    %v3478 = vadd.f32 %v3319, %v3477
    %v3479 = vpop.f32.mrb[0].mxu0
    %3480 = vmatprep.mubr.f32.mxu0 0.0
    %v3481 = vand.u32 %v2321, 4294901760
    %3482 = vmatmul.mubr.f32.gmra.mrb[0].mxu0 %v3481
    %v3483 = vpop.f32.mrb[0].mxu0
    %v3484 = vadd.f32 %v3325, %v3483
    %v3485 = vpop.f32.mrb[0].mxu0
    %3486 = vmatprep.mubr.f32.mxu0 0.0
    %v3487 = vand.u32 %v2322, 4294901760
    %3488 = vmatmul.mubr.f32.gmra.mrb[0].mxu0 %v3487
    %v3489 = vpop.f32.mrb[0].mxu0
    %v3490 = vadd.f32 %v3331, %v3489
    %v3491 = vpop.f32.mrb[0].mxu0
    %3492 = vmatprep.mubr.f32.mxu0 0.0
    %v3493 = vand.u32 %v2323, 4294901760
    %3494 = vmatmul.mubr.f32.gmra.mrb[0].mxu0 %v3493
    %v3495 = vpop.f32.mrb[0].mxu0
    %v3496 = vadd.f32 %v3337, %v3495
    %v3497 = vpop.f32.mrb[0].mxu0
    %3498 = vmatprep.mubr.f32.mxu0 0.0
    %v3499 = vand.u32 %v2324, 4294901760
    %3500 = vmatmul.mubr.f32.gmra.mrb[0].mxu0 %v3499
    %v3501 = vpop.f32.mrb[0].mxu0
    %v3502 = vadd.f32 %v3343, %v3501
    %v3503 = vpop.f32.mrb[0].mxu0
    %3504 = vdwg.mxu0
    %vm3505 = vcmask 7168
    %3506 = vst.msk [vmem:[%s7] sm:$0xff] %vm3505, %v3430
    %3507 = vst.msk [vmem:[%s7 + $0x8] sm:$0xff] %vm3505, %v3436
    %3508 = vst.msk [vmem:[%s7 + $0x10] sm:$0xff] %vm3505, %v3442
    %3509 = vst.msk [vmem:[%s7 + $0x18] sm:$0xff] %vm3505, %v3448
    %3510 = vst.msk [vmem:[%s7 + $0x20] sm:$0xff] %vm3505, %v3454
    %3511 = vst.msk [vmem:[%s7 + $0x28] sm:$0xff] %vm3505, %v3460
    %3512 = vst.msk [vmem:[%s7 + $0x30] sm:$0xff] %vm3505, %v3466
    %3513 = vst.msk [vmem:[%s7 + $0x38] sm:$0xff] %vm3505, %v3472
    %3514 = vst.msk [vmem:[%s7 + $0x40] sm:$0xff] %vm3505, %v3478
    %3515 = vst.msk [vmem:[%s7 + $0x48] sm:$0xff] %vm3505, %v3484
    %3516 = vst.msk [vmem:[%s7 + $0x50] sm:$0xff] %vm3505, %v3490
    %3517 = vst.msk [vmem:[%s7 + $0x58] sm:$0xff] %vm3505, %v3496
    %3518 = vst.msk [vmem:[%s7 + $0x60] sm:$0xff] %vm3505, %v3502
    // Predicated region
    $region38: #{tpu_custom_call.1} parent=1 // pred_check
      _
    $region39: #{tpu_custom_call.1} parent=1 // pred_check_branch
      %3520 = sbr.rel (0) target = $region41
    $region40: #{tpu_custom_call.1} parent=1 // pred_region
      _
    $region41: #{tpu_custom_call.1} parent=1 // pred_fallthru
      _
    // Predicated region
    $region42: #{tpu_custom_call.1} parent=1 // pred_check
      _
    $region43: #{tpu_custom_call.1} parent=1 // pred_check_branch
      %3522 = sbr.rel (0) target = $region45
    $region44: #{tpu_custom_call.1} parent=1 // pred_region
      _
    $region45: #{tpu_custom_call.1} parent=1 // pred_fallthru
      _
    %3523 = vsyncpa [#allocation3], 1
    %3524 = vsyncpa [#allocation5], 1

</llo_original>
